<compile_context>
chip_gen: v6e
topology: v6e:2x2x1
jax: 0.10.0
libtpu: 0.0.40
codegen_flags: <defaults>
</compile_context>

<pallas_src>
import functools

import jax
import jax.numpy as jnp
from jax.experimental import pallas as pl
from jax.experimental.pallas import tpu as pltpu


# MXU operand dtype.  Accumulation is always f32 via preferred_element_type.
MATMUL_DTYPE = jnp.bfloat16


# ---------------------------------------------------------------------------
# In-kernel helpers
# ---------------------------------------------------------------------------
def _circ_shift(a, d, axis):
    """Circular shift: b[..., i, ...] = a[..., (i + d) mod n, ...] (static d)."""
    n = a.shape[axis]
    d = d % n
    if d == 0:
        return a
    lo = jax.lax.slice_in_dim(a, d, n, axis=axis)
    hi = jax.lax.slice_in_dim(a, 0, d, axis=axis)
    return jnp.concatenate([lo, hi], axis=axis)


# ---------------------------------------------------------------------------
# Fused whole-network kernel (one grid step == `N` images)
# ---------------------------------------------------------------------------
def fused_resnet_kernel(x_ref, w_ref, b_ref, o_ref, *, n_blocks, offs, cins,
                        head_cout):
    """x_ref: (N, H, W, Cin0) f32; w_ref: (sum_K, C) bf16 slab;
    b_ref: (L, C) f32 slab; o_ref: (N, H, W, head_cout)."""
    N, H, W, Cin0 = x_ref.shape
    M = N * H * W

    def conv(a_flat, layer, residual=None, relu=False):
        """3x3 circular conv, 3-tap im2col.  a_flat: (M, cin) f32."""
        cin = cins[layer]
        off = offs[layer]
        # Cast once to bf16 BEFORE building patches (halves duplicated bytes).
        a4 = a_flat.reshape(N, H, W, cin).astype(MATMUL_DTYPE)
        # kw taps (column order kw*cin + ci, matching the weight packing).
        aw = jnp.concatenate(
            [_circ_shift(a4, -1, 2), a4, _circ_shift(a4, 1, 2)], axis=3)
        acc = None
        for kh in range(3):                       # kh taps: roll along H
            d = kh - 1
            ah = aw if d == 0 else _circ_shift(aw, d, 1)
            part = jnp.dot(
                ah.reshape(M, 3 * cin),
                w_ref[off + kh * 3 * cin: off + (kh + 1) * 3 * cin, :],
                preferred_element_type=jnp.float32)
            acc = part if acc is None else acc + part
        # f32 epilogue: bias, residual add, ReLU.
        acc = acc + b_ref[layer:layer + 1, :]
        if residual is not None:
            acc = acc + residual
        if relu:
            acc = jnp.maximum(acc, 0.0)
        return acc                                 # (M, C_slab) f32

    x = x_ref[...].astype(jnp.float32).reshape(M, Cin0)

    # stem conv + ReLU
    a = conv(x, 0, relu=True)

    # residual blocks: conv1 + relu, conv2 + residual + relu
    for l in range(n_blocks):
        h = conv(a, 1 + 2 * l, relu=True)
        a = conv(h, 2 + 2 * l, residual=a, relu=True)

    # head conv (no activation); head weight was zero-padded to C_slab cols,
    # keep only the true output channels.
    out = conv(a, 1 + 2 * n_blocks, relu=False)
    o_ref[...] = out[:, :head_cout].reshape(N, H, W, head_cout).astype(
        o_ref.dtype)


# ---------------------------------------------------------------------------
# Parameter packing (weights in HWIO layout)
# ---------------------------------------------------------------------------
def _pack_params(params, channels):
    """Pack all conv weights/biases into one weight slab and one bias slab.

    Weights are HWIO (kh, kw, ci, co).  NOTE: real PyTorch Conv2d weights are
    OIHW and must be permuted with w.permute(2, 3, 1, 0) before packing.
    """
    ws, bs, offs, cins = [], [], [], []
    off = 0

    def add(w, b):
        nonlocal off
        _, _, cin, cout = w.shape
        assert cout <= channels
        wm = w.reshape(9 * cin, cout)              # row order (kh, kw, ci)
        bm = b
        if cout < channels:                        # pad head to slab width
            wm = jnp.pad(wm, ((0, 0), (0, channels - cout)))
            bm = jnp.pad(bm, (0, channels - cout))
        ws.append(wm.astype(MATMUL_DTYPE))
        bs.append(bm.astype(jnp.float32))
        offs.append(off)
        cins.append(cin)
        off += 9 * cin

    add(*params["stem"])
    for (w1, b1, w2, b2) in params["blocks"]:
        add(w1, b1)
        add(w2, b2)
    add(*params["head"])

    w_slab = jnp.concatenate(ws, axis=0)           # (sum_K, channels) bf16
    b_slab = jnp.stack(bs, axis=0)                 # (L, channels) f32
    return w_slab, b_slab, tuple(offs), tuple(cins)


def _images_per_grid_step(batch):
    """Fold the whole batch into one grid step on 1-TC chips (v5e/v6e);
    keep >=2 parallel steps on v7x-class chips so both TensorCores work."""
    try:
        kind = jax.devices()[0].device_kind.lower()
    except Exception:
        kind = ""
    two_tensorcores = "7" in kind                  # v7x-class chips
    if two_tensorcores and batch >= 2 and batch % 2 == 0:
        return batch // 2
    return batch


# ---------------------------------------------------------------------------
# Wrapper
# ---------------------------------------------------------------------------
def simple_resnet_forward(params, x_nchw):
    """Matches SimpleResnet.forward. x_nchw: (B, input_size*lookback, H, W)."""
    B, Cin0, H, W = x_nchw.shape
    channels = params["stem"][0].shape[-1]
    head_cout = params["head"][0].shape[-1]
    n_blocks = len(params["blocks"])

    w_slab, b_slab, offs, cins = _pack_params(params, channels)

    ips = _images_per_grid_step(B)                 # images per grid step
    steps = B // ips

    # NCHW -> NHWC once; allow_input_fusion lets XLA fuse this producer
    # transpose into the pallas call (no separate launch).
    x = jnp.transpose(x_nchw, (0, 2, 3, 1))

    kernel = functools.partial(
        fused_resnet_kernel, n_blocks=n_blocks, offs=offs, cins=cins,
        head_cout=head_cout)

    in_specs = [
        pl.BlockSpec((ips, H, W, Cin0), lambda i: (i, 0, 0, 0)),
        pl.BlockSpec(w_slab.shape, lambda i: (0, 0)),   # whole slab, no re-DMA
        pl.BlockSpec(b_slab.shape, lambda i: (0, 0)),
    ]

    out_nhwc = pl.pallas_call(
        kernel,
        out_shape=jax.ShapeDtypeStruct((B, H, W, head_cout), x_nchw.dtype),
        grid=(steps,),
        in_specs=in_specs,
        out_specs=pl.BlockSpec((ips, H, W, head_cout), lambda i: (i, 0, 0, 0)),
        compiler_params=pltpu.CompilerParams(
            dimension_semantics=("parallel",),
            allow_input_fusion=[True, False, False],
        ),
    )(x, w_slab, b_slab)

    return jnp.transpose(out_nhwc, (0, 3, 1, 2))   # NHWC -> NCHW


# ---------------------------------------------------------------------------
# Parameter init (deterministic, synthetic) — HWIO weight layout
# ---------------------------------------------------------------------------
def _init_conv(key, c_in, c_out):
    kw, kb = jax.random.split(key)
    fan_in = c_in * 9
    scale = 1.0 / jnp.sqrt(jnp.float32(fan_in))
    w = jax.random.uniform(
        kw, (3, 3, c_in, c_out), jnp.float32, minval=-scale, maxval=scale)
    b = jax.random.uniform(
        kb, (c_out,), jnp.float32, minval=-scale, maxval=scale)
    return w, b


def init_simple_resnet(key, input_size, lookback, resblock_layers,
                       resblock_channels):
    keys = jax.random.split(key, 2 + 2 * resblock_layers)
    params = {}
    params["stem"] = _init_conv(keys[0], input_size * lookback,
                                resblock_channels)
    blocks = []
    for i in range(resblock_layers):
        w1, b1 = _init_conv(keys[1 + 2 * i], resblock_channels,
                            resblock_channels)
        w2, b2 = _init_conv(keys[2 + 2 * i], resblock_channels,
                            resblock_channels)
        blocks.append((w1, b1, w2, b2))
    params["blocks"] = blocks
    params["head"] = _init_conv(keys[-1], resblock_channels, input_size)
    return params


# ---------------------------------------------------------------------------
if __name__ == "__main__":
    input_size = 4
    lookback = 2
    resblock_layers = 2
    resblock_channels = 32
    B, H, W = 2, 16, 16

    key = jax.random.PRNGKey(0)
    kp, kx = jax.random.split(key)

    params = init_simple_resnet(kp, input_size, lookback, resblock_layers,
                                resblock_channels)
    x = jax.random.normal(kx, (B, input_size * lookback, H, W), jnp.float32)

    fwd = jax.jit(simple_resnet_forward)
    out = fwd(params, x)
    out = jax.block_until_ready(out)
    assert out.shape == (B, input_size, H, W)
    assert bool(jnp.all(jnp.isfinite(out)))
    print("KERNEL_OK")
</pallas_src>

<mosaic_0001>
module attributes {stable_mosaic.version = 11 : i64} {
  func.func @fused_resnet_kernel(%arg0: i32, %arg1: memref<2x16x16x8xf32, #tpu.memory_space<vmem>>, %arg2: memref<1512x32xbf16, #tpu.memory_space<vmem>>, %arg3: memref<6x32xf32, #tpu.memory_space<vmem>>, %arg4: memref<2x16x16x4xf32, #tpu.memory_space<vmem>>) attributes {dimension_semantics = [#tpu.dimension_semantics<parallel>], iteration_bounds = array<i64: 1>, scalar_prefetch = 0 : i64, scratch_operands = 0 : i64, tpu.core_type = #tpu.core_type<tc>, window_params = [{transform_indices = @transform_0, window_bounds = array<i64: 2, 16, 16, 8>}, {pipeline_mode = #tpu.pipeline_mode<synchronous>, transform_indices = @transform_1, window_bounds = array<i64: 1512, 32>}, {pipeline_mode = #tpu.pipeline_mode<synchronous>, transform_indices = @transform_2, window_bounds = array<i64: 6, 32>}, {transform_indices = @transform_3, window_bounds = array<i64: 2, 16, 16, 4>}]} {
    %c0 = arith.constant 0 : index
    %c0_0 = arith.constant 0 : index
    %c0_1 = arith.constant 0 : index
    %c0_2 = arith.constant 0 : index
    %0 = vector.load %arg1[%c0, %c0_0, %c0_1, %c0_2] : memref<2x16x16x8xf32, #tpu.memory_space<vmem>>, vector<2x16x16x8xf32>
    %1 = vector.shape_cast %0 : vector<2x16x16x8xf32> to vector<512x8xf32>
    %2 = vector.shape_cast %1 : vector<512x8xf32> to vector<2x16x16x8xf32>
    %3 = arith.truncf %2 : vector<2x16x16x8xf32> to vector<2x16x16x8xbf16>
    %4 = vector.extract_strided_slice %3 {offsets = [0, 0, 15, 0], sizes = [2, 16, 1, 8], strides = [1, 1, 1, 1]} : vector<2x16x16x8xbf16> to vector<2x16x1x8xbf16>
    %5 = vector.extract_strided_slice %3 {offsets = [0, 0, 0, 0], sizes = [2, 16, 15, 8], strides = [1, 1, 1, 1]} : vector<2x16x16x8xbf16> to vector<2x16x15x8xbf16>
    %6 = tpu.concatenate %4, %5 in 2 : vector<2x16x1x8xbf16>, vector<2x16x15x8xbf16> -> vector<2x16x16x8xbf16>
    %7 = vector.extract_strided_slice %3 {offsets = [0, 0, 1, 0], sizes = [2, 16, 15, 8], strides = [1, 1, 1, 1]} : vector<2x16x16x8xbf16> to vector<2x16x15x8xbf16>
    %8 = vector.extract_strided_slice %3 {offsets = [0, 0, 0, 0], sizes = [2, 16, 1, 8], strides = [1, 1, 1, 1]} : vector<2x16x16x8xbf16> to vector<2x16x1x8xbf16>
    %9 = tpu.concatenate %7, %8 in 2 : vector<2x16x15x8xbf16>, vector<2x16x1x8xbf16> -> vector<2x16x16x8xbf16>
    %10 = tpu.concatenate %6, %3, %9 in 3 : vector<2x16x16x8xbf16>, vector<2x16x16x8xbf16>, vector<2x16x16x8xbf16> -> vector<2x16x16x24xbf16>
    %11 = vector.extract_strided_slice %10 {offsets = [0, 15, 0, 0], sizes = [2, 1, 16, 24], strides = [1, 1, 1, 1]} : vector<2x16x16x24xbf16> to vector<2x1x16x24xbf16>
    %12 = vector.extract_strided_slice %10 {offsets = [0, 0, 0, 0], sizes = [2, 15, 16, 24], strides = [1, 1, 1, 1]} : vector<2x16x16x24xbf16> to vector<2x15x16x24xbf16>
    %13 = tpu.concatenate %11, %12 in 1 : vector<2x1x16x24xbf16>, vector<2x15x16x24xbf16> -> vector<2x16x16x24xbf16>
    %14 = vector.shape_cast %13 : vector<2x16x16x24xbf16> to vector<512x24xbf16>
    %c0_3 = arith.constant 0 : index
    %c0_4 = arith.constant 0 : index
    %15 = vector.load %arg2[%c0_3, %c0_4] : memref<1512x32xbf16, #tpu.memory_space<vmem>>, vector<24x32xbf16>
    %cst = arith.constant dense<0.000000e+00> : vector<512x32xf32>
    %16 = tpu.matmul %14, %15, %cst {dimension_numbers = #tpu.dot_dimension_numbers<[1], [0], [0], [1], [0, 0, 1, 1], [], []>} : vector<512x24xbf16>, vector<24x32xbf16>, vector<512x32xf32> -> vector<512x32xf32>
    %17 = vector.shape_cast %10 : vector<2x16x16x24xbf16> to vector<512x24xbf16>
    %c24 = arith.constant 24 : index
    %c0_5 = arith.constant 0 : index
    %18 = vector.load %arg2[%c24, %c0_5] : memref<1512x32xbf16, #tpu.memory_space<vmem>>, vector<24x32xbf16>
    %cst_6 = arith.constant dense<0.000000e+00> : vector<512x32xf32>
    %19 = tpu.matmul %17, %18, %cst_6 {dimension_numbers = #tpu.dot_dimension_numbers<[1], [0], [0], [1], [0, 0, 1, 1], [], []>} : vector<512x24xbf16>, vector<24x32xbf16>, vector<512x32xf32> -> vector<512x32xf32>
    %20 = arith.addf %16, %19 : vector<512x32xf32>
    %21 = vector.extract_strided_slice %10 {offsets = [0, 1, 0, 0], sizes = [2, 15, 16, 24], strides = [1, 1, 1, 1]} : vector<2x16x16x24xbf16> to vector<2x15x16x24xbf16>
    %22 = vector.extract_strided_slice %10 {offsets = [0, 0, 0, 0], sizes = [2, 1, 16, 24], strides = [1, 1, 1, 1]} : vector<2x16x16x24xbf16> to vector<2x1x16x24xbf16>
    %23 = tpu.concatenate %21, %22 in 1 : vector<2x15x16x24xbf16>, vector<2x1x16x24xbf16> -> vector<2x16x16x24xbf16>
    %24 = vector.shape_cast %23 : vector<2x16x16x24xbf16> to vector<512x24xbf16>
    %c48 = arith.constant 48 : index
    %c0_7 = arith.constant 0 : index
    %25 = vector.load %arg2[%c48, %c0_7] : memref<1512x32xbf16, #tpu.memory_space<vmem>>, vector<24x32xbf16>
    %cst_8 = arith.constant dense<0.000000e+00> : vector<512x32xf32>
    %26 = tpu.matmul %24, %25, %cst_8 {dimension_numbers = #tpu.dot_dimension_numbers<[1], [0], [0], [1], [0, 0, 1, 1], [], []>} : vector<512x24xbf16>, vector<24x32xbf16>, vector<512x32xf32> -> vector<512x32xf32>
    %27 = arith.addf %20, %26 : vector<512x32xf32>
    %c0_9 = arith.constant 0 : index
    %c0_10 = arith.constant 0 : index
    %28 = vector.load %arg3[%c0_9, %c0_10] : memref<6x32xf32, #tpu.memory_space<vmem>>, vector<1x32xf32>
    %29 = vector.broadcast %28 : vector<1x32xf32> to vector<512x32xf32>
    %30 = arith.addf %27, %29 : vector<512x32xf32>
    %cst_11 = arith.constant 0.000000e+00 : f32
    %31 = vector.broadcast %cst_11 : f32 to vector<512x32xf32>
    %32 = arith.maximumf %30, %31 : vector<512x32xf32>
    %33 = vector.shape_cast %32 : vector<512x32xf32> to vector<2x16x16x32xf32>
    %34 = arith.truncf %33 : vector<2x16x16x32xf32> to vector<2x16x16x32xbf16>
    %35 = vector.extract_strided_slice %34 {offsets = [0, 0, 15, 0], sizes = [2, 16, 1, 32], strides = [1, 1, 1, 1]} : vector<2x16x16x32xbf16> to vector<2x16x1x32xbf16>
    %36 = vector.extract_strided_slice %34 {offsets = [0, 0, 0, 0], sizes = [2, 16, 15, 32], strides = [1, 1, 1, 1]} : vector<2x16x16x32xbf16> to vector<2x16x15x32xbf16>
    %37 = tpu.concatenate %35, %36 in 2 : vector<2x16x1x32xbf16>, vector<2x16x15x32xbf16> -> vector<2x16x16x32xbf16>
    %38 = vector.extract_strided_slice %34 {offsets = [0, 0, 1, 0], sizes = [2, 16, 15, 32], strides = [1, 1, 1, 1]} : vector<2x16x16x32xbf16> to vector<2x16x15x32xbf16>
    %39 = vector.extract_strided_slice %34 {offsets = [0, 0, 0, 0], sizes = [2, 16, 1, 32], strides = [1, 1, 1, 1]} : vector<2x16x16x32xbf16> to vector<2x16x1x32xbf16>
    %40 = tpu.concatenate %38, %39 in 2 : vector<2x16x15x32xbf16>, vector<2x16x1x32xbf16> -> vector<2x16x16x32xbf16>
    %41 = tpu.concatenate %37, %34, %40 in 3 : vector<2x16x16x32xbf16>, vector<2x16x16x32xbf16>, vector<2x16x16x32xbf16> -> vector<2x16x16x96xbf16>
    %42 = vector.extract_strided_slice %41 {offsets = [0, 15, 0, 0], sizes = [2, 1, 16, 96], strides = [1, 1, 1, 1]} : vector<2x16x16x96xbf16> to vector<2x1x16x96xbf16>
    %43 = vector.extract_strided_slice %41 {offsets = [0, 0, 0, 0], sizes = [2, 15, 16, 96], strides = [1, 1, 1, 1]} : vector<2x16x16x96xbf16> to vector<2x15x16x96xbf16>
    %44 = tpu.concatenate %42, %43 in 1 : vector<2x1x16x96xbf16>, vector<2x15x16x96xbf16> -> vector<2x16x16x96xbf16>
    %45 = vector.shape_cast %44 : vector<2x16x16x96xbf16> to vector<512x96xbf16>
    %c72 = arith.constant 72 : index
    %c0_12 = arith.constant 0 : index
    %46 = vector.load %arg2[%c72, %c0_12] : memref<1512x32xbf16, #tpu.memory_space<vmem>>, vector<96x32xbf16>
    %cst_13 = arith.constant dense<0.000000e+00> : vector<512x32xf32>
    %47 = tpu.matmul %45, %46, %cst_13 {dimension_numbers = #tpu.dot_dimension_numbers<[1], [0], [0], [1], [0, 0, 1, 1], [], []>} : vector<512x96xbf16>, vector<96x32xbf16>, vector<512x32xf32> -> vector<512x32xf32>
    %48 = vector.shape_cast %41 : vector<2x16x16x96xbf16> to vector<512x96xbf16>
    %c168 = arith.constant 168 : index
    %c0_14 = arith.constant 0 : index
    %49 = vector.load %arg2[%c168, %c0_14] : memref<1512x32xbf16, #tpu.memory_space<vmem>>, vector<96x32xbf16>
    %cst_15 = arith.constant dense<0.000000e+00> : vector<512x32xf32>
    %50 = tpu.matmul %48, %49, %cst_15 {dimension_numbers = #tpu.dot_dimension_numbers<[1], [0], [0], [1], [0, 0, 1, 1], [], []>} : vector<512x96xbf16>, vector<96x32xbf16>, vector<512x32xf32> -> vector<512x32xf32>
    %51 = arith.addf %47, %50 : vector<512x32xf32>
    %52 = vector.extract_strided_slice %41 {offsets = [0, 1, 0, 0], sizes = [2, 15, 16, 96], strides = [1, 1, 1, 1]} : vector<2x16x16x96xbf16> to vector<2x15x16x96xbf16>
    %53 = vector.extract_strided_slice %41 {offsets = [0, 0, 0, 0], sizes = [2, 1, 16, 96], strides = [1, 1, 1, 1]} : vector<2x16x16x96xbf16> to vector<2x1x16x96xbf16>
    %54 = tpu.concatenate %52, %53 in 1 : vector<2x15x16x96xbf16>, vector<2x1x16x96xbf16> -> vector<2x16x16x96xbf16>
    %55 = vector.shape_cast %54 : vector<2x16x16x96xbf16> to vector<512x96xbf16>
    %c264 = arith.constant 264 : index
    %c0_16 = arith.constant 0 : index
    %56 = vector.load %arg2[%c264, %c0_16] : memref<1512x32xbf16, #tpu.memory_space<vmem>>, vector<96x32xbf16>
    %cst_17 = arith.constant dense<0.000000e+00> : vector<512x32xf32>
    %57 = tpu.matmul %55, %56, %cst_17 {dimension_numbers = #tpu.dot_dimension_numbers<[1], [0], [0], [1], [0, 0, 1, 1], [], []>} : vector<512x96xbf16>, vector<96x32xbf16>, vector<512x32xf32> -> vector<512x32xf32>
    %58 = arith.addf %51, %57 : vector<512x32xf32>
    %c1 = arith.constant 1 : index
    %c0_18 = arith.constant 0 : index
    %59 = vector.load %arg3[%c1, %c0_18] : memref<6x32xf32, #tpu.memory_space<vmem>>, vector<1x32xf32>
    %60 = vector.broadcast %59 : vector<1x32xf32> to vector<512x32xf32>
    %61 = arith.addf %58, %60 : vector<512x32xf32>
    %cst_19 = arith.constant 0.000000e+00 : f32
    %62 = vector.broadcast %cst_19 : f32 to vector<512x32xf32>
    %63 = arith.maximumf %61, %62 : vector<512x32xf32>
    %64 = vector.shape_cast %63 : vector<512x32xf32> to vector<2x16x16x32xf32>
    %65 = arith.truncf %64 : vector<2x16x16x32xf32> to vector<2x16x16x32xbf16>
    %66 = vector.extract_strided_slice %65 {offsets = [0, 0, 15, 0], sizes = [2, 16, 1, 32], strides = [1, 1, 1, 1]} : vector<2x16x16x32xbf16> to vector<2x16x1x32xbf16>
    %67 = vector.extract_strided_slice %65 {offsets = [0, 0, 0, 0], sizes = [2, 16, 15, 32], strides = [1, 1, 1, 1]} : vector<2x16x16x32xbf16> to vector<2x16x15x32xbf16>
    %68 = tpu.concatenate %66, %67 in 2 : vector<2x16x1x32xbf16>, vector<2x16x15x32xbf16> -> vector<2x16x16x32xbf16>
    %69 = vector.extract_strided_slice %65 {offsets = [0, 0, 1, 0], sizes = [2, 16, 15, 32], strides = [1, 1, 1, 1]} : vector<2x16x16x32xbf16> to vector<2x16x15x32xbf16>
    %70 = vector.extract_strided_slice %65 {offsets = [0, 0, 0, 0], sizes = [2, 16, 1, 32], strides = [1, 1, 1, 1]} : vector<2x16x16x32xbf16> to vector<2x16x1x32xbf16>
    %71 = tpu.concatenate %69, %70 in 2 : vector<2x16x15x32xbf16>, vector<2x16x1x32xbf16> -> vector<2x16x16x32xbf16>
    %72 = tpu.concatenate %68, %65, %71 in 3 : vector<2x16x16x32xbf16>, vector<2x16x16x32xbf16>, vector<2x16x16x32xbf16> -> vector<2x16x16x96xbf16>
    %73 = vector.extract_strided_slice %72 {offsets = [0, 15, 0, 0], sizes = [2, 1, 16, 96], strides = [1, 1, 1, 1]} : vector<2x16x16x96xbf16> to vector<2x1x16x96xbf16>
    %74 = vector.extract_strided_slice %72 {offsets = [0, 0, 0, 0], sizes = [2, 15, 16, 96], strides = [1, 1, 1, 1]} : vector<2x16x16x96xbf16> to vector<2x15x16x96xbf16>
    %75 = tpu.concatenate %73, %74 in 1 : vector<2x1x16x96xbf16>, vector<2x15x16x96xbf16> -> vector<2x16x16x96xbf16>
    %76 = vector.shape_cast %75 : vector<2x16x16x96xbf16> to vector<512x96xbf16>
    %c360 = arith.constant 360 : index
    %c0_20 = arith.constant 0 : index
    %77 = vector.load %arg2[%c360, %c0_20] : memref<1512x32xbf16, #tpu.memory_space<vmem>>, vector<96x32xbf16>
    %cst_21 = arith.constant dense<0.000000e+00> : vector<512x32xf32>
    %78 = tpu.matmul %76, %77, %cst_21 {dimension_numbers = #tpu.dot_dimension_numbers<[1], [0], [0], [1], [0, 0, 1, 1], [], []>} : vector<512x96xbf16>, vector<96x32xbf16>, vector<512x32xf32> -> vector<512x32xf32>
    %79 = vector.shape_cast %72 : vector<2x16x16x96xbf16> to vector<512x96xbf16>
    %c456 = arith.constant 456 : index
    %c0_22 = arith.constant 0 : index
    %80 = vector.load %arg2[%c456, %c0_22] : memref<1512x32xbf16, #tpu.memory_space<vmem>>, vector<96x32xbf16>
    %cst_23 = arith.constant dense<0.000000e+00> : vector<512x32xf32>
    %81 = tpu.matmul %79, %80, %cst_23 {dimension_numbers = #tpu.dot_dimension_numbers<[1], [0], [0], [1], [0, 0, 1, 1], [], []>} : vector<512x96xbf16>, vector<96x32xbf16>, vector<512x32xf32> -> vector<512x32xf32>
    %82 = arith.addf %78, %81 : vector<512x32xf32>
    %83 = vector.extract_strided_slice %72 {offsets = [0, 1, 0, 0], sizes = [2, 15, 16, 96], strides = [1, 1, 1, 1]} : vector<2x16x16x96xbf16> to vector<2x15x16x96xbf16>
    %84 = vector.extract_strided_slice %72 {offsets = [0, 0, 0, 0], sizes = [2, 1, 16, 96], strides = [1, 1, 1, 1]} : vector<2x16x16x96xbf16> to vector<2x1x16x96xbf16>
    %85 = tpu.concatenate %83, %84 in 1 : vector<2x15x16x96xbf16>, vector<2x1x16x96xbf16> -> vector<2x16x16x96xbf16>
    %86 = vector.shape_cast %85 : vector<2x16x16x96xbf16> to vector<512x96xbf16>
    %c552 = arith.constant 552 : index
    %c0_24 = arith.constant 0 : index
    %87 = vector.load %arg2[%c552, %c0_24] : memref<1512x32xbf16, #tpu.memory_space<vmem>>, vector<96x32xbf16>
    %cst_25 = arith.constant dense<0.000000e+00> : vector<512x32xf32>
    %88 = tpu.matmul %86, %87, %cst_25 {dimension_numbers = #tpu.dot_dimension_numbers<[1], [0], [0], [1], [0, 0, 1, 1], [], []>} : vector<512x96xbf16>, vector<96x32xbf16>, vector<512x32xf32> -> vector<512x32xf32>
    %89 = arith.addf %82, %88 : vector<512x32xf32>
    %c2 = arith.constant 2 : index
    %c0_26 = arith.constant 0 : index
    %90 = vector.load %arg3[%c2, %c0_26] : memref<6x32xf32, #tpu.memory_space<vmem>>, vector<1x32xf32>
    %91 = vector.broadcast %90 : vector<1x32xf32> to vector<512x32xf32>
    %92 = arith.addf %89, %91 : vector<512x32xf32>
    %93 = arith.addf %92, %32 : vector<512x32xf32>
    %cst_27 = arith.constant 0.000000e+00 : f32
    %94 = vector.broadcast %cst_27 : f32 to vector<512x32xf32>
    %95 = arith.maximumf %93, %94 : vector<512x32xf32>
    %96 = vector.shape_cast %95 : vector<512x32xf32> to vector<2x16x16x32xf32>
    %97 = arith.truncf %96 : vector<2x16x16x32xf32> to vector<2x16x16x32xbf16>
    %98 = vector.extract_strided_slice %97 {offsets = [0, 0, 15, 0], sizes = [2, 16, 1, 32], strides = [1, 1, 1, 1]} : vector<2x16x16x32xbf16> to vector<2x16x1x32xbf16>
    %99 = vector.extract_strided_slice %97 {offsets = [0, 0, 0, 0], sizes = [2, 16, 15, 32], strides = [1, 1, 1, 1]} : vector<2x16x16x32xbf16> to vector<2x16x15x32xbf16>
    %100 = tpu.concatenate %98, %99 in 2 : vector<2x16x1x32xbf16>, vector<2x16x15x32xbf16> -> vector<2x16x16x32xbf16>
    %101 = vector.extract_strided_slice %97 {offsets = [0, 0, 1, 0], sizes = [2, 16, 15, 32], strides = [1, 1, 1, 1]} : vector<2x16x16x32xbf16> to vector<2x16x15x32xbf16>
    %102 = vector.extract_strided_slice %97 {offsets = [0, 0, 0, 0], sizes = [2, 16, 1, 32], strides = [1, 1, 1, 1]} : vector<2x16x16x32xbf16> to vector<2x16x1x32xbf16>
    %103 = tpu.concatenate %101, %102 in 2 : vector<2x16x15x32xbf16>, vector<2x16x1x32xbf16> -> vector<2x16x16x32xbf16>
    %104 = tpu.concatenate %100, %97, %103 in 3 : vector<2x16x16x32xbf16>, vector<2x16x16x32xbf16>, vector<2x16x16x32xbf16> -> vector<2x16x16x96xbf16>
    %105 = vector.extract_strided_slice %104 {offsets = [0, 15, 0, 0], sizes = [2, 1, 16, 96], strides = [1, 1, 1, 1]} : vector<2x16x16x96xbf16> to vector<2x1x16x96xbf16>
    %106 = vector.extract_strided_slice %104 {offsets = [0, 0, 0, 0], sizes = [2, 15, 16, 96], strides = [1, 1, 1, 1]} : vector<2x16x16x96xbf16> to vector<2x15x16x96xbf16>
    %107 = tpu.concatenate %105, %106 in 1 : vector<2x1x16x96xbf16>, vector<2x15x16x96xbf16> -> vector<2x16x16x96xbf16>
    %108 = vector.shape_cast %107 : vector<2x16x16x96xbf16> to vector<512x96xbf16>
    %c648 = arith.constant 648 : index
    %c0_28 = arith.constant 0 : index
    %109 = vector.load %arg2[%c648, %c0_28] : memref<1512x32xbf16, #tpu.memory_space<vmem>>, vector<96x32xbf16>
    %cst_29 = arith.constant dense<0.000000e+00> : vector<512x32xf32>
    %110 = tpu.matmul %108, %109, %cst_29 {dimension_numbers = #tpu.dot_dimension_numbers<[1], [0], [0], [1], [0, 0, 1, 1], [], []>} : vector<512x96xbf16>, vector<96x32xbf16>, vector<512x32xf32> -> vector<512x32xf32>
    %111 = vector.shape_cast %104 : vector<2x16x16x96xbf16> to vector<512x96xbf16>
    %c744 = arith.constant 744 : index
    %c0_30 = arith.constant 0 : index
    %112 = vector.load %arg2[%c744, %c0_30] : memref<1512x32xbf16, #tpu.memory_space<vmem>>, vector<96x32xbf16>
    %cst_31 = arith.constant dense<0.000000e+00> : vector<512x32xf32>
    %113 = tpu.matmul %111, %112, %cst_31 {dimension_numbers = #tpu.dot_dimension_numbers<[1], [0], [0], [1], [0, 0, 1, 1], [], []>} : vector<512x96xbf16>, vector<96x32xbf16>, vector<512x32xf32> -> vector<512x32xf32>
    %114 = arith.addf %110, %113 : vector<512x32xf32>
    %115 = vector.extract_strided_slice %104 {offsets = [0, 1, 0, 0], sizes = [2, 15, 16, 96], strides = [1, 1, 1, 1]} : vector<2x16x16x96xbf16> to vector<2x15x16x96xbf16>
    %116 = vector.extract_strided_slice %104 {offsets = [0, 0, 0, 0], sizes = [2, 1, 16, 96], strides = [1, 1, 1, 1]} : vector<2x16x16x96xbf16> to vector<2x1x16x96xbf16>
    %117 = tpu.concatenate %115, %116 in 1 : vector<2x15x16x96xbf16>, vector<2x1x16x96xbf16> -> vector<2x16x16x96xbf16>
    %118 = vector.shape_cast %117 : vector<2x16x16x96xbf16> to vector<512x96xbf16>
    %c840 = arith.constant 840 : index
    %c0_32 = arith.constant 0 : index
    %119 = vector.load %arg2[%c840, %c0_32] : memref<1512x32xbf16, #tpu.memory_space<vmem>>, vector<96x32xbf16>
    %cst_33 = arith.constant dense<0.000000e+00> : vector<512x32xf32>
    %120 = tpu.matmul %118, %119, %cst_33 {dimension_numbers = #tpu.dot_dimension_numbers<[1], [0], [0], [1], [0, 0, 1, 1], [], []>} : vector<512x96xbf16>, vector<96x32xbf16>, vector<512x32xf32> -> vector<512x32xf32>
    %121 = arith.addf %114, %120 : vector<512x32xf32>
    %c3 = arith.constant 3 : index
    %c0_34 = arith.constant 0 : index
    %122 = vector.load %arg3[%c3, %c0_34] : memref<6x32xf32, #tpu.memory_space<vmem>>, vector<1x32xf32>
    %123 = vector.broadcast %122 : vector<1x32xf32> to vector<512x32xf32>
    %124 = arith.addf %121, %123 : vector<512x32xf32>
    %cst_35 = arith.constant 0.000000e+00 : f32
    %125 = vector.broadcast %cst_35 : f32 to vector<512x32xf32>
    %126 = arith.maximumf %124, %125 : vector<512x32xf32>
    %127 = vector.shape_cast %126 : vector<512x32xf32> to vector<2x16x16x32xf32>
    %128 = arith.truncf %127 : vector<2x16x16x32xf32> to vector<2x16x16x32xbf16>
    %129 = vector.extract_strided_slice %128 {offsets = [0, 0, 15, 0], sizes = [2, 16, 1, 32], strides = [1, 1, 1, 1]} : vector<2x16x16x32xbf16> to vector<2x16x1x32xbf16>
    %130 = vector.extract_strided_slice %128 {offsets = [0, 0, 0, 0], sizes = [2, 16, 15, 32], strides = [1, 1, 1, 1]} : vector<2x16x16x32xbf16> to vector<2x16x15x32xbf16>
    %131 = tpu.concatenate %129, %130 in 2 : vector<2x16x1x32xbf16>, vector<2x16x15x32xbf16> -> vector<2x16x16x32xbf16>
    %132 = vector.extract_strided_slice %128 {offsets = [0, 0, 1, 0], sizes = [2, 16, 15, 32], strides = [1, 1, 1, 1]} : vector<2x16x16x32xbf16> to vector<2x16x15x32xbf16>
    %133 = vector.extract_strided_slice %128 {offsets = [0, 0, 0, 0], sizes = [2, 16, 1, 32], strides = [1, 1, 1, 1]} : vector<2x16x16x32xbf16> to vector<2x16x1x32xbf16>
    %134 = tpu.concatenate %132, %133 in 2 : vector<2x16x15x32xbf16>, vector<2x16x1x32xbf16> -> vector<2x16x16x32xbf16>
    %135 = tpu.concatenate %131, %128, %134 in 3 : vector<2x16x16x32xbf16>, vector<2x16x16x32xbf16>, vector<2x16x16x32xbf16> -> vector<2x16x16x96xbf16>
    %136 = vector.extract_strided_slice %135 {offsets = [0, 15, 0, 0], sizes = [2, 1, 16, 96], strides = [1, 1, 1, 1]} : vector<2x16x16x96xbf16> to vector<2x1x16x96xbf16>
    %137 = vector.extract_strided_slice %135 {offsets = [0, 0, 0, 0], sizes = [2, 15, 16, 96], strides = [1, 1, 1, 1]} : vector<2x16x16x96xbf16> to vector<2x15x16x96xbf16>
    %138 = tpu.concatenate %136, %137 in 1 : vector<2x1x16x96xbf16>, vector<2x15x16x96xbf16> -> vector<2x16x16x96xbf16>
    %139 = vector.shape_cast %138 : vector<2x16x16x96xbf16> to vector<512x96xbf16>
    %c936 = arith.constant 936 : index
    %c0_36 = arith.constant 0 : index
    %140 = vector.load %arg2[%c936, %c0_36] : memref<1512x32xbf16, #tpu.memory_space<vmem>>, vector<96x32xbf16>
    %cst_37 = arith.constant dense<0.000000e+00> : vector<512x32xf32>
    %141 = tpu.matmul %139, %140, %cst_37 {dimension_numbers = #tpu.dot_dimension_numbers<[1], [0], [0], [1], [0, 0, 1, 1], [], []>} : vector<512x96xbf16>, vector<96x32xbf16>, vector<512x32xf32> -> vector<512x32xf32>
    %142 = vector.shape_cast %135 : vector<2x16x16x96xbf16> to vector<512x96xbf16>
    %c1032 = arith.constant 1032 : index
    %c0_38 = arith.constant 0 : index
    %143 = vector.load %arg2[%c1032, %c0_38] : memref<1512x32xbf16, #tpu.memory_space<vmem>>, vector<96x32xbf16>
    %cst_39 = arith.constant dense<0.000000e+00> : vector<512x32xf32>
    %144 = tpu.matmul %142, %143, %cst_39 {dimension_numbers = #tpu.dot_dimension_numbers<[1], [0], [0], [1], [0, 0, 1, 1], [], []>} : vector<512x96xbf16>, vector<96x32xbf16>, vector<512x32xf32> -> vector<512x32xf32>
    %145 = arith.addf %141, %144 : vector<512x32xf32>
    %146 = vector.extract_strided_slice %135 {offsets = [0, 1, 0, 0], sizes = [2, 15, 16, 96], strides = [1, 1, 1, 1]} : vector<2x16x16x96xbf16> to vector<2x15x16x96xbf16>
    %147 = vector.extract_strided_slice %135 {offsets = [0, 0, 0, 0], sizes = [2, 1, 16, 96], strides = [1, 1, 1, 1]} : vector<2x16x16x96xbf16> to vector<2x1x16x96xbf16>
    %148 = tpu.concatenate %146, %147 in 1 : vector<2x15x16x96xbf16>, vector<2x1x16x96xbf16> -> vector<2x16x16x96xbf16>
    %149 = vector.shape_cast %148 : vector<2x16x16x96xbf16> to vector<512x96xbf16>
    %c1128 = arith.constant 1128 : index
    %c0_40 = arith.constant 0 : index
    %150 = vector.load %arg2[%c1128, %c0_40] : memref<1512x32xbf16, #tpu.memory_space<vmem>>, vector<96x32xbf16>
    %cst_41 = arith.constant dense<0.000000e+00> : vector<512x32xf32>
    %151 = tpu.matmul %149, %150, %cst_41 {dimension_numbers = #tpu.dot_dimension_numbers<[1], [0], [0], [1], [0, 0, 1, 1], [], []>} : vector<512x96xbf16>, vector<96x32xbf16>, vector<512x32xf32> -> vector<512x32xf32>
    %152 = arith.addf %145, %151 : vector<512x32xf32>
    %c4 = arith.constant 4 : index
    %c0_42 = arith.constant 0 : index
    %153 = vector.load %arg3[%c4, %c0_42] : memref<6x32xf32, #tpu.memory_space<vmem>>, vector<1x32xf32>
    %154 = vector.broadcast %153 : vector<1x32xf32> to vector<512x32xf32>
    %155 = arith.addf %152, %154 : vector<512x32xf32>
    %156 = arith.addf %155, %95 : vector<512x32xf32>
    %cst_43 = arith.constant 0.000000e+00 : f32
    %157 = vector.broadcast %cst_43 : f32 to vector<512x32xf32>
    %158 = arith.maximumf %156, %157 : vector<512x32xf32>
    %159 = vector.shape_cast %158 : vector<512x32xf32> to vector<2x16x16x32xf32>
    %160 = arith.truncf %159 : vector<2x16x16x32xf32> to vector<2x16x16x32xbf16>
    %161 = vector.extract_strided_slice %160 {offsets = [0, 0, 15, 0], sizes = [2, 16, 1, 32], strides = [1, 1, 1, 1]} : vector<2x16x16x32xbf16> to vector<2x16x1x32xbf16>
    %162 = vector.extract_strided_slice %160 {offsets = [0, 0, 0, 0], sizes = [2, 16, 15, 32], strides = [1, 1, 1, 1]} : vector<2x16x16x32xbf16> to vector<2x16x15x32xbf16>
    %163 = tpu.concatenate %161, %162 in 2 : vector<2x16x1x32xbf16>, vector<2x16x15x32xbf16> -> vector<2x16x16x32xbf16>
    %164 = vector.extract_strided_slice %160 {offsets = [0, 0, 1, 0], sizes = [2, 16, 15, 32], strides = [1, 1, 1, 1]} : vector<2x16x16x32xbf16> to vector<2x16x15x32xbf16>
    %165 = vector.extract_strided_slice %160 {offsets = [0, 0, 0, 0], sizes = [2, 16, 1, 32], strides = [1, 1, 1, 1]} : vector<2x16x16x32xbf16> to vector<2x16x1x32xbf16>
    %166 = tpu.concatenate %164, %165 in 2 : vector<2x16x15x32xbf16>, vector<2x16x1x32xbf16> -> vector<2x16x16x32xbf16>
    %167 = tpu.concatenate %163, %160, %166 in 3 : vector<2x16x16x32xbf16>, vector<2x16x16x32xbf16>, vector<2x16x16x32xbf16> -> vector<2x16x16x96xbf16>
    %168 = vector.extract_strided_slice %167 {offsets = [0, 15, 0, 0], sizes = [2, 1, 16, 96], strides = [1, 1, 1, 1]} : vector<2x16x16x96xbf16> to vector<2x1x16x96xbf16>
    %169 = vector.extract_strided_slice %167 {offsets = [0, 0, 0, 0], sizes = [2, 15, 16, 96], strides = [1, 1, 1, 1]} : vector<2x16x16x96xbf16> to vector<2x15x16x96xbf16>
    %170 = tpu.concatenate %168, %169 in 1 : vector<2x1x16x96xbf16>, vector<2x15x16x96xbf16> -> vector<2x16x16x96xbf16>
    %171 = vector.shape_cast %170 : vector<2x16x16x96xbf16> to vector<512x96xbf16>
    %c1224 = arith.constant 1224 : index
    %c0_44 = arith.constant 0 : index
    %172 = vector.load %arg2[%c1224, %c0_44] : memref<1512x32xbf16, #tpu.memory_space<vmem>>, vector<96x32xbf16>
    %cst_45 = arith.constant dense<0.000000e+00> : vector<512x32xf32>
    %173 = tpu.matmul %171, %172, %cst_45 {dimension_numbers = #tpu.dot_dimension_numbers<[1], [0], [0], [1], [0, 0, 1, 1], [], []>} : vector<512x96xbf16>, vector<96x32xbf16>, vector<512x32xf32> -> vector<512x32xf32>
    %174 = vector.shape_cast %167 : vector<2x16x16x96xbf16> to vector<512x96xbf16>
    %c1320 = arith.constant 1320 : index
    %c0_46 = arith.constant 0 : index
    %175 = vector.load %arg2[%c1320, %c0_46] : memref<1512x32xbf16, #tpu.memory_space<vmem>>, vector<96x32xbf16>
    %cst_47 = arith.constant dense<0.000000e+00> : vector<512x32xf32>
    %176 = tpu.matmul %174, %175, %cst_47 {dimension_numbers = #tpu.dot_dimension_numbers<[1], [0], [0], [1], [0, 0, 1, 1], [], []>} : vector<512x96xbf16>, vector<96x32xbf16>, vector<512x32xf32> -> vector<512x32xf32>
    %177 = arith.addf %173, %176 : vector<512x32xf32>
    %178 = vector.extract_strided_slice %167 {offsets = [0, 1, 0, 0], sizes = [2, 15, 16, 96], strides = [1, 1, 1, 1]} : vector<2x16x16x96xbf16> to vector<2x15x16x96xbf16>
    %179 = vector.extract_strided_slice %167 {offsets = [0, 0, 0, 0], sizes = [2, 1, 16, 96], strides = [1, 1, 1, 1]} : vector<2x16x16x96xbf16> to vector<2x1x16x96xbf16>
    %180 = tpu.concatenate %178, %179 in 1 : vector<2x15x16x96xbf16>, vector<2x1x16x96xbf16> -> vector<2x16x16x96xbf16>
    %181 = vector.shape_cast %180 : vector<2x16x16x96xbf16> to vector<512x96xbf16>
    %c1416 = arith.constant 1416 : index
    %c0_48 = arith.constant 0 : index
    %182 = vector.load %arg2[%c1416, %c0_48] : memref<1512x32xbf16, #tpu.memory_space<vmem>>, vector<96x32xbf16>
    %cst_49 = arith.constant dense<0.000000e+00> : vector<512x32xf32>
    %183 = tpu.matmul %181, %182, %cst_49 {dimension_numbers = #tpu.dot_dimension_numbers<[1], [0], [0], [1], [0, 0, 1, 1], [], []>} : vector<512x96xbf16>, vector<96x32xbf16>, vector<512x32xf32> -> vector<512x32xf32>
    %184 = arith.addf %177, %183 : vector<512x32xf32>
    %c5 = arith.constant 5 : index
    %c0_50 = arith.constant 0 : index
    %185 = vector.load %arg3[%c5, %c0_50] : memref<6x32xf32, #tpu.memory_space<vmem>>, vector<1x32xf32>
    %186 = vector.broadcast %185 : vector<1x32xf32> to vector<512x32xf32>
    %187 = arith.addf %184, %186 : vector<512x32xf32>
    %188 = vector.extract_strided_slice %187 {offsets = [0, 0], sizes = [512, 4], strides = [1, 1]} : vector<512x32xf32> to vector<512x4xf32>
    %189 = vector.shape_cast %188 : vector<512x4xf32> to vector<2x16x16x4xf32>
    %c0_51 = arith.constant 0 : index
    %c0_52 = arith.constant 0 : index
    %c0_53 = arith.constant 0 : index
    %c0_54 = arith.constant 0 : index
    %190 = vector.load %arg4[%c0_51, %c0_52, %c0_53, %c0_54] : memref<2x16x16x4xf32, #tpu.memory_space<vmem>>, vector<2x16x16x4xf32>
    tpu.vector_store %arg4[%c0_51, %c0_52, %c0_53, %c0_54], %189 {strides = array<i32>} : memref<2x16x16x4xf32, #tpu.memory_space<vmem>>, vector<2x16x16x4xf32>,
    return
  }
  func.func @transform_0(%arg0: i32) -> (i32, i32, i32, i32) {
    %c0_i32 = arith.constant 0 : i32
    %c0_i32_0 = arith.constant 0 : i32
    %c0_i32_1 = arith.constant 0 : i32
    %c0_i32_2 = arith.constant 0 : i32
    return %arg0, %c0_i32, %c0_i32_0, %c0_i32_1 : i32, i32, i32, i32
  }
  func.func @transform_1(%arg0: i32) -> (i32, i32) {
    %c0_i32 = arith.constant 0 : i32
    %c0_i32_0 = arith.constant 0 : i32
    %c0_i32_1 = arith.constant 0 : i32
    return %c0_i32, %c0_i32_0 : i32, i32
  }
  func.func @transform_2(%arg0: i32) -> (i32, i32) {
    %c0_i32 = arith.constant 0 : i32
    %c0_i32_0 = arith.constant 0 : i32
    %c0_i32_1 = arith.constant 0 : i32
    return %c0_i32, %c0_i32_0 : i32, i32
  }
  func.func @transform_3(%arg0: i32) -> (i32, i32, i32, i32) {
    %c0_i32 = arith.constant 0 : i32
    %c0_i32_0 = arith.constant 0 : i32
    %c0_i32_1 = arith.constant 0 : i32
    %c0_i32_2 = arith.constant 0 : i32
    return %arg0, %c0_i32, %c0_i32_0, %c0_i32_1 : i32, i32, i32, i32
  }
}

</mosaic_0001>

<llo_original>
// kernel: simple_resnet_forward.2
$region0: #{simple_resnet_forward.2}
  #allocation0 [shape = 'u32[]', space=smem, size = 0x4, offset = 0x4, fixed_abs, tag = 'smem constant byte address 0x4 - core index']
  #allocation1 [shape = 'u32[144,128]{1,0:T(1,128)}', space=vmem, size = 0x12000, scoped, tag = 'internal scratch']
  %s0 = inlined_call_operand.vmem [shape: bf16[1512,32], index: 0, kind: input, shape index: {}]
  %s1 = inlined_call_operand.vmem [shape: f32[6,32], index: 1, kind: input, shape index: {}]
  %s2 = inlined_call_operand.vmem [shape: f32[2,8,16,16], index: 2, kind: input, shape index: {}]
  %s3 = inlined_call_operand.vmem [shape: f32[2,16,16,4], index: 3, kind: output, shape index: {}]
  %s4 = sld [smem:[#allocation0]]
  $region22: #{simple_resnet_forward.2} parent=0
    _
  %s6 = ssub.s32 1, %s4
  %s7 = scalar_select 0, %s6, %s4
  $region1: #{simple_resnet_forward.2} parent=0
    #allocation2 [shape = 'u8[262144]{0}', space=vmem, size = 0x40000, dematerialized = true, scoped, tag = 'FusionAdapter Buffer %fusion.1 = f32[2,16,16,8]{3,2,1,0:T(8,128)} fusion(%param_2.1), kind=kLoop, calls=%fused_computation.1.clone, metadata={op_name="jit(simple_resnet_forward)/transpose" stack_frame_id=26}']
    // Predicated region
    $region2: #{simple_resnet_forward.2} parent=1 // pred_check
      _
    $region3: #{simple_resnet_forward.2} parent=1 // pred_check_branch
      %9 = sbr.rel (0) target = $region5
    $region4: #{simple_resnet_forward.2} parent=1 // pred_region
      _
    $region5: #{simple_resnet_forward.2} parent=1 // pred_fallthru
      _
    // Predicated region
    $region6: #{simple_resnet_forward.2} parent=1 // pred_check
      _
    $region7: #{simple_resnet_forward.2} parent=1 // pred_check_branch
      %11 = sbr.rel (0) target = $region9
    $region8: #{simple_resnet_forward.2} parent=1 // pred_region
      _
    $region9: #{simple_resnet_forward.2} parent=1 // pred_fallthru
      _
    // Predicated region
    $region10: #{simple_resnet_forward.2} parent=1 // pred_check
      _
    $region11: #{simple_resnet_forward.2} parent=1 // pred_check_branch
      %13 = sbr.rel (0) target = $region13
    $region12: #{simple_resnet_forward.2} parent=1 // pred_region
      _
    $region13: #{simple_resnet_forward.2} parent=1 // pred_fallthru
      _
    %v14 = vld [vmem:[%s2] sm:$0xff]
    %s16 = ssub.s32 256, 1
    %17 = vst [vmem:[#allocation2] sm:%s16] %v14
    %s18 = scalar_lea.vmem %s2, 8
    %v19 = vld [vmem:[%s18] sm:$0xff]
    %s20 = scalar_lea.vmem [#allocation2], 8
    %s22 = ssub.s32 256, 1
    %23 = vst [vmem:[%s20] sm:%s22] %v19
    %s24 = scalar_lea.vmem %s2, 16
    %v25 = vld [vmem:[%s24] sm:$0xff]
    %s26 = scalar_lea.vmem [#allocation2], 16
    %s28 = ssub.s32 256, 1
    %29 = vst [vmem:[%s26] sm:%s28] %v25
    %s30 = scalar_lea.vmem %s2, 24
    %v31 = vld [vmem:[%s30] sm:$0xff]
    %s32 = scalar_lea.vmem [#allocation2], 24
    %s34 = ssub.s32 256, 1
    %35 = vst [vmem:[%s32] sm:%s34] %v31
    %s36 = scalar_lea.vmem %s2, 32
    %v37 = vld [vmem:[%s36] sm:$0xff]
    %s38 = scalar_lea.vmem [#allocation2], 32
    %s40 = ssub.s32 256, 1
    %41 = vst [vmem:[%s38] sm:%s40] %v37
    %s42 = scalar_lea.vmem %s2, 40
    %v43 = vld [vmem:[%s42] sm:$0xff]
    %s44 = scalar_lea.vmem [#allocation2], 40
    %s46 = ssub.s32 256, 1
    %47 = vst [vmem:[%s44] sm:%s46] %v43
    %s48 = scalar_lea.vmem %s2, 48
    %v49 = vld [vmem:[%s48] sm:$0xff]
    %s50 = scalar_lea.vmem [#allocation2], 48
    %s52 = ssub.s32 256, 1
    %53 = vst [vmem:[%s50] sm:%s52] %v49
    %s54 = scalar_lea.vmem %s2, 56
    %v55 = vld [vmem:[%s54] sm:$0xff]
    %s56 = scalar_lea.vmem [#allocation2], 56
    %s58 = ssub.s32 256, 1
    %59 = vst [vmem:[%s56] sm:%s58] %v55
    %s60 = scalar_lea.vmem %s2, 64
    %v61 = vld [vmem:[%s60] sm:$0xff]
    %s62 = scalar_lea.vmem [#allocation2], 64
    %s64 = ssub.s32 256, 1
    %65 = vst [vmem:[%s62] sm:%s64] %v61
    %s66 = scalar_lea.vmem %s2, 72
    %v67 = vld [vmem:[%s66] sm:$0xff]
    %s68 = scalar_lea.vmem [#allocation2], 72
    %s70 = ssub.s32 256, 1
    %71 = vst [vmem:[%s68] sm:%s70] %v67
    %s72 = scalar_lea.vmem %s2, 80
    %v73 = vld [vmem:[%s72] sm:$0xff]
    %s74 = scalar_lea.vmem [#allocation2], 80
    %s76 = ssub.s32 256, 1
    %77 = vst [vmem:[%s74] sm:%s76] %v73
    %s78 = scalar_lea.vmem %s2, 88
    %v79 = vld [vmem:[%s78] sm:$0xff]
    %s80 = scalar_lea.vmem [#allocation2], 88
    %s82 = ssub.s32 256, 1
    %83 = vst [vmem:[%s80] sm:%s82] %v79
    %s84 = scalar_lea.vmem %s2, 96
    %v85 = vld [vmem:[%s84] sm:$0xff]
    %s86 = scalar_lea.vmem [#allocation2], 96
    %s88 = ssub.s32 256, 1
    %89 = vst [vmem:[%s86] sm:%s88] %v85
    %s90 = scalar_lea.vmem %s2, 104
    %v91 = vld [vmem:[%s90] sm:$0xff]
    %s92 = scalar_lea.vmem [#allocation2], 104
    %s94 = ssub.s32 256, 1
    %95 = vst [vmem:[%s92] sm:%s94] %v91
    %s96 = scalar_lea.vmem %s2, 112
    %v97 = vld [vmem:[%s96] sm:$0xff]
    %s98 = scalar_lea.vmem [#allocation2], 112
    %s100 = ssub.s32 256, 1
    %101 = vst [vmem:[%s98] sm:%s100] %v97
    %s102 = scalar_lea.vmem %s2, 120
    %v103 = vld [vmem:[%s102] sm:$0xff]
    %s104 = scalar_lea.vmem [#allocation2], 120
    %s106 = ssub.s32 256, 1
    %107 = vst [vmem:[%s104] sm:%s106] %v103
    %s108 = scalar_lea.vmem %s2, 128
    %v109 = vld [vmem:[%s108] sm:$0xff]
    %s110 = scalar_lea.vmem [#allocation2], 128
    %s112 = ssub.s32 256, 1
    %113 = vst [vmem:[%s110] sm:%s112] %v109
    %s114 = scalar_lea.vmem %s2, 136
    %v115 = vld [vmem:[%s114] sm:$0xff]
    %s116 = scalar_lea.vmem [#allocation2], 136
    %s118 = ssub.s32 256, 1
    %119 = vst [vmem:[%s116] sm:%s118] %v115
    %s120 = scalar_lea.vmem %s2, 144
    %v121 = vld [vmem:[%s120] sm:$0xff]
    %s122 = scalar_lea.vmem [#allocation2], 144
    %s124 = ssub.s32 256, 1
    %125 = vst [vmem:[%s122] sm:%s124] %v121
    %s126 = scalar_lea.vmem %s2, 152
    %v127 = vld [vmem:[%s126] sm:$0xff]
    %s128 = scalar_lea.vmem [#allocation2], 152
    %s130 = ssub.s32 256, 1
    %131 = vst [vmem:[%s128] sm:%s130] %v127
    %s132 = scalar_lea.vmem %s2, 160
    %v133 = vld [vmem:[%s132] sm:$0xff]
    %s134 = scalar_lea.vmem [#allocation2], 160
    %s136 = ssub.s32 256, 1
    %137 = vst [vmem:[%s134] sm:%s136] %v133
    %s138 = scalar_lea.vmem %s2, 168
    %v139 = vld [vmem:[%s138] sm:$0xff]
    %s140 = scalar_lea.vmem [#allocation2], 168
    %s142 = ssub.s32 256, 1
    %143 = vst [vmem:[%s140] sm:%s142] %v139
    %s144 = scalar_lea.vmem %s2, 176
    %v145 = vld [vmem:[%s144] sm:$0xff]
    %s146 = scalar_lea.vmem [#allocation2], 176
    %s148 = ssub.s32 256, 1
    %149 = vst [vmem:[%s146] sm:%s148] %v145
    %s150 = scalar_lea.vmem %s2, 184
    %v151 = vld [vmem:[%s150] sm:$0xff]
    %s152 = scalar_lea.vmem [#allocation2], 184
    %s154 = ssub.s32 256, 1
    %155 = vst [vmem:[%s152] sm:%s154] %v151
    %s156 = scalar_lea.vmem %s2, 192
    %v157 = vld [vmem:[%s156] sm:$0xff]
    %s158 = scalar_lea.vmem [#allocation2], 192
    %s160 = ssub.s32 256, 1
    %161 = vst [vmem:[%s158] sm:%s160] %v157
    %s162 = scalar_lea.vmem %s2, 200
    %v163 = vld [vmem:[%s162] sm:$0xff]
    %s164 = scalar_lea.vmem [#allocation2], 200
    %s166 = ssub.s32 256, 1
    %167 = vst [vmem:[%s164] sm:%s166] %v163
    %s168 = scalar_lea.vmem %s2, 208
    %v169 = vld [vmem:[%s168] sm:$0xff]
    %s170 = scalar_lea.vmem [#allocation2], 208
    %s172 = ssub.s32 256, 1
    %173 = vst [vmem:[%s170] sm:%s172] %v169
    %s174 = scalar_lea.vmem %s2, 216
    %v175 = vld [vmem:[%s174] sm:$0xff]
    %s176 = scalar_lea.vmem [#allocation2], 216
    %s178 = ssub.s32 256, 1
    %179 = vst [vmem:[%s176] sm:%s178] %v175
    %s180 = scalar_lea.vmem %s2, 224
    %v181 = vld [vmem:[%s180] sm:$0xff]
    %s182 = scalar_lea.vmem [#allocation2], 224
    %s184 = ssub.s32 256, 1
    %185 = vst [vmem:[%s182] sm:%s184] %v181
    %s186 = scalar_lea.vmem %s2, 232
    %v187 = vld [vmem:[%s186] sm:$0xff]
    %s188 = scalar_lea.vmem [#allocation2], 232
    %s190 = ssub.s32 256, 1
    %191 = vst [vmem:[%s188] sm:%s190] %v187
    %s192 = scalar_lea.vmem %s2, 240
    %v193 = vld [vmem:[%s192] sm:$0xff]
    %s194 = scalar_lea.vmem [#allocation2], 240
    %s196 = ssub.s32 256, 1
    %197 = vst [vmem:[%s194] sm:%s196] %v193
    %s198 = scalar_lea.vmem %s2, 248
    %v199 = vld [vmem:[%s198] sm:$0xff]
    %s200 = scalar_lea.vmem [#allocation2], 248
    %s202 = ssub.s32 256, 1
    %203 = vst [vmem:[%s200] sm:%s202] %v199
    %s204 = scalar_lea.vmem %s2, 256
    %v205 = vld [vmem:[%s204] sm:$0xff]
    %s206 = scalar_lea.vmem [#allocation2], 256
    %s208 = ssub.s32 256, 1
    %209 = vst [vmem:[%s206] sm:%s208] %v205
    %s210 = scalar_lea.vmem %s2, 264
    %v211 = vld [vmem:[%s210] sm:$0xff]
    %s212 = scalar_lea.vmem [#allocation2], 264
    %s214 = ssub.s32 256, 1
    %215 = vst [vmem:[%s212] sm:%s214] %v211
    %s216 = scalar_lea.vmem %s2, 272
    %v217 = vld [vmem:[%s216] sm:$0xff]
    %s218 = scalar_lea.vmem [#allocation2], 272
    %s220 = ssub.s32 256, 1
    %221 = vst [vmem:[%s218] sm:%s220] %v217
    %s222 = scalar_lea.vmem %s2, 280
    %v223 = vld [vmem:[%s222] sm:$0xff]
    %s224 = scalar_lea.vmem [#allocation2], 280
    %s226 = ssub.s32 256, 1
    %227 = vst [vmem:[%s224] sm:%s226] %v223
    %s228 = scalar_lea.vmem %s2, 288
    %v229 = vld [vmem:[%s228] sm:$0xff]
    %s230 = scalar_lea.vmem [#allocation2], 288
    %s232 = ssub.s32 256, 1
    %233 = vst [vmem:[%s230] sm:%s232] %v229
    %s234 = scalar_lea.vmem %s2, 296
    %v235 = vld [vmem:[%s234] sm:$0xff]
    %s236 = scalar_lea.vmem [#allocation2], 296
    %s238 = ssub.s32 256, 1
    %239 = vst [vmem:[%s236] sm:%s238] %v235
    %s240 = scalar_lea.vmem %s2, 304
    %v241 = vld [vmem:[%s240] sm:$0xff]
    %s242 = scalar_lea.vmem [#allocation2], 304
    %s244 = ssub.s32 256, 1
    %245 = vst [vmem:[%s242] sm:%s244] %v241
    %s246 = scalar_lea.vmem %s2, 312
    %v247 = vld [vmem:[%s246] sm:$0xff]
    %s248 = scalar_lea.vmem [#allocation2], 312
    %s250 = ssub.s32 256, 1
    %251 = vst [vmem:[%s248] sm:%s250] %v247
    %s252 = scalar_lea.vmem %s2, 320
    %v253 = vld [vmem:[%s252] sm:$0xff]
    %s254 = scalar_lea.vmem [#allocation2], 320
    %s256 = ssub.s32 256, 1
    %257 = vst [vmem:[%s254] sm:%s256] %v253
    %s258 = scalar_lea.vmem %s2, 328
    %v259 = vld [vmem:[%s258] sm:$0xff]
    %s260 = scalar_lea.vmem [#allocation2], 328
    %s262 = ssub.s32 256, 1
    %263 = vst [vmem:[%s260] sm:%s262] %v259
    %s264 = scalar_lea.vmem %s2, 336
    %v265 = vld [vmem:[%s264] sm:$0xff]
    %s266 = scalar_lea.vmem [#allocation2], 336
    %s268 = ssub.s32 256, 1
    %269 = vst [vmem:[%s266] sm:%s268] %v265
    %s270 = scalar_lea.vmem %s2, 344
    %v271 = vld [vmem:[%s270] sm:$0xff]
    %s272 = scalar_lea.vmem [#allocation2], 344
    %s274 = ssub.s32 256, 1
    %275 = vst [vmem:[%s272] sm:%s274] %v271
    %s276 = scalar_lea.vmem %s2, 352
    %v277 = vld [vmem:[%s276] sm:$0xff]
    %s278 = scalar_lea.vmem [#allocation2], 352
    %s280 = ssub.s32 256, 1
    %281 = vst [vmem:[%s278] sm:%s280] %v277
    %s282 = scalar_lea.vmem %s2, 360
    %v283 = vld [vmem:[%s282] sm:$0xff]
    %s284 = scalar_lea.vmem [#allocation2], 360
    %s286 = ssub.s32 256, 1
    %287 = vst [vmem:[%s284] sm:%s286] %v283
    %s288 = scalar_lea.vmem %s2, 368
    %v289 = vld [vmem:[%s288] sm:$0xff]
    %s290 = scalar_lea.vmem [#allocation2], 368
    %s292 = ssub.s32 256, 1
    %293 = vst [vmem:[%s290] sm:%s292] %v289
    %s294 = scalar_lea.vmem %s2, 376
    %v295 = vld [vmem:[%s294] sm:$0xff]
    %s296 = scalar_lea.vmem [#allocation2], 376
    %s298 = ssub.s32 256, 1
    %299 = vst [vmem:[%s296] sm:%s298] %v295
    %s300 = scalar_lea.vmem %s2, 384
    %v301 = vld [vmem:[%s300] sm:$0xff]
    %s302 = scalar_lea.vmem [#allocation2], 384
    %s304 = ssub.s32 256, 1
    %305 = vst [vmem:[%s302] sm:%s304] %v301
    %s306 = scalar_lea.vmem %s2, 392
    %v307 = vld [vmem:[%s306] sm:$0xff]
    %s308 = scalar_lea.vmem [#allocation2], 392
    %s310 = ssub.s32 256, 1
    %311 = vst [vmem:[%s308] sm:%s310] %v307
    %s312 = scalar_lea.vmem %s2, 400
    %v313 = vld [vmem:[%s312] sm:$0xff]
    %s314 = scalar_lea.vmem [#allocation2], 400
    %s316 = ssub.s32 256, 1
    %317 = vst [vmem:[%s314] sm:%s316] %v313
    %s318 = scalar_lea.vmem %s2, 408
    %v319 = vld [vmem:[%s318] sm:$0xff]
    %s320 = scalar_lea.vmem [#allocation2], 408
    %s322 = ssub.s32 256, 1
    %323 = vst [vmem:[%s320] sm:%s322] %v319
    %s324 = scalar_lea.vmem %s2, 416
    %v325 = vld [vmem:[%s324] sm:$0xff]
    %s326 = scalar_lea.vmem [#allocation2], 416
    %s328 = ssub.s32 256, 1
    %329 = vst [vmem:[%s326] sm:%s328] %v325
    %s330 = scalar_lea.vmem %s2, 424
    %v331 = vld [vmem:[%s330] sm:$0xff]
    %s332 = scalar_lea.vmem [#allocation2], 424
    %s334 = ssub.s32 256, 1
    %335 = vst [vmem:[%s332] sm:%s334] %v331
    %s336 = scalar_lea.vmem %s2, 432
    %v337 = vld [vmem:[%s336] sm:$0xff]
    %s338 = scalar_lea.vmem [#allocation2], 432
    %s340 = ssub.s32 256, 1
    %341 = vst [vmem:[%s338] sm:%s340] %v337
    %s342 = scalar_lea.vmem %s2, 440
    %v343 = vld [vmem:[%s342] sm:$0xff]
    %s344 = scalar_lea.vmem [#allocation2], 440
    %s346 = ssub.s32 256, 1
    %347 = vst [vmem:[%s344] sm:%s346] %v343
    %s348 = scalar_lea.vmem %s2, 448
    %v349 = vld [vmem:[%s348] sm:$0xff]
    %s350 = scalar_lea.vmem [#allocation2], 448
    %s352 = ssub.s32 256, 1
    %353 = vst [vmem:[%s350] sm:%s352] %v349
    %s354 = scalar_lea.vmem %s2, 456
    %v355 = vld [vmem:[%s354] sm:$0xff]
    %s356 = scalar_lea.vmem [#allocation2], 456
    %s358 = ssub.s32 256, 1
    %359 = vst [vmem:[%s356] sm:%s358] %v355
    %s360 = scalar_lea.vmem %s2, 464
    %v361 = vld [vmem:[%s360] sm:$0xff]
    %s362 = scalar_lea.vmem [#allocation2], 464
    %s364 = ssub.s32 256, 1
    %365 = vst [vmem:[%s362] sm:%s364] %v361
    %s366 = scalar_lea.vmem %s2, 472
    %v367 = vld [vmem:[%s366] sm:$0xff]
    %s368 = scalar_lea.vmem [#allocation2], 472
    %s370 = ssub.s32 256, 1
    %371 = vst [vmem:[%s368] sm:%s370] %v367
    %s372 = scalar_lea.vmem %s2, 480
    %v373 = vld [vmem:[%s372] sm:$0xff]
    %s374 = scalar_lea.vmem [#allocation2], 480
    %s376 = ssub.s32 256, 1
    %377 = vst [vmem:[%s374] sm:%s376] %v373
    %s378 = scalar_lea.vmem %s2, 488
    %v379 = vld [vmem:[%s378] sm:$0xff]
    %s380 = scalar_lea.vmem [#allocation2], 488
    %s382 = ssub.s32 256, 1
    %383 = vst [vmem:[%s380] sm:%s382] %v379
    %s384 = scalar_lea.vmem %s2, 496
    %v385 = vld [vmem:[%s384] sm:$0xff]
    %s386 = scalar_lea.vmem [#allocation2], 496
    %s388 = ssub.s32 256, 1
    %389 = vst [vmem:[%s386] sm:%s388] %v385
    %s390 = scalar_lea.vmem %s2, 504
    %v391 = vld [vmem:[%s390] sm:$0xff]
    %s392 = scalar_lea.vmem [#allocation2], 504
    %s394 = ssub.s32 256, 1
    %395 = vst [vmem:[%s392] sm:%s394] %v391
    %v397 = vld [vmem:[#allocation2] sm:$0xff]
    %v398 = vld [vmem:[#allocation2 + $0x8] sm:$0xff]
    %v399 = vld [vmem:[#allocation2 + $0x10] sm:$0xff]
    %v400 = vld [vmem:[#allocation2 + $0x18] sm:$0xff]
    %v401 = vld [vmem:[#allocation2 + $0x20] sm:$0xff]
    %v402 = vld [vmem:[#allocation2 + $0x28] sm:$0xff]
    %v403 = vld [vmem:[#allocation2 + $0x30] sm:$0xff]
    %v404 = vld [vmem:[#allocation2 + $0x38] sm:$0xff]
    %v405 = vld [vmem:[#allocation2 + $0x40] sm:$0xff]
    %v406 = vld [vmem:[#allocation2 + $0x48] sm:$0xff]
    %v407 = vld [vmem:[#allocation2 + $0x50] sm:$0xff]
    %v408 = vld [vmem:[#allocation2 + $0x58] sm:$0xff]
    %v409 = vld [vmem:[#allocation2 + $0x60] sm:$0xff]
    %v410 = vld [vmem:[#allocation2 + $0x68] sm:$0xff]
    %v411 = vld [vmem:[#allocation2 + $0x70] sm:$0xff]
    %v412 = vld [vmem:[#allocation2 + $0x78] sm:$0xff]
    %v413 = vld [vmem:[#allocation2 + $0x80] sm:$0xff]
    %v414 = vld [vmem:[#allocation2 + $0x88] sm:$0xff]
    %v415 = vld [vmem:[#allocation2 + $0x90] sm:$0xff]
    %v416 = vld [vmem:[#allocation2 + $0x98] sm:$0xff]
    %v417 = vld [vmem:[#allocation2 + $0xa0] sm:$0xff]
    %v418 = vld [vmem:[#allocation2 + $0xa8] sm:$0xff]
    %v419 = vld [vmem:[#allocation2 + $0xb0] sm:$0xff]
    %v420 = vld [vmem:[#allocation2 + $0xb8] sm:$0xff]
    %v421 = vld [vmem:[#allocation2 + $0xc0] sm:$0xff]
    %v422 = vld [vmem:[#allocation2 + $0xc8] sm:$0xff]
    %v423 = vld [vmem:[#allocation2 + $0xd0] sm:$0xff]
    %v424 = vld [vmem:[#allocation2 + $0xd8] sm:$0xff]
    %v425 = vld [vmem:[#allocation2 + $0xe0] sm:$0xff]
    %v426 = vld [vmem:[#allocation2 + $0xe8] sm:$0xff]
    %v427 = vld [vmem:[#allocation2 + $0xf0] sm:$0xff]
    %v428 = vld [vmem:[#allocation2 + $0xf8] sm:$0xff]
    %v429 = vld [vmem:[#allocation2 + $0x100] sm:$0xff]
    %v430 = vld [vmem:[#allocation2 + $0x108] sm:$0xff]
    %v431 = vld [vmem:[#allocation2 + $0x110] sm:$0xff]
    %v432 = vld [vmem:[#allocation2 + $0x118] sm:$0xff]
    %v433 = vld [vmem:[#allocation2 + $0x120] sm:$0xff]
    %v434 = vld [vmem:[#allocation2 + $0x128] sm:$0xff]
    %v435 = vld [vmem:[#allocation2 + $0x130] sm:$0xff]
    %v436 = vld [vmem:[#allocation2 + $0x138] sm:$0xff]
    %v437 = vld [vmem:[#allocation2 + $0x140] sm:$0xff]
    %v438 = vld [vmem:[#allocation2 + $0x148] sm:$0xff]
    %v439 = vld [vmem:[#allocation2 + $0x150] sm:$0xff]
    %v440 = vld [vmem:[#allocation2 + $0x158] sm:$0xff]
    %v441 = vld [vmem:[#allocation2 + $0x160] sm:$0xff]
    %v442 = vld [vmem:[#allocation2 + $0x168] sm:$0xff]
    %v443 = vld [vmem:[#allocation2 + $0x170] sm:$0xff]
    %v444 = vld [vmem:[#allocation2 + $0x178] sm:$0xff]
    %v445 = vld [vmem:[#allocation2 + $0x180] sm:$0xff]
    %v446 = vld [vmem:[#allocation2 + $0x188] sm:$0xff]
    %v447 = vld [vmem:[#allocation2 + $0x190] sm:$0xff]
    %v448 = vld [vmem:[#allocation2 + $0x198] sm:$0xff]
    %v449 = vld [vmem:[#allocation2 + $0x1a0] sm:$0xff]
    %v450 = vld [vmem:[#allocation2 + $0x1a8] sm:$0xff]
    %v451 = vld [vmem:[#allocation2 + $0x1b0] sm:$0xff]
    %v452 = vld [vmem:[#allocation2 + $0x1b8] sm:$0xff]
    %v453 = vld [vmem:[#allocation2 + $0x1c0] sm:$0xff]
    %v454 = vld [vmem:[#allocation2 + $0x1c8] sm:$0xff]
    %v455 = vld [vmem:[#allocation2 + $0x1d0] sm:$0xff]
    %v456 = vld [vmem:[#allocation2 + $0x1d8] sm:$0xff]
    %v457 = vld [vmem:[#allocation2 + $0x1e0] sm:$0xff]
    %v458 = vld [vmem:[#allocation2 + $0x1e8] sm:$0xff]
    %v459 = vld [vmem:[#allocation2 + $0x1f0] sm:$0xff]
    %v460 = vld [vmem:[#allocation2 + $0x1f8] sm:$0xff]
    %v461 = vpack.c.bf16 %v398, %v397
    %v462 = vpack.c.bf16 %v400, %v399
    %v463 = vpack.c.bf16 %v402, %v401
    %v464 = vpack.c.bf16 %v404, %v403
    %v465 = vpack.c.bf16 %v406, %v405
    %v466 = vpack.c.bf16 %v408, %v407
    %v467 = vpack.c.bf16 %v410, %v409
    %v468 = vpack.c.bf16 %v412, %v411
    %v469 = vpack.c.bf16 %v414, %v413
    %v470 = vpack.c.bf16 %v416, %v415
    %v471 = vpack.c.bf16 %v418, %v417
    %v472 = vpack.c.bf16 %v420, %v419
    %v473 = vpack.c.bf16 %v422, %v421
    %v474 = vpack.c.bf16 %v424, %v423
    %v475 = vpack.c.bf16 %v426, %v425
    %v476 = vpack.c.bf16 %v428, %v427
    %v477 = vpack.c.bf16 %v430, %v429
    %v478 = vpack.c.bf16 %v432, %v431
    %v479 = vpack.c.bf16 %v434, %v433
    %v480 = vpack.c.bf16 %v436, %v435
    %v481 = vpack.c.bf16 %v438, %v437
    %v482 = vpack.c.bf16 %v440, %v439
    %v483 = vpack.c.bf16 %v442, %v441
    %v484 = vpack.c.bf16 %v444, %v443
    %v485 = vpack.c.bf16 %v446, %v445
    %v486 = vpack.c.bf16 %v448, %v447
    %v487 = vpack.c.bf16 %v450, %v449
    %v488 = vpack.c.bf16 %v452, %v451
    %v489 = vpack.c.bf16 %v454, %v453
    %v490 = vpack.c.bf16 %v456, %v455
    %v491 = vpack.c.bf16 %v458, %v457
    %v492 = vpack.c.bf16 %v460, %v459
    %v494 = vshrl.u32 %v461, 16
    %v496 = vrot.slane %v494, 7
    %v498 = vshrl.u32 %v462, 16
    %v500 = vrot.slane %v498, 7
    %v502 = vshrl.u32 %v463, 16
    %v504 = vrot.slane %v502, 7
    %v506 = vshrl.u32 %v464, 16
    %v508 = vrot.slane %v506, 7
    %v510 = vshrl.u32 %v465, 16
    %v512 = vrot.slane %v510, 7
    %v514 = vshrl.u32 %v466, 16
    %v516 = vrot.slane %v514, 7
    %v518 = vshrl.u32 %v467, 16
    %v520 = vrot.slane %v518, 7
    %v522 = vshrl.u32 %v468, 16
    %v524 = vrot.slane %v522, 7
    %v526 = vshrl.u32 %v469, 16
    %v528 = vrot.slane %v526, 7
    %v530 = vshrl.u32 %v470, 16
    %v532 = vrot.slane %v530, 7
    %v534 = vshrl.u32 %v471, 16
    %v536 = vrot.slane %v534, 7
    %v538 = vshrl.u32 %v472, 16
    %v540 = vrot.slane %v538, 7
    %v542 = vshrl.u32 %v473, 16
    %v544 = vrot.slane %v542, 7
    %v546 = vshrl.u32 %v474, 16
    %v548 = vrot.slane %v546, 7
    %v550 = vshrl.u32 %v475, 16
    %v552 = vrot.slane %v550, 7
    %v554 = vshrl.u32 %v476, 16
    %v556 = vrot.slane %v554, 7
    %v558 = vshrl.u32 %v477, 16
    %v560 = vrot.slane %v558, 7
    %v562 = vshrl.u32 %v478, 16
    %v564 = vrot.slane %v562, 7
    %v566 = vshrl.u32 %v479, 16
    %v568 = vrot.slane %v566, 7
    %v570 = vshrl.u32 %v480, 16
    %v572 = vrot.slane %v570, 7
    %v574 = vshrl.u32 %v481, 16
    %v576 = vrot.slane %v574, 7
    %v578 = vshrl.u32 %v482, 16
    %v580 = vrot.slane %v578, 7
    %v582 = vshrl.u32 %v483, 16
    %v584 = vrot.slane %v582, 7
    %v586 = vshrl.u32 %v484, 16
    %v588 = vrot.slane %v586, 7
    %v590 = vshrl.u32 %v485, 16
    %v592 = vrot.slane %v590, 7
    %v594 = vshrl.u32 %v486, 16
    %v596 = vrot.slane %v594, 7
    %v598 = vshrl.u32 %v487, 16
    %v600 = vrot.slane %v598, 7
    %v602 = vshrl.u32 %v488, 16
    %v604 = vrot.slane %v602, 7
    %v606 = vshrl.u32 %v489, 16
    %v608 = vrot.slane %v606, 7
    %v610 = vshrl.u32 %v490, 16
    %v612 = vrot.slane %v610, 7
    %v614 = vshrl.u32 %v491, 16
    %v616 = vrot.slane %v614, 7
    %v618 = vshrl.u32 %v492, 16
    %v620 = vrot.slane %v618, 7
    %v653 = vshll.u32 %v461, 16
    %v655 = vor.u32 %v496, %v653
    %v656 = vshll.u32 %v462, 16
    %v658 = vor.u32 %v500, %v656
    %v659 = vshll.u32 %v463, 16
    %v661 = vor.u32 %v504, %v659
    %v662 = vshll.u32 %v464, 16
    %v664 = vor.u32 %v508, %v662
    %v665 = vshll.u32 %v465, 16
    %v667 = vor.u32 %v512, %v665
    %v668 = vshll.u32 %v466, 16
    %v670 = vor.u32 %v516, %v668
    %v671 = vshll.u32 %v467, 16
    %v673 = vor.u32 %v520, %v671
    %v674 = vshll.u32 %v468, 16
    %v676 = vor.u32 %v524, %v674
    %v677 = vshll.u32 %v469, 16
    %v679 = vor.u32 %v528, %v677
    %v680 = vshll.u32 %v470, 16
    %v682 = vor.u32 %v532, %v680
    %v683 = vshll.u32 %v471, 16
    %v685 = vor.u32 %v536, %v683
    %v686 = vshll.u32 %v472, 16
    %v688 = vor.u32 %v540, %v686
    %v689 = vshll.u32 %v473, 16
    %v691 = vor.u32 %v544, %v689
    %v692 = vshll.u32 %v474, 16
    %v694 = vor.u32 %v548, %v692
    %v695 = vshll.u32 %v475, 16
    %v697 = vor.u32 %v552, %v695
    %v698 = vshll.u32 %v476, 16
    %v700 = vor.u32 %v556, %v698
    %v701 = vshll.u32 %v477, 16
    %v703 = vor.u32 %v560, %v701
    %v704 = vshll.u32 %v478, 16
    %v706 = vor.u32 %v564, %v704
    %v707 = vshll.u32 %v479, 16
    %v709 = vor.u32 %v568, %v707
    %v710 = vshll.u32 %v480, 16
    %v712 = vor.u32 %v572, %v710
    %v713 = vshll.u32 %v481, 16
    %v715 = vor.u32 %v576, %v713
    %v716 = vshll.u32 %v482, 16
    %v718 = vor.u32 %v580, %v716
    %v719 = vshll.u32 %v483, 16
    %v721 = vor.u32 %v584, %v719
    %v722 = vshll.u32 %v484, 16
    %v724 = vor.u32 %v588, %v722
    %v725 = vshll.u32 %v485, 16
    %v727 = vor.u32 %v592, %v725
    %v728 = vshll.u32 %v486, 16
    %v730 = vor.u32 %v596, %v728
    %v731 = vshll.u32 %v487, 16
    %v733 = vor.u32 %v600, %v731
    %v734 = vshll.u32 %v488, 16
    %v736 = vor.u32 %v604, %v734
    %v737 = vshll.u32 %v489, 16
    %v739 = vor.u32 %v608, %v737
    %v740 = vshll.u32 %v490, 16
    %v742 = vor.u32 %v612, %v740
    %v743 = vshll.u32 %v491, 16
    %v745 = vor.u32 %v616, %v743
    %v746 = vshll.u32 %v492, 16
    %v748 = vor.u32 %v620, %v746
    %vm781 = vcmask 1040384
    %vm782 = vsmask.f32 256
    %vm783 = vmand %vm781, %vm782
    %v784 = vsel %vm783, %v496, %v655
    %v785 = vsel %vm783, %v500, %v658
    %v786 = vsel %vm783, %v504, %v661
    %v787 = vsel %vm783, %v508, %v664
    %v788 = vsel %vm783, %v512, %v667
    %v789 = vsel %vm783, %v516, %v670
    %v790 = vsel %vm783, %v520, %v673
    %v791 = vsel %vm783, %v524, %v676
    %v792 = vsel %vm783, %v528, %v679
    %v793 = vsel %vm783, %v532, %v682
    %v794 = vsel %vm783, %v536, %v685
    %v795 = vsel %vm783, %v540, %v688
    %v796 = vsel %vm783, %v544, %v691
    %v797 = vsel %vm783, %v548, %v694
    %v798 = vsel %vm783, %v552, %v697
    %v799 = vsel %vm783, %v556, %v700
    %v800 = vsel %vm783, %v560, %v703
    %v801 = vsel %vm783, %v564, %v706
    %v802 = vsel %vm783, %v568, %v709
    %v803 = vsel %vm783, %v572, %v712
    %v804 = vsel %vm783, %v576, %v715
    %v805 = vsel %vm783, %v580, %v718
    %v806 = vsel %vm783, %v584, %v721
    %v807 = vsel %vm783, %v588, %v724
    %v808 = vsel %vm783, %v592, %v727
    %v809 = vsel %vm783, %v596, %v730
    %v810 = vsel %vm783, %v600, %v733
    %v811 = vsel %vm783, %v604, %v736
    %v812 = vsel %vm783, %v608, %v739
    %v813 = vsel %vm783, %v612, %v742
    %v814 = vsel %vm783, %v616, %v745
    %v815 = vsel %vm783, %v620, %v748
    %v816 = vrot.slane %v653, 1
    %v817 = vor.u32 %v494, %v816
    %v818 = vrot.slane %v656, 1
    %v819 = vor.u32 %v498, %v818
    %v820 = vrot.slane %v659, 1
    %v821 = vor.u32 %v502, %v820
    %v822 = vrot.slane %v662, 1
    %v823 = vor.u32 %v506, %v822
    %v824 = vrot.slane %v665, 1
    %v825 = vor.u32 %v510, %v824
    %v826 = vrot.slane %v668, 1
    %v827 = vor.u32 %v514, %v826
    %v828 = vrot.slane %v671, 1
    %v829 = vor.u32 %v518, %v828
    %v830 = vrot.slane %v674, 1
    %v831 = vor.u32 %v522, %v830
    %v832 = vrot.slane %v677, 1
    %v833 = vor.u32 %v526, %v832
    %v834 = vrot.slane %v680, 1
    %v835 = vor.u32 %v530, %v834
    %v836 = vrot.slane %v683, 1
    %v837 = vor.u32 %v534, %v836
    %v838 = vrot.slane %v686, 1
    %v839 = vor.u32 %v538, %v838
    %v840 = vrot.slane %v689, 1
    %v841 = vor.u32 %v542, %v840
    %v842 = vrot.slane %v692, 1
    %v843 = vor.u32 %v546, %v842
    %v844 = vrot.slane %v695, 1
    %v845 = vor.u32 %v550, %v844
    %v846 = vrot.slane %v698, 1
    %v847 = vor.u32 %v554, %v846
    %v848 = vrot.slane %v701, 1
    %v849 = vor.u32 %v558, %v848
    %v850 = vrot.slane %v704, 1
    %v851 = vor.u32 %v562, %v850
    %v852 = vrot.slane %v707, 1
    %v853 = vor.u32 %v566, %v852
    %v854 = vrot.slane %v710, 1
    %v855 = vor.u32 %v570, %v854
    %v856 = vrot.slane %v713, 1
    %v857 = vor.u32 %v574, %v856
    %v858 = vrot.slane %v716, 1
    %v859 = vor.u32 %v578, %v858
    %v860 = vrot.slane %v719, 1
    %v861 = vor.u32 %v582, %v860
    %v862 = vrot.slane %v722, 1
    %v863 = vor.u32 %v586, %v862
    %v864 = vrot.slane %v725, 1
    %v865 = vor.u32 %v590, %v864
    %v866 = vrot.slane %v728, 1
    %v867 = vor.u32 %v594, %v866
    %v868 = vrot.slane %v731, 1
    %v869 = vor.u32 %v598, %v868
    %v870 = vrot.slane %v734, 1
    %v871 = vor.u32 %v602, %v870
    %v872 = vrot.slane %v737, 1
    %v873 = vor.u32 %v606, %v872
    %v874 = vrot.slane %v740, 1
    %v875 = vor.u32 %v610, %v874
    %v876 = vrot.slane %v743, 1
    %v877 = vor.u32 %v614, %v876
    %v878 = vrot.slane %v746, 1
    %v879 = vor.u32 %v618, %v878
    %vm944 = vcmask 1047552
    %vm945 = vsmask.f32 7424
    %vm946 = vmand %vm944, %vm945
    %v947 = vsel %vm946, %v817, %v816
    %v948 = vsel %vm946, %v819, %v818
    %v949 = vsel %vm946, %v821, %v820
    %v950 = vsel %vm946, %v823, %v822
    %v951 = vsel %vm946, %v825, %v824
    %v952 = vsel %vm946, %v827, %v826
    %v953 = vsel %vm946, %v829, %v828
    %v954 = vsel %vm946, %v831, %v830
    %v955 = vsel %vm946, %v833, %v832
    %v956 = vsel %vm946, %v835, %v834
    %v957 = vsel %vm946, %v837, %v836
    %v958 = vsel %vm946, %v839, %v838
    %v959 = vsel %vm946, %v841, %v840
    %v960 = vsel %vm946, %v843, %v842
    %v961 = vsel %vm946, %v845, %v844
    %v962 = vsel %vm946, %v847, %v846
    %v963 = vsel %vm946, %v849, %v848
    %v964 = vsel %vm946, %v851, %v850
    %v965 = vsel %vm946, %v853, %v852
    %v966 = vsel %vm946, %v855, %v854
    %v967 = vsel %vm946, %v857, %v856
    %v968 = vsel %vm946, %v859, %v858
    %v969 = vsel %vm946, %v861, %v860
    %v970 = vsel %vm946, %v863, %v862
    %v971 = vsel %vm946, %v865, %v864
    %v972 = vsel %vm946, %v867, %v866
    %v973 = vsel %vm946, %v869, %v868
    %v974 = vsel %vm946, %v871, %v870
    %v975 = vsel %vm946, %v873, %v872
    %v976 = vsel %vm946, %v875, %v874
    %v977 = vsel %vm946, %v877, %v876
    %v978 = vsel %vm946, %v879, %v878
    %1011 = vrot.lane.b32.xlu0 %v461, 8
    %v1012 = vpop.permute.xlu0 %1011
    %1013 = vrot.lane.b32.xlu0 %v462, 8
    %v1014 = vpop.permute.xlu0 %1013
    %1015 = vrot.lane.b32.xlu0 %v463, 8
    %v1016 = vpop.permute.xlu0 %1015
    %1017 = vrot.lane.b32.xlu0 %v464, 8
    %v1018 = vpop.permute.xlu0 %1017
    %1019 = vrot.lane.b32.xlu0 %v465, 8
    %v1020 = vpop.permute.xlu0 %1019
    %1021 = vrot.lane.b32.xlu0 %v466, 8
    %v1022 = vpop.permute.xlu0 %1021
    %1023 = vrot.lane.b32.xlu0 %v467, 8
    %v1024 = vpop.permute.xlu0 %1023
    %1025 = vrot.lane.b32.xlu0 %v468, 8
    %v1026 = vpop.permute.xlu0 %1025
    %1027 = vrot.lane.b32.xlu0 %v469, 8
    %v1028 = vpop.permute.xlu0 %1027
    %1029 = vrot.lane.b32.xlu0 %v470, 8
    %v1030 = vpop.permute.xlu0 %1029
    %1031 = vrot.lane.b32.xlu0 %v471, 8
    %v1032 = vpop.permute.xlu0 %1031
    %1033 = vrot.lane.b32.xlu0 %v472, 8
    %v1034 = vpop.permute.xlu0 %1033
    %1035 = vrot.lane.b32.xlu0 %v473, 8
    %v1036 = vpop.permute.xlu0 %1035
    %1037 = vrot.lane.b32.xlu0 %v474, 8
    %v1038 = vpop.permute.xlu0 %1037
    %1039 = vrot.lane.b32.xlu0 %v475, 8
    %v1040 = vpop.permute.xlu0 %1039
    %1041 = vrot.lane.b32.xlu0 %v476, 8
    %v1042 = vpop.permute.xlu0 %1041
    %1043 = vrot.lane.b32.xlu0 %v477, 8
    %v1044 = vpop.permute.xlu0 %1043
    %1045 = vrot.lane.b32.xlu0 %v478, 8
    %v1046 = vpop.permute.xlu0 %1045
    %1047 = vrot.lane.b32.xlu0 %v479, 8
    %v1048 = vpop.permute.xlu0 %1047
    %1049 = vrot.lane.b32.xlu0 %v480, 8
    %v1050 = vpop.permute.xlu0 %1049
    %1051 = vrot.lane.b32.xlu0 %v481, 8
    %v1052 = vpop.permute.xlu0 %1051
    %1053 = vrot.lane.b32.xlu0 %v482, 8
    %v1054 = vpop.permute.xlu0 %1053
    %1055 = vrot.lane.b32.xlu0 %v483, 8
    %v1056 = vpop.permute.xlu0 %1055
    %1057 = vrot.lane.b32.xlu0 %v484, 8
    %v1058 = vpop.permute.xlu0 %1057
    %1059 = vrot.lane.b32.xlu0 %v485, 8
    %v1060 = vpop.permute.xlu0 %1059
    %1061 = vrot.lane.b32.xlu0 %v486, 8
    %v1062 = vpop.permute.xlu0 %1061
    %1063 = vrot.lane.b32.xlu0 %v487, 8
    %v1064 = vpop.permute.xlu0 %1063
    %1065 = vrot.lane.b32.xlu0 %v488, 8
    %v1066 = vpop.permute.xlu0 %1065
    %1067 = vrot.lane.b32.xlu0 %v489, 8
    %v1068 = vpop.permute.xlu0 %1067
    %1069 = vrot.lane.b32.xlu0 %v490, 8
    %v1070 = vpop.permute.xlu0 %1069
    %1071 = vrot.lane.b32.xlu0 %v491, 8
    %v1072 = vpop.permute.xlu0 %1071
    %1073 = vrot.lane.b32.xlu0 %v492, 8
    %v1074 = vpop.permute.xlu0 %1073
    %1107 = vrot.lane.b32.xlu0 %v947, 16
    %v1108 = vpop.permute.xlu0 %1107
    %1109 = vrot.lane.b32.xlu0 %v948, 16
    %v1110 = vpop.permute.xlu0 %1109
    %1111 = vrot.lane.b32.xlu0 %v949, 16
    %v1112 = vpop.permute.xlu0 %1111
    %1113 = vrot.lane.b32.xlu0 %v950, 16
    %v1114 = vpop.permute.xlu0 %1113
    %1115 = vrot.lane.b32.xlu0 %v951, 16
    %v1116 = vpop.permute.xlu0 %1115
    %1117 = vrot.lane.b32.xlu0 %v952, 16
    %v1118 = vpop.permute.xlu0 %1117
    %1119 = vrot.lane.b32.xlu0 %v953, 16
    %v1120 = vpop.permute.xlu0 %1119
    %1121 = vrot.lane.b32.xlu0 %v954, 16
    %v1122 = vpop.permute.xlu0 %1121
    %1123 = vrot.lane.b32.xlu0 %v955, 16
    %v1124 = vpop.permute.xlu0 %1123
    %1125 = vrot.lane.b32.xlu0 %v956, 16
    %v1126 = vpop.permute.xlu0 %1125
    %1127 = vrot.lane.b32.xlu0 %v957, 16
    %v1128 = vpop.permute.xlu0 %1127
    %1129 = vrot.lane.b32.xlu0 %v958, 16
    %v1130 = vpop.permute.xlu0 %1129
    %1131 = vrot.lane.b32.xlu0 %v959, 16
    %v1132 = vpop.permute.xlu0 %1131
    %1133 = vrot.lane.b32.xlu0 %v960, 16
    %v1134 = vpop.permute.xlu0 %1133
    %1135 = vrot.lane.b32.xlu0 %v961, 16
    %v1136 = vpop.permute.xlu0 %1135
    %1137 = vrot.lane.b32.xlu0 %v962, 16
    %v1138 = vpop.permute.xlu0 %1137
    %1139 = vrot.lane.b32.xlu0 %v963, 16
    %v1140 = vpop.permute.xlu0 %1139
    %1141 = vrot.lane.b32.xlu0 %v964, 16
    %v1142 = vpop.permute.xlu0 %1141
    %1143 = vrot.lane.b32.xlu0 %v965, 16
    %v1144 = vpop.permute.xlu0 %1143
    %1145 = vrot.lane.b32.xlu0 %v966, 16
    %v1146 = vpop.permute.xlu0 %1145
    %1147 = vrot.lane.b32.xlu0 %v967, 16
    %v1148 = vpop.permute.xlu0 %1147
    %1149 = vrot.lane.b32.xlu0 %v968, 16
    %v1150 = vpop.permute.xlu0 %1149
    %1151 = vrot.lane.b32.xlu0 %v969, 16
    %v1152 = vpop.permute.xlu0 %1151
    %1153 = vrot.lane.b32.xlu0 %v970, 16
    %v1154 = vpop.permute.xlu0 %1153
    %1155 = vrot.lane.b32.xlu0 %v971, 16
    %v1156 = vpop.permute.xlu0 %1155
    %1157 = vrot.lane.b32.xlu0 %v972, 16
    %v1158 = vpop.permute.xlu0 %1157
    %1159 = vrot.lane.b32.xlu0 %v973, 16
    %v1160 = vpop.permute.xlu0 %1159
    %1161 = vrot.lane.b32.xlu0 %v974, 16
    %v1162 = vpop.permute.xlu0 %1161
    %1163 = vrot.lane.b32.xlu0 %v975, 16
    %v1164 = vpop.permute.xlu0 %1163
    %1165 = vrot.lane.b32.xlu0 %v976, 16
    %v1166 = vpop.permute.xlu0 %1165
    %1167 = vrot.lane.b32.xlu0 %v977, 16
    %v1168 = vpop.permute.xlu0 %1167
    %1169 = vrot.lane.b32.xlu0 %v978, 16
    %v1170 = vpop.permute.xlu0 %1169
    %vm1171 = vcmask 64512
    %v1174 = vsel %vm1171, %v784, %v1012
    %v1177 = vsel %vm1171, %v785, %v1014
    %v1180 = vsel %vm1171, %v786, %v1016
    %v1183 = vsel %vm1171, %v787, %v1018
    %v1186 = vsel %vm1171, %v788, %v1020
    %v1189 = vsel %vm1171, %v789, %v1022
    %v1192 = vsel %vm1171, %v790, %v1024
    %v1195 = vsel %vm1171, %v791, %v1026
    %v1198 = vsel %vm1171, %v792, %v1028
    %v1201 = vsel %vm1171, %v793, %v1030
    %v1204 = vsel %vm1171, %v794, %v1032
    %v1207 = vsel %vm1171, %v795, %v1034
    %v1210 = vsel %vm1171, %v796, %v1036
    %v1213 = vsel %vm1171, %v797, %v1038
    %v1216 = vsel %vm1171, %v798, %v1040
    %v1219 = vsel %vm1171, %v799, %v1042
    %v1222 = vsel %vm1171, %v800, %v1044
    %v1225 = vsel %vm1171, %v801, %v1046
    %v1228 = vsel %vm1171, %v802, %v1048
    %v1231 = vsel %vm1171, %v803, %v1050
    %v1234 = vsel %vm1171, %v804, %v1052
    %v1237 = vsel %vm1171, %v805, %v1054
    %v1240 = vsel %vm1171, %v806, %v1056
    %v1243 = vsel %vm1171, %v807, %v1058
    %v1246 = vsel %vm1171, %v808, %v1060
    %v1249 = vsel %vm1171, %v809, %v1062
    %v1252 = vsel %vm1171, %v810, %v1064
    %v1255 = vsel %vm1171, %v811, %v1066
    %v1258 = vsel %vm1171, %v812, %v1068
    %v1261 = vsel %vm1171, %v813, %v1070
    %v1264 = vsel %vm1171, %v814, %v1072
    %v1267 = vsel %vm1171, %v815, %v1074
    %vm1268 = vcmask 130048
    %v1270 = vsel %vm1268, %v1174, %v1108
    %v1272 = vsel %vm1268, %v1177, %v1110
    %v1274 = vsel %vm1268, %v1180, %v1112
    %v1276 = vsel %vm1268, %v1183, %v1114
    %v1278 = vsel %vm1268, %v1186, %v1116
    %v1280 = vsel %vm1268, %v1189, %v1118
    %v1282 = vsel %vm1268, %v1192, %v1120
    %v1284 = vsel %vm1268, %v1195, %v1122
    %v1286 = vsel %vm1268, %v1198, %v1124
    %v1288 = vsel %vm1268, %v1201, %v1126
    %v1290 = vsel %vm1268, %v1204, %v1128
    %v1292 = vsel %vm1268, %v1207, %v1130
    %v1294 = vsel %vm1268, %v1210, %v1132
    %v1296 = vsel %vm1268, %v1213, %v1134
    %v1298 = vsel %vm1268, %v1216, %v1136
    %v1300 = vsel %vm1268, %v1219, %v1138
    %v1302 = vsel %vm1268, %v1222, %v1140
    %v1304 = vsel %vm1268, %v1225, %v1142
    %v1306 = vsel %vm1268, %v1228, %v1144
    %v1308 = vsel %vm1268, %v1231, %v1146
    %v1310 = vsel %vm1268, %v1234, %v1148
    %v1312 = vsel %vm1268, %v1237, %v1150
    %v1314 = vsel %vm1268, %v1240, %v1152
    %v1316 = vsel %vm1268, %v1243, %v1154
    %v1318 = vsel %vm1268, %v1246, %v1156
    %v1320 = vsel %vm1268, %v1249, %v1158
    %v1322 = vsel %vm1268, %v1252, %v1160
    %v1324 = vsel %vm1268, %v1255, %v1162
    %v1326 = vsel %vm1268, %v1258, %v1164
    %v1328 = vsel %vm1268, %v1261, %v1166
    %v1330 = vsel %vm1268, %v1264, %v1168
    %v1332 = vsel %vm1268, %v1267, %v1170
    %v1333 = vld [vmem:[%s0] sm:$0xf]
    %v1334 = vld [vmem:[%s0 + $0x4] sm:$0xf]
    %v1335 = vld [vmem:[%s0 + $0x8] sm:$0xf]
    %v1336 = vld [vmem:[%s0 + $0xc] sm:$0xf]
    %v1337 = vld [vmem:[%s0 + $0x10] sm:$0xf]
    %v1338 = vld [vmem:[%s0 + $0x14] sm:$0xf]
    %v1342 = vunpack.c.l.b16 %v1336
    %v1343 = vunpack.c.l.b16 %v1337
    %v1344 = vunpack.c.l.b16 %v1338
    %v1345 = vpack.c.b16 %v1343, %v1342
    %v1346 = vpack.c.b16 %v1344, %v1344
    %vm1348 = vcmask 195584
    %v1349 = vsel %vm1348, %v1270, 0
    %v1351 = vsel %vm1348, %v1272, 0
    %v1353 = vsel %vm1348, %v1274, 0
    %v1355 = vsel %vm1348, %v1276, 0
    %v1357 = vsel %vm1348, %v1278, 0
    %v1359 = vsel %vm1348, %v1280, 0
    %v1361 = vsel %vm1348, %v1282, 0
    %v1363 = vsel %vm1348, %v1284, 0
    %v1365 = vsel %vm1348, %v1286, 0
    %v1367 = vsel %vm1348, %v1288, 0
    %v1369 = vsel %vm1348, %v1290, 0
    %v1371 = vsel %vm1348, %v1292, 0
    %v1373 = vsel %vm1348, %v1294, 0
    %v1375 = vsel %vm1348, %v1296, 0
    %v1377 = vsel %vm1348, %v1298, 0
    %v1379 = vsel %vm1348, %v1300, 0
    %v1381 = vsel %vm1348, %v1302, 0
    %v1383 = vsel %vm1348, %v1304, 0
    %v1385 = vsel %vm1348, %v1306, 0
    %v1387 = vsel %vm1348, %v1308, 0
    %v1389 = vsel %vm1348, %v1310, 0
    %v1391 = vsel %vm1348, %v1312, 0
    %v1393 = vsel %vm1348, %v1314, 0
    %v1395 = vsel %vm1348, %v1316, 0
    %v1397 = vsel %vm1348, %v1318, 0
    %v1399 = vsel %vm1348, %v1320, 0
    %v1401 = vsel %vm1348, %v1322, 0
    %v1403 = vsel %vm1348, %v1324, 0
    %v1405 = vsel %vm1348, %v1326, 0
    %v1407 = vsel %vm1348, %v1328, 0
    %v1409 = vsel %vm1348, %v1330, 0
    %v1411 = vsel %vm1348, %v1332, 0
    %vm1413 = vcmask 1043456
    %v1415 = vsel %vm1413, %v1346, 0
    %1417 = vmatprep.subr.bf16.mxu0 0
    %1418 = vmatpush1.bf16.msra.mxu0 0
    %1419 = vmatprep.subr.bf16.mxu0 0
    %1420 = vmatpush1.bf16.msra.mxu0 0
    %1421 = vmatprep.subr.bf16.mxu0 0
    %1422 = vmatpush1.bf16.msra.mxu0 0
    %1423 = vmatprep.subr.bf16.mxu0 0
    %1424 = vmatpush1.bf16.msra.mxu0 0
    %1425 = vmatprep.subr.bf16.mxu0 0
    %1426 = vmatpush1.bf16.msra.mxu0 0
    %1427 = vmatprep.subr.bf16.mxu0 0
    %1428 = vmatpush1.bf16.msra.mxu0 0
    %1429 = vmatprep.subr.bf16.mxu0 0
    %1430 = vmatpush1.bf16.msra.mxu0 %v1415
    %1431 = vmatprep.subr.bf16.mxu0 0
    %1432 = vmatpush1.bf16.msra.mxu0 %v1345
    %1433 = vmatprep.subr.bf16.mxu0 0
    %1434 = vmatpush2.bf16.msra.mxu0 0
    %1435 = vmatprep.subr.bf16.mxu0 0
    %1436 = vmatpush2.bf16.msra.mxu0 0
    %1437 = vmatprep.subr.bf16.mxu0 0
    %1438 = vmatpush2.bf16.msra.mxu0 0
    %1439 = vmatprep.subr.bf16.mxu0 0
    %1440 = vmatpush2.bf16.msra.mxu0 0
    %1441 = vmatprep.subr.bf16.mxu0 0
    %1442 = vmatpush2.bf16.msra.mxu0 0
    %1443 = vmatprep.subr.bf16.mxu0 0
    %1444 = vmatpush2.bf16.msra.mxu0 0
    %1445 = vmatprep.subr.bf16.mxu0 0
    %1446 = vmatpush2.bf16.msra.mxu0 0
    %1447 = vmatprep.subr.bf16.mxu0 0
    %1448 = vmatpush2.bf16.msra.mxu0 0
    %1449 = vmatprep.mubr.bf16.mxu0 0
    %1450 = vmatmul.mubr.bf16.gmra.mxu0 %v1349
    %v1451 = vpop.f32.mrf.mxu0
    %v1452 = vadd.f32 0.0, %v1451
    %v1453 = vpop.f32.mrf.mxu0
    %v1454 = vpop.f32.mrf.mxu0
    %v1455 = vadd.f32 0.0, %v1454
    %v1456 = vpop.f32.mrf.mxu0
    %1457 = vmatprep.mubr.bf16.mxu0 0
    %1458 = vmatmul.mubr.bf16.gmra.mxu0 %v1351
    %v1459 = vpop.f32.mrf.mxu0
    %v1460 = vadd.f32 0.0, %v1459
    %v1461 = vpop.f32.mrf.mxu0
    %v1462 = vpop.f32.mrf.mxu0
    %v1463 = vadd.f32 0.0, %v1462
    %v1464 = vpop.f32.mrf.mxu0
    %1465 = vmatprep.mubr.bf16.mxu0 0
    %1466 = vmatmul.mubr.bf16.gmra.mxu0 %v1353
    %v1467 = vpop.f32.mrf.mxu0
    %v1468 = vadd.f32 0.0, %v1467
    %v1469 = vpop.f32.mrf.mxu0
    %v1470 = vpop.f32.mrf.mxu0
    %v1471 = vadd.f32 0.0, %v1470
    %v1472 = vpop.f32.mrf.mxu0
    %1473 = vmatprep.mubr.bf16.mxu0 0
    %1474 = vmatmul.mubr.bf16.gmra.mxu0 %v1355
    %v1475 = vpop.f32.mrf.mxu0
    %v1476 = vadd.f32 0.0, %v1475
    %v1477 = vpop.f32.mrf.mxu0
    %v1478 = vpop.f32.mrf.mxu0
    %v1479 = vadd.f32 0.0, %v1478
    %v1480 = vpop.f32.mrf.mxu0
    %1481 = vmatprep.mubr.bf16.mxu0 0
    %1482 = vmatmul.mubr.bf16.gmra.mxu0 %v1357
    %v1483 = vpop.f32.mrf.mxu0
    %v1484 = vadd.f32 0.0, %v1483
    %v1485 = vpop.f32.mrf.mxu0
    %v1486 = vpop.f32.mrf.mxu0
    %v1487 = vadd.f32 0.0, %v1486
    %v1488 = vpop.f32.mrf.mxu0
    %1489 = vmatprep.mubr.bf16.mxu0 0
    %1490 = vmatmul.mubr.bf16.gmra.mxu0 %v1359
    %v1491 = vpop.f32.mrf.mxu0
    %v1492 = vadd.f32 0.0, %v1491
    %v1493 = vpop.f32.mrf.mxu0
    %v1494 = vpop.f32.mrf.mxu0
    %v1495 = vadd.f32 0.0, %v1494
    %v1496 = vpop.f32.mrf.mxu0
    %1497 = vmatprep.mubr.bf16.mxu0 0
    %1498 = vmatmul.mubr.bf16.gmra.mxu0 %v1361
    %v1499 = vpop.f32.mrf.mxu0
    %v1500 = vadd.f32 0.0, %v1499
    %v1501 = vpop.f32.mrf.mxu0
    %v1502 = vpop.f32.mrf.mxu0
    %v1503 = vadd.f32 0.0, %v1502
    %v1504 = vpop.f32.mrf.mxu0
    %1505 = vmatprep.mubr.bf16.mxu0 0
    %1506 = vmatmul.mubr.bf16.gmra.mxu0 %v1363
    %v1507 = vpop.f32.mrf.mxu0
    %v1508 = vadd.f32 0.0, %v1507
    %v1509 = vpop.f32.mrf.mxu0
    %v1510 = vpop.f32.mrf.mxu0
    %v1511 = vadd.f32 0.0, %v1510
    %v1512 = vpop.f32.mrf.mxu0
    %1513 = vmatprep.mubr.bf16.mxu0 0
    %1514 = vmatmul.mubr.bf16.gmra.mxu0 %v1365
    %v1515 = vpop.f32.mrf.mxu0
    %v1516 = vadd.f32 0.0, %v1515
    %v1517 = vpop.f32.mrf.mxu0
    %v1518 = vpop.f32.mrf.mxu0
    %v1519 = vadd.f32 0.0, %v1518
    %v1520 = vpop.f32.mrf.mxu0
    %1521 = vmatprep.mubr.bf16.mxu0 0
    %1522 = vmatmul.mubr.bf16.gmra.mxu0 %v1367
    %v1523 = vpop.f32.mrf.mxu0
    %v1524 = vadd.f32 0.0, %v1523
    %v1525 = vpop.f32.mrf.mxu0
    %v1526 = vpop.f32.mrf.mxu0
    %v1527 = vadd.f32 0.0, %v1526
    %v1528 = vpop.f32.mrf.mxu0
    %1529 = vmatprep.mubr.bf16.mxu0 0
    %1530 = vmatmul.mubr.bf16.gmra.mxu0 %v1369
    %v1531 = vpop.f32.mrf.mxu0
    %v1532 = vadd.f32 0.0, %v1531
    %v1533 = vpop.f32.mrf.mxu0
    %v1534 = vpop.f32.mrf.mxu0
    %v1535 = vadd.f32 0.0, %v1534
    %v1536 = vpop.f32.mrf.mxu0
    %1537 = vmatprep.mubr.bf16.mxu0 0
    %1538 = vmatmul.mubr.bf16.gmra.mxu0 %v1371
    %v1539 = vpop.f32.mrf.mxu0
    %v1540 = vadd.f32 0.0, %v1539
    %v1541 = vpop.f32.mrf.mxu0
    %v1542 = vpop.f32.mrf.mxu0
    %v1543 = vadd.f32 0.0, %v1542
    %v1544 = vpop.f32.mrf.mxu0
    %1545 = vmatprep.mubr.bf16.mxu0 0
    %1546 = vmatmul.mubr.bf16.gmra.mxu0 %v1373
    %v1547 = vpop.f32.mrf.mxu0
    %v1548 = vadd.f32 0.0, %v1547
    %v1549 = vpop.f32.mrf.mxu0
    %v1550 = vpop.f32.mrf.mxu0
    %v1551 = vadd.f32 0.0, %v1550
    %v1552 = vpop.f32.mrf.mxu0
    %1553 = vmatprep.mubr.bf16.mxu0 0
    %1554 = vmatmul.mubr.bf16.gmra.mxu0 %v1375
    %v1555 = vpop.f32.mrf.mxu0
    %v1556 = vadd.f32 0.0, %v1555
    %v1557 = vpop.f32.mrf.mxu0
    %v1558 = vpop.f32.mrf.mxu0
    %v1559 = vadd.f32 0.0, %v1558
    %v1560 = vpop.f32.mrf.mxu0
    %1561 = vmatprep.mubr.bf16.mxu0 0
    %1562 = vmatmul.mubr.bf16.gmra.mxu0 %v1377
    %v1563 = vpop.f32.mrf.mxu0
    %v1564 = vadd.f32 0.0, %v1563
    %v1565 = vpop.f32.mrf.mxu0
    %v1566 = vpop.f32.mrf.mxu0
    %v1567 = vadd.f32 0.0, %v1566
    %v1568 = vpop.f32.mrf.mxu0
    %1569 = vmatprep.mubr.bf16.mxu0 0
    %1570 = vmatmul.mubr.bf16.gmra.mxu0 %v1379
    %v1571 = vpop.f32.mrf.mxu0
    %v1572 = vadd.f32 0.0, %v1571
    %v1573 = vpop.f32.mrf.mxu0
    %v1574 = vpop.f32.mrf.mxu0
    %v1575 = vadd.f32 0.0, %v1574
    %v1576 = vpop.f32.mrf.mxu0
    %1577 = vmatprep.mubr.bf16.mxu0 0
    %1578 = vmatmul.mubr.bf16.gmra.mxu0 %v1381
    %v1579 = vpop.f32.mrf.mxu0
    %v1580 = vadd.f32 0.0, %v1579
    %v1581 = vpop.f32.mrf.mxu0
    %v1582 = vpop.f32.mrf.mxu0
    %v1583 = vadd.f32 0.0, %v1582
    %v1584 = vpop.f32.mrf.mxu0
    %1585 = vmatprep.mubr.bf16.mxu0 0
    %1586 = vmatmul.mubr.bf16.gmra.mxu0 %v1383
    %v1587 = vpop.f32.mrf.mxu0
    %v1588 = vadd.f32 0.0, %v1587
    %v1589 = vpop.f32.mrf.mxu0
    %v1590 = vpop.f32.mrf.mxu0
    %v1591 = vadd.f32 0.0, %v1590
    %v1592 = vpop.f32.mrf.mxu0
    %1593 = vmatprep.mubr.bf16.mxu0 0
    %1594 = vmatmul.mubr.bf16.gmra.mxu0 %v1385
    %v1595 = vpop.f32.mrf.mxu0
    %v1596 = vadd.f32 0.0, %v1595
    %v1597 = vpop.f32.mrf.mxu0
    %v1598 = vpop.f32.mrf.mxu0
    %v1599 = vadd.f32 0.0, %v1598
    %v1600 = vpop.f32.mrf.mxu0
    %1601 = vmatprep.mubr.bf16.mxu0 0
    %1602 = vmatmul.mubr.bf16.gmra.mxu0 %v1387
    %v1603 = vpop.f32.mrf.mxu0
    %v1604 = vadd.f32 0.0, %v1603
    %v1605 = vpop.f32.mrf.mxu0
    %v1606 = vpop.f32.mrf.mxu0
    %v1607 = vadd.f32 0.0, %v1606
    %v1608 = vpop.f32.mrf.mxu0
    %1609 = vmatprep.mubr.bf16.mxu0 0
    %1610 = vmatmul.mubr.bf16.gmra.mxu0 %v1389
    %v1611 = vpop.f32.mrf.mxu0
    %v1612 = vadd.f32 0.0, %v1611
    %v1613 = vpop.f32.mrf.mxu0
    %v1614 = vpop.f32.mrf.mxu0
    %v1615 = vadd.f32 0.0, %v1614
    %v1616 = vpop.f32.mrf.mxu0
    %1617 = vmatprep.mubr.bf16.mxu0 0
    %1618 = vmatmul.mubr.bf16.gmra.mxu0 %v1391
    %v1619 = vpop.f32.mrf.mxu0
    %v1620 = vadd.f32 0.0, %v1619
    %v1621 = vpop.f32.mrf.mxu0
    %v1622 = vpop.f32.mrf.mxu0
    %v1623 = vadd.f32 0.0, %v1622
    %v1624 = vpop.f32.mrf.mxu0
    %1625 = vmatprep.mubr.bf16.mxu0 0
    %1626 = vmatmul.mubr.bf16.gmra.mxu0 %v1393
    %v1627 = vpop.f32.mrf.mxu0
    %v1628 = vadd.f32 0.0, %v1627
    %v1629 = vpop.f32.mrf.mxu0
    %v1630 = vpop.f32.mrf.mxu0
    %v1631 = vadd.f32 0.0, %v1630
    %v1632 = vpop.f32.mrf.mxu0
    %1633 = vmatprep.mubr.bf16.mxu0 0
    %1634 = vmatmul.mubr.bf16.gmra.mxu0 %v1395
    %v1635 = vpop.f32.mrf.mxu0
    %v1636 = vadd.f32 0.0, %v1635
    %v1637 = vpop.f32.mrf.mxu0
    %v1638 = vpop.f32.mrf.mxu0
    %v1639 = vadd.f32 0.0, %v1638
    %v1640 = vpop.f32.mrf.mxu0
    %1641 = vmatprep.mubr.bf16.mxu0 0
    %1642 = vmatmul.mubr.bf16.gmra.mxu0 %v1397
    %v1643 = vpop.f32.mrf.mxu0
    %v1644 = vadd.f32 0.0, %v1643
    %v1645 = vpop.f32.mrf.mxu0
    %v1646 = vpop.f32.mrf.mxu0
    %v1647 = vadd.f32 0.0, %v1646
    %v1648 = vpop.f32.mrf.mxu0
    %1649 = vmatprep.mubr.bf16.mxu0 0
    %1650 = vmatmul.mubr.bf16.gmra.mxu0 %v1399
    %v1651 = vpop.f32.mrf.mxu0
    %v1652 = vadd.f32 0.0, %v1651
    %v1653 = vpop.f32.mrf.mxu0
    %v1654 = vpop.f32.mrf.mxu0
    %v1655 = vadd.f32 0.0, %v1654
    %v1656 = vpop.f32.mrf.mxu0
    %1657 = vmatprep.mubr.bf16.mxu0 0
    %1658 = vmatmul.mubr.bf16.gmra.mxu0 %v1401
    %v1659 = vpop.f32.mrf.mxu0
    %v1660 = vadd.f32 0.0, %v1659
    %v1661 = vpop.f32.mrf.mxu0
    %v1662 = vpop.f32.mrf.mxu0
    %v1663 = vadd.f32 0.0, %v1662
    %v1664 = vpop.f32.mrf.mxu0
    %1665 = vmatprep.mubr.bf16.mxu0 0
    %1666 = vmatmul.mubr.bf16.gmra.mxu0 %v1403
    %v1667 = vpop.f32.mrf.mxu0
    %v1668 = vadd.f32 0.0, %v1667
    %v1669 = vpop.f32.mrf.mxu0
    %v1670 = vpop.f32.mrf.mxu0
    %v1671 = vadd.f32 0.0, %v1670
    %v1672 = vpop.f32.mrf.mxu0
    %1673 = vmatprep.mubr.bf16.mxu0 0
    %1674 = vmatmul.mubr.bf16.gmra.mxu0 %v1405
    %v1675 = vpop.f32.mrf.mxu0
    %v1676 = vadd.f32 0.0, %v1675
    %v1677 = vpop.f32.mrf.mxu0
    %v1678 = vpop.f32.mrf.mxu0
    %v1679 = vadd.f32 0.0, %v1678
    %v1680 = vpop.f32.mrf.mxu0
    %1681 = vmatprep.mubr.bf16.mxu0 0
    %1682 = vmatmul.mubr.bf16.gmra.mxu0 %v1407
    %v1683 = vpop.f32.mrf.mxu0
    %v1684 = vadd.f32 0.0, %v1683
    %v1685 = vpop.f32.mrf.mxu0
    %v1686 = vpop.f32.mrf.mxu0
    %v1687 = vadd.f32 0.0, %v1686
    %v1688 = vpop.f32.mrf.mxu0
    %1689 = vmatprep.mubr.bf16.mxu0 0
    %1690 = vmatmul.mubr.bf16.gmra.mxu0 %v1409
    %v1691 = vpop.f32.mrf.mxu0
    %v1692 = vadd.f32 0.0, %v1691
    %v1693 = vpop.f32.mrf.mxu0
    %v1694 = vpop.f32.mrf.mxu0
    %v1695 = vadd.f32 0.0, %v1694
    %v1696 = vpop.f32.mrf.mxu0
    %1697 = vmatprep.mubr.bf16.mxu0 0
    %1698 = vmatmul.mubr.bf16.gmra.mxu0 %v1411
    %v1699 = vpop.f32.mrf.mxu0
    %v1700 = vadd.f32 0.0, %v1699
    %v1701 = vpop.f32.mrf.mxu0
    %v1702 = vpop.f32.mrf.mxu0
    %v1703 = vadd.f32 0.0, %v1702
    %v1704 = vpop.f32.mrf.mxu0
    %1705 = vdwg.mxu0
    %v1709 = vunpack.c.l.b16 %v1333
    %v1710 = vunpack.c.l.b16 %v1334
    %v1711 = vunpack.c.l.b16 %v1335
    %v1712 = vpack.c.b16 %v1710, %v1709
    %v1713 = vpack.c.b16 %v1711, %v1711
    %v1716 = vsel %vm1413, %v1713, 0
    %1718 = vmatprep.subr.bf16.mxu0 0
    %1719 = vmatpush1.bf16.msra.mxu0 0
    %1720 = vmatprep.subr.bf16.mxu0 0
    %1721 = vmatpush1.bf16.msra.mxu0 0
    %1722 = vmatprep.subr.bf16.mxu0 0
    %1723 = vmatpush1.bf16.msra.mxu0 0
    %1724 = vmatprep.subr.bf16.mxu0 0
    %1725 = vmatpush1.bf16.msra.mxu0 0
    %1726 = vmatprep.subr.bf16.mxu0 0
    %1727 = vmatpush1.bf16.msra.mxu0 0
    %1728 = vmatprep.subr.bf16.mxu0 0
    %1729 = vmatpush1.bf16.msra.mxu0 0
    %1730 = vmatprep.subr.bf16.mxu0 0
    %1731 = vmatpush1.bf16.msra.mxu0 %v1716
    %1732 = vmatprep.subr.bf16.mxu0 0
    %1733 = vmatpush1.bf16.msra.mxu0 %v1712
    %1734 = vmatprep.subr.bf16.mxu0 0
    %1735 = vmatpush2.bf16.msra.mxu0 0
    %1736 = vmatprep.subr.bf16.mxu0 0
    %1737 = vmatpush2.bf16.msra.mxu0 0
    %1738 = vmatprep.subr.bf16.mxu0 0
    %1739 = vmatpush2.bf16.msra.mxu0 0
    %1740 = vmatprep.subr.bf16.mxu0 0
    %1741 = vmatpush2.bf16.msra.mxu0 0
    %1742 = vmatprep.subr.bf16.mxu0 0
    %1743 = vmatpush2.bf16.msra.mxu0 0
    %1744 = vmatprep.subr.bf16.mxu0 0
    %1745 = vmatpush2.bf16.msra.mxu0 0
    %1746 = vmatprep.subr.bf16.mxu0 0
    %1747 = vmatpush2.bf16.msra.mxu0 0
    %1748 = vmatprep.subr.bf16.mxu0 0
    %1749 = vmatpush2.bf16.msra.mxu0 0
    %1750 = vmatprep.mubr.bf16.mxu0 0
    %1751 = vmatmul.mubr.bf16.gmra.mxu0 %v1379
    %v1752 = vpop.f32.mrf.mxu0
    %v1753 = vadd.f32 %v1452, %v1752
    %v1754 = vpop.f32.mrf.mxu0
    %v1755 = vpop.f32.mrf.mxu0
    %v1756 = vadd.f32 %v1455, %v1755
    %v1757 = vpop.f32.mrf.mxu0
    %1758 = vmatprep.mubr.bf16.mxu0 0
    %1759 = vmatmul.mubr.bf16.gmra.mxu0 %v1349
    %v1760 = vpop.f32.mrf.mxu0
    %v1761 = vadd.f32 %v1460, %v1760
    %v1762 = vpop.f32.mrf.mxu0
    %v1763 = vpop.f32.mrf.mxu0
    %v1764 = vadd.f32 %v1463, %v1763
    %v1765 = vpop.f32.mrf.mxu0
    %1766 = vmatprep.mubr.bf16.mxu0 0
    %1767 = vmatmul.mubr.bf16.gmra.mxu0 %v1351
    %v1768 = vpop.f32.mrf.mxu0
    %v1769 = vadd.f32 %v1468, %v1768
    %v1770 = vpop.f32.mrf.mxu0
    %v1771 = vpop.f32.mrf.mxu0
    %v1772 = vadd.f32 %v1471, %v1771
    %v1773 = vpop.f32.mrf.mxu0
    %1774 = vmatprep.mubr.bf16.mxu0 0
    %1775 = vmatmul.mubr.bf16.gmra.mxu0 %v1353
    %v1776 = vpop.f32.mrf.mxu0
    %v1777 = vadd.f32 %v1476, %v1776
    %v1778 = vpop.f32.mrf.mxu0
    %v1779 = vpop.f32.mrf.mxu0
    %v1780 = vadd.f32 %v1479, %v1779
    %v1781 = vpop.f32.mrf.mxu0
    %1782 = vmatprep.mubr.bf16.mxu0 0
    %1783 = vmatmul.mubr.bf16.gmra.mxu0 %v1355
    %v1784 = vpop.f32.mrf.mxu0
    %v1785 = vadd.f32 %v1484, %v1784
    %v1786 = vpop.f32.mrf.mxu0
    %v1787 = vpop.f32.mrf.mxu0
    %v1788 = vadd.f32 %v1487, %v1787
    %v1789 = vpop.f32.mrf.mxu0
    %1790 = vmatprep.mubr.bf16.mxu0 0
    %1791 = vmatmul.mubr.bf16.gmra.mxu0 %v1357
    %v1792 = vpop.f32.mrf.mxu0
    %v1793 = vadd.f32 %v1492, %v1792
    %v1794 = vpop.f32.mrf.mxu0
    %v1795 = vpop.f32.mrf.mxu0
    %v1796 = vadd.f32 %v1495, %v1795
    %v1797 = vpop.f32.mrf.mxu0
    %1798 = vmatprep.mubr.bf16.mxu0 0
    %1799 = vmatmul.mubr.bf16.gmra.mxu0 %v1359
    %v1800 = vpop.f32.mrf.mxu0
    %v1801 = vadd.f32 %v1500, %v1800
    %v1802 = vpop.f32.mrf.mxu0
    %v1803 = vpop.f32.mrf.mxu0
    %v1804 = vadd.f32 %v1503, %v1803
    %v1805 = vpop.f32.mrf.mxu0
    %1806 = vmatprep.mubr.bf16.mxu0 0
    %1807 = vmatmul.mubr.bf16.gmra.mxu0 %v1361
    %v1808 = vpop.f32.mrf.mxu0
    %v1809 = vadd.f32 %v1508, %v1808
    %v1810 = vpop.f32.mrf.mxu0
    %v1811 = vpop.f32.mrf.mxu0
    %v1812 = vadd.f32 %v1511, %v1811
    %v1813 = vpop.f32.mrf.mxu0
    %1814 = vmatprep.mubr.bf16.mxu0 0
    %1815 = vmatmul.mubr.bf16.gmra.mxu0 %v1363
    %v1816 = vpop.f32.mrf.mxu0
    %v1817 = vadd.f32 %v1516, %v1816
    %v1818 = vpop.f32.mrf.mxu0
    %v1819 = vpop.f32.mrf.mxu0
    %v1820 = vadd.f32 %v1519, %v1819
    %v1821 = vpop.f32.mrf.mxu0
    %1822 = vmatprep.mubr.bf16.mxu0 0
    %1823 = vmatmul.mubr.bf16.gmra.mxu0 %v1365
    %v1824 = vpop.f32.mrf.mxu0
    %v1825 = vadd.f32 %v1524, %v1824
    %v1826 = vpop.f32.mrf.mxu0
    %v1827 = vpop.f32.mrf.mxu0
    %v1828 = vadd.f32 %v1527, %v1827
    %v1829 = vpop.f32.mrf.mxu0
    %1830 = vmatprep.mubr.bf16.mxu0 0
    %1831 = vmatmul.mubr.bf16.gmra.mxu0 %v1367
    %v1832 = vpop.f32.mrf.mxu0
    %v1833 = vadd.f32 %v1532, %v1832
    %v1834 = vpop.f32.mrf.mxu0
    %v1835 = vpop.f32.mrf.mxu0
    %v1836 = vadd.f32 %v1535, %v1835
    %v1837 = vpop.f32.mrf.mxu0
    %1838 = vmatprep.mubr.bf16.mxu0 0
    %1839 = vmatmul.mubr.bf16.gmra.mxu0 %v1369
    %v1840 = vpop.f32.mrf.mxu0
    %v1841 = vadd.f32 %v1540, %v1840
    %v1842 = vpop.f32.mrf.mxu0
    %v1843 = vpop.f32.mrf.mxu0
    %v1844 = vadd.f32 %v1543, %v1843
    %v1845 = vpop.f32.mrf.mxu0
    %1846 = vmatprep.mubr.bf16.mxu0 0
    %1847 = vmatmul.mubr.bf16.gmra.mxu0 %v1371
    %v1848 = vpop.f32.mrf.mxu0
    %v1849 = vadd.f32 %v1548, %v1848
    %v1850 = vpop.f32.mrf.mxu0
    %v1851 = vpop.f32.mrf.mxu0
    %v1852 = vadd.f32 %v1551, %v1851
    %v1853 = vpop.f32.mrf.mxu0
    %1854 = vmatprep.mubr.bf16.mxu0 0
    %1855 = vmatmul.mubr.bf16.gmra.mxu0 %v1373
    %v1856 = vpop.f32.mrf.mxu0
    %v1857 = vadd.f32 %v1556, %v1856
    %v1858 = vpop.f32.mrf.mxu0
    %v1859 = vpop.f32.mrf.mxu0
    %v1860 = vadd.f32 %v1559, %v1859
    %v1861 = vpop.f32.mrf.mxu0
    %1862 = vmatprep.mubr.bf16.mxu0 0
    %1863 = vmatmul.mubr.bf16.gmra.mxu0 %v1375
    %v1864 = vpop.f32.mrf.mxu0
    %v1865 = vadd.f32 %v1564, %v1864
    %v1866 = vpop.f32.mrf.mxu0
    %v1867 = vpop.f32.mrf.mxu0
    %v1868 = vadd.f32 %v1567, %v1867
    %v1869 = vpop.f32.mrf.mxu0
    %1870 = vmatprep.mubr.bf16.mxu0 0
    %1871 = vmatmul.mubr.bf16.gmra.mxu0 %v1377
    %v1872 = vpop.f32.mrf.mxu0
    %v1873 = vadd.f32 %v1572, %v1872
    %v1874 = vpop.f32.mrf.mxu0
    %v1875 = vpop.f32.mrf.mxu0
    %v1876 = vadd.f32 %v1575, %v1875
    %v1877 = vpop.f32.mrf.mxu0
    %1878 = vmatprep.mubr.bf16.mxu0 0
    %1879 = vmatmul.mubr.bf16.gmra.mxu0 %v1411
    %v1880 = vpop.f32.mrf.mxu0
    %v1881 = vadd.f32 %v1580, %v1880
    %v1882 = vpop.f32.mrf.mxu0
    %v1883 = vpop.f32.mrf.mxu0
    %v1884 = vadd.f32 %v1583, %v1883
    %v1885 = vpop.f32.mrf.mxu0
    %1886 = vmatprep.mubr.bf16.mxu0 0
    %1887 = vmatmul.mubr.bf16.gmra.mxu0 %v1381
    %v1888 = vpop.f32.mrf.mxu0
    %v1889 = vadd.f32 %v1588, %v1888
    %v1890 = vpop.f32.mrf.mxu0
    %v1891 = vpop.f32.mrf.mxu0
    %v1892 = vadd.f32 %v1591, %v1891
    %v1893 = vpop.f32.mrf.mxu0
    %1894 = vmatprep.mubr.bf16.mxu0 0
    %1895 = vmatmul.mubr.bf16.gmra.mxu0 %v1383
    %v1896 = vpop.f32.mrf.mxu0
    %v1897 = vadd.f32 %v1596, %v1896
    %v1898 = vpop.f32.mrf.mxu0
    %v1899 = vpop.f32.mrf.mxu0
    %v1900 = vadd.f32 %v1599, %v1899
    %v1901 = vpop.f32.mrf.mxu0
    %1902 = vmatprep.mubr.bf16.mxu0 0
    %1903 = vmatmul.mubr.bf16.gmra.mxu0 %v1385
    %v1904 = vpop.f32.mrf.mxu0
    %v1905 = vadd.f32 %v1604, %v1904
    %v1906 = vpop.f32.mrf.mxu0
    %v1907 = vpop.f32.mrf.mxu0
    %v1908 = vadd.f32 %v1607, %v1907
    %v1909 = vpop.f32.mrf.mxu0
    %1910 = vmatprep.mubr.bf16.mxu0 0
    %1911 = vmatmul.mubr.bf16.gmra.mxu0 %v1387
    %v1912 = vpop.f32.mrf.mxu0
    %v1913 = vadd.f32 %v1612, %v1912
    %v1914 = vpop.f32.mrf.mxu0
    %v1915 = vpop.f32.mrf.mxu0
    %v1916 = vadd.f32 %v1615, %v1915
    %v1917 = vpop.f32.mrf.mxu0
    %1918 = vmatprep.mubr.bf16.mxu0 0
    %1919 = vmatmul.mubr.bf16.gmra.mxu0 %v1389
    %v1920 = vpop.f32.mrf.mxu0
    %v1921 = vadd.f32 %v1620, %v1920
    %v1922 = vpop.f32.mrf.mxu0
    %v1923 = vpop.f32.mrf.mxu0
    %v1924 = vadd.f32 %v1623, %v1923
    %v1925 = vpop.f32.mrf.mxu0
    %1926 = vmatprep.mubr.bf16.mxu0 0
    %1927 = vmatmul.mubr.bf16.gmra.mxu0 %v1391
    %v1928 = vpop.f32.mrf.mxu0
    %v1929 = vadd.f32 %v1628, %v1928
    %v1930 = vpop.f32.mrf.mxu0
    %v1931 = vpop.f32.mrf.mxu0
    %v1932 = vadd.f32 %v1631, %v1931
    %v1933 = vpop.f32.mrf.mxu0
    %1934 = vmatprep.mubr.bf16.mxu0 0
    %1935 = vmatmul.mubr.bf16.gmra.mxu0 %v1393
    %v1936 = vpop.f32.mrf.mxu0
    %v1937 = vadd.f32 %v1636, %v1936
    %v1938 = vpop.f32.mrf.mxu0
    %v1939 = vpop.f32.mrf.mxu0
    %v1940 = vadd.f32 %v1639, %v1939
    %v1941 = vpop.f32.mrf.mxu0
    %1942 = vmatprep.mubr.bf16.mxu0 0
    %1943 = vmatmul.mubr.bf16.gmra.mxu0 %v1395
    %v1944 = vpop.f32.mrf.mxu0
    %v1945 = vadd.f32 %v1644, %v1944
    %v1946 = vpop.f32.mrf.mxu0
    %v1947 = vpop.f32.mrf.mxu0
    %v1948 = vadd.f32 %v1647, %v1947
    %v1949 = vpop.f32.mrf.mxu0
    %1950 = vmatprep.mubr.bf16.mxu0 0
    %1951 = vmatmul.mubr.bf16.gmra.mxu0 %v1397
    %v1952 = vpop.f32.mrf.mxu0
    %v1953 = vadd.f32 %v1652, %v1952
    %v1954 = vpop.f32.mrf.mxu0
    %v1955 = vpop.f32.mrf.mxu0
    %v1956 = vadd.f32 %v1655, %v1955
    %v1957 = vpop.f32.mrf.mxu0
    %1958 = vmatprep.mubr.bf16.mxu0 0
    %1959 = vmatmul.mubr.bf16.gmra.mxu0 %v1399
    %v1960 = vpop.f32.mrf.mxu0
    %v1961 = vadd.f32 %v1660, %v1960
    %v1962 = vpop.f32.mrf.mxu0
    %v1963 = vpop.f32.mrf.mxu0
    %v1964 = vadd.f32 %v1663, %v1963
    %v1965 = vpop.f32.mrf.mxu0
    %1966 = vmatprep.mubr.bf16.mxu0 0
    %1967 = vmatmul.mubr.bf16.gmra.mxu0 %v1401
    %v1968 = vpop.f32.mrf.mxu0
    %v1969 = vadd.f32 %v1668, %v1968
    %v1970 = vpop.f32.mrf.mxu0
    %v1971 = vpop.f32.mrf.mxu0
    %v1972 = vadd.f32 %v1671, %v1971
    %v1973 = vpop.f32.mrf.mxu0
    %1974 = vmatprep.mubr.bf16.mxu0 0
    %1975 = vmatmul.mubr.bf16.gmra.mxu0 %v1403
    %v1976 = vpop.f32.mrf.mxu0
    %v1977 = vadd.f32 %v1676, %v1976
    %v1978 = vpop.f32.mrf.mxu0
    %v1979 = vpop.f32.mrf.mxu0
    %v1980 = vadd.f32 %v1679, %v1979
    %v1981 = vpop.f32.mrf.mxu0
    %1982 = vmatprep.mubr.bf16.mxu0 0
    %1983 = vmatmul.mubr.bf16.gmra.mxu0 %v1405
    %v1984 = vpop.f32.mrf.mxu0
    %v1985 = vadd.f32 %v1684, %v1984
    %v1986 = vpop.f32.mrf.mxu0
    %v1987 = vpop.f32.mrf.mxu0
    %v1988 = vadd.f32 %v1687, %v1987
    %v1989 = vpop.f32.mrf.mxu0
    %1990 = vmatprep.mubr.bf16.mxu0 0
    %1991 = vmatmul.mubr.bf16.gmra.mxu0 %v1407
    %v1992 = vpop.f32.mrf.mxu0
    %v1993 = vadd.f32 %v1692, %v1992
    %v1994 = vpop.f32.mrf.mxu0
    %v1995 = vpop.f32.mrf.mxu0
    %v1996 = vadd.f32 %v1695, %v1995
    %v1997 = vpop.f32.mrf.mxu0
    %1998 = vmatprep.mubr.bf16.mxu0 0
    %1999 = vmatmul.mubr.bf16.gmra.mxu0 %v1409
    %v2000 = vpop.f32.mrf.mxu0
    %v2001 = vadd.f32 %v1700, %v2000
    %v2002 = vpop.f32.mrf.mxu0
    %v2003 = vpop.f32.mrf.mxu0
    %v2004 = vadd.f32 %v1703, %v2003
    %v2005 = vpop.f32.mrf.mxu0
    %2006 = vdwg.mxu0
    %v2007 = vld [vmem:[%s0 + $0x18] sm:$0xf]
    %v2008 = vld [vmem:[%s0 + $0x1c] sm:$0xf]
    %v2009 = vld [vmem:[%s0 + $0x20] sm:$0xf]
    %v2013 = vunpack.c.l.b16 %v2007
    %v2014 = vunpack.c.l.b16 %v2008
    %v2015 = vunpack.c.l.b16 %v2009
    %v2016 = vpack.c.b16 %v2014, %v2013
    %v2017 = vpack.c.b16 %v2015, %v2015
    %v2020 = vsel %vm1413, %v2017, 0
    %2022 = vmatprep.subr.bf16.mxu0 0
    %2023 = vmatpush1.bf16.msra.mxu0 0
    %2024 = vmatprep.subr.bf16.mxu0 0
    %2025 = vmatpush1.bf16.msra.mxu0 0
    %2026 = vmatprep.subr.bf16.mxu0 0
    %2027 = vmatpush1.bf16.msra.mxu0 0
    %2028 = vmatprep.subr.bf16.mxu0 0
    %2029 = vmatpush1.bf16.msra.mxu0 0
    %2030 = vmatprep.subr.bf16.mxu0 0
    %2031 = vmatpush1.bf16.msra.mxu0 0
    %2032 = vmatprep.subr.bf16.mxu0 0
    %2033 = vmatpush1.bf16.msra.mxu0 0
    %2034 = vmatprep.subr.bf16.mxu0 0
    %2035 = vmatpush1.bf16.msra.mxu0 %v2020
    %2036 = vmatprep.subr.bf16.mxu0 0
    %2037 = vmatpush1.bf16.msra.mxu0 %v2016
    %2038 = vmatprep.subr.bf16.mxu0 0
    %2039 = vmatpush2.bf16.msra.mxu0 0
    %2040 = vmatprep.subr.bf16.mxu0 0
    %2041 = vmatpush2.bf16.msra.mxu0 0
    %2042 = vmatprep.subr.bf16.mxu0 0
    %2043 = vmatpush2.bf16.msra.mxu0 0
    %2044 = vmatprep.subr.bf16.mxu0 0
    %2045 = vmatpush2.bf16.msra.mxu0 0
    %2046 = vmatprep.subr.bf16.mxu0 0
    %2047 = vmatpush2.bf16.msra.mxu0 0
    %2048 = vmatprep.subr.bf16.mxu0 0
    %2049 = vmatpush2.bf16.msra.mxu0 0
    %2050 = vmatprep.subr.bf16.mxu0 0
    %2051 = vmatpush2.bf16.msra.mxu0 0
    %2052 = vmatprep.subr.bf16.mxu0 0
    %2053 = vmatpush2.bf16.msra.mxu0 0
    %2054 = vmatprep.mubr.bf16.mxu0 0
    %2055 = vmatmul.mubr.bf16.gmra.mxu0 %v1351
    %v2056 = vpop.f32.mrf.mxu0
    %v2057 = vadd.f32 0.0, %v2056
    %v2058 = vpop.f32.mrf.mxu0
    %v2059 = vpop.f32.mrf.mxu0
    %v2060 = vadd.f32 0.0, %v2059
    %v2061 = vpop.f32.mrf.mxu0
    %2062 = vmatprep.mubr.bf16.mxu0 0
    %2063 = vmatmul.mubr.bf16.gmra.mxu0 %v1353
    %v2064 = vpop.f32.mrf.mxu0
    %v2065 = vadd.f32 0.0, %v2064
    %v2066 = vpop.f32.mrf.mxu0
    %v2067 = vpop.f32.mrf.mxu0
    %v2068 = vadd.f32 0.0, %v2067
    %v2069 = vpop.f32.mrf.mxu0
    %2070 = vmatprep.mubr.bf16.mxu0 0
    %2071 = vmatmul.mubr.bf16.gmra.mxu0 %v1355
    %v2072 = vpop.f32.mrf.mxu0
    %v2073 = vadd.f32 0.0, %v2072
    %v2074 = vpop.f32.mrf.mxu0
    %v2075 = vpop.f32.mrf.mxu0
    %v2076 = vadd.f32 0.0, %v2075
    %v2077 = vpop.f32.mrf.mxu0
    %2078 = vmatprep.mubr.bf16.mxu0 0
    %2079 = vmatmul.mubr.bf16.gmra.mxu0 %v1357
    %v2080 = vpop.f32.mrf.mxu0
    %v2081 = vadd.f32 0.0, %v2080
    %v2082 = vpop.f32.mrf.mxu0
    %v2083 = vpop.f32.mrf.mxu0
    %v2084 = vadd.f32 0.0, %v2083
    %v2085 = vpop.f32.mrf.mxu0
    %2086 = vmatprep.mubr.bf16.mxu0 0
    %2087 = vmatmul.mubr.bf16.gmra.mxu0 %v1359
    %v2088 = vpop.f32.mrf.mxu0
    %v2089 = vadd.f32 0.0, %v2088
    %v2090 = vpop.f32.mrf.mxu0
    %v2091 = vpop.f32.mrf.mxu0
    %v2092 = vadd.f32 0.0, %v2091
    %v2093 = vpop.f32.mrf.mxu0
    %2094 = vmatprep.mubr.bf16.mxu0 0
    %2095 = vmatmul.mubr.bf16.gmra.mxu0 %v1361
    %v2096 = vpop.f32.mrf.mxu0
    %v2097 = vadd.f32 0.0, %v2096
    %v2098 = vpop.f32.mrf.mxu0
    %v2099 = vpop.f32.mrf.mxu0
    %v2100 = vadd.f32 0.0, %v2099
    %v2101 = vpop.f32.mrf.mxu0
    %2102 = vmatprep.mubr.bf16.mxu0 0
    %2103 = vmatmul.mubr.bf16.gmra.mxu0 %v1363
    %v2104 = vpop.f32.mrf.mxu0
    %v2105 = vadd.f32 0.0, %v2104
    %v2106 = vpop.f32.mrf.mxu0
    %v2107 = vpop.f32.mrf.mxu0
    %v2108 = vadd.f32 0.0, %v2107
    %v2109 = vpop.f32.mrf.mxu0
    %2110 = vmatprep.mubr.bf16.mxu0 0
    %2111 = vmatmul.mubr.bf16.gmra.mxu0 %v1365
    %v2112 = vpop.f32.mrf.mxu0
    %v2113 = vadd.f32 0.0, %v2112
    %v2114 = vpop.f32.mrf.mxu0
    %v2115 = vpop.f32.mrf.mxu0
    %v2116 = vadd.f32 0.0, %v2115
    %v2117 = vpop.f32.mrf.mxu0
    %2118 = vmatprep.mubr.bf16.mxu0 0
    %2119 = vmatmul.mubr.bf16.gmra.mxu0 %v1367
    %v2120 = vpop.f32.mrf.mxu0
    %v2121 = vadd.f32 0.0, %v2120
    %v2122 = vpop.f32.mrf.mxu0
    %v2123 = vpop.f32.mrf.mxu0
    %v2124 = vadd.f32 0.0, %v2123
    %v2125 = vpop.f32.mrf.mxu0
    %2126 = vmatprep.mubr.bf16.mxu0 0
    %2127 = vmatmul.mubr.bf16.gmra.mxu0 %v1369
    %v2128 = vpop.f32.mrf.mxu0
    %v2129 = vadd.f32 0.0, %v2128
    %v2130 = vpop.f32.mrf.mxu0
    %v2131 = vpop.f32.mrf.mxu0
    %v2132 = vadd.f32 0.0, %v2131
    %v2133 = vpop.f32.mrf.mxu0
    %2134 = vmatprep.mubr.bf16.mxu0 0
    %2135 = vmatmul.mubr.bf16.gmra.mxu0 %v1371
    %v2136 = vpop.f32.mrf.mxu0
    %v2137 = vadd.f32 0.0, %v2136
    %v2138 = vpop.f32.mrf.mxu0
    %v2139 = vpop.f32.mrf.mxu0
    %v2140 = vadd.f32 0.0, %v2139
    %v2141 = vpop.f32.mrf.mxu0
    %2142 = vmatprep.mubr.bf16.mxu0 0
    %2143 = vmatmul.mubr.bf16.gmra.mxu0 %v1373
    %v2144 = vpop.f32.mrf.mxu0
    %v2145 = vadd.f32 0.0, %v2144
    %v2146 = vpop.f32.mrf.mxu0
    %v2147 = vpop.f32.mrf.mxu0
    %v2148 = vadd.f32 0.0, %v2147
    %v2149 = vpop.f32.mrf.mxu0
    %2150 = vmatprep.mubr.bf16.mxu0 0
    %2151 = vmatmul.mubr.bf16.gmra.mxu0 %v1375
    %v2152 = vpop.f32.mrf.mxu0
    %v2153 = vadd.f32 0.0, %v2152
    %v2154 = vpop.f32.mrf.mxu0
    %v2155 = vpop.f32.mrf.mxu0
    %v2156 = vadd.f32 0.0, %v2155
    %v2157 = vpop.f32.mrf.mxu0
    %2158 = vmatprep.mubr.bf16.mxu0 0
    %2159 = vmatmul.mubr.bf16.gmra.mxu0 %v1377
    %v2160 = vpop.f32.mrf.mxu0
    %v2161 = vadd.f32 0.0, %v2160
    %v2162 = vpop.f32.mrf.mxu0
    %v2163 = vpop.f32.mrf.mxu0
    %v2164 = vadd.f32 0.0, %v2163
    %v2165 = vpop.f32.mrf.mxu0
    %2166 = vmatprep.mubr.bf16.mxu0 0
    %2167 = vmatmul.mubr.bf16.gmra.mxu0 %v1379
    %v2168 = vpop.f32.mrf.mxu0
    %v2169 = vadd.f32 0.0, %v2168
    %v2170 = vpop.f32.mrf.mxu0
    %v2171 = vpop.f32.mrf.mxu0
    %v2172 = vadd.f32 0.0, %v2171
    %v2173 = vpop.f32.mrf.mxu0
    %2174 = vmatprep.mubr.bf16.mxu0 0
    %2175 = vmatmul.mubr.bf16.gmra.mxu0 %v1349
    %v2176 = vpop.f32.mrf.mxu0
    %v2177 = vadd.f32 0.0, %v2176
    %v2178 = vpop.f32.mrf.mxu0
    %v2179 = vpop.f32.mrf.mxu0
    %v2180 = vadd.f32 0.0, %v2179
    %v2181 = vpop.f32.mrf.mxu0
    %2182 = vmatprep.mubr.bf16.mxu0 0
    %2183 = vmatmul.mubr.bf16.gmra.mxu0 %v1383
    %v2184 = vpop.f32.mrf.mxu0
    %v2185 = vadd.f32 0.0, %v2184
    %v2186 = vpop.f32.mrf.mxu0
    %v2187 = vpop.f32.mrf.mxu0
    %v2188 = vadd.f32 0.0, %v2187
    %v2189 = vpop.f32.mrf.mxu0
    %2190 = vmatprep.mubr.bf16.mxu0 0
    %2191 = vmatmul.mubr.bf16.gmra.mxu0 %v1385
    %v2192 = vpop.f32.mrf.mxu0
    %v2193 = vadd.f32 0.0, %v2192
    %v2194 = vpop.f32.mrf.mxu0
    %v2195 = vpop.f32.mrf.mxu0
    %v2196 = vadd.f32 0.0, %v2195
    %v2197 = vpop.f32.mrf.mxu0
    %2198 = vmatprep.mubr.bf16.mxu0 0
    %2199 = vmatmul.mubr.bf16.gmra.mxu0 %v1387
    %v2200 = vpop.f32.mrf.mxu0
    %v2201 = vadd.f32 0.0, %v2200
    %v2202 = vpop.f32.mrf.mxu0
    %v2203 = vpop.f32.mrf.mxu0
    %v2204 = vadd.f32 0.0, %v2203
    %v2205 = vpop.f32.mrf.mxu0
    %2206 = vmatprep.mubr.bf16.mxu0 0
    %2207 = vmatmul.mubr.bf16.gmra.mxu0 %v1389
    %v2208 = vpop.f32.mrf.mxu0
    %v2209 = vadd.f32 0.0, %v2208
    %v2210 = vpop.f32.mrf.mxu0
    %v2211 = vpop.f32.mrf.mxu0
    %v2212 = vadd.f32 0.0, %v2211
    %v2213 = vpop.f32.mrf.mxu0
    %2214 = vmatprep.mubr.bf16.mxu0 0
    %2215 = vmatmul.mubr.bf16.gmra.mxu0 %v1391
    %v2216 = vpop.f32.mrf.mxu0
    %v2217 = vadd.f32 0.0, %v2216
    %v2218 = vpop.f32.mrf.mxu0
    %v2219 = vpop.f32.mrf.mxu0
    %v2220 = vadd.f32 0.0, %v2219
    %v2221 = vpop.f32.mrf.mxu0
    %2222 = vmatprep.mubr.bf16.mxu0 0
    %2223 = vmatmul.mubr.bf16.gmra.mxu0 %v1393
    %v2224 = vpop.f32.mrf.mxu0
    %v2225 = vadd.f32 0.0, %v2224
    %v2226 = vpop.f32.mrf.mxu0
    %v2227 = vpop.f32.mrf.mxu0
    %v2228 = vadd.f32 0.0, %v2227
    %v2229 = vpop.f32.mrf.mxu0
    %2230 = vmatprep.mubr.bf16.mxu0 0
    %2231 = vmatmul.mubr.bf16.gmra.mxu0 %v1395
    %v2232 = vpop.f32.mrf.mxu0
    %v2233 = vadd.f32 0.0, %v2232
    %v2234 = vpop.f32.mrf.mxu0
    %v2235 = vpop.f32.mrf.mxu0
    %v2236 = vadd.f32 0.0, %v2235
    %v2237 = vpop.f32.mrf.mxu0
    %2238 = vmatprep.mubr.bf16.mxu0 0
    %2239 = vmatmul.mubr.bf16.gmra.mxu0 %v1397
    %v2240 = vpop.f32.mrf.mxu0
    %v2241 = vadd.f32 0.0, %v2240
    %v2242 = vpop.f32.mrf.mxu0
    %v2243 = vpop.f32.mrf.mxu0
    %v2244 = vadd.f32 0.0, %v2243
    %v2245 = vpop.f32.mrf.mxu0
    %2246 = vmatprep.mubr.bf16.mxu0 0
    %2247 = vmatmul.mubr.bf16.gmra.mxu0 %v1399
    %v2248 = vpop.f32.mrf.mxu0
    %v2249 = vadd.f32 0.0, %v2248
    %v2250 = vpop.f32.mrf.mxu0
    %v2251 = vpop.f32.mrf.mxu0
    %v2252 = vadd.f32 0.0, %v2251
    %v2253 = vpop.f32.mrf.mxu0
    %2254 = vmatprep.mubr.bf16.mxu0 0
    %2255 = vmatmul.mubr.bf16.gmra.mxu0 %v1401
    %v2256 = vpop.f32.mrf.mxu0
    %v2257 = vadd.f32 0.0, %v2256
    %v2258 = vpop.f32.mrf.mxu0
    %v2259 = vpop.f32.mrf.mxu0
    %v2260 = vadd.f32 0.0, %v2259
    %v2261 = vpop.f32.mrf.mxu0
    %2262 = vmatprep.mubr.bf16.mxu0 0
    %2263 = vmatmul.mubr.bf16.gmra.mxu0 %v1403
    %v2264 = vpop.f32.mrf.mxu0
    %v2265 = vadd.f32 0.0, %v2264
    %v2266 = vpop.f32.mrf.mxu0
    %v2267 = vpop.f32.mrf.mxu0
    %v2268 = vadd.f32 0.0, %v2267
    %v2269 = vpop.f32.mrf.mxu0
    %2270 = vmatprep.mubr.bf16.mxu0 0
    %2271 = vmatmul.mubr.bf16.gmra.mxu0 %v1405
    %v2272 = vpop.f32.mrf.mxu0
    %v2273 = vadd.f32 0.0, %v2272
    %v2274 = vpop.f32.mrf.mxu0
    %v2275 = vpop.f32.mrf.mxu0
    %v2276 = vadd.f32 0.0, %v2275
    %v2277 = vpop.f32.mrf.mxu0
    %2278 = vmatprep.mubr.bf16.mxu0 0
    %2279 = vmatmul.mubr.bf16.gmra.mxu0 %v1407
    %v2280 = vpop.f32.mrf.mxu0
    %v2281 = vadd.f32 0.0, %v2280
    %v2282 = vpop.f32.mrf.mxu0
    %v2283 = vpop.f32.mrf.mxu0
    %v2284 = vadd.f32 0.0, %v2283
    %v2285 = vpop.f32.mrf.mxu0
    %2286 = vmatprep.mubr.bf16.mxu0 0
    %2287 = vmatmul.mubr.bf16.gmra.mxu0 %v1409
    %v2288 = vpop.f32.mrf.mxu0
    %v2289 = vadd.f32 0.0, %v2288
    %v2290 = vpop.f32.mrf.mxu0
    %v2291 = vpop.f32.mrf.mxu0
    %v2292 = vadd.f32 0.0, %v2291
    %v2293 = vpop.f32.mrf.mxu0
    %2294 = vmatprep.mubr.bf16.mxu0 0
    %2295 = vmatmul.mubr.bf16.gmra.mxu0 %v1411
    %v2296 = vpop.f32.mrf.mxu0
    %v2297 = vadd.f32 0.0, %v2296
    %v2298 = vpop.f32.mrf.mxu0
    %v2299 = vpop.f32.mrf.mxu0
    %v2300 = vadd.f32 0.0, %v2299
    %v2301 = vpop.f32.mrf.mxu0
    %2302 = vmatprep.mubr.bf16.mxu0 0
    %2303 = vmatmul.mubr.bf16.gmra.mxu0 %v1381
    %v2304 = vpop.f32.mrf.mxu0
    %v2305 = vadd.f32 0.0, %v2304
    %v2306 = vpop.f32.mrf.mxu0
    %v2307 = vpop.f32.mrf.mxu0
    %v2308 = vadd.f32 0.0, %v2307
    %v2309 = vpop.f32.mrf.mxu0
    %2310 = vdwg.mxu0
    %v2311 = vadd.f32 %v1753, %v2057
    %v2312 = vadd.f32 %v1756, %v2060
    %v2313 = vadd.f32 %v1761, %v2065
    %v2314 = vadd.f32 %v1764, %v2068
    %v2315 = vadd.f32 %v1769, %v2073
    %v2316 = vadd.f32 %v1772, %v2076
    %v2317 = vadd.f32 %v1777, %v2081
    %v2318 = vadd.f32 %v1780, %v2084
    %v2319 = vadd.f32 %v1785, %v2089
    %v2320 = vadd.f32 %v1788, %v2092
    %v2321 = vadd.f32 %v1793, %v2097
    %v2322 = vadd.f32 %v1796, %v2100
    %v2323 = vadd.f32 %v1801, %v2105
    %v2324 = vadd.f32 %v1804, %v2108
    %v2325 = vadd.f32 %v1809, %v2113
    %v2326 = vadd.f32 %v1812, %v2116
    %v2327 = vadd.f32 %v1817, %v2121
    %v2328 = vadd.f32 %v1820, %v2124
    %v2329 = vadd.f32 %v1825, %v2129
    %v2330 = vadd.f32 %v1828, %v2132
    %v2331 = vadd.f32 %v1833, %v2137
    %v2332 = vadd.f32 %v1836, %v2140
    %v2333 = vadd.f32 %v1841, %v2145
    %v2334 = vadd.f32 %v1844, %v2148
    %v2335 = vadd.f32 %v1849, %v2153
    %v2336 = vadd.f32 %v1852, %v2156
    %v2337 = vadd.f32 %v1857, %v2161
    %v2338 = vadd.f32 %v1860, %v2164
    %v2339 = vadd.f32 %v1865, %v2169
    %v2340 = vadd.f32 %v1868, %v2172
    %v2341 = vadd.f32 %v1873, %v2177
    %v2342 = vadd.f32 %v1876, %v2180
    %v2343 = vadd.f32 %v1881, %v2185
    %v2344 = vadd.f32 %v1884, %v2188
    %v2345 = vadd.f32 %v1889, %v2193
    %v2346 = vadd.f32 %v1892, %v2196
    %v2347 = vadd.f32 %v1897, %v2201
    %v2348 = vadd.f32 %v1900, %v2204
    %v2349 = vadd.f32 %v1905, %v2209
    %v2350 = vadd.f32 %v1908, %v2212
    %v2351 = vadd.f32 %v1913, %v2217
    %v2352 = vadd.f32 %v1916, %v2220
    %v2353 = vadd.f32 %v1921, %v2225
    %v2354 = vadd.f32 %v1924, %v2228
    %v2355 = vadd.f32 %v1929, %v2233
    %v2356 = vadd.f32 %v1932, %v2236
    %v2357 = vadd.f32 %v1937, %v2241
    %v2358 = vadd.f32 %v1940, %v2244
    %v2359 = vadd.f32 %v1945, %v2249
    %v2360 = vadd.f32 %v1948, %v2252
    %v2361 = vadd.f32 %v1953, %v2257
    %v2362 = vadd.f32 %v1956, %v2260
    %v2363 = vadd.f32 %v1961, %v2265
    %v2364 = vadd.f32 %v1964, %v2268
    %v2365 = vadd.f32 %v1969, %v2273
    %v2366 = vadd.f32 %v1972, %v2276
    %v2367 = vadd.f32 %v1977, %v2281
    %v2368 = vadd.f32 %v1980, %v2284
    %v2369 = vadd.f32 %v1985, %v2289
    %v2370 = vadd.f32 %v1988, %v2292
    %v2371 = vadd.f32 %v1993, %v2297
    %v2372 = vadd.f32 %v1996, %v2300
    %v2373 = vadd.f32 %v2001, %v2305
    %v2374 = vadd.f32 %v2004, %v2308
    %v2375 = vld [vmem:[%s1] sm:$0x1]
    %v2376 = vlaneseq
    %v2377 = vshrl.u32 %v2376, 7
    %v2378 = vsub.s32 0, %v2377
    %v2379 = vrot.slane %v2375, %v2378
    %v2380 = vadd.f32 %v2311, %v2379
    %v2381 = vadd.f32 %v2312, %v2379
    %v2382 = vadd.f32 %v2313, %v2379
    %v2383 = vadd.f32 %v2314, %v2379
    %v2384 = vadd.f32 %v2315, %v2379
    %v2385 = vadd.f32 %v2316, %v2379
    %v2386 = vadd.f32 %v2317, %v2379
    %v2387 = vadd.f32 %v2318, %v2379
    %v2388 = vadd.f32 %v2319, %v2379
    %v2389 = vadd.f32 %v2320, %v2379
    %v2390 = vadd.f32 %v2321, %v2379
    %v2391 = vadd.f32 %v2322, %v2379
    %v2392 = vadd.f32 %v2323, %v2379
    %v2393 = vadd.f32 %v2324, %v2379
    %v2394 = vadd.f32 %v2325, %v2379
    %v2395 = vadd.f32 %v2326, %v2379
    %v2396 = vadd.f32 %v2327, %v2379
    %v2397 = vadd.f32 %v2328, %v2379
    %v2398 = vadd.f32 %v2329, %v2379
    %v2399 = vadd.f32 %v2330, %v2379
    %v2400 = vadd.f32 %v2331, %v2379
    %v2401 = vadd.f32 %v2332, %v2379
    %v2402 = vadd.f32 %v2333, %v2379
    %v2403 = vadd.f32 %v2334, %v2379
    %v2404 = vadd.f32 %v2335, %v2379
    %v2405 = vadd.f32 %v2336, %v2379
    %v2406 = vadd.f32 %v2337, %v2379
    %v2407 = vadd.f32 %v2338, %v2379
    %v2408 = vadd.f32 %v2339, %v2379
    %v2409 = vadd.f32 %v2340, %v2379
    %v2410 = vadd.f32 %v2341, %v2379
    %v2411 = vadd.f32 %v2342, %v2379
    %v2412 = vadd.f32 %v2343, %v2379
    %v2413 = vadd.f32 %v2344, %v2379
    %v2414 = vadd.f32 %v2345, %v2379
    %v2415 = vadd.f32 %v2346, %v2379
    %v2416 = vadd.f32 %v2347, %v2379
    %v2417 = vadd.f32 %v2348, %v2379
    %v2418 = vadd.f32 %v2349, %v2379
    %v2419 = vadd.f32 %v2350, %v2379
    %v2420 = vadd.f32 %v2351, %v2379
    %v2421 = vadd.f32 %v2352, %v2379
    %v2422 = vadd.f32 %v2353, %v2379
    %v2423 = vadd.f32 %v2354, %v2379
    %v2424 = vadd.f32 %v2355, %v2379
    %v2425 = vadd.f32 %v2356, %v2379
    %v2426 = vadd.f32 %v2357, %v2379
    %v2427 = vadd.f32 %v2358, %v2379
    %v2428 = vadd.f32 %v2359, %v2379
    %v2429 = vadd.f32 %v2360, %v2379
    %v2430 = vadd.f32 %v2361, %v2379
    %v2431 = vadd.f32 %v2362, %v2379
    %v2432 = vadd.f32 %v2363, %v2379
    %v2433 = vadd.f32 %v2364, %v2379
    %v2434 = vadd.f32 %v2365, %v2379
    %v2435 = vadd.f32 %v2366, %v2379
    %v2436 = vadd.f32 %v2367, %v2379
    %v2437 = vadd.f32 %v2368, %v2379
    %v2438 = vadd.f32 %v2369, %v2379
    %v2439 = vadd.f32 %v2370, %v2379
    %v2440 = vadd.f32 %v2371, %v2379
    %v2441 = vadd.f32 %v2372, %v2379
    %v2442 = vadd.f32 %v2373, %v2379
    %v2443 = vadd.f32 %v2374, %v2379
    %v2444 = vmax.f32 %v2380, 0.0
    %v2445 = vmax.f32 %v2381, 0.0
    %v2446 = vmax.f32 %v2382, 0.0
    %v2447 = vmax.f32 %v2383, 0.0
    %v2448 = vmax.f32 %v2384, 0.0
    %v2449 = vmax.f32 %v2385, 0.0
    %v2450 = vmax.f32 %v2386, 0.0
    %v2451 = vmax.f32 %v2387, 0.0
    %v2452 = vmax.f32 %v2388, 0.0
    %v2453 = vmax.f32 %v2389, 0.0
    %v2454 = vmax.f32 %v2390, 0.0
    %v2455 = vmax.f32 %v2391, 0.0
    %v2456 = vmax.f32 %v2392, 0.0
    %v2457 = vmax.f32 %v2393, 0.0
    %v2458 = vmax.f32 %v2394, 0.0
    %v2459 = vmax.f32 %v2395, 0.0
    %v2460 = vmax.f32 %v2396, 0.0
    %v2461 = vmax.f32 %v2397, 0.0
    %v2462 = vmax.f32 %v2398, 0.0
    %v2463 = vmax.f32 %v2399, 0.0
    %v2464 = vmax.f32 %v2400, 0.0
    %v2465 = vmax.f32 %v2401, 0.0
    %v2466 = vmax.f32 %v2402, 0.0
    %v2467 = vmax.f32 %v2403, 0.0
    %v2468 = vmax.f32 %v2404, 0.0
    %v2469 = vmax.f32 %v2405, 0.0
    %v2470 = vmax.f32 %v2406, 0.0
    %v2471 = vmax.f32 %v2407, 0.0
    %v2472 = vmax.f32 %v2408, 0.0
    %v2473 = vmax.f32 %v2409, 0.0
    %v2474 = vmax.f32 %v2410, 0.0
    %v2475 = vmax.f32 %v2411, 0.0
    %v2476 = vmax.f32 %v2412, 0.0
    %v2477 = vmax.f32 %v2413, 0.0
    %v2478 = vmax.f32 %v2414, 0.0
    %v2479 = vmax.f32 %v2415, 0.0
    %v2480 = vmax.f32 %v2416, 0.0
    %v2481 = vmax.f32 %v2417, 0.0
    %v2482 = vmax.f32 %v2418, 0.0
    %v2483 = vmax.f32 %v2419, 0.0
    %v2484 = vmax.f32 %v2420, 0.0
    %v2485 = vmax.f32 %v2421, 0.0
    %v2486 = vmax.f32 %v2422, 0.0
    %v2487 = vmax.f32 %v2423, 0.0
    %v2488 = vmax.f32 %v2424, 0.0
    %v2489 = vmax.f32 %v2425, 0.0
    %v2490 = vmax.f32 %v2426, 0.0
    %v2491 = vmax.f32 %v2427, 0.0
    %v2492 = vmax.f32 %v2428, 0.0
    %v2493 = vmax.f32 %v2429, 0.0
    %v2494 = vmax.f32 %v2430, 0.0
    %v2495 = vmax.f32 %v2431, 0.0
    %v2496 = vmax.f32 %v2432, 0.0
    %v2497 = vmax.f32 %v2433, 0.0
    %v2498 = vmax.f32 %v2434, 0.0
    %v2499 = vmax.f32 %v2435, 0.0
    %v2500 = vmax.f32 %v2436, 0.0
    %v2501 = vmax.f32 %v2437, 0.0
    %v2502 = vmax.f32 %v2438, 0.0
    %v2503 = vmax.f32 %v2439, 0.0
    %v2504 = vmax.f32 %v2440, 0.0
    %v2505 = vmax.f32 %v2441, 0.0
    %v2506 = vmax.f32 %v2442, 0.0
    %v2507 = vmax.f32 %v2443, 0.0
    %v2508 = vpack.c.bf16 %v2445, %v2444
    %v2509 = vpack.c.bf16 %v2447, %v2446
    %v2510 = vpack.c.bf16 %v2449, %v2448
    %v2511 = vpack.c.bf16 %v2451, %v2450
    %v2512 = vpack.c.bf16 %v2453, %v2452
    %v2513 = vpack.c.bf16 %v2455, %v2454
    %v2514 = vpack.c.bf16 %v2457, %v2456
    %v2515 = vpack.c.bf16 %v2459, %v2458
    %v2516 = vpack.c.bf16 %v2461, %v2460
    %v2517 = vpack.c.bf16 %v2463, %v2462
    %v2518 = vpack.c.bf16 %v2465, %v2464
    %v2519 = vpack.c.bf16 %v2467, %v2466
    %v2520 = vpack.c.bf16 %v2469, %v2468
    %v2521 = vpack.c.bf16 %v2471, %v2470
    %v2522 = vpack.c.bf16 %v2473, %v2472
    %v2523 = vpack.c.bf16 %v2475, %v2474
    %v2524 = vpack.c.bf16 %v2477, %v2476
    %v2525 = vpack.c.bf16 %v2479, %v2478
    %v2526 = vpack.c.bf16 %v2481, %v2480
    %v2527 = vpack.c.bf16 %v2483, %v2482
    %v2528 = vpack.c.bf16 %v2485, %v2484
    %v2529 = vpack.c.bf16 %v2487, %v2486
    %v2530 = vpack.c.bf16 %v2489, %v2488
    %v2531 = vpack.c.bf16 %v2491, %v2490
    %v2532 = vpack.c.bf16 %v2493, %v2492
    %v2533 = vpack.c.bf16 %v2495, %v2494
    %v2534 = vpack.c.bf16 %v2497, %v2496
    %v2535 = vpack.c.bf16 %v2499, %v2498
    %v2536 = vpack.c.bf16 %v2501, %v2500
    %v2537 = vpack.c.bf16 %v2503, %v2502
    %v2538 = vpack.c.bf16 %v2505, %v2504
    %v2539 = vpack.c.bf16 %v2507, %v2506
    %v2541 = vshrl.u32 %v2508, 16
    %v2543 = vrot.slane %v2541, 7
    %v2545 = vshrl.u32 %v2509, 16
    %v2547 = vrot.slane %v2545, 7
    %v2549 = vshrl.u32 %v2510, 16
    %v2551 = vrot.slane %v2549, 7
    %v2553 = vshrl.u32 %v2511, 16
    %v2555 = vrot.slane %v2553, 7
    %v2557 = vshrl.u32 %v2512, 16
    %v2559 = vrot.slane %v2557, 7
    %v2561 = vshrl.u32 %v2513, 16
    %v2563 = vrot.slane %v2561, 7
    %v2565 = vshrl.u32 %v2514, 16
    %v2567 = vrot.slane %v2565, 7
    %v2569 = vshrl.u32 %v2515, 16
    %v2571 = vrot.slane %v2569, 7
    %v2573 = vshrl.u32 %v2516, 16
    %v2575 = vrot.slane %v2573, 7
    %v2577 = vshrl.u32 %v2517, 16
    %v2579 = vrot.slane %v2577, 7
    %v2581 = vshrl.u32 %v2518, 16
    %v2583 = vrot.slane %v2581, 7
    %v2585 = vshrl.u32 %v2519, 16
    %v2587 = vrot.slane %v2585, 7
    %v2589 = vshrl.u32 %v2520, 16
    %v2591 = vrot.slane %v2589, 7
    %v2593 = vshrl.u32 %v2521, 16
    %v2595 = vrot.slane %v2593, 7
    %v2597 = vshrl.u32 %v2522, 16
    %v2599 = vrot.slane %v2597, 7
    %v2601 = vshrl.u32 %v2523, 16
    %v2603 = vrot.slane %v2601, 7
    %v2605 = vshrl.u32 %v2524, 16
    %v2607 = vrot.slane %v2605, 7
    %v2609 = vshrl.u32 %v2525, 16
    %v2611 = vrot.slane %v2609, 7
    %v2613 = vshrl.u32 %v2526, 16
    %v2615 = vrot.slane %v2613, 7
    %v2617 = vshrl.u32 %v2527, 16
    %v2619 = vrot.slane %v2617, 7
    %v2621 = vshrl.u32 %v2528, 16
    %v2623 = vrot.slane %v2621, 7
    %v2625 = vshrl.u32 %v2529, 16
    %v2627 = vrot.slane %v2625, 7
    %v2629 = vshrl.u32 %v2530, 16
    %v2631 = vrot.slane %v2629, 7
    %v2633 = vshrl.u32 %v2531, 16
    %v2635 = vrot.slane %v2633, 7
    %v2637 = vshrl.u32 %v2532, 16
    %v2639 = vrot.slane %v2637, 7
    %v2641 = vshrl.u32 %v2533, 16
    %v2643 = vrot.slane %v2641, 7
    %v2645 = vshrl.u32 %v2534, 16
    %v2647 = vrot.slane %v2645, 7
    %v2649 = vshrl.u32 %v2535, 16
    %v2651 = vrot.slane %v2649, 7
    %v2653 = vshrl.u32 %v2536, 16
    %v2655 = vrot.slane %v2653, 7
    %v2657 = vshrl.u32 %v2537, 16
    %v2659 = vrot.slane %v2657, 7
    %v2661 = vshrl.u32 %v2538, 16
    %v2663 = vrot.slane %v2661, 7
    %v2665 = vshrl.u32 %v2539, 16
    %v2667 = vrot.slane %v2665, 7
    %v2700 = vshll.u32 %v2508, 16
    %v2702 = vor.u32 %v2543, %v2700
    %v2703 = vshll.u32 %v2509, 16
    %v2705 = vor.u32 %v2547, %v2703
    %v2706 = vshll.u32 %v2510, 16
    %v2708 = vor.u32 %v2551, %v2706
    %v2709 = vshll.u32 %v2511, 16
    %v2711 = vor.u32 %v2555, %v2709
    %v2712 = vshll.u32 %v2512, 16
    %v2714 = vor.u32 %v2559, %v2712
    %v2715 = vshll.u32 %v2513, 16
    %v2717 = vor.u32 %v2563, %v2715
    %v2718 = vshll.u32 %v2514, 16
    %v2720 = vor.u32 %v2567, %v2718
    %v2721 = vshll.u32 %v2515, 16
    %v2723 = vor.u32 %v2571, %v2721
    %v2724 = vshll.u32 %v2516, 16
    %v2726 = vor.u32 %v2575, %v2724
    %v2727 = vshll.u32 %v2517, 16
    %v2729 = vor.u32 %v2579, %v2727
    %v2730 = vshll.u32 %v2518, 16
    %v2732 = vor.u32 %v2583, %v2730
    %v2733 = vshll.u32 %v2519, 16
    %v2735 = vor.u32 %v2587, %v2733
    %v2736 = vshll.u32 %v2520, 16
    %v2738 = vor.u32 %v2591, %v2736
    %v2739 = vshll.u32 %v2521, 16
    %v2741 = vor.u32 %v2595, %v2739
    %v2742 = vshll.u32 %v2522, 16
    %v2744 = vor.u32 %v2599, %v2742
    %v2745 = vshll.u32 %v2523, 16
    %v2747 = vor.u32 %v2603, %v2745
    %v2748 = vshll.u32 %v2524, 16
    %v2750 = vor.u32 %v2607, %v2748
    %v2751 = vshll.u32 %v2525, 16
    %v2753 = vor.u32 %v2611, %v2751
    %v2754 = vshll.u32 %v2526, 16
    %v2756 = vor.u32 %v2615, %v2754
    %v2757 = vshll.u32 %v2527, 16
    %v2759 = vor.u32 %v2619, %v2757
    %v2760 = vshll.u32 %v2528, 16
    %v2762 = vor.u32 %v2623, %v2760
    %v2763 = vshll.u32 %v2529, 16
    %v2765 = vor.u32 %v2627, %v2763
    %v2766 = vshll.u32 %v2530, 16
    %v2768 = vor.u32 %v2631, %v2766
    %v2769 = vshll.u32 %v2531, 16
    %v2771 = vor.u32 %v2635, %v2769
    %v2772 = vshll.u32 %v2532, 16
    %v2774 = vor.u32 %v2639, %v2772
    %v2775 = vshll.u32 %v2533, 16
    %v2777 = vor.u32 %v2643, %v2775
    %v2778 = vshll.u32 %v2534, 16
    %v2780 = vor.u32 %v2647, %v2778
    %v2781 = vshll.u32 %v2535, 16
    %v2783 = vor.u32 %v2651, %v2781
    %v2784 = vshll.u32 %v2536, 16
    %v2786 = vor.u32 %v2655, %v2784
    %v2787 = vshll.u32 %v2537, 16
    %v2789 = vor.u32 %v2659, %v2787
    %v2790 = vshll.u32 %v2538, 16
    %v2792 = vor.u32 %v2663, %v2790
    %v2793 = vshll.u32 %v2539, 16
    %v2795 = vor.u32 %v2667, %v2793
    %v2828 = vsel %vm783, %v2543, %v2702
    %v2829 = vsel %vm783, %v2547, %v2705
    %v2830 = vsel %vm783, %v2551, %v2708
    %v2831 = vsel %vm783, %v2555, %v2711
    %v2832 = vsel %vm783, %v2559, %v2714
    %v2833 = vsel %vm783, %v2563, %v2717
    %v2834 = vsel %vm783, %v2567, %v2720
    %v2835 = vsel %vm783, %v2571, %v2723
    %v2836 = vsel %vm783, %v2575, %v2726
    %v2837 = vsel %vm783, %v2579, %v2729
    %v2838 = vsel %vm783, %v2583, %v2732
    %v2839 = vsel %vm783, %v2587, %v2735
    %v2840 = vsel %vm783, %v2591, %v2738
    %v2841 = vsel %vm783, %v2595, %v2741
    %v2842 = vsel %vm783, %v2599, %v2744
    %v2843 = vsel %vm783, %v2603, %v2747
    %v2844 = vsel %vm783, %v2607, %v2750
    %v2845 = vsel %vm783, %v2611, %v2753
    %v2846 = vsel %vm783, %v2615, %v2756
    %v2847 = vsel %vm783, %v2619, %v2759
    %v2848 = vsel %vm783, %v2623, %v2762
    %v2849 = vsel %vm783, %v2627, %v2765
    %v2850 = vsel %vm783, %v2631, %v2768
    %v2851 = vsel %vm783, %v2635, %v2771
    %v2852 = vsel %vm783, %v2639, %v2774
    %v2853 = vsel %vm783, %v2643, %v2777
    %v2854 = vsel %vm783, %v2647, %v2780
    %v2855 = vsel %vm783, %v2651, %v2783
    %v2856 = vsel %vm783, %v2655, %v2786
    %v2857 = vsel %vm783, %v2659, %v2789
    %v2858 = vsel %vm783, %v2663, %v2792
    %v2859 = vsel %vm783, %v2667, %v2795
    %v2860 = vrot.slane %v2700, 1
    %v2861 = vor.u32 %v2541, %v2860
    %v2862 = vrot.slane %v2703, 1
    %v2863 = vor.u32 %v2545, %v2862
    %v2864 = vrot.slane %v2706, 1
    %v2865 = vor.u32 %v2549, %v2864
    %v2866 = vrot.slane %v2709, 1
    %v2867 = vor.u32 %v2553, %v2866
    %v2868 = vrot.slane %v2712, 1
    %v2869 = vor.u32 %v2557, %v2868
    %v2870 = vrot.slane %v2715, 1
    %v2871 = vor.u32 %v2561, %v2870
    %v2872 = vrot.slane %v2718, 1
    %v2873 = vor.u32 %v2565, %v2872
    %v2874 = vrot.slane %v2721, 1
    %v2875 = vor.u32 %v2569, %v2874
    %v2876 = vrot.slane %v2724, 1
    %v2877 = vor.u32 %v2573, %v2876
    %v2878 = vrot.slane %v2727, 1
    %v2879 = vor.u32 %v2577, %v2878
    %v2880 = vrot.slane %v2730, 1
    %v2881 = vor.u32 %v2581, %v2880
    %v2882 = vrot.slane %v2733, 1
    %v2883 = vor.u32 %v2585, %v2882
    %v2884 = vrot.slane %v2736, 1
    %v2885 = vor.u32 %v2589, %v2884
    %v2886 = vrot.slane %v2739, 1
    %v2887 = vor.u32 %v2593, %v2886
    %v2888 = vrot.slane %v2742, 1
    %v2889 = vor.u32 %v2597, %v2888
    %v2890 = vrot.slane %v2745, 1
    %v2891 = vor.u32 %v2601, %v2890
    %v2892 = vrot.slane %v2748, 1
    %v2893 = vor.u32 %v2605, %v2892
    %v2894 = vrot.slane %v2751, 1
    %v2895 = vor.u32 %v2609, %v2894
    %v2896 = vrot.slane %v2754, 1
    %v2897 = vor.u32 %v2613, %v2896
    %v2898 = vrot.slane %v2757, 1
    %v2899 = vor.u32 %v2617, %v2898
    %v2900 = vrot.slane %v2760, 1
    %v2901 = vor.u32 %v2621, %v2900
    %v2902 = vrot.slane %v2763, 1
    %v2903 = vor.u32 %v2625, %v2902
    %v2904 = vrot.slane %v2766, 1
    %v2905 = vor.u32 %v2629, %v2904
    %v2906 = vrot.slane %v2769, 1
    %v2907 = vor.u32 %v2633, %v2906
    %v2908 = vrot.slane %v2772, 1
    %v2909 = vor.u32 %v2637, %v2908
    %v2910 = vrot.slane %v2775, 1
    %v2911 = vor.u32 %v2641, %v2910
    %v2912 = vrot.slane %v2778, 1
    %v2913 = vor.u32 %v2645, %v2912
    %v2914 = vrot.slane %v2781, 1
    %v2915 = vor.u32 %v2649, %v2914
    %v2916 = vrot.slane %v2784, 1
    %v2917 = vor.u32 %v2653, %v2916
    %v2918 = vrot.slane %v2787, 1
    %v2919 = vor.u32 %v2657, %v2918
    %v2920 = vrot.slane %v2790, 1
    %v2921 = vor.u32 %v2661, %v2920
    %v2922 = vrot.slane %v2793, 1
    %v2923 = vor.u32 %v2665, %v2922
    %v2988 = vsel %vm946, %v2861, %v2860
    %v2989 = vsel %vm946, %v2863, %v2862
    %v2990 = vsel %vm946, %v2865, %v2864
    %v2991 = vsel %vm946, %v2867, %v2866
    %v2992 = vsel %vm946, %v2869, %v2868
    %v2993 = vsel %vm946, %v2871, %v2870
    %v2994 = vsel %vm946, %v2873, %v2872
    %v2995 = vsel %vm946, %v2875, %v2874
    %v2996 = vsel %vm946, %v2877, %v2876
    %v2997 = vsel %vm946, %v2879, %v2878
    %v2998 = vsel %vm946, %v2881, %v2880
    %v2999 = vsel %vm946, %v2883, %v2882
    %v3000 = vsel %vm946, %v2885, %v2884
    %v3001 = vsel %vm946, %v2887, %v2886
    %v3002 = vsel %vm946, %v2889, %v2888
    %v3003 = vsel %vm946, %v2891, %v2890
    %v3004 = vsel %vm946, %v2893, %v2892
    %v3005 = vsel %vm946, %v2895, %v2894
    %v3006 = vsel %vm946, %v2897, %v2896
    %v3007 = vsel %vm946, %v2899, %v2898
    %v3008 = vsel %vm946, %v2901, %v2900
    %v3009 = vsel %vm946, %v2903, %v2902
    %v3010 = vsel %vm946, %v2905, %v2904
    %v3011 = vsel %vm946, %v2907, %v2906
    %v3012 = vsel %vm946, %v2909, %v2908
    %v3013 = vsel %vm946, %v2911, %v2910
    %v3014 = vsel %vm946, %v2913, %v2912
    %v3015 = vsel %vm946, %v2915, %v2914
    %v3016 = vsel %vm946, %v2917, %v2916
    %v3017 = vsel %vm946, %v2919, %v2918
    %v3018 = vsel %vm946, %v2921, %v2920
    %v3019 = vsel %vm946, %v2923, %v2922
    %3052 = vrot.lane.b32.xlu0 %v2508, 32
    %v3053 = vpop.permute.xlu0 %3052
    %3054 = vrot.lane.b32.xlu0 %v2509, 32
    %v3055 = vpop.permute.xlu0 %3054
    %3056 = vrot.lane.b32.xlu0 %v2510, 32
    %v3057 = vpop.permute.xlu0 %3056
    %3058 = vrot.lane.b32.xlu0 %v2511, 32
    %v3059 = vpop.permute.xlu0 %3058
    %3060 = vrot.lane.b32.xlu0 %v2512, 32
    %v3061 = vpop.permute.xlu0 %3060
    %3062 = vrot.lane.b32.xlu0 %v2513, 32
    %v3063 = vpop.permute.xlu0 %3062
    %3064 = vrot.lane.b32.xlu0 %v2514, 32
    %v3065 = vpop.permute.xlu0 %3064
    %3066 = vrot.lane.b32.xlu0 %v2515, 32
    %v3067 = vpop.permute.xlu0 %3066
    %3068 = vrot.lane.b32.xlu0 %v2516, 32
    %v3069 = vpop.permute.xlu0 %3068
    %3070 = vrot.lane.b32.xlu0 %v2517, 32
    %v3071 = vpop.permute.xlu0 %3070
    %3072 = vrot.lane.b32.xlu0 %v2518, 32
    %v3073 = vpop.permute.xlu0 %3072
    %3074 = vrot.lane.b32.xlu0 %v2519, 32
    %v3075 = vpop.permute.xlu0 %3074
    %3076 = vrot.lane.b32.xlu0 %v2520, 32
    %v3077 = vpop.permute.xlu0 %3076
    %3078 = vrot.lane.b32.xlu0 %v2521, 32
    %v3079 = vpop.permute.xlu0 %3078
    %3080 = vrot.lane.b32.xlu0 %v2522, 32
    %v3081 = vpop.permute.xlu0 %3080
    %3082 = vrot.lane.b32.xlu0 %v2523, 32
    %v3083 = vpop.permute.xlu0 %3082
    %3084 = vrot.lane.b32.xlu0 %v2524, 32
    %v3085 = vpop.permute.xlu0 %3084
    %3086 = vrot.lane.b32.xlu0 %v2525, 32
    %v3087 = vpop.permute.xlu0 %3086
    %3088 = vrot.lane.b32.xlu0 %v2526, 32
    %v3089 = vpop.permute.xlu0 %3088
    %3090 = vrot.lane.b32.xlu0 %v2527, 32
    %v3091 = vpop.permute.xlu0 %3090
    %3092 = vrot.lane.b32.xlu0 %v2528, 32
    %v3093 = vpop.permute.xlu0 %3092
    %3094 = vrot.lane.b32.xlu0 %v2529, 32
    %v3095 = vpop.permute.xlu0 %3094
    %3096 = vrot.lane.b32.xlu0 %v2530, 32
    %v3097 = vpop.permute.xlu0 %3096
    %3098 = vrot.lane.b32.xlu0 %v2531, 32
    %v3099 = vpop.permute.xlu0 %3098
    %3100 = vrot.lane.b32.xlu0 %v2532, 32
    %v3101 = vpop.permute.xlu0 %3100
    %3102 = vrot.lane.b32.xlu0 %v2533, 32
    %v3103 = vpop.permute.xlu0 %3102
    %3104 = vrot.lane.b32.xlu0 %v2534, 32
    %v3105 = vpop.permute.xlu0 %3104
    %3106 = vrot.lane.b32.xlu0 %v2535, 32
    %v3107 = vpop.permute.xlu0 %3106
    %3108 = vrot.lane.b32.xlu0 %v2536, 32
    %v3109 = vpop.permute.xlu0 %3108
    %3110 = vrot.lane.b32.xlu0 %v2537, 32
    %v3111 = vpop.permute.xlu0 %3110
    %3112 = vrot.lane.b32.xlu0 %v2538, 32
    %v3113 = vpop.permute.xlu0 %3112
    %3114 = vrot.lane.b32.xlu0 %v2539, 32
    %v3115 = vpop.permute.xlu0 %3114
    %3148 = vrot.lane.b32.xlu0 %v2988, 64
    %v3149 = vpop.permute.xlu0 %3148
    %3150 = vrot.lane.b32.xlu0 %v2989, 64
    %v3151 = vpop.permute.xlu0 %3150
    %3152 = vrot.lane.b32.xlu0 %v2990, 64
    %v3153 = vpop.permute.xlu0 %3152
    %3154 = vrot.lane.b32.xlu0 %v2991, 64
    %v3155 = vpop.permute.xlu0 %3154
    %3156 = vrot.lane.b32.xlu0 %v2992, 64
    %v3157 = vpop.permute.xlu0 %3156
    %3158 = vrot.lane.b32.xlu0 %v2993, 64
    %v3159 = vpop.permute.xlu0 %3158
    %3160 = vrot.lane.b32.xlu0 %v2994, 64
    %v3161 = vpop.permute.xlu0 %3160
    %3162 = vrot.lane.b32.xlu0 %v2995, 64
    %v3163 = vpop.permute.xlu0 %3162
    %3164 = vrot.lane.b32.xlu0 %v2996, 64
    %v3165 = vpop.permute.xlu0 %3164
    %3166 = vrot.lane.b32.xlu0 %v2997, 64
    %v3167 = vpop.permute.xlu0 %3166
    %3168 = vrot.lane.b32.xlu0 %v2998, 64
    %v3169 = vpop.permute.xlu0 %3168
    %3170 = vrot.lane.b32.xlu0 %v2999, 64
    %v3171 = vpop.permute.xlu0 %3170
    %3172 = vrot.lane.b32.xlu0 %v3000, 64
    %v3173 = vpop.permute.xlu0 %3172
    %3174 = vrot.lane.b32.xlu0 %v3001, 64
    %v3175 = vpop.permute.xlu0 %3174
    %3176 = vrot.lane.b32.xlu0 %v3002, 64
    %v3177 = vpop.permute.xlu0 %3176
    %3178 = vrot.lane.b32.xlu0 %v3003, 64
    %v3179 = vpop.permute.xlu0 %3178
    %3180 = vrot.lane.b32.xlu0 %v3004, 64
    %v3181 = vpop.permute.xlu0 %3180
    %3182 = vrot.lane.b32.xlu0 %v3005, 64
    %v3183 = vpop.permute.xlu0 %3182
    %3184 = vrot.lane.b32.xlu0 %v3006, 64
    %v3185 = vpop.permute.xlu0 %3184
    %3186 = vrot.lane.b32.xlu0 %v3007, 64
    %v3187 = vpop.permute.xlu0 %3186
    %3188 = vrot.lane.b32.xlu0 %v3008, 64
    %v3189 = vpop.permute.xlu0 %3188
    %3190 = vrot.lane.b32.xlu0 %v3009, 64
    %v3191 = vpop.permute.xlu0 %3190
    %3192 = vrot.lane.b32.xlu0 %v3010, 64
    %v3193 = vpop.permute.xlu0 %3192
    %3194 = vrot.lane.b32.xlu0 %v3011, 64
    %v3195 = vpop.permute.xlu0 %3194
    %3196 = vrot.lane.b32.xlu0 %v3012, 64
    %v3197 = vpop.permute.xlu0 %3196
    %3198 = vrot.lane.b32.xlu0 %v3013, 64
    %v3199 = vpop.permute.xlu0 %3198
    %3200 = vrot.lane.b32.xlu0 %v3014, 64
    %v3201 = vpop.permute.xlu0 %3200
    %3202 = vrot.lane.b32.xlu0 %v3015, 64
    %v3203 = vpop.permute.xlu0 %3202
    %3204 = vrot.lane.b32.xlu0 %v3016, 64
    %v3205 = vpop.permute.xlu0 %3204
    %3206 = vrot.lane.b32.xlu0 %v3017, 64
    %v3207 = vpop.permute.xlu0 %3206
    %3208 = vrot.lane.b32.xlu0 %v3018, 64
    %v3209 = vpop.permute.xlu0 %3208
    %3210 = vrot.lane.b32.xlu0 %v3019, 64
    %v3211 = vpop.permute.xlu0 %3210
    %vm3212 = vcmask 261120
    %v3215 = vsel %vm3212, %v2828, %v3053
    %v3218 = vsel %vm3212, %v2829, %v3055
    %v3221 = vsel %vm3212, %v2830, %v3057
    %v3224 = vsel %vm3212, %v2831, %v3059
    %v3227 = vsel %vm3212, %v2832, %v3061
    %v3230 = vsel %vm3212, %v2833, %v3063
    %v3233 = vsel %vm3212, %v2834, %v3065
    %v3236 = vsel %vm3212, %v2835, %v3067
    %v3239 = vsel %vm3212, %v2836, %v3069
    %v3242 = vsel %vm3212, %v2837, %v3071
    %v3245 = vsel %vm3212, %v2838, %v3073
    %v3248 = vsel %vm3212, %v2839, %v3075
    %v3251 = vsel %vm3212, %v2840, %v3077
    %v3254 = vsel %vm3212, %v2841, %v3079
    %v3257 = vsel %vm3212, %v2842, %v3081
    %v3260 = vsel %vm3212, %v2843, %v3083
    %v3263 = vsel %vm3212, %v2844, %v3085
    %v3266 = vsel %vm3212, %v2845, %v3087
    %v3269 = vsel %vm3212, %v2846, %v3089
    %v3272 = vsel %vm3212, %v2847, %v3091
    %v3275 = vsel %vm3212, %v2848, %v3093
    %v3278 = vsel %vm3212, %v2849, %v3095
    %v3281 = vsel %vm3212, %v2850, %v3097
    %v3284 = vsel %vm3212, %v2851, %v3099
    %v3287 = vsel %vm3212, %v2852, %v3101
    %v3290 = vsel %vm3212, %v2853, %v3103
    %v3293 = vsel %vm3212, %v2854, %v3105
    %v3296 = vsel %vm3212, %v2855, %v3107
    %v3299 = vsel %vm3212, %v2856, %v3109
    %v3302 = vsel %vm3212, %v2857, %v3111
    %v3305 = vsel %vm3212, %v2858, %v3113
    %v3308 = vsel %vm3212, %v2859, %v3115
    %vm3309 = vcmask 523264
    %v3311 = vsel %vm3309, %v3215, %v3149
    %v3313 = vsel %vm3309, %v3218, %v3151
    %v3315 = vsel %vm3309, %v3221, %v3153
    %v3317 = vsel %vm3309, %v3224, %v3155
    %v3319 = vsel %vm3309, %v3227, %v3157
    %v3321 = vsel %vm3309, %v3230, %v3159
    %v3323 = vsel %vm3309, %v3233, %v3161
    %v3325 = vsel %vm3309, %v3236, %v3163
    %v3327 = vsel %vm3309, %v3239, %v3165
    %v3329 = vsel %vm3309, %v3242, %v3167
    %v3331 = vsel %vm3309, %v3245, %v3169
    %v3333 = vsel %vm3309, %v3248, %v3171
    %v3335 = vsel %vm3309, %v3251, %v3173
    %v3337 = vsel %vm3309, %v3254, %v3175
    %v3339 = vsel %vm3309, %v3257, %v3177
    %v3341 = vsel %vm3309, %v3260, %v3179
    %v3343 = vsel %vm3309, %v3263, %v3181
    %v3345 = vsel %vm3309, %v3266, %v3183
    %v3347 = vsel %vm3309, %v3269, %v3185
    %v3349 = vsel %vm3309, %v3272, %v3187
    %v3351 = vsel %vm3309, %v3275, %v3189
    %v3353 = vsel %vm3309, %v3278, %v3191
    %v3355 = vsel %vm3309, %v3281, %v3193
    %v3357 = vsel %vm3309, %v3284, %v3195
    %v3359 = vsel %vm3309, %v3287, %v3197
    %v3361 = vsel %vm3309, %v3290, %v3199
    %v3363 = vsel %vm3309, %v3293, %v3201
    %v3365 = vsel %vm3309, %v3296, %v3203
    %v3367 = vsel %vm3309, %v3299, %v3205
    %v3369 = vsel %vm3309, %v3302, %v3207
    %v3371 = vsel %vm3309, %v3305, %v3209
    %v3373 = vsel %vm3309, %v3308, %v3211
    %v3374 = vld [vmem:[%s0 + $0x24] sm:$0xf]
    %v3375 = vld [vmem:[%s0 + $0x28] sm:$0xf]
    %v3376 = vld [vmem:[%s0 + $0x2c] sm:$0xf]
    %v3377 = vld [vmem:[%s0 + $0x30] sm:$0xf]
    %v3378 = vld [vmem:[%s0 + $0x34] sm:$0xf]
    %v3379 = vld [vmem:[%s0 + $0x38] sm:$0xf]
    %v3380 = vld [vmem:[%s0 + $0x3c] sm:$0xf]
    %v3381 = vld [vmem:[%s0 + $0x40] sm:$0xf]
    %v3382 = vld [vmem:[%s0 + $0x44] sm:$0xf]
    %v3383 = vld [vmem:[%s0 + $0x48] sm:$0xf]
    %v3384 = vld [vmem:[%s0 + $0x4c] sm:$0xf]
    %v3385 = vld [vmem:[%s0 + $0x50] sm:$0xf]
    %v3386 = vld [vmem:[%s0 + $0x54] sm:$0xf]
    %v3387 = vld [vmem:[%s0 + $0x58] sm:$0xf]
    %v3388 = vld [vmem:[%s0 + $0x5c] sm:$0xf]
    %v3389 = vld [vmem:[%s0 + $0x60] sm:$0xf]
    %v3390 = vld [vmem:[%s0 + $0x64] sm:$0xf]
    %v3391 = vld [vmem:[%s0 + $0x68] sm:$0xf]
    %v3392 = vld [vmem:[%s0 + $0x6c] sm:$0xf]
    %v3393 = vld [vmem:[%s0 + $0x70] sm:$0xf]
    %v3394 = vld [vmem:[%s0 + $0x74] sm:$0xf]
    %v3395 = vld [vmem:[%s0 + $0x78] sm:$0xf]
    %v3396 = vld [vmem:[%s0 + $0x7c] sm:$0xf]
    %v3397 = vld [vmem:[%s0 + $0x80] sm:$0xf]
    %v3410 = vunpack.c.l.b16 %v3386
    %v3411 = vunpack.c.l.b16 %v3387
    %v3412 = vunpack.c.l.b16 %v3388
    %v3413 = vunpack.c.l.b16 %v3389
    %v3414 = vunpack.c.l.b16 %v3390
    %v3415 = vunpack.c.l.b16 %v3391
    %v3416 = vunpack.c.l.b16 %v3392
    %v3417 = vunpack.c.l.b16 %v3393
    %v3418 = vunpack.c.l.b16 %v3394
    %v3419 = vunpack.c.l.b16 %v3395
    %v3420 = vunpack.c.l.b16 %v3396
    %v3421 = vunpack.c.l.b16 %v3397
    %v3422 = vpack.c.b16 %v3411, %v3410
    %v3423 = vpack.c.b16 %v3413, %v3412
    %v3424 = vpack.c.b16 %v3415, %v3414
    %v3425 = vpack.c.b16 %v3417, %v3416
    %v3426 = vpack.c.b16 %v3419, %v3418
    %v3427 = vpack.c.b16 %v3421, %v3420
    %vm3434 = vcmask 785408
    %v3435 = vsel %vm3434, %v3311, 0
    %v3437 = vsel %vm3434, %v3313, 0
    %v3439 = vsel %vm3434, %v3315, 0
    %v3441 = vsel %vm3434, %v3317, 0
    %v3443 = vsel %vm3434, %v3319, 0
    %v3445 = vsel %vm3434, %v3321, 0
    %v3447 = vsel %vm3434, %v3323, 0
    %v3449 = vsel %vm3434, %v3325, 0
    %v3451 = vsel %vm3434, %v3327, 0
    %v3453 = vsel %vm3434, %v3329, 0
    %v3455 = vsel %vm3434, %v3331, 0
    %v3457 = vsel %vm3434, %v3333, 0
    %v3459 = vsel %vm3434, %v3335, 0
    %v3461 = vsel %vm3434, %v3337, 0
    %v3463 = vsel %vm3434, %v3339, 0
    %v3465 = vsel %vm3434, %v3341, 0
    %v3467 = vsel %vm3434, %v3343, 0
    %v3469 = vsel %vm3434, %v3345, 0
    %v3471 = vsel %vm3434, %v3347, 0
    %v3473 = vsel %vm3434, %v3349, 0
    %v3475 = vsel %vm3434, %v3351, 0
    %v3477 = vsel %vm3434, %v3353, 0
    %v3479 = vsel %vm3434, %v3355, 0
    %v3481 = vsel %vm3434, %v3357, 0
    %v3483 = vsel %vm3434, %v3359, 0
    %v3485 = vsel %vm3434, %v3361, 0
    %v3487 = vsel %vm3434, %v3363, 0
    %v3489 = vsel %vm3434, %v3365, 0
    %v3491 = vsel %vm3434, %v3367, 0
    %v3493 = vsel %vm3434, %v3369, 0
    %v3495 = vsel %vm3434, %v3371, 0
    %v3497 = vsel %vm3434, %v3373, 0
    %3499 = vmatprep.subr.bf16.mxu0 0
    %3500 = vmatpush1.bf16.msra.mxu0 0
    %3501 = vmatprep.subr.bf16.mxu0 0
    %3502 = vmatpush1.bf16.msra.mxu0 0
    %3503 = vmatprep.subr.bf16.mxu0 0
    %3504 = vmatpush1.bf16.msra.mxu0 %v3427
    %3505 = vmatprep.subr.bf16.mxu0 0
    %3506 = vmatpush1.bf16.msra.mxu0 %v3426
    %3507 = vmatprep.subr.bf16.mxu0 0
    %3508 = vmatpush1.bf16.msra.mxu0 %v3425
    %3509 = vmatprep.subr.bf16.mxu0 0
    %3510 = vmatpush1.bf16.msra.mxu0 %v3424
    %3511 = vmatprep.subr.bf16.mxu0 0
    %3512 = vmatpush1.bf16.msra.mxu0 %v3423
    %3513 = vmatprep.subr.bf16.mxu0 0
    %3514 = vmatpush1.bf16.msra.mxu0 %v3422
    %3515 = vmatprep.subr.bf16.mxu0 0
    %3516 = vmatpush2.bf16.msra.mxu0 0
    %3517 = vmatprep.subr.bf16.mxu0 0
    %3518 = vmatpush2.bf16.msra.mxu0 0
    %3519 = vmatprep.subr.bf16.mxu0 0
    %3520 = vmatpush2.bf16.msra.mxu0 0
    %3521 = vmatprep.subr.bf16.mxu0 0
    %3522 = vmatpush2.bf16.msra.mxu0 0
    %3523 = vmatprep.subr.bf16.mxu0 0
    %3524 = vmatpush2.bf16.msra.mxu0 0
    %3525 = vmatprep.subr.bf16.mxu0 0
    %3526 = vmatpush2.bf16.msra.mxu0 0
    %3527 = vmatprep.subr.bf16.mxu0 0
    %3528 = vmatpush2.bf16.msra.mxu0 0
    %3529 = vmatprep.subr.bf16.mxu0 0
    %3530 = vmatpush2.bf16.msra.mxu0 0
    %3531 = vmatprep.mubr.bf16.mxu0 0
    %3532 = vmatmul.mubr.bf16.gmra.mxu0 %v3435
    %v3533 = vpop.f32.mrf.mxu0
    %v3534 = vadd.f32 0.0, %v3533
    %v3535 = vpop.f32.mrf.mxu0
    %v3536 = vpop.f32.mrf.mxu0
    %v3537 = vadd.f32 0.0, %v3536
    %v3538 = vpop.f32.mrf.mxu0
    %3539 = vmatprep.mubr.bf16.mxu0 0
    %3540 = vmatmul.mubr.bf16.gmra.mxu0 %v3437
    %v3541 = vpop.f32.mrf.mxu0
    %v3542 = vadd.f32 0.0, %v3541
    %v3543 = vpop.f32.mrf.mxu0
    %v3544 = vpop.f32.mrf.mxu0
    %v3545 = vadd.f32 0.0, %v3544
    %v3546 = vpop.f32.mrf.mxu0
    %3547 = vmatprep.mubr.bf16.mxu0 0
    %3548 = vmatmul.mubr.bf16.gmra.mxu0 %v3439
    %v3549 = vpop.f32.mrf.mxu0
    %v3550 = vadd.f32 0.0, %v3549
    %v3551 = vpop.f32.mrf.mxu0
    %v3552 = vpop.f32.mrf.mxu0
    %v3553 = vadd.f32 0.0, %v3552
    %v3554 = vpop.f32.mrf.mxu0
    %3555 = vmatprep.mubr.bf16.mxu0 0
    %3556 = vmatmul.mubr.bf16.gmra.mxu0 %v3441
    %v3557 = vpop.f32.mrf.mxu0
    %v3558 = vadd.f32 0.0, %v3557
    %v3559 = vpop.f32.mrf.mxu0
    %v3560 = vpop.f32.mrf.mxu0
    %v3561 = vadd.f32 0.0, %v3560
    %v3562 = vpop.f32.mrf.mxu0
    %3563 = vmatprep.mubr.bf16.mxu0 0
    %3564 = vmatmul.mubr.bf16.gmra.mxu0 %v3443
    %v3565 = vpop.f32.mrf.mxu0
    %v3566 = vadd.f32 0.0, %v3565
    %v3567 = vpop.f32.mrf.mxu0
    %v3568 = vpop.f32.mrf.mxu0
    %v3569 = vadd.f32 0.0, %v3568
    %v3570 = vpop.f32.mrf.mxu0
    %3571 = vmatprep.mubr.bf16.mxu0 0
    %3572 = vmatmul.mubr.bf16.gmra.mxu0 %v3445
    %v3573 = vpop.f32.mrf.mxu0
    %v3574 = vadd.f32 0.0, %v3573
    %v3575 = vpop.f32.mrf.mxu0
    %v3576 = vpop.f32.mrf.mxu0
    %v3577 = vadd.f32 0.0, %v3576
    %v3578 = vpop.f32.mrf.mxu0
    %3579 = vmatprep.mubr.bf16.mxu0 0
    %3580 = vmatmul.mubr.bf16.gmra.mxu0 %v3447
    %v3581 = vpop.f32.mrf.mxu0
    %v3582 = vadd.f32 0.0, %v3581
    %v3583 = vpop.f32.mrf.mxu0
    %v3584 = vpop.f32.mrf.mxu0
    %v3585 = vadd.f32 0.0, %v3584
    %v3586 = vpop.f32.mrf.mxu0
    %3587 = vmatprep.mubr.bf16.mxu0 0
    %3588 = vmatmul.mubr.bf16.gmra.mxu0 %v3449
    %v3589 = vpop.f32.mrf.mxu0
    %v3590 = vadd.f32 0.0, %v3589
    %v3591 = vpop.f32.mrf.mxu0
    %v3592 = vpop.f32.mrf.mxu0
    %v3593 = vadd.f32 0.0, %v3592
    %v3594 = vpop.f32.mrf.mxu0
    %3595 = vmatprep.mubr.bf16.mxu0 0
    %3596 = vmatmul.mubr.bf16.gmra.mxu0 %v3451
    %v3597 = vpop.f32.mrf.mxu0
    %v3598 = vadd.f32 0.0, %v3597
    %v3599 = vpop.f32.mrf.mxu0
    %v3600 = vpop.f32.mrf.mxu0
    %v3601 = vadd.f32 0.0, %v3600
    %v3602 = vpop.f32.mrf.mxu0
    %3603 = vmatprep.mubr.bf16.mxu0 0
    %3604 = vmatmul.mubr.bf16.gmra.mxu0 %v3453
    %v3605 = vpop.f32.mrf.mxu0
    %v3606 = vadd.f32 0.0, %v3605
    %v3607 = vpop.f32.mrf.mxu0
    %v3608 = vpop.f32.mrf.mxu0
    %v3609 = vadd.f32 0.0, %v3608
    %v3610 = vpop.f32.mrf.mxu0
    %3611 = vmatprep.mubr.bf16.mxu0 0
    %3612 = vmatmul.mubr.bf16.gmra.mxu0 %v3455
    %v3613 = vpop.f32.mrf.mxu0
    %v3614 = vadd.f32 0.0, %v3613
    %v3615 = vpop.f32.mrf.mxu0
    %v3616 = vpop.f32.mrf.mxu0
    %v3617 = vadd.f32 0.0, %v3616
    %v3618 = vpop.f32.mrf.mxu0
    %3619 = vmatprep.mubr.bf16.mxu0 0
    %3620 = vmatmul.mubr.bf16.gmra.mxu0 %v3457
    %v3621 = vpop.f32.mrf.mxu0
    %v3622 = vadd.f32 0.0, %v3621
    %v3623 = vpop.f32.mrf.mxu0
    %v3624 = vpop.f32.mrf.mxu0
    %v3625 = vadd.f32 0.0, %v3624
    %v3626 = vpop.f32.mrf.mxu0
    %3627 = vmatprep.mubr.bf16.mxu0 0
    %3628 = vmatmul.mubr.bf16.gmra.mxu0 %v3459
    %v3629 = vpop.f32.mrf.mxu0
    %v3630 = vadd.f32 0.0, %v3629
    %v3631 = vpop.f32.mrf.mxu0
    %v3632 = vpop.f32.mrf.mxu0
    %v3633 = vadd.f32 0.0, %v3632
    %v3634 = vpop.f32.mrf.mxu0
    %3635 = vmatprep.mubr.bf16.mxu0 0
    %3636 = vmatmul.mubr.bf16.gmra.mxu0 %v3461
    %v3637 = vpop.f32.mrf.mxu0
    %v3638 = vadd.f32 0.0, %v3637
    %v3639 = vpop.f32.mrf.mxu0
    %v3640 = vpop.f32.mrf.mxu0
    %v3641 = vadd.f32 0.0, %v3640
    %v3642 = vpop.f32.mrf.mxu0
    %3643 = vmatprep.mubr.bf16.mxu0 0
    %3644 = vmatmul.mubr.bf16.gmra.mxu0 %v3463
    %v3645 = vpop.f32.mrf.mxu0
    %v3646 = vadd.f32 0.0, %v3645
    %v3647 = vpop.f32.mrf.mxu0
    %v3648 = vpop.f32.mrf.mxu0
    %v3649 = vadd.f32 0.0, %v3648
    %v3650 = vpop.f32.mrf.mxu0
    %3651 = vmatprep.mubr.bf16.mxu0 0
    %3652 = vmatmul.mubr.bf16.gmra.mxu0 %v3465
    %v3653 = vpop.f32.mrf.mxu0
    %v3654 = vadd.f32 0.0, %v3653
    %v3655 = vpop.f32.mrf.mxu0
    %v3656 = vpop.f32.mrf.mxu0
    %v3657 = vadd.f32 0.0, %v3656
    %v3658 = vpop.f32.mrf.mxu0
    %3659 = vmatprep.mubr.bf16.mxu0 0
    %3660 = vmatmul.mubr.bf16.gmra.mxu0 %v3467
    %v3661 = vpop.f32.mrf.mxu0
    %v3662 = vadd.f32 0.0, %v3661
    %v3663 = vpop.f32.mrf.mxu0
    %v3664 = vpop.f32.mrf.mxu0
    %v3665 = vadd.f32 0.0, %v3664
    %v3666 = vpop.f32.mrf.mxu0
    %3667 = vmatprep.mubr.bf16.mxu0 0
    %3668 = vmatmul.mubr.bf16.gmra.mxu0 %v3469
    %v3669 = vpop.f32.mrf.mxu0
    %v3670 = vadd.f32 0.0, %v3669
    %v3671 = vpop.f32.mrf.mxu0
    %v3672 = vpop.f32.mrf.mxu0
    %v3673 = vadd.f32 0.0, %v3672
    %v3674 = vpop.f32.mrf.mxu0
    %3675 = vmatprep.mubr.bf16.mxu0 0
    %3676 = vmatmul.mubr.bf16.gmra.mxu0 %v3471
    %v3677 = vpop.f32.mrf.mxu0
    %v3678 = vadd.f32 0.0, %v3677
    %v3679 = vpop.f32.mrf.mxu0
    %v3680 = vpop.f32.mrf.mxu0
    %v3681 = vadd.f32 0.0, %v3680
    %v3682 = vpop.f32.mrf.mxu0
    %3683 = vmatprep.mubr.bf16.mxu0 0
    %3684 = vmatmul.mubr.bf16.gmra.mxu0 %v3473
    %v3685 = vpop.f32.mrf.mxu0
    %v3686 = vadd.f32 0.0, %v3685
    %v3687 = vpop.f32.mrf.mxu0
    %v3688 = vpop.f32.mrf.mxu0
    %v3689 = vadd.f32 0.0, %v3688
    %v3690 = vpop.f32.mrf.mxu0
    %3691 = vmatprep.mubr.bf16.mxu0 0
    %3692 = vmatmul.mubr.bf16.gmra.mxu0 %v3475
    %v3693 = vpop.f32.mrf.mxu0
    %v3694 = vadd.f32 0.0, %v3693
    %v3695 = vpop.f32.mrf.mxu0
    %v3696 = vpop.f32.mrf.mxu0
    %v3697 = vadd.f32 0.0, %v3696
    %v3698 = vpop.f32.mrf.mxu0
    %3699 = vmatprep.mubr.bf16.mxu0 0
    %3700 = vmatmul.mubr.bf16.gmra.mxu0 %v3477
    %v3701 = vpop.f32.mrf.mxu0
    %v3702 = vadd.f32 0.0, %v3701
    %v3703 = vpop.f32.mrf.mxu0
    %v3704 = vpop.f32.mrf.mxu0
    %v3705 = vadd.f32 0.0, %v3704
    %v3706 = vpop.f32.mrf.mxu0
    %3707 = vmatprep.mubr.bf16.mxu0 0
    %3708 = vmatmul.mubr.bf16.gmra.mxu0 %v3479
    %v3709 = vpop.f32.mrf.mxu0
    %v3710 = vadd.f32 0.0, %v3709
    %v3711 = vpop.f32.mrf.mxu0
    %v3712 = vpop.f32.mrf.mxu0
    %v3713 = vadd.f32 0.0, %v3712
    %v3714 = vpop.f32.mrf.mxu0
    %3715 = vmatprep.mubr.bf16.mxu0 0
    %3716 = vmatmul.mubr.bf16.gmra.mxu0 %v3481
    %v3717 = vpop.f32.mrf.mxu0
    %v3718 = vadd.f32 0.0, %v3717
    %v3719 = vpop.f32.mrf.mxu0
    %v3720 = vpop.f32.mrf.mxu0
    %v3721 = vadd.f32 0.0, %v3720
    %v3722 = vpop.f32.mrf.mxu0
    %3723 = vmatprep.mubr.bf16.mxu0 0
    %3724 = vmatmul.mubr.bf16.gmra.mxu0 %v3483
    %v3725 = vpop.f32.mrf.mxu0
    %v3726 = vadd.f32 0.0, %v3725
    %v3727 = vpop.f32.mrf.mxu0
    %v3728 = vpop.f32.mrf.mxu0
    %v3729 = vadd.f32 0.0, %v3728
    %v3730 = vpop.f32.mrf.mxu0
    %3731 = vmatprep.mubr.bf16.mxu0 0
    %3732 = vmatmul.mubr.bf16.gmra.mxu0 %v3485
    %v3733 = vpop.f32.mrf.mxu0
    %v3734 = vadd.f32 0.0, %v3733
    %v3735 = vpop.f32.mrf.mxu0
    %v3736 = vpop.f32.mrf.mxu0
    %v3737 = vadd.f32 0.0, %v3736
    %v3738 = vpop.f32.mrf.mxu0
    %3739 = vmatprep.mubr.bf16.mxu0 0
    %3740 = vmatmul.mubr.bf16.gmra.mxu0 %v3487
    %v3741 = vpop.f32.mrf.mxu0
    %v3742 = vadd.f32 0.0, %v3741
    %v3743 = vpop.f32.mrf.mxu0
    %v3744 = vpop.f32.mrf.mxu0
    %v3745 = vadd.f32 0.0, %v3744
    %v3746 = vpop.f32.mrf.mxu0
    %3747 = vmatprep.mubr.bf16.mxu0 0
    %3748 = vmatmul.mubr.bf16.gmra.mxu0 %v3489
    %v3749 = vpop.f32.mrf.mxu0
    %v3750 = vadd.f32 0.0, %v3749
    %v3751 = vpop.f32.mrf.mxu0
    %v3752 = vpop.f32.mrf.mxu0
    %v3753 = vadd.f32 0.0, %v3752
    %v3754 = vpop.f32.mrf.mxu0
    %3755 = vmatprep.mubr.bf16.mxu0 0
    %3756 = vmatmul.mubr.bf16.gmra.mxu0 %v3491
    %v3757 = vpop.f32.mrf.mxu0
    %v3758 = vadd.f32 0.0, %v3757
    %v3759 = vpop.f32.mrf.mxu0
    %v3760 = vpop.f32.mrf.mxu0
    %v3761 = vadd.f32 0.0, %v3760
    %v3762 = vpop.f32.mrf.mxu0
    %3763 = vmatprep.mubr.bf16.mxu0 0
    %3764 = vmatmul.mubr.bf16.gmra.mxu0 %v3493
    %v3765 = vpop.f32.mrf.mxu0
    %v3766 = vadd.f32 0.0, %v3765
    %v3767 = vpop.f32.mrf.mxu0
    %v3768 = vpop.f32.mrf.mxu0
    %v3769 = vadd.f32 0.0, %v3768
    %v3770 = vpop.f32.mrf.mxu0
    %3771 = vmatprep.mubr.bf16.mxu0 0
    %3772 = vmatmul.mubr.bf16.gmra.mxu0 %v3495
    %v3773 = vpop.f32.mrf.mxu0
    %v3774 = vadd.f32 0.0, %v3773
    %v3775 = vpop.f32.mrf.mxu0
    %v3776 = vpop.f32.mrf.mxu0
    %v3777 = vadd.f32 0.0, %v3776
    %v3778 = vpop.f32.mrf.mxu0
    %3779 = vmatprep.mubr.bf16.mxu0 0
    %3780 = vmatmul.mubr.bf16.gmra.mxu0 %v3497
    %v3781 = vpop.f32.mrf.mxu0
    %v3782 = vadd.f32 0.0, %v3781
    %v3783 = vpop.f32.mrf.mxu0
    %v3784 = vpop.f32.mrf.mxu0
    %v3785 = vadd.f32 0.0, %v3784
    %v3786 = vpop.f32.mrf.mxu0
    %3787 = vdwg.mxu0
    %v3800 = vunpack.c.l.b16 %v3374
    %v3801 = vunpack.c.l.b16 %v3375
    %v3802 = vunpack.c.l.b16 %v3376
    %v3803 = vunpack.c.l.b16 %v3377
    %v3804 = vunpack.c.l.b16 %v3378
    %v3805 = vunpack.c.l.b16 %v3379
    %v3806 = vunpack.c.l.b16 %v3380
    %v3807 = vunpack.c.l.b16 %v3381
    %v3808 = vunpack.c.l.b16 %v3382
    %v3809 = vunpack.c.l.b16 %v3383
    %v3810 = vunpack.c.l.b16 %v3384
    %v3811 = vunpack.c.l.b16 %v3385
    %v3812 = vpack.c.b16 %v3801, %v3800
    %v3813 = vpack.c.b16 %v3803, %v3802
    %v3814 = vpack.c.b16 %v3805, %v3804
    %v3815 = vpack.c.b16 %v3807, %v3806
    %v3816 = vpack.c.b16 %v3809, %v3808
    %v3817 = vpack.c.b16 %v3811, %v3810
    %3824 = vmatprep.subr.bf16.mxu0 0
    %3825 = vmatpush1.bf16.msra.mxu0 0
    %3826 = vmatprep.subr.bf16.mxu0 0
    %3827 = vmatpush1.bf16.msra.mxu0 0
    %3828 = vmatprep.subr.bf16.mxu0 0
    %3829 = vmatpush1.bf16.msra.mxu0 %v3817
    %3830 = vmatprep.subr.bf16.mxu0 0
    %3831 = vmatpush1.bf16.msra.mxu0 %v3816
    %3832 = vmatprep.subr.bf16.mxu0 0
    %3833 = vmatpush1.bf16.msra.mxu0 %v3815
    %3834 = vmatprep.subr.bf16.mxu0 0
    %3835 = vmatpush1.bf16.msra.mxu0 %v3814
    %3836 = vmatprep.subr.bf16.mxu0 0
    %3837 = vmatpush1.bf16.msra.mxu0 %v3813
    %3838 = vmatprep.subr.bf16.mxu0 0
    %3839 = vmatpush1.bf16.msra.mxu0 %v3812
    %3840 = vmatprep.subr.bf16.mxu0 0
    %3841 = vmatpush2.bf16.msra.mxu0 0
    %3842 = vmatprep.subr.bf16.mxu0 0
    %3843 = vmatpush2.bf16.msra.mxu0 0
    %3844 = vmatprep.subr.bf16.mxu0 0
    %3845 = vmatpush2.bf16.msra.mxu0 0
    %3846 = vmatprep.subr.bf16.mxu0 0
    %3847 = vmatpush2.bf16.msra.mxu0 0
    %3848 = vmatprep.subr.bf16.mxu0 0
    %3849 = vmatpush2.bf16.msra.mxu0 0
    %3850 = vmatprep.subr.bf16.mxu0 0
    %3851 = vmatpush2.bf16.msra.mxu0 0
    %3852 = vmatprep.subr.bf16.mxu0 0
    %3853 = vmatpush2.bf16.msra.mxu0 0
    %3854 = vmatprep.subr.bf16.mxu0 0
    %3855 = vmatpush2.bf16.msra.mxu0 0
    %3856 = vmatprep.mubr.bf16.mxu0 0
    %3857 = vmatmul.mubr.bf16.gmra.mxu0 %v3465
    %v3858 = vpop.f32.mrf.mxu0
    %v3859 = vadd.f32 %v3534, %v3858
    %v3860 = vpop.f32.mrf.mxu0
    %v3861 = vpop.f32.mrf.mxu0
    %v3862 = vadd.f32 %v3537, %v3861
    %v3863 = vpop.f32.mrf.mxu0
    %3864 = vmatprep.mubr.bf16.mxu0 0
    %3865 = vmatmul.mubr.bf16.gmra.mxu0 %v3435
    %v3866 = vpop.f32.mrf.mxu0
    %v3867 = vadd.f32 %v3542, %v3866
    %v3868 = vpop.f32.mrf.mxu0
    %v3869 = vpop.f32.mrf.mxu0
    %v3870 = vadd.f32 %v3545, %v3869
    %v3871 = vpop.f32.mrf.mxu0
    %3872 = vmatprep.mubr.bf16.mxu0 0
    %3873 = vmatmul.mubr.bf16.gmra.mxu0 %v3437
    %v3874 = vpop.f32.mrf.mxu0
    %v3875 = vadd.f32 %v3550, %v3874
    %v3876 = vpop.f32.mrf.mxu0
    %v3877 = vpop.f32.mrf.mxu0
    %v3878 = vadd.f32 %v3553, %v3877
    %v3879 = vpop.f32.mrf.mxu0
    %3880 = vmatprep.mubr.bf16.mxu0 0
    %3881 = vmatmul.mubr.bf16.gmra.mxu0 %v3439
    %v3882 = vpop.f32.mrf.mxu0
    %v3883 = vadd.f32 %v3558, %v3882
    %v3884 = vpop.f32.mrf.mxu0
    %v3885 = vpop.f32.mrf.mxu0
    %v3886 = vadd.f32 %v3561, %v3885
    %v3887 = vpop.f32.mrf.mxu0
    %3888 = vmatprep.mubr.bf16.mxu0 0
    %3889 = vmatmul.mubr.bf16.gmra.mxu0 %v3441
    %v3890 = vpop.f32.mrf.mxu0
    %v3891 = vadd.f32 %v3566, %v3890
    %v3892 = vpop.f32.mrf.mxu0
    %v3893 = vpop.f32.mrf.mxu0
    %v3894 = vadd.f32 %v3569, %v3893
    %v3895 = vpop.f32.mrf.mxu0
    %3896 = vmatprep.mubr.bf16.mxu0 0
    %3897 = vmatmul.mubr.bf16.gmra.mxu0 %v3443
    %v3898 = vpop.f32.mrf.mxu0
    %v3899 = vadd.f32 %v3574, %v3898
    %v3900 = vpop.f32.mrf.mxu0
    %v3901 = vpop.f32.mrf.mxu0
    %v3902 = vadd.f32 %v3577, %v3901
    %v3903 = vpop.f32.mrf.mxu0
    %3904 = vmatprep.mubr.bf16.mxu0 0
    %3905 = vmatmul.mubr.bf16.gmra.mxu0 %v3445
    %v3906 = vpop.f32.mrf.mxu0
    %v3907 = vadd.f32 %v3582, %v3906
    %v3908 = vpop.f32.mrf.mxu0
    %v3909 = vpop.f32.mrf.mxu0
    %v3910 = vadd.f32 %v3585, %v3909
    %v3911 = vpop.f32.mrf.mxu0
    %3912 = vmatprep.mubr.bf16.mxu0 0
    %3913 = vmatmul.mubr.bf16.gmra.mxu0 %v3447
    %v3914 = vpop.f32.mrf.mxu0
    %v3915 = vadd.f32 %v3590, %v3914
    %v3916 = vpop.f32.mrf.mxu0
    %v3917 = vpop.f32.mrf.mxu0
    %v3918 = vadd.f32 %v3593, %v3917
    %v3919 = vpop.f32.mrf.mxu0
    %3920 = vmatprep.mubr.bf16.mxu0 0
    %3921 = vmatmul.mubr.bf16.gmra.mxu0 %v3449
    %v3922 = vpop.f32.mrf.mxu0
    %v3923 = vadd.f32 %v3598, %v3922
    %v3924 = vpop.f32.mrf.mxu0
    %v3925 = vpop.f32.mrf.mxu0
    %v3926 = vadd.f32 %v3601, %v3925
    %v3927 = vpop.f32.mrf.mxu0
    %3928 = vmatprep.mubr.bf16.mxu0 0
    %3929 = vmatmul.mubr.bf16.gmra.mxu0 %v3451
    %v3930 = vpop.f32.mrf.mxu0
    %v3931 = vadd.f32 %v3606, %v3930
    %v3932 = vpop.f32.mrf.mxu0
    %v3933 = vpop.f32.mrf.mxu0
    %v3934 = vadd.f32 %v3609, %v3933
    %v3935 = vpop.f32.mrf.mxu0
    %3936 = vmatprep.mubr.bf16.mxu0 0
    %3937 = vmatmul.mubr.bf16.gmra.mxu0 %v3453
    %v3938 = vpop.f32.mrf.mxu0
    %v3939 = vadd.f32 %v3614, %v3938
    %v3940 = vpop.f32.mrf.mxu0
    %v3941 = vpop.f32.mrf.mxu0
    %v3942 = vadd.f32 %v3617, %v3941
    %v3943 = vpop.f32.mrf.mxu0
    %3944 = vmatprep.mubr.bf16.mxu0 0
    %3945 = vmatmul.mubr.bf16.gmra.mxu0 %v3455
    %v3946 = vpop.f32.mrf.mxu0
    %v3947 = vadd.f32 %v3622, %v3946
    %v3948 = vpop.f32.mrf.mxu0
    %v3949 = vpop.f32.mrf.mxu0
    %v3950 = vadd.f32 %v3625, %v3949
    %v3951 = vpop.f32.mrf.mxu0
    %3952 = vmatprep.mubr.bf16.mxu0 0
    %3953 = vmatmul.mubr.bf16.gmra.mxu0 %v3457
    %v3954 = vpop.f32.mrf.mxu0
    %v3955 = vadd.f32 %v3630, %v3954
    %v3956 = vpop.f32.mrf.mxu0
    %v3957 = vpop.f32.mrf.mxu0
    %v3958 = vadd.f32 %v3633, %v3957
    %v3959 = vpop.f32.mrf.mxu0
    %3960 = vmatprep.mubr.bf16.mxu0 0
    %3961 = vmatmul.mubr.bf16.gmra.mxu0 %v3459
    %v3962 = vpop.f32.mrf.mxu0
    %v3963 = vadd.f32 %v3638, %v3962
    %v3964 = vpop.f32.mrf.mxu0
    %v3965 = vpop.f32.mrf.mxu0
    %v3966 = vadd.f32 %v3641, %v3965
    %v3967 = vpop.f32.mrf.mxu0
    %3968 = vmatprep.mubr.bf16.mxu0 0
    %3969 = vmatmul.mubr.bf16.gmra.mxu0 %v3461
    %v3970 = vpop.f32.mrf.mxu0
    %v3971 = vadd.f32 %v3646, %v3970
    %v3972 = vpop.f32.mrf.mxu0
    %v3973 = vpop.f32.mrf.mxu0
    %v3974 = vadd.f32 %v3649, %v3973
    %v3975 = vpop.f32.mrf.mxu0
    %3976 = vmatprep.mubr.bf16.mxu0 0
    %3977 = vmatmul.mubr.bf16.gmra.mxu0 %v3463
    %v3978 = vpop.f32.mrf.mxu0
    %v3979 = vadd.f32 %v3654, %v3978
    %v3980 = vpop.f32.mrf.mxu0
    %v3981 = vpop.f32.mrf.mxu0
    %v3982 = vadd.f32 %v3657, %v3981
    %v3983 = vpop.f32.mrf.mxu0
    %3984 = vmatprep.mubr.bf16.mxu0 0
    %3985 = vmatmul.mubr.bf16.gmra.mxu0 %v3497
    %v3986 = vpop.f32.mrf.mxu0
    %v3987 = vadd.f32 %v3662, %v3986
    %v3988 = vpop.f32.mrf.mxu0
    %v3989 = vpop.f32.mrf.mxu0
    %v3990 = vadd.f32 %v3665, %v3989
    %v3991 = vpop.f32.mrf.mxu0
    %3992 = vmatprep.mubr.bf16.mxu0 0
    %3993 = vmatmul.mubr.bf16.gmra.mxu0 %v3467
    %v3994 = vpop.f32.mrf.mxu0
    %v3995 = vadd.f32 %v3670, %v3994
    %v3996 = vpop.f32.mrf.mxu0
    %v3997 = vpop.f32.mrf.mxu0
    %v3998 = vadd.f32 %v3673, %v3997
    %v3999 = vpop.f32.mrf.mxu0
    %4000 = vmatprep.mubr.bf16.mxu0 0
    %4001 = vmatmul.mubr.bf16.gmra.mxu0 %v3469
    %v4002 = vpop.f32.mrf.mxu0
    %v4003 = vadd.f32 %v3678, %v4002
    %v4004 = vpop.f32.mrf.mxu0
    %v4005 = vpop.f32.mrf.mxu0
    %v4006 = vadd.f32 %v3681, %v4005
    %v4007 = vpop.f32.mrf.mxu0
    %4008 = vmatprep.mubr.bf16.mxu0 0
    %4009 = vmatmul.mubr.bf16.gmra.mxu0 %v3471
    %v4010 = vpop.f32.mrf.mxu0
    %v4011 = vadd.f32 %v3686, %v4010
    %v4012 = vpop.f32.mrf.mxu0
    %v4013 = vpop.f32.mrf.mxu0
    %v4014 = vadd.f32 %v3689, %v4013
    %v4015 = vpop.f32.mrf.mxu0
    %4016 = vmatprep.mubr.bf16.mxu0 0
    %4017 = vmatmul.mubr.bf16.gmra.mxu0 %v3473
    %v4018 = vpop.f32.mrf.mxu0
    %v4019 = vadd.f32 %v3694, %v4018
    %v4020 = vpop.f32.mrf.mxu0
    %v4021 = vpop.f32.mrf.mxu0
    %v4022 = vadd.f32 %v3697, %v4021
    %v4023 = vpop.f32.mrf.mxu0
    %4024 = vmatprep.mubr.bf16.mxu0 0
    %4025 = vmatmul.mubr.bf16.gmra.mxu0 %v3475
    %v4026 = vpop.f32.mrf.mxu0
    %v4027 = vadd.f32 %v3702, %v4026
    %v4028 = vpop.f32.mrf.mxu0
    %v4029 = vpop.f32.mrf.mxu0
    %v4030 = vadd.f32 %v3705, %v4029
    %v4031 = vpop.f32.mrf.mxu0
    %4032 = vmatprep.mubr.bf16.mxu0 0
    %4033 = vmatmul.mubr.bf16.gmra.mxu0 %v3477
    %v4034 = vpop.f32.mrf.mxu0
    %v4035 = vadd.f32 %v3710, %v4034
    %v4036 = vpop.f32.mrf.mxu0
    %v4037 = vpop.f32.mrf.mxu0
    %v4038 = vadd.f32 %v3713, %v4037
    %v4039 = vpop.f32.mrf.mxu0
    %4040 = vmatprep.mubr.bf16.mxu0 0
    %4041 = vmatmul.mubr.bf16.gmra.mxu0 %v3479
    %v4042 = vpop.f32.mrf.mxu0
    %v4043 = vadd.f32 %v3718, %v4042
    %v4044 = vpop.f32.mrf.mxu0
    %v4045 = vpop.f32.mrf.mxu0
    %v4046 = vadd.f32 %v3721, %v4045
    %v4047 = vpop.f32.mrf.mxu0
    %4048 = vmatprep.mubr.bf16.mxu0 0
    %4049 = vmatmul.mubr.bf16.gmra.mxu0 %v3481
    %v4050 = vpop.f32.mrf.mxu0
    %v4051 = vadd.f32 %v3726, %v4050
    %v4052 = vpop.f32.mrf.mxu0
    %v4053 = vpop.f32.mrf.mxu0
    %v4054 = vadd.f32 %v3729, %v4053
    %v4055 = vpop.f32.mrf.mxu0
    %4056 = vmatprep.mubr.bf16.mxu0 0
    %4057 = vmatmul.mubr.bf16.gmra.mxu0 %v3483
    %v4058 = vpop.f32.mrf.mxu0
    %v4059 = vadd.f32 %v3734, %v4058
    %v4060 = vpop.f32.mrf.mxu0
    %v4061 = vpop.f32.mrf.mxu0
    %v4062 = vadd.f32 %v3737, %v4061
    %v4063 = vpop.f32.mrf.mxu0
    %4064 = vmatprep.mubr.bf16.mxu0 0
    %4065 = vmatmul.mubr.bf16.gmra.mxu0 %v3485
    %v4066 = vpop.f32.mrf.mxu0
    %v4067 = vadd.f32 %v3742, %v4066
    %v4068 = vpop.f32.mrf.mxu0
    %v4069 = vpop.f32.mrf.mxu0
    %v4070 = vadd.f32 %v3745, %v4069
    %v4071 = vpop.f32.mrf.mxu0
    %4072 = vmatprep.mubr.bf16.mxu0 0
    %4073 = vmatmul.mubr.bf16.gmra.mxu0 %v3487
    %v4074 = vpop.f32.mrf.mxu0
    %v4075 = vadd.f32 %v3750, %v4074
    %v4076 = vpop.f32.mrf.mxu0
    %v4077 = vpop.f32.mrf.mxu0
    %v4078 = vadd.f32 %v3753, %v4077
    %v4079 = vpop.f32.mrf.mxu0
    %4080 = vmatprep.mubr.bf16.mxu0 0
    %4081 = vmatmul.mubr.bf16.gmra.mxu0 %v3489
    %v4082 = vpop.f32.mrf.mxu0
    %v4083 = vadd.f32 %v3758, %v4082
    %v4084 = vpop.f32.mrf.mxu0
    %v4085 = vpop.f32.mrf.mxu0
    %v4086 = vadd.f32 %v3761, %v4085
    %v4087 = vpop.f32.mrf.mxu0
    %4088 = vmatprep.mubr.bf16.mxu0 0
    %4089 = vmatmul.mubr.bf16.gmra.mxu0 %v3491
    %v4090 = vpop.f32.mrf.mxu0
    %v4091 = vadd.f32 %v3766, %v4090
    %v4092 = vpop.f32.mrf.mxu0
    %v4093 = vpop.f32.mrf.mxu0
    %v4094 = vadd.f32 %v3769, %v4093
    %v4095 = vpop.f32.mrf.mxu0
    %4096 = vmatprep.mubr.bf16.mxu0 0
    %4097 = vmatmul.mubr.bf16.gmra.mxu0 %v3493
    %v4098 = vpop.f32.mrf.mxu0
    %v4099 = vadd.f32 %v3774, %v4098
    %v4100 = vpop.f32.mrf.mxu0
    %v4101 = vpop.f32.mrf.mxu0
    %v4102 = vadd.f32 %v3777, %v4101
    %v4103 = vpop.f32.mrf.mxu0
    %4104 = vmatprep.mubr.bf16.mxu0 0
    %4105 = vmatmul.mubr.bf16.gmra.mxu0 %v3495
    %v4106 = vpop.f32.mrf.mxu0
    %v4107 = vadd.f32 %v3782, %v4106
    %v4108 = vpop.f32.mrf.mxu0
    %v4109 = vpop.f32.mrf.mxu0
    %v4110 = vadd.f32 %v3785, %v4109
    %v4111 = vpop.f32.mrf.mxu0
    %4112 = vdwg.mxu0
    %v4113 = vld [vmem:[%s0 + $0x84] sm:$0xf]
    %v4114 = vld [vmem:[%s0 + $0x88] sm:$0xf]
    %v4115 = vld [vmem:[%s0 + $0x8c] sm:$0xf]
    %v4116 = vld [vmem:[%s0 + $0x90] sm:$0xf]
    %v4117 = vld [vmem:[%s0 + $0x94] sm:$0xf]
    %v4118 = vld [vmem:[%s0 + $0x98] sm:$0xf]
    %v4119 = vld [vmem:[%s0 + $0x9c] sm:$0xf]
    %v4120 = vld [vmem:[%s0 + $0xa0] sm:$0xf]
    %v4121 = vld [vmem:[%s0 + $0xa4] sm:$0xf]
    %v4122 = vld [vmem:[%s0 + $0xa8] sm:$0xf]
    %v4123 = vld [vmem:[%s0 + $0xac] sm:$0xf]
    %v4124 = vld [vmem:[%s0 + $0xb0] sm:$0xf]
    %v4137 = vunpack.c.l.b16 %v4113
    %v4138 = vunpack.c.l.b16 %v4114
    %v4139 = vunpack.c.l.b16 %v4115
    %v4140 = vunpack.c.l.b16 %v4116
    %v4141 = vunpack.c.l.b16 %v4117
    %v4142 = vunpack.c.l.b16 %v4118
    %v4143 = vunpack.c.l.b16 %v4119
    %v4144 = vunpack.c.l.b16 %v4120
    %v4145 = vunpack.c.l.b16 %v4121
    %v4146 = vunpack.c.l.b16 %v4122
    %v4147 = vunpack.c.l.b16 %v4123
    %v4148 = vunpack.c.l.b16 %v4124
    %v4149 = vpack.c.b16 %v4138, %v4137
    %v4150 = vpack.c.b16 %v4140, %v4139
    %v4151 = vpack.c.b16 %v4142, %v4141
    %v4152 = vpack.c.b16 %v4144, %v4143
    %v4153 = vpack.c.b16 %v4146, %v4145
    %v4154 = vpack.c.b16 %v4148, %v4147
    %4161 = vmatprep.subr.bf16.mxu0 0
    %4162 = vmatpush1.bf16.msra.mxu0 0
    %4163 = vmatprep.subr.bf16.mxu0 0
    %4164 = vmatpush1.bf16.msra.mxu0 0
    %4165 = vmatprep.subr.bf16.mxu0 0
    %4166 = vmatpush1.bf16.msra.mxu0 %v4154
    %4167 = vmatprep.subr.bf16.mxu0 0
    %4168 = vmatpush1.bf16.msra.mxu0 %v4153
    %4169 = vmatprep.subr.bf16.mxu0 0
    %4170 = vmatpush1.bf16.msra.mxu0 %v4152
    %4171 = vmatprep.subr.bf16.mxu0 0
    %4172 = vmatpush1.bf16.msra.mxu0 %v4151
    %4173 = vmatprep.subr.bf16.mxu0 0
    %4174 = vmatpush1.bf16.msra.mxu0 %v4150
    %4175 = vmatprep.subr.bf16.mxu0 0
    %4176 = vmatpush1.bf16.msra.mxu0 %v4149
    %4177 = vmatprep.subr.bf16.mxu0 0
    %4178 = vmatpush2.bf16.msra.mxu0 0
    %4179 = vmatprep.subr.bf16.mxu0 0
    %4180 = vmatpush2.bf16.msra.mxu0 0
    %4181 = vmatprep.subr.bf16.mxu0 0
    %4182 = vmatpush2.bf16.msra.mxu0 0
    %4183 = vmatprep.subr.bf16.mxu0 0
    %4184 = vmatpush2.bf16.msra.mxu0 0
    %4185 = vmatprep.subr.bf16.mxu0 0
    %4186 = vmatpush2.bf16.msra.mxu0 0
    %4187 = vmatprep.subr.bf16.mxu0 0
    %4188 = vmatpush2.bf16.msra.mxu0 0
    %4189 = vmatprep.subr.bf16.mxu0 0
    %4190 = vmatpush2.bf16.msra.mxu0 0
    %4191 = vmatprep.subr.bf16.mxu0 0
    %4192 = vmatpush2.bf16.msra.mxu0 0
    %4193 = vmatprep.mubr.bf16.mxu0 0
    %4194 = vmatmul.mubr.bf16.gmra.mxu0 %v3437
    %v4195 = vpop.f32.mrf.mxu0
    %v4196 = vadd.f32 0.0, %v4195
    %v4197 = vpop.f32.mrf.mxu0
    %v4198 = vpop.f32.mrf.mxu0
    %v4199 = vadd.f32 0.0, %v4198
    %v4200 = vpop.f32.mrf.mxu0
    %4201 = vmatprep.mubr.bf16.mxu0 0
    %4202 = vmatmul.mubr.bf16.gmra.mxu0 %v3439
    %v4203 = vpop.f32.mrf.mxu0
    %v4204 = vadd.f32 0.0, %v4203
    %v4205 = vpop.f32.mrf.mxu0
    %v4206 = vpop.f32.mrf.mxu0
    %v4207 = vadd.f32 0.0, %v4206
    %v4208 = vpop.f32.mrf.mxu0
    %4209 = vmatprep.mubr.bf16.mxu0 0
    %4210 = vmatmul.mubr.bf16.gmra.mxu0 %v3441
    %v4211 = vpop.f32.mrf.mxu0
    %v4212 = vadd.f32 0.0, %v4211
    %v4213 = vpop.f32.mrf.mxu0
    %v4214 = vpop.f32.mrf.mxu0
    %v4215 = vadd.f32 0.0, %v4214
    %v4216 = vpop.f32.mrf.mxu0
    %4217 = vmatprep.mubr.bf16.mxu0 0
    %4218 = vmatmul.mubr.bf16.gmra.mxu0 %v3443
    %v4219 = vpop.f32.mrf.mxu0
    %v4220 = vadd.f32 0.0, %v4219
    %v4221 = vpop.f32.mrf.mxu0
    %v4222 = vpop.f32.mrf.mxu0
    %v4223 = vadd.f32 0.0, %v4222
    %v4224 = vpop.f32.mrf.mxu0
    %4225 = vmatprep.mubr.bf16.mxu0 0
    %4226 = vmatmul.mubr.bf16.gmra.mxu0 %v3445
    %v4227 = vpop.f32.mrf.mxu0
    %v4228 = vadd.f32 0.0, %v4227
    %v4229 = vpop.f32.mrf.mxu0
    %v4230 = vpop.f32.mrf.mxu0
    %v4231 = vadd.f32 0.0, %v4230
    %v4232 = vpop.f32.mrf.mxu0
    %4233 = vmatprep.mubr.bf16.mxu0 0
    %4234 = vmatmul.mubr.bf16.gmra.mxu0 %v3447
    %v4235 = vpop.f32.mrf.mxu0
    %v4236 = vadd.f32 0.0, %v4235
    %v4237 = vpop.f32.mrf.mxu0
    %v4238 = vpop.f32.mrf.mxu0
    %v4239 = vadd.f32 0.0, %v4238
    %v4240 = vpop.f32.mrf.mxu0
    %4241 = vmatprep.mubr.bf16.mxu0 0
    %4242 = vmatmul.mubr.bf16.gmra.mxu0 %v3449
    %v4243 = vpop.f32.mrf.mxu0
    %v4244 = vadd.f32 0.0, %v4243
    %v4245 = vpop.f32.mrf.mxu0
    %v4246 = vpop.f32.mrf.mxu0
    %v4247 = vadd.f32 0.0, %v4246
    %v4248 = vpop.f32.mrf.mxu0
    %4249 = vmatprep.mubr.bf16.mxu0 0
    %4250 = vmatmul.mubr.bf16.gmra.mxu0 %v3451
    %v4251 = vpop.f32.mrf.mxu0
    %v4252 = vadd.f32 0.0, %v4251
    %v4253 = vpop.f32.mrf.mxu0
    %v4254 = vpop.f32.mrf.mxu0
    %v4255 = vadd.f32 0.0, %v4254
    %v4256 = vpop.f32.mrf.mxu0
    %4257 = vmatprep.mubr.bf16.mxu0 0
    %4258 = vmatmul.mubr.bf16.gmra.mxu0 %v3453
    %v4259 = vpop.f32.mrf.mxu0
    %v4260 = vadd.f32 0.0, %v4259
    %v4261 = vpop.f32.mrf.mxu0
    %v4262 = vpop.f32.mrf.mxu0
    %v4263 = vadd.f32 0.0, %v4262
    %v4264 = vpop.f32.mrf.mxu0
    %4265 = vmatprep.mubr.bf16.mxu0 0
    %4266 = vmatmul.mubr.bf16.gmra.mxu0 %v3455
    %v4267 = vpop.f32.mrf.mxu0
    %v4268 = vadd.f32 0.0, %v4267
    %v4269 = vpop.f32.mrf.mxu0
    %v4270 = vpop.f32.mrf.mxu0
    %v4271 = vadd.f32 0.0, %v4270
    %v4272 = vpop.f32.mrf.mxu0
    %4273 = vmatprep.mubr.bf16.mxu0 0
    %4274 = vmatmul.mubr.bf16.gmra.mxu0 %v3457
    %v4275 = vpop.f32.mrf.mxu0
    %v4276 = vadd.f32 0.0, %v4275
    %v4277 = vpop.f32.mrf.mxu0
    %v4278 = vpop.f32.mrf.mxu0
    %v4279 = vadd.f32 0.0, %v4278
    %v4280 = vpop.f32.mrf.mxu0
    %4281 = vmatprep.mubr.bf16.mxu0 0
    %4282 = vmatmul.mubr.bf16.gmra.mxu0 %v3459
    %v4283 = vpop.f32.mrf.mxu0
    %v4284 = vadd.f32 0.0, %v4283
    %v4285 = vpop.f32.mrf.mxu0
    %v4286 = vpop.f32.mrf.mxu0
    %v4287 = vadd.f32 0.0, %v4286
    %v4288 = vpop.f32.mrf.mxu0
    %4289 = vmatprep.mubr.bf16.mxu0 0
    %4290 = vmatmul.mubr.bf16.gmra.mxu0 %v3461
    %v4291 = vpop.f32.mrf.mxu0
    %v4292 = vadd.f32 0.0, %v4291
    %v4293 = vpop.f32.mrf.mxu0
    %v4294 = vpop.f32.mrf.mxu0
    %v4295 = vadd.f32 0.0, %v4294
    %v4296 = vpop.f32.mrf.mxu0
    %4297 = vmatprep.mubr.bf16.mxu0 0
    %4298 = vmatmul.mubr.bf16.gmra.mxu0 %v3463
    %v4299 = vpop.f32.mrf.mxu0
    %v4300 = vadd.f32 0.0, %v4299
    %v4301 = vpop.f32.mrf.mxu0
    %v4302 = vpop.f32.mrf.mxu0
    %v4303 = vadd.f32 0.0, %v4302
    %v4304 = vpop.f32.mrf.mxu0
    %4305 = vmatprep.mubr.bf16.mxu0 0
    %4306 = vmatmul.mubr.bf16.gmra.mxu0 %v3465
    %v4307 = vpop.f32.mrf.mxu0
    %v4308 = vadd.f32 0.0, %v4307
    %v4309 = vpop.f32.mrf.mxu0
    %v4310 = vpop.f32.mrf.mxu0
    %v4311 = vadd.f32 0.0, %v4310
    %v4312 = vpop.f32.mrf.mxu0
    %4313 = vmatprep.mubr.bf16.mxu0 0
    %4314 = vmatmul.mubr.bf16.gmra.mxu0 %v3435
    %v4315 = vpop.f32.mrf.mxu0
    %v4316 = vadd.f32 0.0, %v4315
    %v4317 = vpop.f32.mrf.mxu0
    %v4318 = vpop.f32.mrf.mxu0
    %v4319 = vadd.f32 0.0, %v4318
    %v4320 = vpop.f32.mrf.mxu0
    %4321 = vmatprep.mubr.bf16.mxu0 0
    %4322 = vmatmul.mubr.bf16.gmra.mxu0 %v3469
    %v4323 = vpop.f32.mrf.mxu0
    %v4324 = vadd.f32 0.0, %v4323
    %v4325 = vpop.f32.mrf.mxu0
    %v4326 = vpop.f32.mrf.mxu0
    %v4327 = vadd.f32 0.0, %v4326
    %v4328 = vpop.f32.mrf.mxu0
    %4329 = vmatprep.mubr.bf16.mxu0 0
    %4330 = vmatmul.mubr.bf16.gmra.mxu0 %v3471
    %v4331 = vpop.f32.mrf.mxu0
    %v4332 = vadd.f32 0.0, %v4331
    %v4333 = vpop.f32.mrf.mxu0
    %v4334 = vpop.f32.mrf.mxu0
    %v4335 = vadd.f32 0.0, %v4334
    %v4336 = vpop.f32.mrf.mxu0
    %4337 = vmatprep.mubr.bf16.mxu0 0
    %4338 = vmatmul.mubr.bf16.gmra.mxu0 %v3473
    %v4339 = vpop.f32.mrf.mxu0
    %v4340 = vadd.f32 0.0, %v4339
    %v4341 = vpop.f32.mrf.mxu0
    %v4342 = vpop.f32.mrf.mxu0
    %v4343 = vadd.f32 0.0, %v4342
    %v4344 = vpop.f32.mrf.mxu0
    %4345 = vmatprep.mubr.bf16.mxu0 0
    %4346 = vmatmul.mubr.bf16.gmra.mxu0 %v3475
    %v4347 = vpop.f32.mrf.mxu0
    %v4348 = vadd.f32 0.0, %v4347
    %v4349 = vpop.f32.mrf.mxu0
    %v4350 = vpop.f32.mrf.mxu0
    %v4351 = vadd.f32 0.0, %v4350
    %v4352 = vpop.f32.mrf.mxu0
    %4353 = vmatprep.mubr.bf16.mxu0 0
    %4354 = vmatmul.mubr.bf16.gmra.mxu0 %v3477
    %v4355 = vpop.f32.mrf.mxu0
    %v4356 = vadd.f32 0.0, %v4355
    %v4357 = vpop.f32.mrf.mxu0
    %v4358 = vpop.f32.mrf.mxu0
    %v4359 = vadd.f32 0.0, %v4358
    %v4360 = vpop.f32.mrf.mxu0
    %4361 = vmatprep.mubr.bf16.mxu0 0
    %4362 = vmatmul.mubr.bf16.gmra.mxu0 %v3479
    %v4363 = vpop.f32.mrf.mxu0
    %v4364 = vadd.f32 0.0, %v4363
    %v4365 = vpop.f32.mrf.mxu0
    %v4366 = vpop.f32.mrf.mxu0
    %v4367 = vadd.f32 0.0, %v4366
    %v4368 = vpop.f32.mrf.mxu0
    %4369 = vmatprep.mubr.bf16.mxu0 0
    %4370 = vmatmul.mubr.bf16.gmra.mxu0 %v3481
    %v4371 = vpop.f32.mrf.mxu0
    %v4372 = vadd.f32 0.0, %v4371
    %v4373 = vpop.f32.mrf.mxu0
    %v4374 = vpop.f32.mrf.mxu0
    %v4375 = vadd.f32 0.0, %v4374
    %v4376 = vpop.f32.mrf.mxu0
    %4377 = vmatprep.mubr.bf16.mxu0 0
    %4378 = vmatmul.mubr.bf16.gmra.mxu0 %v3483
    %v4379 = vpop.f32.mrf.mxu0
    %v4380 = vadd.f32 0.0, %v4379
    %v4381 = vpop.f32.mrf.mxu0
    %v4382 = vpop.f32.mrf.mxu0
    %v4383 = vadd.f32 0.0, %v4382
    %v4384 = vpop.f32.mrf.mxu0
    %4385 = vmatprep.mubr.bf16.mxu0 0
    %4386 = vmatmul.mubr.bf16.gmra.mxu0 %v3485
    %v4387 = vpop.f32.mrf.mxu0
    %v4388 = vadd.f32 0.0, %v4387
    %v4389 = vpop.f32.mrf.mxu0
    %v4390 = vpop.f32.mrf.mxu0
    %v4391 = vadd.f32 0.0, %v4390
    %v4392 = vpop.f32.mrf.mxu0
    %4393 = vmatprep.mubr.bf16.mxu0 0
    %4394 = vmatmul.mubr.bf16.gmra.mxu0 %v3487
    %v4395 = vpop.f32.mrf.mxu0
    %v4396 = vadd.f32 0.0, %v4395
    %v4397 = vpop.f32.mrf.mxu0
    %v4398 = vpop.f32.mrf.mxu0
    %v4399 = vadd.f32 0.0, %v4398
    %v4400 = vpop.f32.mrf.mxu0
    %4401 = vmatprep.mubr.bf16.mxu0 0
    %4402 = vmatmul.mubr.bf16.gmra.mxu0 %v3489
    %v4403 = vpop.f32.mrf.mxu0
    %v4404 = vadd.f32 0.0, %v4403
    %v4405 = vpop.f32.mrf.mxu0
    %v4406 = vpop.f32.mrf.mxu0
    %v4407 = vadd.f32 0.0, %v4406
    %v4408 = vpop.f32.mrf.mxu0
    %4409 = vmatprep.mubr.bf16.mxu0 0
    %4410 = vmatmul.mubr.bf16.gmra.mxu0 %v3491
    %v4411 = vpop.f32.mrf.mxu0
    %v4412 = vadd.f32 0.0, %v4411
    %v4413 = vpop.f32.mrf.mxu0
    %v4414 = vpop.f32.mrf.mxu0
    %v4415 = vadd.f32 0.0, %v4414
    %v4416 = vpop.f32.mrf.mxu0
    %4417 = vmatprep.mubr.bf16.mxu0 0
    %4418 = vmatmul.mubr.bf16.gmra.mxu0 %v3493
    %v4419 = vpop.f32.mrf.mxu0
    %v4420 = vadd.f32 0.0, %v4419
    %v4421 = vpop.f32.mrf.mxu0
    %v4422 = vpop.f32.mrf.mxu0
    %v4423 = vadd.f32 0.0, %v4422
    %v4424 = vpop.f32.mrf.mxu0
    %4425 = vmatprep.mubr.bf16.mxu0 0
    %4426 = vmatmul.mubr.bf16.gmra.mxu0 %v3495
    %v4427 = vpop.f32.mrf.mxu0
    %v4428 = vadd.f32 0.0, %v4427
    %v4429 = vpop.f32.mrf.mxu0
    %v4430 = vpop.f32.mrf.mxu0
    %v4431 = vadd.f32 0.0, %v4430
    %v4432 = vpop.f32.mrf.mxu0
    %4433 = vmatprep.mubr.bf16.mxu0 0
    %4434 = vmatmul.mubr.bf16.gmra.mxu0 %v3497
    %v4435 = vpop.f32.mrf.mxu0
    %v4436 = vadd.f32 0.0, %v4435
    %v4437 = vpop.f32.mrf.mxu0
    %v4438 = vpop.f32.mrf.mxu0
    %v4439 = vadd.f32 0.0, %v4438
    %v4440 = vpop.f32.mrf.mxu0
    %4441 = vmatprep.mubr.bf16.mxu0 0
    %4442 = vmatmul.mubr.bf16.gmra.mxu0 %v3467
    %v4443 = vpop.f32.mrf.mxu0
    %v4444 = vadd.f32 0.0, %v4443
    %v4445 = vpop.f32.mrf.mxu0
    %v4446 = vpop.f32.mrf.mxu0
    %v4447 = vadd.f32 0.0, %v4446
    %v4448 = vpop.f32.mrf.mxu0
    %4449 = vdwg.mxu0
    %v4450 = vadd.f32 %v3859, %v4196
    %v4451 = vadd.f32 %v3862, %v4199
    %v4452 = vadd.f32 %v3867, %v4204
    %v4453 = vadd.f32 %v3870, %v4207
    %v4454 = vadd.f32 %v3875, %v4212
    %v4455 = vadd.f32 %v3878, %v4215
    %v4456 = vadd.f32 %v3883, %v4220
    %v4457 = vadd.f32 %v3886, %v4223
    %v4458 = vadd.f32 %v3891, %v4228
    %v4459 = vadd.f32 %v3894, %v4231
    %v4460 = vadd.f32 %v3899, %v4236
    %v4461 = vadd.f32 %v3902, %v4239
    %v4462 = vadd.f32 %v3907, %v4244
    %v4463 = vadd.f32 %v3910, %v4247
    %v4464 = vadd.f32 %v3915, %v4252
    %v4465 = vadd.f32 %v3918, %v4255
    %v4466 = vadd.f32 %v3923, %v4260
    %v4467 = vadd.f32 %v3926, %v4263
    %v4468 = vadd.f32 %v3931, %v4268
    %v4469 = vadd.f32 %v3934, %v4271
    %v4470 = vadd.f32 %v3939, %v4276
    %v4471 = vadd.f32 %v3942, %v4279
    %v4472 = vadd.f32 %v3947, %v4284
    %v4473 = vadd.f32 %v3950, %v4287
    %v4474 = vadd.f32 %v3955, %v4292
    %v4475 = vadd.f32 %v3958, %v4295
    %v4476 = vadd.f32 %v3963, %v4300
    %v4477 = vadd.f32 %v3966, %v4303
    %v4478 = vadd.f32 %v3971, %v4308
    %v4479 = vadd.f32 %v3974, %v4311
    %v4480 = vadd.f32 %v3979, %v4316
    %v4481 = vadd.f32 %v3982, %v4319
    %v4482 = vadd.f32 %v3987, %v4324
    %v4483 = vadd.f32 %v3990, %v4327
    %v4484 = vadd.f32 %v3995, %v4332
    %v4485 = vadd.f32 %v3998, %v4335
    %v4486 = vadd.f32 %v4003, %v4340
    %v4487 = vadd.f32 %v4006, %v4343
    %v4488 = vadd.f32 %v4011, %v4348
    %v4489 = vadd.f32 %v4014, %v4351
    %v4490 = vadd.f32 %v4019, %v4356
    %v4491 = vadd.f32 %v4022, %v4359
    %v4492 = vadd.f32 %v4027, %v4364
    %v4493 = vadd.f32 %v4030, %v4367
    %v4494 = vadd.f32 %v4035, %v4372
    %v4495 = vadd.f32 %v4038, %v4375
    %v4496 = vadd.f32 %v4043, %v4380
    %v4497 = vadd.f32 %v4046, %v4383
    %v4498 = vadd.f32 %v4051, %v4388
    %v4499 = vadd.f32 %v4054, %v4391
    %v4500 = vadd.f32 %v4059, %v4396
    %v4501 = vadd.f32 %v4062, %v4399
    %v4502 = vadd.f32 %v4067, %v4404
    %v4503 = vadd.f32 %v4070, %v4407
    %v4504 = vadd.f32 %v4075, %v4412
    %v4505 = vadd.f32 %v4078, %v4415
    %v4506 = vadd.f32 %v4083, %v4420
    %v4507 = vadd.f32 %v4086, %v4423
    %v4508 = vadd.f32 %v4091, %v4428
    %v4509 = vadd.f32 %v4094, %v4431
    %v4510 = vadd.f32 %v4099, %v4436
    %v4511 = vadd.f32 %v4102, %v4439
    %v4512 = vadd.f32 %v4107, %v4444
    %v4513 = vadd.f32 %v4110, %v4447
    %v4514 = vld [vmem:[%s1 + $0x1] sm:$0x1]
    %v4515 = vlaneseq
    %v4516 = vshrl.u32 %v4515, 7
    %v4517 = vsub.s32 0, %v4516
    %v4518 = vrot.slane %v4514, %v4517
    %v4519 = vadd.f32 %v4450, %v4518
    %v4520 = vadd.f32 %v4451, %v4518
    %v4521 = vadd.f32 %v4452, %v4518
    %v4522 = vadd.f32 %v4453, %v4518
    %v4523 = vadd.f32 %v4454, %v4518
    %v4524 = vadd.f32 %v4455, %v4518
    %v4525 = vadd.f32 %v4456, %v4518
    %v4526 = vadd.f32 %v4457, %v4518
    %v4527 = vadd.f32 %v4458, %v4518
    %v4528 = vadd.f32 %v4459, %v4518
    %v4529 = vadd.f32 %v4460, %v4518
    %v4530 = vadd.f32 %v4461, %v4518
    %v4531 = vadd.f32 %v4462, %v4518
    %v4532 = vadd.f32 %v4463, %v4518
    %v4533 = vadd.f32 %v4464, %v4518
    %v4534 = vadd.f32 %v4465, %v4518
    %v4535 = vadd.f32 %v4466, %v4518
    %v4536 = vadd.f32 %v4467, %v4518
    %v4537 = vadd.f32 %v4468, %v4518
    %v4538 = vadd.f32 %v4469, %v4518
    %v4539 = vadd.f32 %v4470, %v4518
    %v4540 = vadd.f32 %v4471, %v4518
    %v4541 = vadd.f32 %v4472, %v4518
    %v4542 = vadd.f32 %v4473, %v4518
    %v4543 = vadd.f32 %v4474, %v4518
    %v4544 = vadd.f32 %v4475, %v4518
    %v4545 = vadd.f32 %v4476, %v4518
    %v4546 = vadd.f32 %v4477, %v4518
    %v4547 = vadd.f32 %v4478, %v4518
    %v4548 = vadd.f32 %v4479, %v4518
    %v4549 = vadd.f32 %v4480, %v4518
    %v4550 = vadd.f32 %v4481, %v4518
    %v4551 = vadd.f32 %v4482, %v4518
    %v4552 = vadd.f32 %v4483, %v4518
    %v4553 = vadd.f32 %v4484, %v4518
    %v4554 = vadd.f32 %v4485, %v4518
    %v4555 = vadd.f32 %v4486, %v4518
    %v4556 = vadd.f32 %v4487, %v4518
    %v4557 = vadd.f32 %v4488, %v4518
    %v4558 = vadd.f32 %v4489, %v4518
    %v4559 = vadd.f32 %v4490, %v4518
    %v4560 = vadd.f32 %v4491, %v4518
    %v4561 = vadd.f32 %v4492, %v4518
    %v4562 = vadd.f32 %v4493, %v4518
    %v4563 = vadd.f32 %v4494, %v4518
    %v4564 = vadd.f32 %v4495, %v4518
    %v4565 = vadd.f32 %v4496, %v4518
    %v4566 = vadd.f32 %v4497, %v4518
    %v4567 = vadd.f32 %v4498, %v4518
    %v4568 = vadd.f32 %v4499, %v4518
    %v4569 = vadd.f32 %v4500, %v4518
    %v4570 = vadd.f32 %v4501, %v4518
    %v4571 = vadd.f32 %v4502, %v4518
    %v4572 = vadd.f32 %v4503, %v4518
    %v4573 = vadd.f32 %v4504, %v4518
    %v4574 = vadd.f32 %v4505, %v4518
    %v4575 = vadd.f32 %v4506, %v4518
    %v4576 = vadd.f32 %v4507, %v4518
    %v4577 = vadd.f32 %v4508, %v4518
    %v4578 = vadd.f32 %v4509, %v4518
    %v4579 = vadd.f32 %v4510, %v4518
    %v4580 = vadd.f32 %v4511, %v4518
    %v4581 = vadd.f32 %v4512, %v4518
    %v4582 = vadd.f32 %v4513, %v4518
    %v4583 = vmax.f32 %v4519, 0.0
    %v4584 = vmax.f32 %v4520, 0.0
    %v4585 = vmax.f32 %v4521, 0.0
    %v4586 = vmax.f32 %v4522, 0.0
    %v4587 = vmax.f32 %v4523, 0.0
    %v4588 = vmax.f32 %v4524, 0.0
    %v4589 = vmax.f32 %v4525, 0.0
    %v4590 = vmax.f32 %v4526, 0.0
    %v4591 = vmax.f32 %v4527, 0.0
    %v4592 = vmax.f32 %v4528, 0.0
    %v4593 = vmax.f32 %v4529, 0.0
    %v4594 = vmax.f32 %v4530, 0.0
    %v4595 = vmax.f32 %v4531, 0.0
    %v4596 = vmax.f32 %v4532, 0.0
    %v4597 = vmax.f32 %v4533, 0.0
    %v4598 = vmax.f32 %v4534, 0.0
    %v4599 = vmax.f32 %v4535, 0.0
    %v4600 = vmax.f32 %v4536, 0.0
    %v4601 = vmax.f32 %v4537, 0.0
    %v4602 = vmax.f32 %v4538, 0.0
    %v4603 = vmax.f32 %v4539, 0.0
    %v4604 = vmax.f32 %v4540, 0.0
    %v4605 = vmax.f32 %v4541, 0.0
    %v4606 = vmax.f32 %v4542, 0.0
    %v4607 = vmax.f32 %v4543, 0.0
    %v4608 = vmax.f32 %v4544, 0.0
    %v4609 = vmax.f32 %v4545, 0.0
    %v4610 = vmax.f32 %v4546, 0.0
    %v4611 = vmax.f32 %v4547, 0.0
    %v4612 = vmax.f32 %v4548, 0.0
    %v4613 = vmax.f32 %v4549, 0.0
    %v4614 = vmax.f32 %v4550, 0.0
    %v4615 = vmax.f32 %v4551, 0.0
    %v4616 = vmax.f32 %v4552, 0.0
    %v4617 = vmax.f32 %v4553, 0.0
    %v4618 = vmax.f32 %v4554, 0.0
    %v4619 = vmax.f32 %v4555, 0.0
    %v4620 = vmax.f32 %v4556, 0.0
    %v4621 = vmax.f32 %v4557, 0.0
    %v4622 = vmax.f32 %v4558, 0.0
    %v4623 = vmax.f32 %v4559, 0.0
    %v4624 = vmax.f32 %v4560, 0.0
    %v4625 = vmax.f32 %v4561, 0.0
    %v4626 = vmax.f32 %v4562, 0.0
    %v4627 = vmax.f32 %v4563, 0.0
    %v4628 = vmax.f32 %v4564, 0.0
    %v4629 = vmax.f32 %v4565, 0.0
    %v4630 = vmax.f32 %v4566, 0.0
    %v4631 = vmax.f32 %v4567, 0.0
    %v4632 = vmax.f32 %v4568, 0.0
    %v4633 = vmax.f32 %v4569, 0.0
    %v4634 = vmax.f32 %v4570, 0.0
    %v4635 = vmax.f32 %v4571, 0.0
    %v4636 = vmax.f32 %v4572, 0.0
    %v4637 = vmax.f32 %v4573, 0.0
    %v4638 = vmax.f32 %v4574, 0.0
    %v4639 = vmax.f32 %v4575, 0.0
    %v4640 = vmax.f32 %v4576, 0.0
    %v4641 = vmax.f32 %v4577, 0.0
    %v4642 = vmax.f32 %v4578, 0.0
    %v4643 = vmax.f32 %v4579, 0.0
    %v4644 = vmax.f32 %v4580, 0.0
    %v4645 = vmax.f32 %v4581, 0.0
    %v4646 = vmax.f32 %v4582, 0.0
    %v4647 = vpack.c.bf16 %v4584, %v4583
    %v4648 = vpack.c.bf16 %v4586, %v4585
    %v4649 = vpack.c.bf16 %v4588, %v4587
    %v4650 = vpack.c.bf16 %v4590, %v4589
    %v4651 = vpack.c.bf16 %v4592, %v4591
    %v4652 = vpack.c.bf16 %v4594, %v4593
    %v4653 = vpack.c.bf16 %v4596, %v4595
    %v4654 = vpack.c.bf16 %v4598, %v4597
    %v4655 = vpack.c.bf16 %v4600, %v4599
    %v4656 = vpack.c.bf16 %v4602, %v4601
    %v4657 = vpack.c.bf16 %v4604, %v4603
    %v4658 = vpack.c.bf16 %v4606, %v4605
    %v4659 = vpack.c.bf16 %v4608, %v4607
    %v4660 = vpack.c.bf16 %v4610, %v4609
    %v4661 = vpack.c.bf16 %v4612, %v4611
    %v4662 = vpack.c.bf16 %v4614, %v4613
    %v4663 = vpack.c.bf16 %v4616, %v4615
    %v4664 = vpack.c.bf16 %v4618, %v4617
    %v4665 = vpack.c.bf16 %v4620, %v4619
    %v4666 = vpack.c.bf16 %v4622, %v4621
    %v4667 = vpack.c.bf16 %v4624, %v4623
    %v4668 = vpack.c.bf16 %v4626, %v4625
    %v4669 = vpack.c.bf16 %v4628, %v4627
    %v4670 = vpack.c.bf16 %v4630, %v4629
    %v4671 = vpack.c.bf16 %v4632, %v4631
    %v4672 = vpack.c.bf16 %v4634, %v4633
    %v4673 = vpack.c.bf16 %v4636, %v4635
    %v4674 = vpack.c.bf16 %v4638, %v4637
    %v4675 = vpack.c.bf16 %v4640, %v4639
    %v4676 = vpack.c.bf16 %v4642, %v4641
    %v4677 = vpack.c.bf16 %v4644, %v4643
    %v4678 = vpack.c.bf16 %v4646, %v4645
    %v4680 = vshrl.u32 %v4647, 16
    %v4682 = vrot.slane %v4680, 7
    %v4684 = vshrl.u32 %v4648, 16
    %v4686 = vrot.slane %v4684, 7
    %v4688 = vshrl.u32 %v4649, 16
    %v4690 = vrot.slane %v4688, 7
    %v4692 = vshrl.u32 %v4650, 16
    %v4694 = vrot.slane %v4692, 7
    %v4696 = vshrl.u32 %v4651, 16
    %v4698 = vrot.slane %v4696, 7
    %v4700 = vshrl.u32 %v4652, 16
    %v4702 = vrot.slane %v4700, 7
    %v4704 = vshrl.u32 %v4653, 16
    %v4706 = vrot.slane %v4704, 7
    %v4708 = vshrl.u32 %v4654, 16
    %v4710 = vrot.slane %v4708, 7
    %v4712 = vshrl.u32 %v4655, 16
    %v4714 = vrot.slane %v4712, 7
    %v4716 = vshrl.u32 %v4656, 16
    %v4718 = vrot.slane %v4716, 7
    %v4720 = vshrl.u32 %v4657, 16
    %v4722 = vrot.slane %v4720, 7
    %v4724 = vshrl.u32 %v4658, 16
    %v4726 = vrot.slane %v4724, 7
    %v4728 = vshrl.u32 %v4659, 16
    %v4730 = vrot.slane %v4728, 7
    %v4732 = vshrl.u32 %v4660, 16
    %v4734 = vrot.slane %v4732, 7
    %v4736 = vshrl.u32 %v4661, 16
    %v4738 = vrot.slane %v4736, 7
    %v4740 = vshrl.u32 %v4662, 16
    %v4742 = vrot.slane %v4740, 7
    %v4744 = vshrl.u32 %v4663, 16
    %v4746 = vrot.slane %v4744, 7
    %v4748 = vshrl.u32 %v4664, 16
    %v4750 = vrot.slane %v4748, 7
    %v4752 = vshrl.u32 %v4665, 16
    %v4754 = vrot.slane %v4752, 7
    %v4756 = vshrl.u32 %v4666, 16
    %v4758 = vrot.slane %v4756, 7
    %v4760 = vshrl.u32 %v4667, 16
    %v4762 = vrot.slane %v4760, 7
    %v4764 = vshrl.u32 %v4668, 16
    %v4766 = vrot.slane %v4764, 7
    %v4768 = vshrl.u32 %v4669, 16
    %v4770 = vrot.slane %v4768, 7
    %v4772 = vshrl.u32 %v4670, 16
    %v4774 = vrot.slane %v4772, 7
    %v4776 = vshrl.u32 %v4671, 16
    %v4778 = vrot.slane %v4776, 7
    %v4780 = vshrl.u32 %v4672, 16
    %v4782 = vrot.slane %v4780, 7
    %v4784 = vshrl.u32 %v4673, 16
    %v4786 = vrot.slane %v4784, 7
    %v4788 = vshrl.u32 %v4674, 16
    %v4790 = vrot.slane %v4788, 7
    %v4792 = vshrl.u32 %v4675, 16
    %v4794 = vrot.slane %v4792, 7
    %v4796 = vshrl.u32 %v4676, 16
    %v4798 = vrot.slane %v4796, 7
    %v4800 = vshrl.u32 %v4677, 16
    %v4802 = vrot.slane %v4800, 7
    %v4804 = vshrl.u32 %v4678, 16
    %v4806 = vrot.slane %v4804, 7
    %v4839 = vshll.u32 %v4647, 16
    %v4841 = vor.u32 %v4682, %v4839
    %v4842 = vshll.u32 %v4648, 16
    %v4844 = vor.u32 %v4686, %v4842
    %v4845 = vshll.u32 %v4649, 16
    %v4847 = vor.u32 %v4690, %v4845
    %v4848 = vshll.u32 %v4650, 16
    %v4850 = vor.u32 %v4694, %v4848
    %v4851 = vshll.u32 %v4651, 16
    %v4853 = vor.u32 %v4698, %v4851
    %v4854 = vshll.u32 %v4652, 16
    %v4856 = vor.u32 %v4702, %v4854
    %v4857 = vshll.u32 %v4653, 16
    %v4859 = vor.u32 %v4706, %v4857
    %v4860 = vshll.u32 %v4654, 16
    %v4862 = vor.u32 %v4710, %v4860
    %v4863 = vshll.u32 %v4655, 16
    %v4865 = vor.u32 %v4714, %v4863
    %v4866 = vshll.u32 %v4656, 16
    %v4868 = vor.u32 %v4718, %v4866
    %v4869 = vshll.u32 %v4657, 16
    %v4871 = vor.u32 %v4722, %v4869
    %v4872 = vshll.u32 %v4658, 16
    %v4874 = vor.u32 %v4726, %v4872
    %v4875 = vshll.u32 %v4659, 16
    %v4877 = vor.u32 %v4730, %v4875
    %v4878 = vshll.u32 %v4660, 16
    %v4880 = vor.u32 %v4734, %v4878
    %v4881 = vshll.u32 %v4661, 16
    %v4883 = vor.u32 %v4738, %v4881
    %v4884 = vshll.u32 %v4662, 16
    %v4886 = vor.u32 %v4742, %v4884
    %v4887 = vshll.u32 %v4663, 16
    %v4889 = vor.u32 %v4746, %v4887
    %v4890 = vshll.u32 %v4664, 16
    %v4892 = vor.u32 %v4750, %v4890
    %v4893 = vshll.u32 %v4665, 16
    %v4895 = vor.u32 %v4754, %v4893
    %v4896 = vshll.u32 %v4666, 16
    %v4898 = vor.u32 %v4758, %v4896
    %v4899 = vshll.u32 %v4667, 16
    %v4901 = vor.u32 %v4762, %v4899
    %v4902 = vshll.u32 %v4668, 16
    %v4904 = vor.u32 %v4766, %v4902
    %v4905 = vshll.u32 %v4669, 16
    %v4907 = vor.u32 %v4770, %v4905
    %v4908 = vshll.u32 %v4670, 16
    %v4910 = vor.u32 %v4774, %v4908
    %v4911 = vshll.u32 %v4671, 16
    %v4913 = vor.u32 %v4778, %v4911
    %v4914 = vshll.u32 %v4672, 16
    %v4916 = vor.u32 %v4782, %v4914
    %v4917 = vshll.u32 %v4673, 16
    %v4919 = vor.u32 %v4786, %v4917
    %v4920 = vshll.u32 %v4674, 16
    %v4922 = vor.u32 %v4790, %v4920
    %v4923 = vshll.u32 %v4675, 16
    %v4925 = vor.u32 %v4794, %v4923
    %v4926 = vshll.u32 %v4676, 16
    %v4928 = vor.u32 %v4798, %v4926
    %v4929 = vshll.u32 %v4677, 16
    %v4931 = vor.u32 %v4802, %v4929
    %v4932 = vshll.u32 %v4678, 16
    %v4934 = vor.u32 %v4806, %v4932
    %v4967 = vsel %vm783, %v4682, %v4841
    %v4968 = vsel %vm783, %v4686, %v4844
    %v4969 = vsel %vm783, %v4690, %v4847
    %v4970 = vsel %vm783, %v4694, %v4850
    %v4971 = vsel %vm783, %v4698, %v4853
    %v4972 = vsel %vm783, %v4702, %v4856
    %v4973 = vsel %vm783, %v4706, %v4859
    %v4974 = vsel %vm783, %v4710, %v4862
    %v4975 = vsel %vm783, %v4714, %v4865
    %v4976 = vsel %vm783, %v4718, %v4868
    %v4977 = vsel %vm783, %v4722, %v4871
    %v4978 = vsel %vm783, %v4726, %v4874
    %v4979 = vsel %vm783, %v4730, %v4877
    %v4980 = vsel %vm783, %v4734, %v4880
    %v4981 = vsel %vm783, %v4738, %v4883
    %v4982 = vsel %vm783, %v4742, %v4886
    %v4983 = vsel %vm783, %v4746, %v4889
    %v4984 = vsel %vm783, %v4750, %v4892
    %v4985 = vsel %vm783, %v4754, %v4895
    %v4986 = vsel %vm783, %v4758, %v4898
    %v4987 = vsel %vm783, %v4762, %v4901
    %v4988 = vsel %vm783, %v4766, %v4904
    %v4989 = vsel %vm783, %v4770, %v4907
    %v4990 = vsel %vm783, %v4774, %v4910
    %v4991 = vsel %vm783, %v4778, %v4913
    %v4992 = vsel %vm783, %v4782, %v4916
    %v4993 = vsel %vm783, %v4786, %v4919
    %v4994 = vsel %vm783, %v4790, %v4922
    %v4995 = vsel %vm783, %v4794, %v4925
    %v4996 = vsel %vm783, %v4798, %v4928
    %v4997 = vsel %vm783, %v4802, %v4931
    %v4998 = vsel %vm783, %v4806, %v4934
    %v4999 = vrot.slane %v4839, 1
    %v5000 = vor.u32 %v4680, %v4999
    %v5001 = vrot.slane %v4842, 1
    %v5002 = vor.u32 %v4684, %v5001
    %v5003 = vrot.slane %v4845, 1
    %v5004 = vor.u32 %v4688, %v5003
    %v5005 = vrot.slane %v4848, 1
    %v5006 = vor.u32 %v4692, %v5005
    %v5007 = vrot.slane %v4851, 1
    %v5008 = vor.u32 %v4696, %v5007
    %v5009 = vrot.slane %v4854, 1
    %v5010 = vor.u32 %v4700, %v5009
    %v5011 = vrot.slane %v4857, 1
    %v5012 = vor.u32 %v4704, %v5011
    %v5013 = vrot.slane %v4860, 1
    %v5014 = vor.u32 %v4708, %v5013
    %v5015 = vrot.slane %v4863, 1
    %v5016 = vor.u32 %v4712, %v5015
    %v5017 = vrot.slane %v4866, 1
    %v5018 = vor.u32 %v4716, %v5017
    %v5019 = vrot.slane %v4869, 1
    %v5020 = vor.u32 %v4720, %v5019
    %v5021 = vrot.slane %v4872, 1
    %v5022 = vor.u32 %v4724, %v5021
    %v5023 = vrot.slane %v4875, 1
    %v5024 = vor.u32 %v4728, %v5023
    %v5025 = vrot.slane %v4878, 1
    %v5026 = vor.u32 %v4732, %v5025
    %v5027 = vrot.slane %v4881, 1
    %v5028 = vor.u32 %v4736, %v5027
    %v5029 = vrot.slane %v4884, 1
    %v5030 = vor.u32 %v4740, %v5029
    %v5031 = vrot.slane %v4887, 1
    %v5032 = vor.u32 %v4744, %v5031
    %v5033 = vrot.slane %v4890, 1
    %v5034 = vor.u32 %v4748, %v5033
    %v5035 = vrot.slane %v4893, 1
    %v5036 = vor.u32 %v4752, %v5035
    %v5037 = vrot.slane %v4896, 1
    %v5038 = vor.u32 %v4756, %v5037
    %v5039 = vrot.slane %v4899, 1
    %v5040 = vor.u32 %v4760, %v5039
    %v5041 = vrot.slane %v4902, 1
    %v5042 = vor.u32 %v4764, %v5041
    %v5043 = vrot.slane %v4905, 1
    %v5044 = vor.u32 %v4768, %v5043
    %v5045 = vrot.slane %v4908, 1
    %v5046 = vor.u32 %v4772, %v5045
    %v5047 = vrot.slane %v4911, 1
    %v5048 = vor.u32 %v4776, %v5047
    %v5049 = vrot.slane %v4914, 1
    %v5050 = vor.u32 %v4780, %v5049
    %v5051 = vrot.slane %v4917, 1
    %v5052 = vor.u32 %v4784, %v5051
    %v5053 = vrot.slane %v4920, 1
    %v5054 = vor.u32 %v4788, %v5053
    %v5055 = vrot.slane %v4923, 1
    %v5056 = vor.u32 %v4792, %v5055
    %v5057 = vrot.slane %v4926, 1
    %v5058 = vor.u32 %v4796, %v5057
    %v5059 = vrot.slane %v4929, 1
    %v5060 = vor.u32 %v4800, %v5059
    %v5061 = vrot.slane %v4932, 1
    %v5062 = vor.u32 %v4804, %v5061
    %v5127 = vsel %vm946, %v5000, %v4999
    %v5128 = vsel %vm946, %v5002, %v5001
    %v5129 = vsel %vm946, %v5004, %v5003
    %v5130 = vsel %vm946, %v5006, %v5005
    %v5131 = vsel %vm946, %v5008, %v5007
    %v5132 = vsel %vm946, %v5010, %v5009
    %v5133 = vsel %vm946, %v5012, %v5011
    %v5134 = vsel %vm946, %v5014, %v5013
    %v5135 = vsel %vm946, %v5016, %v5015
    %v5136 = vsel %vm946, %v5018, %v5017
    %v5137 = vsel %vm946, %v5020, %v5019
    %v5138 = vsel %vm946, %v5022, %v5021
    %v5139 = vsel %vm946, %v5024, %v5023
    %v5140 = vsel %vm946, %v5026, %v5025
    %v5141 = vsel %vm946, %v5028, %v5027
    %v5142 = vsel %vm946, %v5030, %v5029
    %v5143 = vsel %vm946, %v5032, %v5031
    %v5144 = vsel %vm946, %v5034, %v5033
    %v5145 = vsel %vm946, %v5036, %v5035
    %v5146 = vsel %vm946, %v5038, %v5037
    %v5147 = vsel %vm946, %v5040, %v5039
    %v5148 = vsel %vm946, %v5042, %v5041
    %v5149 = vsel %vm946, %v5044, %v5043
    %v5150 = vsel %vm946, %v5046, %v5045
    %v5151 = vsel %vm946, %v5048, %v5047
    %v5152 = vsel %vm946, %v5050, %v5049
    %v5153 = vsel %vm946, %v5052, %v5051
    %v5154 = vsel %vm946, %v5054, %v5053
    %v5155 = vsel %vm946, %v5056, %v5055
    %v5156 = vsel %vm946, %v5058, %v5057
    %v5157 = vsel %vm946, %v5060, %v5059
    %v5158 = vsel %vm946, %v5062, %v5061
    %5191 = vrot.lane.b32.xlu0 %v4647, 32
    %v5192 = vpop.permute.xlu0 %5191
    %5193 = vrot.lane.b32.xlu0 %v4648, 32
    %v5194 = vpop.permute.xlu0 %5193
    %5195 = vrot.lane.b32.xlu0 %v4649, 32
    %v5196 = vpop.permute.xlu0 %5195
    %5197 = vrot.lane.b32.xlu0 %v4650, 32
    %v5198 = vpop.permute.xlu0 %5197
    %5199 = vrot.lane.b32.xlu0 %v4651, 32
    %v5200 = vpop.permute.xlu0 %5199
    %5201 = vrot.lane.b32.xlu0 %v4652, 32
    %v5202 = vpop.permute.xlu0 %5201
    %5203 = vrot.lane.b32.xlu0 %v4653, 32
    %v5204 = vpop.permute.xlu0 %5203
    %5205 = vrot.lane.b32.xlu0 %v4654, 32
    %v5206 = vpop.permute.xlu0 %5205
    %5207 = vrot.lane.b32.xlu0 %v4655, 32
    %v5208 = vpop.permute.xlu0 %5207
    %5209 = vrot.lane.b32.xlu0 %v4656, 32
    %v5210 = vpop.permute.xlu0 %5209
    %5211 = vrot.lane.b32.xlu0 %v4657, 32
    %v5212 = vpop.permute.xlu0 %5211
    %5213 = vrot.lane.b32.xlu0 %v4658, 32
    %v5214 = vpop.permute.xlu0 %5213
    %5215 = vrot.lane.b32.xlu0 %v4659, 32
    %v5216 = vpop.permute.xlu0 %5215
    %5217 = vrot.lane.b32.xlu0 %v4660, 32
    %v5218 = vpop.permute.xlu0 %5217
    %5219 = vrot.lane.b32.xlu0 %v4661, 32
    %v5220 = vpop.permute.xlu0 %5219
    %5221 = vrot.lane.b32.xlu0 %v4662, 32
    %v5222 = vpop.permute.xlu0 %5221
    %5223 = vrot.lane.b32.xlu0 %v4663, 32
    %v5224 = vpop.permute.xlu0 %5223
    %5225 = vrot.lane.b32.xlu0 %v4664, 32
    %v5226 = vpop.permute.xlu0 %5225
    %5227 = vrot.lane.b32.xlu0 %v4665, 32
    %v5228 = vpop.permute.xlu0 %5227
    %5229 = vrot.lane.b32.xlu0 %v4666, 32
    %v5230 = vpop.permute.xlu0 %5229
    %5231 = vrot.lane.b32.xlu0 %v4667, 32
    %v5232 = vpop.permute.xlu0 %5231
    %5233 = vrot.lane.b32.xlu0 %v4668, 32
    %v5234 = vpop.permute.xlu0 %5233
    %5235 = vrot.lane.b32.xlu0 %v4669, 32
    %v5236 = vpop.permute.xlu0 %5235
    %5237 = vrot.lane.b32.xlu0 %v4670, 32
    %v5238 = vpop.permute.xlu0 %5237
    %5239 = vrot.lane.b32.xlu0 %v4671, 32
    %v5240 = vpop.permute.xlu0 %5239
    %5241 = vrot.lane.b32.xlu0 %v4672, 32
    %v5242 = vpop.permute.xlu0 %5241
    %5243 = vrot.lane.b32.xlu0 %v4673, 32
    %v5244 = vpop.permute.xlu0 %5243
    %5245 = vrot.lane.b32.xlu0 %v4674, 32
    %v5246 = vpop.permute.xlu0 %5245
    %5247 = vrot.lane.b32.xlu0 %v4675, 32
    %v5248 = vpop.permute.xlu0 %5247
    %5249 = vrot.lane.b32.xlu0 %v4676, 32
    %v5250 = vpop.permute.xlu0 %5249
    %5251 = vrot.lane.b32.xlu0 %v4677, 32
    %v5252 = vpop.permute.xlu0 %5251
    %5253 = vrot.lane.b32.xlu0 %v4678, 32
    %v5254 = vpop.permute.xlu0 %5253
    %5287 = vrot.lane.b32.xlu0 %v5127, 64
    %v5288 = vpop.permute.xlu0 %5287
    %5289 = vrot.lane.b32.xlu0 %v5128, 64
    %v5290 = vpop.permute.xlu0 %5289
    %5291 = vrot.lane.b32.xlu0 %v5129, 64
    %v5292 = vpop.permute.xlu0 %5291
    %5293 = vrot.lane.b32.xlu0 %v5130, 64
    %v5294 = vpop.permute.xlu0 %5293
    %5295 = vrot.lane.b32.xlu0 %v5131, 64
    %v5296 = vpop.permute.xlu0 %5295
    %5297 = vrot.lane.b32.xlu0 %v5132, 64
    %v5298 = vpop.permute.xlu0 %5297
    %5299 = vrot.lane.b32.xlu0 %v5133, 64
    %v5300 = vpop.permute.xlu0 %5299
    %5301 = vrot.lane.b32.xlu0 %v5134, 64
    %v5302 = vpop.permute.xlu0 %5301
    %5303 = vrot.lane.b32.xlu0 %v5135, 64
    %v5304 = vpop.permute.xlu0 %5303
    %5305 = vrot.lane.b32.xlu0 %v5136, 64
    %v5306 = vpop.permute.xlu0 %5305
    %5307 = vrot.lane.b32.xlu0 %v5137, 64
    %v5308 = vpop.permute.xlu0 %5307
    %5309 = vrot.lane.b32.xlu0 %v5138, 64
    %v5310 = vpop.permute.xlu0 %5309
    %5311 = vrot.lane.b32.xlu0 %v5139, 64
    %v5312 = vpop.permute.xlu0 %5311
    %5313 = vrot.lane.b32.xlu0 %v5140, 64
    %v5314 = vpop.permute.xlu0 %5313
    %5315 = vrot.lane.b32.xlu0 %v5141, 64
    %v5316 = vpop.permute.xlu0 %5315
    %5317 = vrot.lane.b32.xlu0 %v5142, 64
    %v5318 = vpop.permute.xlu0 %5317
    %5319 = vrot.lane.b32.xlu0 %v5143, 64
    %v5320 = vpop.permute.xlu0 %5319
    %5321 = vrot.lane.b32.xlu0 %v5144, 64
    %v5322 = vpop.permute.xlu0 %5321
    %5323 = vrot.lane.b32.xlu0 %v5145, 64
    %v5324 = vpop.permute.xlu0 %5323
    %5325 = vrot.lane.b32.xlu0 %v5146, 64
    %v5326 = vpop.permute.xlu0 %5325
    %5327 = vrot.lane.b32.xlu0 %v5147, 64
    %v5328 = vpop.permute.xlu0 %5327
    %5329 = vrot.lane.b32.xlu0 %v5148, 64
    %v5330 = vpop.permute.xlu0 %5329
    %5331 = vrot.lane.b32.xlu0 %v5149, 64
    %v5332 = vpop.permute.xlu0 %5331
    %5333 = vrot.lane.b32.xlu0 %v5150, 64
    %v5334 = vpop.permute.xlu0 %5333
    %5335 = vrot.lane.b32.xlu0 %v5151, 64
    %v5336 = vpop.permute.xlu0 %5335
    %5337 = vrot.lane.b32.xlu0 %v5152, 64
    %v5338 = vpop.permute.xlu0 %5337
    %5339 = vrot.lane.b32.xlu0 %v5153, 64
    %v5340 = vpop.permute.xlu0 %5339
    %5341 = vrot.lane.b32.xlu0 %v5154, 64
    %v5342 = vpop.permute.xlu0 %5341
    %5343 = vrot.lane.b32.xlu0 %v5155, 64
    %v5344 = vpop.permute.xlu0 %5343
    %5345 = vrot.lane.b32.xlu0 %v5156, 64
    %v5346 = vpop.permute.xlu0 %5345
    %5347 = vrot.lane.b32.xlu0 %v5157, 64
    %v5348 = vpop.permute.xlu0 %5347
    %5349 = vrot.lane.b32.xlu0 %v5158, 64
    %v5350 = vpop.permute.xlu0 %5349
    %v5353 = vsel %vm3212, %v4967, %v5192
    %v5356 = vsel %vm3212, %v4968, %v5194
    %v5359 = vsel %vm3212, %v4969, %v5196
    %v5362 = vsel %vm3212, %v4970, %v5198
    %v5365 = vsel %vm3212, %v4971, %v5200
    %v5368 = vsel %vm3212, %v4972, %v5202
    %v5371 = vsel %vm3212, %v4973, %v5204
    %v5374 = vsel %vm3212, %v4974, %v5206
    %v5377 = vsel %vm3212, %v4975, %v5208
    %v5380 = vsel %vm3212, %v4976, %v5210
    %v5383 = vsel %vm3212, %v4977, %v5212
    %v5386 = vsel %vm3212, %v4978, %v5214
    %v5389 = vsel %vm3212, %v4979, %v5216
    %v5392 = vsel %vm3212, %v4980, %v5218
    %v5395 = vsel %vm3212, %v4981, %v5220
    %v5398 = vsel %vm3212, %v4982, %v5222
    %v5401 = vsel %vm3212, %v4983, %v5224
    %v5404 = vsel %vm3212, %v4984, %v5226
    %v5407 = vsel %vm3212, %v4985, %v5228
    %v5410 = vsel %vm3212, %v4986, %v5230
    %v5413 = vsel %vm3212, %v4987, %v5232
    %v5416 = vsel %vm3212, %v4988, %v5234
    %v5419 = vsel %vm3212, %v4989, %v5236
    %v5422 = vsel %vm3212, %v4990, %v5238
    %v5425 = vsel %vm3212, %v4991, %v5240
    %v5428 = vsel %vm3212, %v4992, %v5242
    %v5431 = vsel %vm3212, %v4993, %v5244
    %v5434 = vsel %vm3212, %v4994, %v5246
    %v5437 = vsel %vm3212, %v4995, %v5248
    %v5440 = vsel %vm3212, %v4996, %v5250
    %v5443 = vsel %vm3212, %v4997, %v5252
    %v5446 = vsel %vm3212, %v4998, %v5254
    %v5448 = vsel %vm3309, %v5353, %v5288
    %v5450 = vsel %vm3309, %v5356, %v5290
    %v5452 = vsel %vm3309, %v5359, %v5292
    %v5454 = vsel %vm3309, %v5362, %v5294
    %v5456 = vsel %vm3309, %v5365, %v5296
    %v5458 = vsel %vm3309, %v5368, %v5298
    %v5460 = vsel %vm3309, %v5371, %v5300
    %v5462 = vsel %vm3309, %v5374, %v5302
    %v5464 = vsel %vm3309, %v5377, %v5304
    %v5466 = vsel %vm3309, %v5380, %v5306
    %v5468 = vsel %vm3309, %v5383, %v5308
    %v5470 = vsel %vm3309, %v5386, %v5310
    %v5472 = vsel %vm3309, %v5389, %v5312
    %v5474 = vsel %vm3309, %v5392, %v5314
    %v5476 = vsel %vm3309, %v5395, %v5316
    %v5478 = vsel %vm3309, %v5398, %v5318
    %v5480 = vsel %vm3309, %v5401, %v5320
    %v5482 = vsel %vm3309, %v5404, %v5322
    %v5484 = vsel %vm3309, %v5407, %v5324
    %v5486 = vsel %vm3309, %v5410, %v5326
    %v5488 = vsel %vm3309, %v5413, %v5328
    %v5490 = vsel %vm3309, %v5416, %v5330
    %v5492 = vsel %vm3309, %v5419, %v5332
    %v5494 = vsel %vm3309, %v5422, %v5334
    %v5496 = vsel %vm3309, %v5425, %v5336
    %v5498 = vsel %vm3309, %v5428, %v5338
    %v5500 = vsel %vm3309, %v5431, %v5340
    %v5502 = vsel %vm3309, %v5434, %v5342
    %v5504 = vsel %vm3309, %v5437, %v5344
    %v5506 = vsel %vm3309, %v5440, %v5346
    %v5508 = vsel %vm3309, %v5443, %v5348
    %v5510 = vsel %vm3309, %v5446, %v5350
    %v5511 = vld [vmem:[%s0 + $0xb4] sm:$0xf]
    %v5512 = vld [vmem:[%s0 + $0xb8] sm:$0xf]
    %v5513 = vld [vmem:[%s0 + $0xbc] sm:$0xf]
    %v5514 = vld [vmem:[%s0 + $0xc0] sm:$0xf]
    %v5515 = vld [vmem:[%s0 + $0xc4] sm:$0xf]
    %v5516 = vld [vmem:[%s0 + $0xc8] sm:$0xf]
    %v5517 = vld [vmem:[%s0 + $0xcc] sm:$0xf]
    %v5518 = vld [vmem:[%s0 + $0xd0] sm:$0xf]
    %v5519 = vld [vmem:[%s0 + $0xd4] sm:$0xf]
    %v5520 = vld [vmem:[%s0 + $0xd8] sm:$0xf]
    %v5521 = vld [vmem:[%s0 + $0xdc] sm:$0xf]
    %v5522 = vld [vmem:[%s0 + $0xe0] sm:$0xf]
    %v5523 = vld [vmem:[%s0 + $0xe4] sm:$0xf]
    %v5524 = vld [vmem:[%s0 + $0xe8] sm:$0xf]
    %v5525 = vld [vmem:[%s0 + $0xec] sm:$0xf]
    %v5526 = vld [vmem:[%s0 + $0xf0] sm:$0xf]
    %v5527 = vld [vmem:[%s0 + $0xf4] sm:$0xf]
    %v5528 = vld [vmem:[%s0 + $0xf8] sm:$0xf]
    %v5529 = vld [vmem:[%s0 + $0xfc] sm:$0xf]
    %v5530 = vld [vmem:[%s0 + $0x100] sm:$0xf]
    %v5531 = vld [vmem:[%s0 + $0x104] sm:$0xf]
    %v5532 = vld [vmem:[%s0 + $0x108] sm:$0xf]
    %v5533 = vld [vmem:[%s0 + $0x10c] sm:$0xf]
    %v5534 = vld [vmem:[%s0 + $0x110] sm:$0xf]
    %v5547 = vunpack.c.l.b16 %v5523
    %v5548 = vunpack.c.l.b16 %v5524
    %v5549 = vunpack.c.l.b16 %v5525
    %v5550 = vunpack.c.l.b16 %v5526
    %v5551 = vunpack.c.l.b16 %v5527
    %v5552 = vunpack.c.l.b16 %v5528
    %v5553 = vunpack.c.l.b16 %v5529
    %v5554 = vunpack.c.l.b16 %v5530
    %v5555 = vunpack.c.l.b16 %v5531
    %v5556 = vunpack.c.l.b16 %v5532
    %v5557 = vunpack.c.l.b16 %v5533
    %v5558 = vunpack.c.l.b16 %v5534
    %v5559 = vpack.c.b16 %v5548, %v5547
    %v5560 = vpack.c.b16 %v5550, %v5549
    %v5561 = vpack.c.b16 %v5552, %v5551
    %v5562 = vpack.c.b16 %v5554, %v5553
    %v5563 = vpack.c.b16 %v5556, %v5555
    %v5564 = vpack.c.b16 %v5558, %v5557
    %v5571 = vsel %vm3434, %v5448, 0
    %v5573 = vsel %vm3434, %v5450, 0
    %v5575 = vsel %vm3434, %v5452, 0
    %v5577 = vsel %vm3434, %v5454, 0
    %v5579 = vsel %vm3434, %v5456, 0
    %v5581 = vsel %vm3434, %v5458, 0
    %v5583 = vsel %vm3434, %v5460, 0
    %v5585 = vsel %vm3434, %v5462, 0
    %v5587 = vsel %vm3434, %v5464, 0
    %v5589 = vsel %vm3434, %v5466, 0
    %v5591 = vsel %vm3434, %v5468, 0
    %v5593 = vsel %vm3434, %v5470, 0
    %v5595 = vsel %vm3434, %v5472, 0
    %v5597 = vsel %vm3434, %v5474, 0
    %v5599 = vsel %vm3434, %v5476, 0
    %v5601 = vsel %vm3434, %v5478, 0
    %v5603 = vsel %vm3434, %v5480, 0
    %v5605 = vsel %vm3434, %v5482, 0
    %v5607 = vsel %vm3434, %v5484, 0
    %v5609 = vsel %vm3434, %v5486, 0
    %v5611 = vsel %vm3434, %v5488, 0
    %v5613 = vsel %vm3434, %v5490, 0
    %v5615 = vsel %vm3434, %v5492, 0
    %v5617 = vsel %vm3434, %v5494, 0
    %v5619 = vsel %vm3434, %v5496, 0
    %v5621 = vsel %vm3434, %v5498, 0
    %v5623 = vsel %vm3434, %v5500, 0
    %v5625 = vsel %vm3434, %v5502, 0
    %v5627 = vsel %vm3434, %v5504, 0
    %v5629 = vsel %vm3434, %v5506, 0
    %v5631 = vsel %vm3434, %v5508, 0
    %v5633 = vsel %vm3434, %v5510, 0
    %5635 = vmatprep.subr.bf16.mxu0 0
    %5636 = vmatpush1.bf16.msra.mxu0 0
    %5637 = vmatprep.subr.bf16.mxu0 0
    %5638 = vmatpush1.bf16.msra.mxu0 0
    %5639 = vmatprep.subr.bf16.mxu0 0
    %5640 = vmatpush1.bf16.msra.mxu0 %v5564
    %5641 = vmatprep.subr.bf16.mxu0 0
    %5642 = vmatpush1.bf16.msra.mxu0 %v5563
    %5643 = vmatprep.subr.bf16.mxu0 0
    %5644 = vmatpush1.bf16.msra.mxu0 %v5562
    %5645 = vmatprep.subr.bf16.mxu0 0
    %5646 = vmatpush1.bf16.msra.mxu0 %v5561
    %5647 = vmatprep.subr.bf16.mxu0 0
    %5648 = vmatpush1.bf16.msra.mxu0 %v5560
    %5649 = vmatprep.subr.bf16.mxu0 0
    %5650 = vmatpush1.bf16.msra.mxu0 %v5559
    %5651 = vmatprep.subr.bf16.mxu0 0
    %5652 = vmatpush2.bf16.msra.mxu0 0
    %5653 = vmatprep.subr.bf16.mxu0 0
    %5654 = vmatpush2.bf16.msra.mxu0 0
    %5655 = vmatprep.subr.bf16.mxu0 0
    %5656 = vmatpush2.bf16.msra.mxu0 0
    %5657 = vmatprep.subr.bf16.mxu0 0
    %5658 = vmatpush2.bf16.msra.mxu0 0
    %5659 = vmatprep.subr.bf16.mxu0 0
    %5660 = vmatpush2.bf16.msra.mxu0 0
    %5661 = vmatprep.subr.bf16.mxu0 0
    %5662 = vmatpush2.bf16.msra.mxu0 0
    %5663 = vmatprep.subr.bf16.mxu0 0
    %5664 = vmatpush2.bf16.msra.mxu0 0
    %5665 = vmatprep.subr.bf16.mxu0 0
    %5666 = vmatpush2.bf16.msra.mxu0 0
    %5667 = vmatprep.mubr.bf16.mxu0 0
    %5668 = vmatmul.mubr.bf16.gmra.mxu0 %v5571
    %v5669 = vpop.f32.mrf.mxu0
    %v5670 = vadd.f32 0.0, %v5669
    %v5671 = vpop.f32.mrf.mxu0
    %v5672 = vpop.f32.mrf.mxu0
    %v5673 = vadd.f32 0.0, %v5672
    %v5674 = vpop.f32.mrf.mxu0
    %5675 = vmatprep.mubr.bf16.mxu0 0
    %5676 = vmatmul.mubr.bf16.gmra.mxu0 %v5573
    %v5677 = vpop.f32.mrf.mxu0
    %v5678 = vadd.f32 0.0, %v5677
    %v5679 = vpop.f32.mrf.mxu0
    %v5680 = vpop.f32.mrf.mxu0
    %v5681 = vadd.f32 0.0, %v5680
    %v5682 = vpop.f32.mrf.mxu0
    %5683 = vmatprep.mubr.bf16.mxu0 0
    %5684 = vmatmul.mubr.bf16.gmra.mxu0 %v5575
    %v5685 = vpop.f32.mrf.mxu0
    %v5686 = vadd.f32 0.0, %v5685
    %v5687 = vpop.f32.mrf.mxu0
    %v5688 = vpop.f32.mrf.mxu0
    %v5689 = vadd.f32 0.0, %v5688
    %v5690 = vpop.f32.mrf.mxu0
    %5691 = vmatprep.mubr.bf16.mxu0 0
    %5692 = vmatmul.mubr.bf16.gmra.mxu0 %v5577
    %v5693 = vpop.f32.mrf.mxu0
    %v5694 = vadd.f32 0.0, %v5693
    %v5695 = vpop.f32.mrf.mxu0
    %v5696 = vpop.f32.mrf.mxu0
    %v5697 = vadd.f32 0.0, %v5696
    %v5698 = vpop.f32.mrf.mxu0
    %5699 = vmatprep.mubr.bf16.mxu0 0
    %5700 = vmatmul.mubr.bf16.gmra.mxu0 %v5579
    %v5701 = vpop.f32.mrf.mxu0
    %v5702 = vadd.f32 0.0, %v5701
    %v5703 = vpop.f32.mrf.mxu0
    %v5704 = vpop.f32.mrf.mxu0
    %v5705 = vadd.f32 0.0, %v5704
    %v5706 = vpop.f32.mrf.mxu0
    %5707 = vmatprep.mubr.bf16.mxu0 0
    %5708 = vmatmul.mubr.bf16.gmra.mxu0 %v5581
    %v5709 = vpop.f32.mrf.mxu0
    %v5710 = vadd.f32 0.0, %v5709
    %v5711 = vpop.f32.mrf.mxu0
    %v5712 = vpop.f32.mrf.mxu0
    %v5713 = vadd.f32 0.0, %v5712
    %v5714 = vpop.f32.mrf.mxu0
    %5715 = vmatprep.mubr.bf16.mxu0 0
    %5716 = vmatmul.mubr.bf16.gmra.mxu0 %v5583
    %v5717 = vpop.f32.mrf.mxu0
    %v5718 = vadd.f32 0.0, %v5717
    %v5719 = vpop.f32.mrf.mxu0
    %v5720 = vpop.f32.mrf.mxu0
    %v5721 = vadd.f32 0.0, %v5720
    %v5722 = vpop.f32.mrf.mxu0
    %5723 = vmatprep.mubr.bf16.mxu0 0
    %5724 = vmatmul.mubr.bf16.gmra.mxu0 %v5585
    %v5725 = vpop.f32.mrf.mxu0
    %v5726 = vadd.f32 0.0, %v5725
    %v5727 = vpop.f32.mrf.mxu0
    %v5728 = vpop.f32.mrf.mxu0
    %v5729 = vadd.f32 0.0, %v5728
    %v5730 = vpop.f32.mrf.mxu0
    %5731 = vmatprep.mubr.bf16.mxu0 0
    %5732 = vmatmul.mubr.bf16.gmra.mxu0 %v5587
    %v5733 = vpop.f32.mrf.mxu0
    %v5734 = vadd.f32 0.0, %v5733
    %v5735 = vpop.f32.mrf.mxu0
    %v5736 = vpop.f32.mrf.mxu0
    %v5737 = vadd.f32 0.0, %v5736
    %v5738 = vpop.f32.mrf.mxu0
    %5739 = vmatprep.mubr.bf16.mxu0 0
    %5740 = vmatmul.mubr.bf16.gmra.mxu0 %v5589
    %v5741 = vpop.f32.mrf.mxu0
    %v5742 = vadd.f32 0.0, %v5741
    %v5743 = vpop.f32.mrf.mxu0
    %v5744 = vpop.f32.mrf.mxu0
    %v5745 = vadd.f32 0.0, %v5744
    %v5746 = vpop.f32.mrf.mxu0
    %5747 = vmatprep.mubr.bf16.mxu0 0
    %5748 = vmatmul.mubr.bf16.gmra.mxu0 %v5591
    %v5749 = vpop.f32.mrf.mxu0
    %v5750 = vadd.f32 0.0, %v5749
    %v5751 = vpop.f32.mrf.mxu0
    %v5752 = vpop.f32.mrf.mxu0
    %v5753 = vadd.f32 0.0, %v5752
    %v5754 = vpop.f32.mrf.mxu0
    %5755 = vmatprep.mubr.bf16.mxu0 0
    %5756 = vmatmul.mubr.bf16.gmra.mxu0 %v5593
    %v5757 = vpop.f32.mrf.mxu0
    %v5758 = vadd.f32 0.0, %v5757
    %v5759 = vpop.f32.mrf.mxu0
    %v5760 = vpop.f32.mrf.mxu0
    %v5761 = vadd.f32 0.0, %v5760
    %v5762 = vpop.f32.mrf.mxu0
    %5763 = vmatprep.mubr.bf16.mxu0 0
    %5764 = vmatmul.mubr.bf16.gmra.mxu0 %v5595
    %v5765 = vpop.f32.mrf.mxu0
    %v5766 = vadd.f32 0.0, %v5765
    %v5767 = vpop.f32.mrf.mxu0
    %v5768 = vpop.f32.mrf.mxu0
    %v5769 = vadd.f32 0.0, %v5768
    %v5770 = vpop.f32.mrf.mxu0
    %5771 = vmatprep.mubr.bf16.mxu0 0
    %5772 = vmatmul.mubr.bf16.gmra.mxu0 %v5597
    %v5773 = vpop.f32.mrf.mxu0
    %v5774 = vadd.f32 0.0, %v5773
    %v5775 = vpop.f32.mrf.mxu0
    %v5776 = vpop.f32.mrf.mxu0
    %v5777 = vadd.f32 0.0, %v5776
    %v5778 = vpop.f32.mrf.mxu0
    %5779 = vmatprep.mubr.bf16.mxu0 0
    %5780 = vmatmul.mubr.bf16.gmra.mxu0 %v5599
    %v5781 = vpop.f32.mrf.mxu0
    %v5782 = vadd.f32 0.0, %v5781
    %v5783 = vpop.f32.mrf.mxu0
    %v5784 = vpop.f32.mrf.mxu0
    %v5785 = vadd.f32 0.0, %v5784
    %v5786 = vpop.f32.mrf.mxu0
    %5787 = vmatprep.mubr.bf16.mxu0 0
    %5788 = vmatmul.mubr.bf16.gmra.mxu0 %v5601
    %v5789 = vpop.f32.mrf.mxu0
    %v5790 = vadd.f32 0.0, %v5789
    %v5791 = vpop.f32.mrf.mxu0
    %v5792 = vpop.f32.mrf.mxu0
    %v5793 = vadd.f32 0.0, %v5792
    %v5794 = vpop.f32.mrf.mxu0
    %5795 = vmatprep.mubr.bf16.mxu0 0
    %5796 = vmatmul.mubr.bf16.gmra.mxu0 %v5603
    %v5797 = vpop.f32.mrf.mxu0
    %v5798 = vadd.f32 0.0, %v5797
    %v5799 = vpop.f32.mrf.mxu0
    %v5800 = vpop.f32.mrf.mxu0
    %v5801 = vadd.f32 0.0, %v5800
    %v5802 = vpop.f32.mrf.mxu0
    %5803 = vmatprep.mubr.bf16.mxu0 0
    %5804 = vmatmul.mubr.bf16.gmra.mxu0 %v5605
    %v5805 = vpop.f32.mrf.mxu0
    %v5806 = vadd.f32 0.0, %v5805
    %v5807 = vpop.f32.mrf.mxu0
    %v5808 = vpop.f32.mrf.mxu0
    %v5809 = vadd.f32 0.0, %v5808
    %v5810 = vpop.f32.mrf.mxu0
    %5811 = vmatprep.mubr.bf16.mxu0 0
    %5812 = vmatmul.mubr.bf16.gmra.mxu0 %v5607
    %v5813 = vpop.f32.mrf.mxu0
    %v5814 = vadd.f32 0.0, %v5813
    %v5815 = vpop.f32.mrf.mxu0
    %v5816 = vpop.f32.mrf.mxu0
    %v5817 = vadd.f32 0.0, %v5816
    %v5818 = vpop.f32.mrf.mxu0
    %5819 = vmatprep.mubr.bf16.mxu0 0
    %5820 = vmatmul.mubr.bf16.gmra.mxu0 %v5609
    %v5821 = vpop.f32.mrf.mxu0
    %v5822 = vadd.f32 0.0, %v5821
    %v5823 = vpop.f32.mrf.mxu0
    %v5824 = vpop.f32.mrf.mxu0
    %v5825 = vadd.f32 0.0, %v5824
    %v5826 = vpop.f32.mrf.mxu0
    %5827 = vmatprep.mubr.bf16.mxu0 0
    %5828 = vmatmul.mubr.bf16.gmra.mxu0 %v5611
    %v5829 = vpop.f32.mrf.mxu0
    %v5830 = vadd.f32 0.0, %v5829
    %v5831 = vpop.f32.mrf.mxu0
    %v5832 = vpop.f32.mrf.mxu0
    %v5833 = vadd.f32 0.0, %v5832
    %v5834 = vpop.f32.mrf.mxu0
    %5835 = vmatprep.mubr.bf16.mxu0 0
    %5836 = vmatmul.mubr.bf16.gmra.mxu0 %v5613
    %v5837 = vpop.f32.mrf.mxu0
    %v5838 = vadd.f32 0.0, %v5837
    %v5839 = vpop.f32.mrf.mxu0
    %v5840 = vpop.f32.mrf.mxu0
    %v5841 = vadd.f32 0.0, %v5840
    %v5842 = vpop.f32.mrf.mxu0
    %5843 = vmatprep.mubr.bf16.mxu0 0
    %5844 = vmatmul.mubr.bf16.gmra.mxu0 %v5615
    %v5845 = vpop.f32.mrf.mxu0
    %v5846 = vadd.f32 0.0, %v5845
    %v5847 = vpop.f32.mrf.mxu0
    %v5848 = vpop.f32.mrf.mxu0
    %v5849 = vadd.f32 0.0, %v5848
    %v5850 = vpop.f32.mrf.mxu0
    %5851 = vmatprep.mubr.bf16.mxu0 0
    %5852 = vmatmul.mubr.bf16.gmra.mxu0 %v5617
    %v5853 = vpop.f32.mrf.mxu0
    %v5854 = vadd.f32 0.0, %v5853
    %v5855 = vpop.f32.mrf.mxu0
    %v5856 = vpop.f32.mrf.mxu0
    %v5857 = vadd.f32 0.0, %v5856
    %v5858 = vpop.f32.mrf.mxu0
    %5859 = vmatprep.mubr.bf16.mxu0 0
    %5860 = vmatmul.mubr.bf16.gmra.mxu0 %v5619
    %v5861 = vpop.f32.mrf.mxu0
    %v5862 = vadd.f32 0.0, %v5861
    %v5863 = vpop.f32.mrf.mxu0
    %v5864 = vpop.f32.mrf.mxu0
    %v5865 = vadd.f32 0.0, %v5864
    %v5866 = vpop.f32.mrf.mxu0
    %5867 = vmatprep.mubr.bf16.mxu0 0
    %5868 = vmatmul.mubr.bf16.gmra.mxu0 %v5621
    %v5869 = vpop.f32.mrf.mxu0
    %v5870 = vadd.f32 0.0, %v5869
    %v5871 = vpop.f32.mrf.mxu0
    %v5872 = vpop.f32.mrf.mxu0
    %v5873 = vadd.f32 0.0, %v5872
    %v5874 = vpop.f32.mrf.mxu0
    %5875 = vmatprep.mubr.bf16.mxu0 0
    %5876 = vmatmul.mubr.bf16.gmra.mxu0 %v5623
    %v5877 = vpop.f32.mrf.mxu0
    %v5878 = vadd.f32 0.0, %v5877
    %v5879 = vpop.f32.mrf.mxu0
    %v5880 = vpop.f32.mrf.mxu0
    %v5881 = vadd.f32 0.0, %v5880
    %v5882 = vpop.f32.mrf.mxu0
    %5883 = vmatprep.mubr.bf16.mxu0 0
    %5884 = vmatmul.mubr.bf16.gmra.mxu0 %v5625
    %v5885 = vpop.f32.mrf.mxu0
    %v5886 = vadd.f32 0.0, %v5885
    %v5887 = vpop.f32.mrf.mxu0
    %v5888 = vpop.f32.mrf.mxu0
    %v5889 = vadd.f32 0.0, %v5888
    %v5890 = vpop.f32.mrf.mxu0
    %5891 = vmatprep.mubr.bf16.mxu0 0
    %5892 = vmatmul.mubr.bf16.gmra.mxu0 %v5627
    %v5893 = vpop.f32.mrf.mxu0
    %v5894 = vadd.f32 0.0, %v5893
    %v5895 = vpop.f32.mrf.mxu0
    %v5896 = vpop.f32.mrf.mxu0
    %v5897 = vadd.f32 0.0, %v5896
    %v5898 = vpop.f32.mrf.mxu0
    %5899 = vmatprep.mubr.bf16.mxu0 0
    %5900 = vmatmul.mubr.bf16.gmra.mxu0 %v5629
    %v5901 = vpop.f32.mrf.mxu0
    %v5902 = vadd.f32 0.0, %v5901
    %v5903 = vpop.f32.mrf.mxu0
    %v5904 = vpop.f32.mrf.mxu0
    %v5905 = vadd.f32 0.0, %v5904
    %v5906 = vpop.f32.mrf.mxu0
    %5907 = vmatprep.mubr.bf16.mxu0 0
    %5908 = vmatmul.mubr.bf16.gmra.mxu0 %v5631
    %v5909 = vpop.f32.mrf.mxu0
    %v5910 = vadd.f32 0.0, %v5909
    %v5911 = vpop.f32.mrf.mxu0
    %v5912 = vpop.f32.mrf.mxu0
    %v5913 = vadd.f32 0.0, %v5912
    %v5914 = vpop.f32.mrf.mxu0
    %5915 = vmatprep.mubr.bf16.mxu0 0
    %5916 = vmatmul.mubr.bf16.gmra.mxu0 %v5633
    %v5917 = vpop.f32.mrf.mxu0
    %v5918 = vadd.f32 0.0, %v5917
    %v5919 = vpop.f32.mrf.mxu0
    %v5920 = vpop.f32.mrf.mxu0
    %v5921 = vadd.f32 0.0, %v5920
    %v5922 = vpop.f32.mrf.mxu0
    %5923 = vdwg.mxu0
    %v5936 = vunpack.c.l.b16 %v5511
    %v5937 = vunpack.c.l.b16 %v5512
    %v5938 = vunpack.c.l.b16 %v5513
    %v5939 = vunpack.c.l.b16 %v5514
    %v5940 = vunpack.c.l.b16 %v5515
    %v5941 = vunpack.c.l.b16 %v5516
    %v5942 = vunpack.c.l.b16 %v5517
    %v5943 = vunpack.c.l.b16 %v5518
    %v5944 = vunpack.c.l.b16 %v5519
    %v5945 = vunpack.c.l.b16 %v5520
    %v5946 = vunpack.c.l.b16 %v5521
    %v5947 = vunpack.c.l.b16 %v5522
    %v5948 = vpack.c.b16 %v5937, %v5936
    %v5949 = vpack.c.b16 %v5939, %v5938
    %v5950 = vpack.c.b16 %v5941, %v5940
    %v5951 = vpack.c.b16 %v5943, %v5942
    %v5952 = vpack.c.b16 %v5945, %v5944
    %v5953 = vpack.c.b16 %v5947, %v5946
    %5960 = vmatprep.subr.bf16.mxu0 0
    %5961 = vmatpush1.bf16.msra.mxu0 0
    %5962 = vmatprep.subr.bf16.mxu0 0
    %5963 = vmatpush1.bf16.msra.mxu0 0
    %5964 = vmatprep.subr.bf16.mxu0 0
    %5965 = vmatpush1.bf16.msra.mxu0 %v5953
    %5966 = vmatprep.subr.bf16.mxu0 0
    %5967 = vmatpush1.bf16.msra.mxu0 %v5952
    %5968 = vmatprep.subr.bf16.mxu0 0
    %5969 = vmatpush1.bf16.msra.mxu0 %v5951
    %5970 = vmatprep.subr.bf16.mxu0 0
    %5971 = vmatpush1.bf16.msra.mxu0 %v5950
    %5972 = vmatprep.subr.bf16.mxu0 0
    %5973 = vmatpush1.bf16.msra.mxu0 %v5949
    %5974 = vmatprep.subr.bf16.mxu0 0
    %5975 = vmatpush1.bf16.msra.mxu0 %v5948
    %5976 = vmatprep.subr.bf16.mxu0 0
    %5977 = vmatpush2.bf16.msra.mxu0 0
    %5978 = vmatprep.subr.bf16.mxu0 0
    %5979 = vmatpush2.bf16.msra.mxu0 0
    %5980 = vmatprep.subr.bf16.mxu0 0
    %5981 = vmatpush2.bf16.msra.mxu0 0
    %5982 = vmatprep.subr.bf16.mxu0 0
    %5983 = vmatpush2.bf16.msra.mxu0 0
    %5984 = vmatprep.subr.bf16.mxu0 0
    %5985 = vmatpush2.bf16.msra.mxu0 0
    %5986 = vmatprep.subr.bf16.mxu0 0
    %5987 = vmatpush2.bf16.msra.mxu0 0
    %5988 = vmatprep.subr.bf16.mxu0 0
    %5989 = vmatpush2.bf16.msra.mxu0 0
    %5990 = vmatprep.subr.bf16.mxu0 0
    %5991 = vmatpush2.bf16.msra.mxu0 0
    %5992 = vmatprep.mubr.bf16.mxu0 0
    %5993 = vmatmul.mubr.bf16.gmra.mxu0 %v5601
    %v5994 = vpop.f32.mrf.mxu0
    %v5995 = vadd.f32 %v5670, %v5994
    %v5996 = vpop.f32.mrf.mxu0
    %v5997 = vpop.f32.mrf.mxu0
    %v5998 = vadd.f32 %v5673, %v5997
    %v5999 = vpop.f32.mrf.mxu0
    %6000 = vmatprep.mubr.bf16.mxu0 0
    %6001 = vmatmul.mubr.bf16.gmra.mxu0 %v5571
    %v6002 = vpop.f32.mrf.mxu0
    %v6003 = vadd.f32 %v5678, %v6002
    %v6004 = vpop.f32.mrf.mxu0
    %v6005 = vpop.f32.mrf.mxu0
    %v6006 = vadd.f32 %v5681, %v6005
    %v6007 = vpop.f32.mrf.mxu0
    %6008 = vmatprep.mubr.bf16.mxu0 0
    %6009 = vmatmul.mubr.bf16.gmra.mxu0 %v5573
    %v6010 = vpop.f32.mrf.mxu0
    %v6011 = vadd.f32 %v5686, %v6010
    %v6012 = vpop.f32.mrf.mxu0
    %v6013 = vpop.f32.mrf.mxu0
    %v6014 = vadd.f32 %v5689, %v6013
    %v6015 = vpop.f32.mrf.mxu0
    %6016 = vmatprep.mubr.bf16.mxu0 0
    %6017 = vmatmul.mubr.bf16.gmra.mxu0 %v5575
    %v6018 = vpop.f32.mrf.mxu0
    %v6019 = vadd.f32 %v5694, %v6018
    %v6020 = vpop.f32.mrf.mxu0
    %v6021 = vpop.f32.mrf.mxu0
    %v6022 = vadd.f32 %v5697, %v6021
    %v6023 = vpop.f32.mrf.mxu0
    %6024 = vmatprep.mubr.bf16.mxu0 0
    %6025 = vmatmul.mubr.bf16.gmra.mxu0 %v5577
    %v6026 = vpop.f32.mrf.mxu0
    %v6027 = vadd.f32 %v5702, %v6026
    %v6028 = vpop.f32.mrf.mxu0
    %v6029 = vpop.f32.mrf.mxu0
    %v6030 = vadd.f32 %v5705, %v6029
    %v6031 = vpop.f32.mrf.mxu0
    %6032 = vmatprep.mubr.bf16.mxu0 0
    %6033 = vmatmul.mubr.bf16.gmra.mxu0 %v5579
    %v6034 = vpop.f32.mrf.mxu0
    %v6035 = vadd.f32 %v5710, %v6034
    %v6036 = vpop.f32.mrf.mxu0
    %v6037 = vpop.f32.mrf.mxu0
    %v6038 = vadd.f32 %v5713, %v6037
    %v6039 = vpop.f32.mrf.mxu0
    %6040 = vmatprep.mubr.bf16.mxu0 0
    %6041 = vmatmul.mubr.bf16.gmra.mxu0 %v5581
    %v6042 = vpop.f32.mrf.mxu0
    %v6043 = vadd.f32 %v5718, %v6042
    %v6044 = vpop.f32.mrf.mxu0
    %v6045 = vpop.f32.mrf.mxu0
    %v6046 = vadd.f32 %v5721, %v6045
    %v6047 = vpop.f32.mrf.mxu0
    %6048 = vmatprep.mubr.bf16.mxu0 0
    %6049 = vmatmul.mubr.bf16.gmra.mxu0 %v5583
    %v6050 = vpop.f32.mrf.mxu0
    %v6051 = vadd.f32 %v5726, %v6050
    %v6052 = vpop.f32.mrf.mxu0
    %v6053 = vpop.f32.mrf.mxu0
    %v6054 = vadd.f32 %v5729, %v6053
    %v6055 = vpop.f32.mrf.mxu0
    %6056 = vmatprep.mubr.bf16.mxu0 0
    %6057 = vmatmul.mubr.bf16.gmra.mxu0 %v5585
    %v6058 = vpop.f32.mrf.mxu0
    %v6059 = vadd.f32 %v5734, %v6058
    %v6060 = vpop.f32.mrf.mxu0
    %v6061 = vpop.f32.mrf.mxu0
    %v6062 = vadd.f32 %v5737, %v6061
    %v6063 = vpop.f32.mrf.mxu0
    %6064 = vmatprep.mubr.bf16.mxu0 0
    %6065 = vmatmul.mubr.bf16.gmra.mxu0 %v5587
    %v6066 = vpop.f32.mrf.mxu0
    %v6067 = vadd.f32 %v5742, %v6066
    %v6068 = vpop.f32.mrf.mxu0
    %v6069 = vpop.f32.mrf.mxu0
    %v6070 = vadd.f32 %v5745, %v6069
    %v6071 = vpop.f32.mrf.mxu0
    %6072 = vmatprep.mubr.bf16.mxu0 0
    %6073 = vmatmul.mubr.bf16.gmra.mxu0 %v5589
    %v6074 = vpop.f32.mrf.mxu0
    %v6075 = vadd.f32 %v5750, %v6074
    %v6076 = vpop.f32.mrf.mxu0
    %v6077 = vpop.f32.mrf.mxu0
    %v6078 = vadd.f32 %v5753, %v6077
    %v6079 = vpop.f32.mrf.mxu0
    %6080 = vmatprep.mubr.bf16.mxu0 0
    %6081 = vmatmul.mubr.bf16.gmra.mxu0 %v5591
    %v6082 = vpop.f32.mrf.mxu0
    %v6083 = vadd.f32 %v5758, %v6082
    %v6084 = vpop.f32.mrf.mxu0
    %v6085 = vpop.f32.mrf.mxu0
    %v6086 = vadd.f32 %v5761, %v6085
    %v6087 = vpop.f32.mrf.mxu0
    %6088 = vmatprep.mubr.bf16.mxu0 0
    %6089 = vmatmul.mubr.bf16.gmra.mxu0 %v5593
    %v6090 = vpop.f32.mrf.mxu0
    %v6091 = vadd.f32 %v5766, %v6090
    %v6092 = vpop.f32.mrf.mxu0
    %v6093 = vpop.f32.mrf.mxu0
    %v6094 = vadd.f32 %v5769, %v6093
    %v6095 = vpop.f32.mrf.mxu0
    %6096 = vmatprep.mubr.bf16.mxu0 0
    %6097 = vmatmul.mubr.bf16.gmra.mxu0 %v5595
    %v6098 = vpop.f32.mrf.mxu0
    %v6099 = vadd.f32 %v5774, %v6098
    %v6100 = vpop.f32.mrf.mxu0
    %v6101 = vpop.f32.mrf.mxu0
    %v6102 = vadd.f32 %v5777, %v6101
    %v6103 = vpop.f32.mrf.mxu0
    %6104 = vmatprep.mubr.bf16.mxu0 0
    %6105 = vmatmul.mubr.bf16.gmra.mxu0 %v5597
    %v6106 = vpop.f32.mrf.mxu0
    %v6107 = vadd.f32 %v5782, %v6106
    %v6108 = vpop.f32.mrf.mxu0
    %v6109 = vpop.f32.mrf.mxu0
    %v6110 = vadd.f32 %v5785, %v6109
    %v6111 = vpop.f32.mrf.mxu0
    %6112 = vmatprep.mubr.bf16.mxu0 0
    %6113 = vmatmul.mubr.bf16.gmra.mxu0 %v5599
    %v6114 = vpop.f32.mrf.mxu0
    %v6115 = vadd.f32 %v5790, %v6114
    %v6116 = vpop.f32.mrf.mxu0
    %v6117 = vpop.f32.mrf.mxu0
    %v6118 = vadd.f32 %v5793, %v6117
    %v6119 = vpop.f32.mrf.mxu0
    %6120 = vmatprep.mubr.bf16.mxu0 0
    %6121 = vmatmul.mubr.bf16.gmra.mxu0 %v5633
    %v6122 = vpop.f32.mrf.mxu0
    %v6123 = vadd.f32 %v5798, %v6122
    %v6124 = vpop.f32.mrf.mxu0
    %v6125 = vpop.f32.mrf.mxu0
    %v6126 = vadd.f32 %v5801, %v6125
    %v6127 = vpop.f32.mrf.mxu0
    %6128 = vmatprep.mubr.bf16.mxu0 0
    %6129 = vmatmul.mubr.bf16.gmra.mxu0 %v5603
    %v6130 = vpop.f32.mrf.mxu0
    %v6131 = vadd.f32 %v5806, %v6130
    %v6132 = vpop.f32.mrf.mxu0
    %v6133 = vpop.f32.mrf.mxu0
    %v6134 = vadd.f32 %v5809, %v6133
    %v6135 = vpop.f32.mrf.mxu0
    %6136 = vmatprep.mubr.bf16.mxu0 0
    %6137 = vmatmul.mubr.bf16.gmra.mxu0 %v5605
    %v6138 = vpop.f32.mrf.mxu0
    %v6139 = vadd.f32 %v5814, %v6138
    %v6140 = vpop.f32.mrf.mxu0
    %v6141 = vpop.f32.mrf.mxu0
    %v6142 = vadd.f32 %v5817, %v6141
    %v6143 = vpop.f32.mrf.mxu0
    %6144 = vmatprep.mubr.bf16.mxu0 0
    %6145 = vmatmul.mubr.bf16.gmra.mxu0 %v5607
    %v6146 = vpop.f32.mrf.mxu0
    %v6147 = vadd.f32 %v5822, %v6146
    %v6148 = vpop.f32.mrf.mxu0
    %v6149 = vpop.f32.mrf.mxu0
    %v6150 = vadd.f32 %v5825, %v6149
    %v6151 = vpop.f32.mrf.mxu0
    %6152 = vmatprep.mubr.bf16.mxu0 0
    %6153 = vmatmul.mubr.bf16.gmra.mxu0 %v5609
    %v6154 = vpop.f32.mrf.mxu0
    %v6155 = vadd.f32 %v5830, %v6154
    %v6156 = vpop.f32.mrf.mxu0
    %v6157 = vpop.f32.mrf.mxu0
    %v6158 = vadd.f32 %v5833, %v6157
    %v6159 = vpop.f32.mrf.mxu0
    %6160 = vmatprep.mubr.bf16.mxu0 0
    %6161 = vmatmul.mubr.bf16.gmra.mxu0 %v5611
    %v6162 = vpop.f32.mrf.mxu0
    %v6163 = vadd.f32 %v5838, %v6162
    %v6164 = vpop.f32.mrf.mxu0
    %v6165 = vpop.f32.mrf.mxu0
    %v6166 = vadd.f32 %v5841, %v6165
    %v6167 = vpop.f32.mrf.mxu0
    %6168 = vmatprep.mubr.bf16.mxu0 0
    %6169 = vmatmul.mubr.bf16.gmra.mxu0 %v5613
    %v6170 = vpop.f32.mrf.mxu0
    %v6171 = vadd.f32 %v5846, %v6170
    %v6172 = vpop.f32.mrf.mxu0
    %v6173 = vpop.f32.mrf.mxu0
    %v6174 = vadd.f32 %v5849, %v6173
    %v6175 = vpop.f32.mrf.mxu0
    %6176 = vmatprep.mubr.bf16.mxu0 0
    %6177 = vmatmul.mubr.bf16.gmra.mxu0 %v5615
    %v6178 = vpop.f32.mrf.mxu0
    %v6179 = vadd.f32 %v5854, %v6178
    %v6180 = vpop.f32.mrf.mxu0
    %v6181 = vpop.f32.mrf.mxu0
    %v6182 = vadd.f32 %v5857, %v6181
    %v6183 = vpop.f32.mrf.mxu0
    %6184 = vmatprep.mubr.bf16.mxu0 0
    %6185 = vmatmul.mubr.bf16.gmra.mxu0 %v5617
    %v6186 = vpop.f32.mrf.mxu0
    %v6187 = vadd.f32 %v5862, %v6186
    %v6188 = vpop.f32.mrf.mxu0
    %v6189 = vpop.f32.mrf.mxu0
    %v6190 = vadd.f32 %v5865, %v6189
    %v6191 = vpop.f32.mrf.mxu0
    %6192 = vmatprep.mubr.bf16.mxu0 0
    %6193 = vmatmul.mubr.bf16.gmra.mxu0 %v5619
    %v6194 = vpop.f32.mrf.mxu0
    %v6195 = vadd.f32 %v5870, %v6194
    %v6196 = vpop.f32.mrf.mxu0
    %v6197 = vpop.f32.mrf.mxu0
    %v6198 = vadd.f32 %v5873, %v6197
    %v6199 = vpop.f32.mrf.mxu0
    %6200 = vmatprep.mubr.bf16.mxu0 0
    %6201 = vmatmul.mubr.bf16.gmra.mxu0 %v5621
    %v6202 = vpop.f32.mrf.mxu0
    %v6203 = vadd.f32 %v5878, %v6202
    %v6204 = vpop.f32.mrf.mxu0
    %v6205 = vpop.f32.mrf.mxu0
    %v6206 = vadd.f32 %v5881, %v6205
    %v6207 = vpop.f32.mrf.mxu0
    %6208 = vmatprep.mubr.bf16.mxu0 0
    %6209 = vmatmul.mubr.bf16.gmra.mxu0 %v5623
    %v6210 = vpop.f32.mrf.mxu0
    %v6211 = vadd.f32 %v5886, %v6210
    %v6212 = vpop.f32.mrf.mxu0
    %v6213 = vpop.f32.mrf.mxu0
    %v6214 = vadd.f32 %v5889, %v6213
    %v6215 = vpop.f32.mrf.mxu0
    %6216 = vmatprep.mubr.bf16.mxu0 0
    %6217 = vmatmul.mubr.bf16.gmra.mxu0 %v5625
    %v6218 = vpop.f32.mrf.mxu0
    %v6219 = vadd.f32 %v5894, %v6218
    %v6220 = vpop.f32.mrf.mxu0
    %v6221 = vpop.f32.mrf.mxu0
    %v6222 = vadd.f32 %v5897, %v6221
    %v6223 = vpop.f32.mrf.mxu0
    %6224 = vmatprep.mubr.bf16.mxu0 0
    %6225 = vmatmul.mubr.bf16.gmra.mxu0 %v5627
    %v6226 = vpop.f32.mrf.mxu0
    %v6227 = vadd.f32 %v5902, %v6226
    %v6228 = vpop.f32.mrf.mxu0
    %v6229 = vpop.f32.mrf.mxu0
    %v6230 = vadd.f32 %v5905, %v6229
    %v6231 = vpop.f32.mrf.mxu0
    %6232 = vmatprep.mubr.bf16.mxu0 0
    %6233 = vmatmul.mubr.bf16.gmra.mxu0 %v5629
    %v6234 = vpop.f32.mrf.mxu0
    %v6235 = vadd.f32 %v5910, %v6234
    %v6236 = vpop.f32.mrf.mxu0
    %v6237 = vpop.f32.mrf.mxu0
    %v6238 = vadd.f32 %v5913, %v6237
    %v6239 = vpop.f32.mrf.mxu0
    %6240 = vmatprep.mubr.bf16.mxu0 0
    %6241 = vmatmul.mubr.bf16.gmra.mxu0 %v5631
    %v6242 = vpop.f32.mrf.mxu0
    %v6243 = vadd.f32 %v5918, %v6242
    %v6244 = vpop.f32.mrf.mxu0
    %v6245 = vpop.f32.mrf.mxu0
    %v6246 = vadd.f32 %v5921, %v6245
    %v6247 = vpop.f32.mrf.mxu0
    %6248 = vdwg.mxu0
    %v6249 = vld [vmem:[%s0 + $0x114] sm:$0xf]
    %v6250 = vld [vmem:[%s0 + $0x118] sm:$0xf]
    %v6251 = vld [vmem:[%s0 + $0x11c] sm:$0xf]
    %v6252 = vld [vmem:[%s0 + $0x120] sm:$0xf]
    %v6253 = vld [vmem:[%s0 + $0x124] sm:$0xf]
    %v6254 = vld [vmem:[%s0 + $0x128] sm:$0xf]
    %v6255 = vld [vmem:[%s0 + $0x12c] sm:$0xf]
    %v6256 = vld [vmem:[%s0 + $0x130] sm:$0xf]
    %v6257 = vld [vmem:[%s0 + $0x134] sm:$0xf]
    %v6258 = vld [vmem:[%s0 + $0x138] sm:$0xf]
    %v6259 = vld [vmem:[%s0 + $0x13c] sm:$0xf]
    %v6260 = vld [vmem:[%s0 + $0x140] sm:$0xf]
    %v6273 = vunpack.c.l.b16 %v6249
    %v6274 = vunpack.c.l.b16 %v6250
    %v6275 = vunpack.c.l.b16 %v6251
    %v6276 = vunpack.c.l.b16 %v6252
    %v6277 = vunpack.c.l.b16 %v6253
    %v6278 = vunpack.c.l.b16 %v6254
    %v6279 = vunpack.c.l.b16 %v6255
    %v6280 = vunpack.c.l.b16 %v6256
    %v6281 = vunpack.c.l.b16 %v6257
    %v6282 = vunpack.c.l.b16 %v6258
    %v6283 = vunpack.c.l.b16 %v6259
    %v6284 = vunpack.c.l.b16 %v6260
    %v6285 = vpack.c.b16 %v6274, %v6273
    %v6286 = vpack.c.b16 %v6276, %v6275
    %v6287 = vpack.c.b16 %v6278, %v6277
    %v6288 = vpack.c.b16 %v6280, %v6279
    %v6289 = vpack.c.b16 %v6282, %v6281
    %v6290 = vpack.c.b16 %v6284, %v6283
    %6297 = vmatprep.subr.bf16.mxu0 0
    %6298 = vmatpush1.bf16.msra.mxu0 0
    %6299 = vmatprep.subr.bf16.mxu0 0
    %6300 = vmatpush1.bf16.msra.mxu0 0
    %6301 = vmatprep.subr.bf16.mxu0 0
    %6302 = vmatpush1.bf16.msra.mxu0 %v6290
    %6303 = vmatprep.subr.bf16.mxu0 0
    %6304 = vmatpush1.bf16.msra.mxu0 %v6289
    %6305 = vmatprep.subr.bf16.mxu0 0
    %6306 = vmatpush1.bf16.msra.mxu0 %v6288
    %6307 = vmatprep.subr.bf16.mxu0 0
    %6308 = vmatpush1.bf16.msra.mxu0 %v6287
    %6309 = vmatprep.subr.bf16.mxu0 0
    %6310 = vmatpush1.bf16.msra.mxu0 %v6286
    %6311 = vmatprep.subr.bf16.mxu0 0
    %6312 = vmatpush1.bf16.msra.mxu0 %v6285
    %6313 = vmatprep.subr.bf16.mxu0 0
    %6314 = vmatpush2.bf16.msra.mxu0 0
    %6315 = vmatprep.subr.bf16.mxu0 0
    %6316 = vmatpush2.bf16.msra.mxu0 0
    %6317 = vmatprep.subr.bf16.mxu0 0
    %6318 = vmatpush2.bf16.msra.mxu0 0
    %6319 = vmatprep.subr.bf16.mxu0 0
    %6320 = vmatpush2.bf16.msra.mxu0 0
    %6321 = vmatprep.subr.bf16.mxu0 0
    %6322 = vmatpush2.bf16.msra.mxu0 0
    %6323 = vmatprep.subr.bf16.mxu0 0
    %6324 = vmatpush2.bf16.msra.mxu0 0
    %6325 = vmatprep.subr.bf16.mxu0 0
    %6326 = vmatpush2.bf16.msra.mxu0 0
    %6327 = vmatprep.subr.bf16.mxu0 0
    %6328 = vmatpush2.bf16.msra.mxu0 0
    %6329 = vmatprep.mubr.bf16.mxu0 0
    %6330 = vmatmul.mubr.bf16.gmra.mxu0 %v5573
    %v6331 = vpop.f32.mrf.mxu0
    %v6332 = vadd.f32 0.0, %v6331
    %v6333 = vpop.f32.mrf.mxu0
    %v6334 = vpop.f32.mrf.mxu0
    %v6335 = vadd.f32 0.0, %v6334
    %v6336 = vpop.f32.mrf.mxu0
    %6337 = vmatprep.mubr.bf16.mxu0 0
    %6338 = vmatmul.mubr.bf16.gmra.mxu0 %v5575
    %v6339 = vpop.f32.mrf.mxu0
    %v6340 = vadd.f32 0.0, %v6339
    %v6341 = vpop.f32.mrf.mxu0
    %v6342 = vpop.f32.mrf.mxu0
    %v6343 = vadd.f32 0.0, %v6342
    %v6344 = vpop.f32.mrf.mxu0
    %6345 = vmatprep.mubr.bf16.mxu0 0
    %6346 = vmatmul.mubr.bf16.gmra.mxu0 %v5577
    %v6347 = vpop.f32.mrf.mxu0
    %v6348 = vadd.f32 0.0, %v6347
    %v6349 = vpop.f32.mrf.mxu0
    %v6350 = vpop.f32.mrf.mxu0
    %v6351 = vadd.f32 0.0, %v6350
    %v6352 = vpop.f32.mrf.mxu0
    %6353 = vmatprep.mubr.bf16.mxu0 0
    %6354 = vmatmul.mubr.bf16.gmra.mxu0 %v5579
    %v6355 = vpop.f32.mrf.mxu0
    %v6356 = vadd.f32 0.0, %v6355
    %v6357 = vpop.f32.mrf.mxu0
    %v6358 = vpop.f32.mrf.mxu0
    %v6359 = vadd.f32 0.0, %v6358
    %v6360 = vpop.f32.mrf.mxu0
    %6361 = vmatprep.mubr.bf16.mxu0 0
    %6362 = vmatmul.mubr.bf16.gmra.mxu0 %v5581
    %v6363 = vpop.f32.mrf.mxu0
    %v6364 = vadd.f32 0.0, %v6363
    %v6365 = vpop.f32.mrf.mxu0
    %v6366 = vpop.f32.mrf.mxu0
    %v6367 = vadd.f32 0.0, %v6366
    %v6368 = vpop.f32.mrf.mxu0
    %6369 = vmatprep.mubr.bf16.mxu0 0
    %6370 = vmatmul.mubr.bf16.gmra.mxu0 %v5583
    %v6371 = vpop.f32.mrf.mxu0
    %v6372 = vadd.f32 0.0, %v6371
    %v6373 = vpop.f32.mrf.mxu0
    %v6374 = vpop.f32.mrf.mxu0
    %v6375 = vadd.f32 0.0, %v6374
    %v6376 = vpop.f32.mrf.mxu0
    %6377 = vmatprep.mubr.bf16.mxu0 0
    %6378 = vmatmul.mubr.bf16.gmra.mxu0 %v5585
    %v6379 = vpop.f32.mrf.mxu0
    %v6380 = vadd.f32 0.0, %v6379
    %v6381 = vpop.f32.mrf.mxu0
    %v6382 = vpop.f32.mrf.mxu0
    %v6383 = vadd.f32 0.0, %v6382
    %v6384 = vpop.f32.mrf.mxu0
    %6385 = vmatprep.mubr.bf16.mxu0 0
    %6386 = vmatmul.mubr.bf16.gmra.mxu0 %v5587
    %v6387 = vpop.f32.mrf.mxu0
    %v6388 = vadd.f32 0.0, %v6387
    %v6389 = vpop.f32.mrf.mxu0
    %v6390 = vpop.f32.mrf.mxu0
    %v6391 = vadd.f32 0.0, %v6390
    %v6392 = vpop.f32.mrf.mxu0
    %6393 = vmatprep.mubr.bf16.mxu0 0
    %6394 = vmatmul.mubr.bf16.gmra.mxu0 %v5589
    %v6395 = vpop.f32.mrf.mxu0
    %v6396 = vadd.f32 0.0, %v6395
    %v6397 = vpop.f32.mrf.mxu0
    %v6398 = vpop.f32.mrf.mxu0
    %v6399 = vadd.f32 0.0, %v6398
    %v6400 = vpop.f32.mrf.mxu0
    %6401 = vmatprep.mubr.bf16.mxu0 0
    %6402 = vmatmul.mubr.bf16.gmra.mxu0 %v5591
    %v6403 = vpop.f32.mrf.mxu0
    %v6404 = vadd.f32 0.0, %v6403
    %v6405 = vpop.f32.mrf.mxu0
    %v6406 = vpop.f32.mrf.mxu0
    %v6407 = vadd.f32 0.0, %v6406
    %v6408 = vpop.f32.mrf.mxu0
    %6409 = vmatprep.mubr.bf16.mxu0 0
    %6410 = vmatmul.mubr.bf16.gmra.mxu0 %v5593
    %v6411 = vpop.f32.mrf.mxu0
    %v6412 = vadd.f32 0.0, %v6411
    %v6413 = vpop.f32.mrf.mxu0
    %v6414 = vpop.f32.mrf.mxu0
    %v6415 = vadd.f32 0.0, %v6414
    %v6416 = vpop.f32.mrf.mxu0
    %6417 = vmatprep.mubr.bf16.mxu0 0
    %6418 = vmatmul.mubr.bf16.gmra.mxu0 %v5595
    %v6419 = vpop.f32.mrf.mxu0
    %v6420 = vadd.f32 0.0, %v6419
    %v6421 = vpop.f32.mrf.mxu0
    %v6422 = vpop.f32.mrf.mxu0
    %v6423 = vadd.f32 0.0, %v6422
    %v6424 = vpop.f32.mrf.mxu0
    %6425 = vmatprep.mubr.bf16.mxu0 0
    %6426 = vmatmul.mubr.bf16.gmra.mxu0 %v5597
    %v6427 = vpop.f32.mrf.mxu0
    %v6428 = vadd.f32 0.0, %v6427
    %v6429 = vpop.f32.mrf.mxu0
    %v6430 = vpop.f32.mrf.mxu0
    %v6431 = vadd.f32 0.0, %v6430
    %v6432 = vpop.f32.mrf.mxu0
    %6433 = vmatprep.mubr.bf16.mxu0 0
    %6434 = vmatmul.mubr.bf16.gmra.mxu0 %v5599
    %v6435 = vpop.f32.mrf.mxu0
    %v6436 = vadd.f32 0.0, %v6435
    %v6437 = vpop.f32.mrf.mxu0
    %v6438 = vpop.f32.mrf.mxu0
    %v6439 = vadd.f32 0.0, %v6438
    %v6440 = vpop.f32.mrf.mxu0
    %6441 = vmatprep.mubr.bf16.mxu0 0
    %6442 = vmatmul.mubr.bf16.gmra.mxu0 %v5601
    %v6443 = vpop.f32.mrf.mxu0
    %v6444 = vadd.f32 0.0, %v6443
    %v6445 = vpop.f32.mrf.mxu0
    %v6446 = vpop.f32.mrf.mxu0
    %v6447 = vadd.f32 0.0, %v6446
    %v6448 = vpop.f32.mrf.mxu0
    %6449 = vmatprep.mubr.bf16.mxu0 0
    %6450 = vmatmul.mubr.bf16.gmra.mxu0 %v5571
    %v6451 = vpop.f32.mrf.mxu0
    %v6452 = vadd.f32 0.0, %v6451
    %v6453 = vpop.f32.mrf.mxu0
    %v6454 = vpop.f32.mrf.mxu0
    %v6455 = vadd.f32 0.0, %v6454
    %v6456 = vpop.f32.mrf.mxu0
    %6457 = vmatprep.mubr.bf16.mxu0 0
    %6458 = vmatmul.mubr.bf16.gmra.mxu0 %v5605
    %v6459 = vpop.f32.mrf.mxu0
    %v6460 = vadd.f32 0.0, %v6459
    %v6461 = vpop.f32.mrf.mxu0
    %v6462 = vpop.f32.mrf.mxu0
    %v6463 = vadd.f32 0.0, %v6462
    %v6464 = vpop.f32.mrf.mxu0
    %6465 = vmatprep.mubr.bf16.mxu0 0
    %6466 = vmatmul.mubr.bf16.gmra.mxu0 %v5607
    %v6467 = vpop.f32.mrf.mxu0
    %v6468 = vadd.f32 0.0, %v6467
    %v6469 = vpop.f32.mrf.mxu0
    %v6470 = vpop.f32.mrf.mxu0
    %v6471 = vadd.f32 0.0, %v6470
    %v6472 = vpop.f32.mrf.mxu0
    %6473 = vmatprep.mubr.bf16.mxu0 0
    %6474 = vmatmul.mubr.bf16.gmra.mxu0 %v5609
    %v6475 = vpop.f32.mrf.mxu0
    %v6476 = vadd.f32 0.0, %v6475
    %v6477 = vpop.f32.mrf.mxu0
    %v6478 = vpop.f32.mrf.mxu0
    %v6479 = vadd.f32 0.0, %v6478
    %v6480 = vpop.f32.mrf.mxu0
    %6481 = vmatprep.mubr.bf16.mxu0 0
    %6482 = vmatmul.mubr.bf16.gmra.mxu0 %v5611
    %v6483 = vpop.f32.mrf.mxu0
    %v6484 = vadd.f32 0.0, %v6483
    %v6485 = vpop.f32.mrf.mxu0
    %v6486 = vpop.f32.mrf.mxu0
    %v6487 = vadd.f32 0.0, %v6486
    %v6488 = vpop.f32.mrf.mxu0
    %6489 = vmatprep.mubr.bf16.mxu0 0
    %6490 = vmatmul.mubr.bf16.gmra.mxu0 %v5613
    %v6491 = vpop.f32.mrf.mxu0
    %v6492 = vadd.f32 0.0, %v6491
    %v6493 = vpop.f32.mrf.mxu0
    %v6494 = vpop.f32.mrf.mxu0
    %v6495 = vadd.f32 0.0, %v6494
    %v6496 = vpop.f32.mrf.mxu0
    %6497 = vmatprep.mubr.bf16.mxu0 0
    %6498 = vmatmul.mubr.bf16.gmra.mxu0 %v5615
    %v6499 = vpop.f32.mrf.mxu0
    %v6500 = vadd.f32 0.0, %v6499
    %v6501 = vpop.f32.mrf.mxu0
    %v6502 = vpop.f32.mrf.mxu0
    %v6503 = vadd.f32 0.0, %v6502
    %v6504 = vpop.f32.mrf.mxu0
    %6505 = vmatprep.mubr.bf16.mxu0 0
    %6506 = vmatmul.mubr.bf16.gmra.mxu0 %v5617
    %v6507 = vpop.f32.mrf.mxu0
    %v6508 = vadd.f32 0.0, %v6507
    %v6509 = vpop.f32.mrf.mxu0
    %v6510 = vpop.f32.mrf.mxu0
    %v6511 = vadd.f32 0.0, %v6510
    %v6512 = vpop.f32.mrf.mxu0
    %6513 = vmatprep.mubr.bf16.mxu0 0
    %6514 = vmatmul.mubr.bf16.gmra.mxu0 %v5619
    %v6515 = vpop.f32.mrf.mxu0
    %v6516 = vadd.f32 0.0, %v6515
    %v6517 = vpop.f32.mrf.mxu0
    %v6518 = vpop.f32.mrf.mxu0
    %v6519 = vadd.f32 0.0, %v6518
    %v6520 = vpop.f32.mrf.mxu0
    %6521 = vmatprep.mubr.bf16.mxu0 0
    %6522 = vmatmul.mubr.bf16.gmra.mxu0 %v5621
    %v6523 = vpop.f32.mrf.mxu0
    %v6524 = vadd.f32 0.0, %v6523
    %v6525 = vpop.f32.mrf.mxu0
    %v6526 = vpop.f32.mrf.mxu0
    %v6527 = vadd.f32 0.0, %v6526
    %v6528 = vpop.f32.mrf.mxu0
    %6529 = vmatprep.mubr.bf16.mxu0 0
    %6530 = vmatmul.mubr.bf16.gmra.mxu0 %v5623
    %v6531 = vpop.f32.mrf.mxu0
    %v6532 = vadd.f32 0.0, %v6531
    %v6533 = vpop.f32.mrf.mxu0
    %v6534 = vpop.f32.mrf.mxu0
    %v6535 = vadd.f32 0.0, %v6534
    %v6536 = vpop.f32.mrf.mxu0
    %6537 = vmatprep.mubr.bf16.mxu0 0
    %6538 = vmatmul.mubr.bf16.gmra.mxu0 %v5625
    %v6539 = vpop.f32.mrf.mxu0
    %v6540 = vadd.f32 0.0, %v6539
    %v6541 = vpop.f32.mrf.mxu0
    %v6542 = vpop.f32.mrf.mxu0
    %v6543 = vadd.f32 0.0, %v6542
    %v6544 = vpop.f32.mrf.mxu0
    %6545 = vmatprep.mubr.bf16.mxu0 0
    %6546 = vmatmul.mubr.bf16.gmra.mxu0 %v5627
    %v6547 = vpop.f32.mrf.mxu0
    %v6548 = vadd.f32 0.0, %v6547
    %v6549 = vpop.f32.mrf.mxu0
    %v6550 = vpop.f32.mrf.mxu0
    %v6551 = vadd.f32 0.0, %v6550
    %v6552 = vpop.f32.mrf.mxu0
    %6553 = vmatprep.mubr.bf16.mxu0 0
    %6554 = vmatmul.mubr.bf16.gmra.mxu0 %v5629
    %v6555 = vpop.f32.mrf.mxu0
    %v6556 = vadd.f32 0.0, %v6555
    %v6557 = vpop.f32.mrf.mxu0
    %v6558 = vpop.f32.mrf.mxu0
    %v6559 = vadd.f32 0.0, %v6558
    %v6560 = vpop.f32.mrf.mxu0
    %6561 = vmatprep.mubr.bf16.mxu0 0
    %6562 = vmatmul.mubr.bf16.gmra.mxu0 %v5631
    %v6563 = vpop.f32.mrf.mxu0
    %v6564 = vadd.f32 0.0, %v6563
    %v6565 = vpop.f32.mrf.mxu0
    %v6566 = vpop.f32.mrf.mxu0
    %v6567 = vadd.f32 0.0, %v6566
    %v6568 = vpop.f32.mrf.mxu0
    %6569 = vmatprep.mubr.bf16.mxu0 0
    %6570 = vmatmul.mubr.bf16.gmra.mxu0 %v5633
    %v6571 = vpop.f32.mrf.mxu0
    %v6572 = vadd.f32 0.0, %v6571
    %v6573 = vpop.f32.mrf.mxu0
    %v6574 = vpop.f32.mrf.mxu0
    %v6575 = vadd.f32 0.0, %v6574
    %v6576 = vpop.f32.mrf.mxu0
    %6577 = vmatprep.mubr.bf16.mxu0 0
    %6578 = vmatmul.mubr.bf16.gmra.mxu0 %v5603
    %v6579 = vpop.f32.mrf.mxu0
    %v6580 = vadd.f32 0.0, %v6579
    %v6581 = vpop.f32.mrf.mxu0
    %v6582 = vpop.f32.mrf.mxu0
    %v6583 = vadd.f32 0.0, %v6582
    %v6584 = vpop.f32.mrf.mxu0
    %6585 = vdwg.mxu0
    %v6586 = vadd.f32 %v5995, %v6332
    %v6587 = vadd.f32 %v5998, %v6335
    %v6588 = vadd.f32 %v6003, %v6340
    %v6589 = vadd.f32 %v6006, %v6343
    %v6590 = vadd.f32 %v6011, %v6348
    %v6591 = vadd.f32 %v6014, %v6351
    %v6592 = vadd.f32 %v6019, %v6356
    %v6593 = vadd.f32 %v6022, %v6359
    %v6594 = vadd.f32 %v6027, %v6364
    %v6595 = vadd.f32 %v6030, %v6367
    %v6596 = vadd.f32 %v6035, %v6372
    %v6597 = vadd.f32 %v6038, %v6375
    %v6598 = vadd.f32 %v6043, %v6380
    %v6599 = vadd.f32 %v6046, %v6383
    %v6600 = vadd.f32 %v6051, %v6388
    %v6601 = vadd.f32 %v6054, %v6391
    %v6602 = vadd.f32 %v6059, %v6396
    %v6603 = vadd.f32 %v6062, %v6399
    %v6604 = vadd.f32 %v6067, %v6404
    %v6605 = vadd.f32 %v6070, %v6407
    %v6606 = vadd.f32 %v6075, %v6412
    %v6607 = vadd.f32 %v6078, %v6415
    %v6608 = vadd.f32 %v6083, %v6420
    %v6609 = vadd.f32 %v6086, %v6423
    %v6610 = vadd.f32 %v6091, %v6428
    %v6611 = vadd.f32 %v6094, %v6431
    %v6612 = vadd.f32 %v6099, %v6436
    %v6613 = vadd.f32 %v6102, %v6439
    %v6614 = vadd.f32 %v6107, %v6444
    %v6615 = vadd.f32 %v6110, %v6447
    %v6616 = vadd.f32 %v6115, %v6452
    %v6617 = vadd.f32 %v6118, %v6455
    %v6618 = vadd.f32 %v6123, %v6460
    %v6619 = vadd.f32 %v6126, %v6463
    %v6620 = vadd.f32 %v6131, %v6468
    %v6621 = vadd.f32 %v6134, %v6471
    %v6622 = vadd.f32 %v6139, %v6476
    %v6623 = vadd.f32 %v6142, %v6479
    %v6624 = vadd.f32 %v6147, %v6484
    %v6625 = vadd.f32 %v6150, %v6487
    %v6626 = vadd.f32 %v6155, %v6492
    %v6627 = vadd.f32 %v6158, %v6495
    %v6628 = vadd.f32 %v6163, %v6500
    %v6629 = vadd.f32 %v6166, %v6503
    %v6630 = vadd.f32 %v6171, %v6508
    %v6631 = vadd.f32 %v6174, %v6511
    %v6632 = vadd.f32 %v6179, %v6516
    %v6633 = vadd.f32 %v6182, %v6519
    %v6634 = vadd.f32 %v6187, %v6524
    %v6635 = vadd.f32 %v6190, %v6527
    %v6636 = vadd.f32 %v6195, %v6532
    %v6637 = vadd.f32 %v6198, %v6535
    %v6638 = vadd.f32 %v6203, %v6540
    %v6639 = vadd.f32 %v6206, %v6543
    %v6640 = vadd.f32 %v6211, %v6548
    %v6641 = vadd.f32 %v6214, %v6551
    %v6642 = vadd.f32 %v6219, %v6556
    %v6643 = vadd.f32 %v6222, %v6559
    %v6644 = vadd.f32 %v6227, %v6564
    %v6645 = vadd.f32 %v6230, %v6567
    %v6646 = vadd.f32 %v6235, %v6572
    %v6647 = vadd.f32 %v6238, %v6575
    %v6648 = vadd.f32 %v6243, %v6580
    %v6649 = vadd.f32 %v6246, %v6583
    %v6650 = vld [vmem:[%s1 + $0x2] sm:$0x1]
    %v6651 = vlaneseq
    %v6652 = vshrl.u32 %v6651, 7
    %v6653 = vsub.s32 0, %v6652
    %v6654 = vrot.slane %v6650, %v6653
    %v6655 = vadd.f32 %v6586, %v6654
    %v6656 = vadd.f32 %v6587, %v6654
    %v6657 = vadd.f32 %v6588, %v6654
    %v6658 = vadd.f32 %v6589, %v6654
    %v6659 = vadd.f32 %v6590, %v6654
    %v6660 = vadd.f32 %v6591, %v6654
    %v6661 = vadd.f32 %v6592, %v6654
    %v6662 = vadd.f32 %v6593, %v6654
    %v6663 = vadd.f32 %v6594, %v6654
    %v6664 = vadd.f32 %v6595, %v6654
    %v6665 = vadd.f32 %v6596, %v6654
    %v6666 = vadd.f32 %v6597, %v6654
    %v6667 = vadd.f32 %v6598, %v6654
    %v6668 = vadd.f32 %v6599, %v6654
    %v6669 = vadd.f32 %v6600, %v6654
    %v6670 = vadd.f32 %v6601, %v6654
    %v6671 = vadd.f32 %v6602, %v6654
    %v6672 = vadd.f32 %v6603, %v6654
    %v6673 = vadd.f32 %v6604, %v6654
    %v6674 = vadd.f32 %v6605, %v6654
    %v6675 = vadd.f32 %v6606, %v6654
    %v6676 = vadd.f32 %v6607, %v6654
    %v6677 = vadd.f32 %v6608, %v6654
    %v6678 = vadd.f32 %v6609, %v6654
    %v6679 = vadd.f32 %v6610, %v6654
    %v6680 = vadd.f32 %v6611, %v6654
    %v6681 = vadd.f32 %v6612, %v6654
    %v6682 = vadd.f32 %v6613, %v6654
    %v6683 = vadd.f32 %v6614, %v6654
    %v6684 = vadd.f32 %v6615, %v6654
    %v6685 = vadd.f32 %v6616, %v6654
    %v6686 = vadd.f32 %v6617, %v6654
    %v6687 = vadd.f32 %v6618, %v6654
    %v6688 = vadd.f32 %v6619, %v6654
    %v6689 = vadd.f32 %v6620, %v6654
    %v6690 = vadd.f32 %v6621, %v6654
    %v6691 = vadd.f32 %v6622, %v6654
    %v6692 = vadd.f32 %v6623, %v6654
    %v6693 = vadd.f32 %v6624, %v6654
    %v6694 = vadd.f32 %v6625, %v6654
    %v6695 = vadd.f32 %v6626, %v6654
    %v6696 = vadd.f32 %v6627, %v6654
    %v6697 = vadd.f32 %v6628, %v6654
    %v6698 = vadd.f32 %v6629, %v6654
    %v6699 = vadd.f32 %v6630, %v6654
    %v6700 = vadd.f32 %v6631, %v6654
    %v6701 = vadd.f32 %v6632, %v6654
    %v6702 = vadd.f32 %v6633, %v6654
    %v6703 = vadd.f32 %v6634, %v6654
    %v6704 = vadd.f32 %v6635, %v6654
    %v6705 = vadd.f32 %v6636, %v6654
    %v6706 = vadd.f32 %v6637, %v6654
    %v6707 = vadd.f32 %v6638, %v6654
    %v6708 = vadd.f32 %v6639, %v6654
    %v6709 = vadd.f32 %v6640, %v6654
    %v6710 = vadd.f32 %v6641, %v6654
    %v6711 = vadd.f32 %v6642, %v6654
    %v6712 = vadd.f32 %v6643, %v6654
    %v6713 = vadd.f32 %v6644, %v6654
    %v6714 = vadd.f32 %v6645, %v6654
    %v6715 = vadd.f32 %v6646, %v6654
    %v6716 = vadd.f32 %v6647, %v6654
    %v6717 = vadd.f32 %v6648, %v6654
    %v6718 = vadd.f32 %v6649, %v6654
    %v6719 = vadd.f32 %v6655, %v2444
    %v6720 = vadd.f32 %v6656, %v2445
    %v6721 = vadd.f32 %v6657, %v2446
    %v6722 = vadd.f32 %v6658, %v2447
    %v6723 = vadd.f32 %v6659, %v2448
    %v6724 = vadd.f32 %v6660, %v2449
    %v6725 = vadd.f32 %v6661, %v2450
    %v6726 = vadd.f32 %v6662, %v2451
    %v6727 = vadd.f32 %v6663, %v2452
    %v6728 = vadd.f32 %v6664, %v2453
    %v6729 = vadd.f32 %v6665, %v2454
    %v6730 = vadd.f32 %v6666, %v2455
    %v6731 = vadd.f32 %v6667, %v2456
    %v6732 = vadd.f32 %v6668, %v2457
    %v6733 = vadd.f32 %v6669, %v2458
    %v6734 = vadd.f32 %v6670, %v2459
    %v6735 = vadd.f32 %v6671, %v2460
    %v6736 = vadd.f32 %v6672, %v2461
    %v6737 = vadd.f32 %v6673, %v2462
    %v6738 = vadd.f32 %v6674, %v2463
    %v6739 = vadd.f32 %v6675, %v2464
    %v6740 = vadd.f32 %v6676, %v2465
    %v6741 = vadd.f32 %v6677, %v2466
    %v6742 = vadd.f32 %v6678, %v2467
    %v6743 = vadd.f32 %v6679, %v2468
    %v6744 = vadd.f32 %v6680, %v2469
    %v6745 = vadd.f32 %v6681, %v2470
    %v6746 = vadd.f32 %v6682, %v2471
    %v6747 = vadd.f32 %v6683, %v2472
    %v6748 = vadd.f32 %v6684, %v2473
    %v6749 = vadd.f32 %v6685, %v2474
    %v6750 = vadd.f32 %v6686, %v2475
    %v6751 = vadd.f32 %v6687, %v2476
    %v6752 = vadd.f32 %v6688, %v2477
    %v6753 = vadd.f32 %v6689, %v2478
    %v6754 = vadd.f32 %v6690, %v2479
    %v6755 = vadd.f32 %v6691, %v2480
    %v6756 = vadd.f32 %v6692, %v2481
    %v6757 = vadd.f32 %v6693, %v2482
    %v6758 = vadd.f32 %v6694, %v2483
    %v6759 = vadd.f32 %v6695, %v2484
    %v6760 = vadd.f32 %v6696, %v2485
    %v6761 = vadd.f32 %v6697, %v2486
    %v6762 = vadd.f32 %v6698, %v2487
    %v6763 = vadd.f32 %v6699, %v2488
    %v6764 = vadd.f32 %v6700, %v2489
    %v6765 = vadd.f32 %v6701, %v2490
    %v6766 = vadd.f32 %v6702, %v2491
    %v6767 = vadd.f32 %v6703, %v2492
    %v6768 = vadd.f32 %v6704, %v2493
    %v6769 = vadd.f32 %v6705, %v2494
    %v6770 = vadd.f32 %v6706, %v2495
    %v6771 = vadd.f32 %v6707, %v2496
    %v6772 = vadd.f32 %v6708, %v2497
    %v6773 = vadd.f32 %v6709, %v2498
    %v6774 = vadd.f32 %v6710, %v2499
    %v6775 = vadd.f32 %v6711, %v2500
    %v6776 = vadd.f32 %v6712, %v2501
    %v6777 = vadd.f32 %v6713, %v2502
    %v6778 = vadd.f32 %v6714, %v2503
    %v6779 = vadd.f32 %v6715, %v2504
    %v6780 = vadd.f32 %v6716, %v2505
    %v6781 = vadd.f32 %v6717, %v2506
    %v6782 = vadd.f32 %v6718, %v2507
    %v6783 = vmax.f32 %v6719, 0.0
    %v6784 = vmax.f32 %v6720, 0.0
    %v6785 = vmax.f32 %v6721, 0.0
    %v6786 = vmax.f32 %v6722, 0.0
    %v6787 = vmax.f32 %v6723, 0.0
    %v6788 = vmax.f32 %v6724, 0.0
    %v6789 = vmax.f32 %v6725, 0.0
    %v6790 = vmax.f32 %v6726, 0.0
    %v6791 = vmax.f32 %v6727, 0.0
    %v6792 = vmax.f32 %v6728, 0.0
    %v6793 = vmax.f32 %v6729, 0.0
    %v6794 = vmax.f32 %v6730, 0.0
    %v6795 = vmax.f32 %v6731, 0.0
    %v6796 = vmax.f32 %v6732, 0.0
    %v6797 = vmax.f32 %v6733, 0.0
    %v6798 = vmax.f32 %v6734, 0.0
    %v6799 = vmax.f32 %v6735, 0.0
    %v6800 = vmax.f32 %v6736, 0.0
    %v6801 = vmax.f32 %v6737, 0.0
    %v6802 = vmax.f32 %v6738, 0.0
    %v6803 = vmax.f32 %v6739, 0.0
    %v6804 = vmax.f32 %v6740, 0.0
    %v6805 = vmax.f32 %v6741, 0.0
    %v6806 = vmax.f32 %v6742, 0.0
    %v6807 = vmax.f32 %v6743, 0.0
    %v6808 = vmax.f32 %v6744, 0.0
    %v6809 = vmax.f32 %v6745, 0.0
    %v6810 = vmax.f32 %v6746, 0.0
    %v6811 = vmax.f32 %v6747, 0.0
    %v6812 = vmax.f32 %v6748, 0.0
    %v6813 = vmax.f32 %v6749, 0.0
    %v6814 = vmax.f32 %v6750, 0.0
    %v6815 = vmax.f32 %v6751, 0.0
    %v6816 = vmax.f32 %v6752, 0.0
    %v6817 = vmax.f32 %v6753, 0.0
    %v6818 = vmax.f32 %v6754, 0.0
    %v6819 = vmax.f32 %v6755, 0.0
    %v6820 = vmax.f32 %v6756, 0.0
    %v6821 = vmax.f32 %v6757, 0.0
    %v6822 = vmax.f32 %v6758, 0.0
    %v6823 = vmax.f32 %v6759, 0.0
    %v6824 = vmax.f32 %v6760, 0.0
    %v6825 = vmax.f32 %v6761, 0.0
    %v6826 = vmax.f32 %v6762, 0.0
    %v6827 = vmax.f32 %v6763, 0.0
    %v6828 = vmax.f32 %v6764, 0.0
    %v6829 = vmax.f32 %v6765, 0.0
    %v6830 = vmax.f32 %v6766, 0.0
    %v6831 = vmax.f32 %v6767, 0.0
    %v6832 = vmax.f32 %v6768, 0.0
    %v6833 = vmax.f32 %v6769, 0.0
    %v6834 = vmax.f32 %v6770, 0.0
    %v6835 = vmax.f32 %v6771, 0.0
    %v6836 = vmax.f32 %v6772, 0.0
    %v6837 = vmax.f32 %v6773, 0.0
    %v6838 = vmax.f32 %v6774, 0.0
    %v6839 = vmax.f32 %v6775, 0.0
    %v6840 = vmax.f32 %v6776, 0.0
    %v6841 = vmax.f32 %v6777, 0.0
    %v6842 = vmax.f32 %v6778, 0.0
    %v6843 = vmax.f32 %v6779, 0.0
    %v6844 = vmax.f32 %v6780, 0.0
    %v6845 = vmax.f32 %v6781, 0.0
    %v6846 = vmax.f32 %v6782, 0.0
    %v6847 = vpack.c.bf16 %v6784, %v6783
    %v6848 = vpack.c.bf16 %v6786, %v6785
    %v6849 = vpack.c.bf16 %v6788, %v6787
    %v6850 = vpack.c.bf16 %v6790, %v6789
    %v6851 = vpack.c.bf16 %v6792, %v6791
    %v6852 = vpack.c.bf16 %v6794, %v6793
    %v6853 = vpack.c.bf16 %v6796, %v6795
    %v6854 = vpack.c.bf16 %v6798, %v6797
    %v6855 = vpack.c.bf16 %v6800, %v6799
    %v6856 = vpack.c.bf16 %v6802, %v6801
    %v6857 = vpack.c.bf16 %v6804, %v6803
    %v6858 = vpack.c.bf16 %v6806, %v6805
    %v6859 = vpack.c.bf16 %v6808, %v6807
    %v6860 = vpack.c.bf16 %v6810, %v6809
    %v6861 = vpack.c.bf16 %v6812, %v6811
    %v6862 = vpack.c.bf16 %v6814, %v6813
    %v6863 = vpack.c.bf16 %v6816, %v6815
    %v6864 = vpack.c.bf16 %v6818, %v6817
    %v6865 = vpack.c.bf16 %v6820, %v6819
    %v6866 = vpack.c.bf16 %v6822, %v6821
    %v6867 = vpack.c.bf16 %v6824, %v6823
    %v6868 = vpack.c.bf16 %v6826, %v6825
    %v6869 = vpack.c.bf16 %v6828, %v6827
    %v6870 = vpack.c.bf16 %v6830, %v6829
    %v6871 = vpack.c.bf16 %v6832, %v6831
    %v6872 = vpack.c.bf16 %v6834, %v6833
    %v6873 = vpack.c.bf16 %v6836, %v6835
    %v6874 = vpack.c.bf16 %v6838, %v6837
    %v6875 = vpack.c.bf16 %v6840, %v6839
    %v6876 = vpack.c.bf16 %v6842, %v6841
    %v6877 = vpack.c.bf16 %v6844, %v6843
    %v6878 = vpack.c.bf16 %v6846, %v6845
    %v6880 = vshrl.u32 %v6847, 16
    %v6882 = vrot.slane %v6880, 7
    %v6884 = vshrl.u32 %v6848, 16
    %v6886 = vrot.slane %v6884, 7
    %v6888 = vshrl.u32 %v6849, 16
    %v6890 = vrot.slane %v6888, 7
    %v6892 = vshrl.u32 %v6850, 16
    %v6894 = vrot.slane %v6892, 7
    %v6896 = vshrl.u32 %v6851, 16
    %v6898 = vrot.slane %v6896, 7
    %v6900 = vshrl.u32 %v6852, 16
    %v6902 = vrot.slane %v6900, 7
    %v6904 = vshrl.u32 %v6853, 16
    %v6906 = vrot.slane %v6904, 7
    %v6908 = vshrl.u32 %v6854, 16
    %v6910 = vrot.slane %v6908, 7
    %v6912 = vshrl.u32 %v6855, 16
    %v6914 = vrot.slane %v6912, 7
    %v6916 = vshrl.u32 %v6856, 16
    %v6918 = vrot.slane %v6916, 7
    %v6920 = vshrl.u32 %v6857, 16
    %v6922 = vrot.slane %v6920, 7
    %v6924 = vshrl.u32 %v6858, 16
    %v6926 = vrot.slane %v6924, 7
    %v6928 = vshrl.u32 %v6859, 16
    %v6930 = vrot.slane %v6928, 7
    %v6932 = vshrl.u32 %v6860, 16
    %v6934 = vrot.slane %v6932, 7
    %v6936 = vshrl.u32 %v6861, 16
    %v6938 = vrot.slane %v6936, 7
    %v6940 = vshrl.u32 %v6862, 16
    %v6942 = vrot.slane %v6940, 7
    %v6944 = vshrl.u32 %v6863, 16
    %v6946 = vrot.slane %v6944, 7
    %v6948 = vshrl.u32 %v6864, 16
    %v6950 = vrot.slane %v6948, 7
    %v6952 = vshrl.u32 %v6865, 16
    %v6954 = vrot.slane %v6952, 7
    %v6956 = vshrl.u32 %v6866, 16
    %v6958 = vrot.slane %v6956, 7
    %v6960 = vshrl.u32 %v6867, 16
    %v6962 = vrot.slane %v6960, 7
    %v6964 = vshrl.u32 %v6868, 16
    %v6966 = vrot.slane %v6964, 7
    %v6968 = vshrl.u32 %v6869, 16
    %v6970 = vrot.slane %v6968, 7
    %v6972 = vshrl.u32 %v6870, 16
    %v6974 = vrot.slane %v6972, 7
    %v6976 = vshrl.u32 %v6871, 16
    %v6978 = vrot.slane %v6976, 7
    %v6980 = vshrl.u32 %v6872, 16
    %v6982 = vrot.slane %v6980, 7
    %v6984 = vshrl.u32 %v6873, 16
    %v6986 = vrot.slane %v6984, 7
    %v6988 = vshrl.u32 %v6874, 16
    %v6990 = vrot.slane %v6988, 7
    %v6992 = vshrl.u32 %v6875, 16
    %v6994 = vrot.slane %v6992, 7
    %v6996 = vshrl.u32 %v6876, 16
    %v6998 = vrot.slane %v6996, 7
    %v7000 = vshrl.u32 %v6877, 16
    %v7002 = vrot.slane %v7000, 7
    %v7004 = vshrl.u32 %v6878, 16
    %v7006 = vrot.slane %v7004, 7
    %v7039 = vshll.u32 %v6847, 16
    %v7041 = vor.u32 %v6882, %v7039
    %v7042 = vshll.u32 %v6848, 16
    %v7044 = vor.u32 %v6886, %v7042
    %v7045 = vshll.u32 %v6849, 16
    %v7047 = vor.u32 %v6890, %v7045
    %v7048 = vshll.u32 %v6850, 16
    %v7050 = vor.u32 %v6894, %v7048
    %v7051 = vshll.u32 %v6851, 16
    %v7053 = vor.u32 %v6898, %v7051
    %v7054 = vshll.u32 %v6852, 16
    %v7056 = vor.u32 %v6902, %v7054
    %v7057 = vshll.u32 %v6853, 16
    %v7059 = vor.u32 %v6906, %v7057
    %v7060 = vshll.u32 %v6854, 16
    %v7062 = vor.u32 %v6910, %v7060
    %v7063 = vshll.u32 %v6855, 16
    %v7065 = vor.u32 %v6914, %v7063
    %v7066 = vshll.u32 %v6856, 16
    %v7068 = vor.u32 %v6918, %v7066
    %v7069 = vshll.u32 %v6857, 16
    %v7071 = vor.u32 %v6922, %v7069
    %v7072 = vshll.u32 %v6858, 16
    %v7074 = vor.u32 %v6926, %v7072
    %v7075 = vshll.u32 %v6859, 16
    %v7077 = vor.u32 %v6930, %v7075
    %v7078 = vshll.u32 %v6860, 16
    %v7080 = vor.u32 %v6934, %v7078
    %v7081 = vshll.u32 %v6861, 16
    %v7083 = vor.u32 %v6938, %v7081
    %v7084 = vshll.u32 %v6862, 16
    %v7086 = vor.u32 %v6942, %v7084
    %v7087 = vshll.u32 %v6863, 16
    %v7089 = vor.u32 %v6946, %v7087
    %v7090 = vshll.u32 %v6864, 16
    %v7092 = vor.u32 %v6950, %v7090
    %v7093 = vshll.u32 %v6865, 16
    %v7095 = vor.u32 %v6954, %v7093
    %v7096 = vshll.u32 %v6866, 16
    %v7098 = vor.u32 %v6958, %v7096
    %v7099 = vshll.u32 %v6867, 16
    %v7101 = vor.u32 %v6962, %v7099
    %v7102 = vshll.u32 %v6868, 16
    %v7104 = vor.u32 %v6966, %v7102
    %v7105 = vshll.u32 %v6869, 16
    %v7107 = vor.u32 %v6970, %v7105
    %v7108 = vshll.u32 %v6870, 16
    %v7110 = vor.u32 %v6974, %v7108
    %v7111 = vshll.u32 %v6871, 16
    %v7113 = vor.u32 %v6978, %v7111
    %v7114 = vshll.u32 %v6872, 16
    %v7116 = vor.u32 %v6982, %v7114
    %v7117 = vshll.u32 %v6873, 16
    %v7119 = vor.u32 %v6986, %v7117
    %v7120 = vshll.u32 %v6874, 16
    %v7122 = vor.u32 %v6990, %v7120
    %v7123 = vshll.u32 %v6875, 16
    %v7125 = vor.u32 %v6994, %v7123
    %v7126 = vshll.u32 %v6876, 16
    %v7128 = vor.u32 %v6998, %v7126
    %v7129 = vshll.u32 %v6877, 16
    %v7131 = vor.u32 %v7002, %v7129
    %v7132 = vshll.u32 %v6878, 16
    %v7134 = vor.u32 %v7006, %v7132
    %v7167 = vsel %vm783, %v6882, %v7041
    %v7168 = vsel %vm783, %v6886, %v7044
    %v7169 = vsel %vm783, %v6890, %v7047
    %v7170 = vsel %vm783, %v6894, %v7050
    %v7171 = vsel %vm783, %v6898, %v7053
    %v7172 = vsel %vm783, %v6902, %v7056
    %v7173 = vsel %vm783, %v6906, %v7059
    %v7174 = vsel %vm783, %v6910, %v7062
    %v7175 = vsel %vm783, %v6914, %v7065
    %v7176 = vsel %vm783, %v6918, %v7068
    %v7177 = vsel %vm783, %v6922, %v7071
    %v7178 = vsel %vm783, %v6926, %v7074
    %v7179 = vsel %vm783, %v6930, %v7077
    %v7180 = vsel %vm783, %v6934, %v7080
    %v7181 = vsel %vm783, %v6938, %v7083
    %v7182 = vsel %vm783, %v6942, %v7086
    %v7183 = vsel %vm783, %v6946, %v7089
    %v7184 = vsel %vm783, %v6950, %v7092
    %v7185 = vsel %vm783, %v6954, %v7095
    %v7186 = vsel %vm783, %v6958, %v7098
    %v7187 = vsel %vm783, %v6962, %v7101
    %v7188 = vsel %vm783, %v6966, %v7104
    %v7189 = vsel %vm783, %v6970, %v7107
    %v7190 = vsel %vm783, %v6974, %v7110
    %v7191 = vsel %vm783, %v6978, %v7113
    %v7192 = vsel %vm783, %v6982, %v7116
    %v7193 = vsel %vm783, %v6986, %v7119
    %v7194 = vsel %vm783, %v6990, %v7122
    %v7195 = vsel %vm783, %v6994, %v7125
    %v7196 = vsel %vm783, %v6998, %v7128
    %v7197 = vsel %vm783, %v7002, %v7131
    %v7198 = vsel %vm783, %v7006, %v7134
    %v7199 = vrot.slane %v7039, 1
    %v7200 = vor.u32 %v6880, %v7199
    %v7201 = vrot.slane %v7042, 1
    %v7202 = vor.u32 %v6884, %v7201
    %v7203 = vrot.slane %v7045, 1
    %v7204 = vor.u32 %v6888, %v7203
    %v7205 = vrot.slane %v7048, 1
    %v7206 = vor.u32 %v6892, %v7205
    %v7207 = vrot.slane %v7051, 1
    %v7208 = vor.u32 %v6896, %v7207
    %v7209 = vrot.slane %v7054, 1
    %v7210 = vor.u32 %v6900, %v7209
    %v7211 = vrot.slane %v7057, 1
    %v7212 = vor.u32 %v6904, %v7211
    %v7213 = vrot.slane %v7060, 1
    %v7214 = vor.u32 %v6908, %v7213
    %v7215 = vrot.slane %v7063, 1
    %v7216 = vor.u32 %v6912, %v7215
    %v7217 = vrot.slane %v7066, 1
    %v7218 = vor.u32 %v6916, %v7217
    %v7219 = vrot.slane %v7069, 1
    %v7220 = vor.u32 %v6920, %v7219
    %v7221 = vrot.slane %v7072, 1
    %v7222 = vor.u32 %v6924, %v7221
    %v7223 = vrot.slane %v7075, 1
    %v7224 = vor.u32 %v6928, %v7223
    %v7225 = vrot.slane %v7078, 1
    %v7226 = vor.u32 %v6932, %v7225
    %v7227 = vrot.slane %v7081, 1
    %v7228 = vor.u32 %v6936, %v7227
    %v7229 = vrot.slane %v7084, 1
    %v7230 = vor.u32 %v6940, %v7229
    %v7231 = vrot.slane %v7087, 1
    %v7232 = vor.u32 %v6944, %v7231
    %v7233 = vrot.slane %v7090, 1
    %v7234 = vor.u32 %v6948, %v7233
    %v7235 = vrot.slane %v7093, 1
    %v7236 = vor.u32 %v6952, %v7235
    %v7237 = vrot.slane %v7096, 1
    %v7238 = vor.u32 %v6956, %v7237
    %v7239 = vrot.slane %v7099, 1
    %v7240 = vor.u32 %v6960, %v7239
    %v7241 = vrot.slane %v7102, 1
    %v7242 = vor.u32 %v6964, %v7241
    %v7243 = vrot.slane %v7105, 1
    %v7244 = vor.u32 %v6968, %v7243
    %v7245 = vrot.slane %v7108, 1
    %v7246 = vor.u32 %v6972, %v7245
    %v7247 = vrot.slane %v7111, 1
    %v7248 = vor.u32 %v6976, %v7247
    %v7249 = vrot.slane %v7114, 1
    %v7250 = vor.u32 %v6980, %v7249
    %v7251 = vrot.slane %v7117, 1
    %v7252 = vor.u32 %v6984, %v7251
    %v7253 = vrot.slane %v7120, 1
    %v7254 = vor.u32 %v6988, %v7253
    %v7255 = vrot.slane %v7123, 1
    %v7256 = vor.u32 %v6992, %v7255
    %v7257 = vrot.slane %v7126, 1
    %v7258 = vor.u32 %v6996, %v7257
    %v7259 = vrot.slane %v7129, 1
    %v7260 = vor.u32 %v7000, %v7259
    %v7261 = vrot.slane %v7132, 1
    %v7262 = vor.u32 %v7004, %v7261
    %v7327 = vsel %vm946, %v7200, %v7199
    %v7328 = vsel %vm946, %v7202, %v7201
    %v7329 = vsel %vm946, %v7204, %v7203
    %v7330 = vsel %vm946, %v7206, %v7205
    %v7331 = vsel %vm946, %v7208, %v7207
    %v7332 = vsel %vm946, %v7210, %v7209
    %v7333 = vsel %vm946, %v7212, %v7211
    %v7334 = vsel %vm946, %v7214, %v7213
    %v7335 = vsel %vm946, %v7216, %v7215
    %v7336 = vsel %vm946, %v7218, %v7217
    %v7337 = vsel %vm946, %v7220, %v7219
    %v7338 = vsel %vm946, %v7222, %v7221
    %v7339 = vsel %vm946, %v7224, %v7223
    %v7340 = vsel %vm946, %v7226, %v7225
    %v7341 = vsel %vm946, %v7228, %v7227
    %v7342 = vsel %vm946, %v7230, %v7229
    %v7343 = vsel %vm946, %v7232, %v7231
    %v7344 = vsel %vm946, %v7234, %v7233
    %v7345 = vsel %vm946, %v7236, %v7235
    %v7346 = vsel %vm946, %v7238, %v7237
    %v7347 = vsel %vm946, %v7240, %v7239
    %v7348 = vsel %vm946, %v7242, %v7241
    %v7349 = vsel %vm946, %v7244, %v7243
    %v7350 = vsel %vm946, %v7246, %v7245
    %v7351 = vsel %vm946, %v7248, %v7247
    %v7352 = vsel %vm946, %v7250, %v7249
    %v7353 = vsel %vm946, %v7252, %v7251
    %v7354 = vsel %vm946, %v7254, %v7253
    %v7355 = vsel %vm946, %v7256, %v7255
    %v7356 = vsel %vm946, %v7258, %v7257
    %v7357 = vsel %vm946, %v7260, %v7259
    %v7358 = vsel %vm946, %v7262, %v7261
    %7391 = vrot.lane.b32.xlu0 %v6847, 32
    %v7392 = vpop.permute.xlu0 %7391
    %7393 = vrot.lane.b32.xlu0 %v6848, 32
    %v7394 = vpop.permute.xlu0 %7393
    %7395 = vrot.lane.b32.xlu0 %v6849, 32
    %v7396 = vpop.permute.xlu0 %7395
    %7397 = vrot.lane.b32.xlu0 %v6850, 32
    %v7398 = vpop.permute.xlu0 %7397
    %7399 = vrot.lane.b32.xlu0 %v6851, 32
    %v7400 = vpop.permute.xlu0 %7399
    %7401 = vrot.lane.b32.xlu0 %v6852, 32
    %v7402 = vpop.permute.xlu0 %7401
    %7403 = vrot.lane.b32.xlu0 %v6853, 32
    %v7404 = vpop.permute.xlu0 %7403
    %7405 = vrot.lane.b32.xlu0 %v6854, 32
    %v7406 = vpop.permute.xlu0 %7405
    %7407 = vrot.lane.b32.xlu0 %v6855, 32
    %v7408 = vpop.permute.xlu0 %7407
    %7409 = vrot.lane.b32.xlu0 %v6856, 32
    %v7410 = vpop.permute.xlu0 %7409
    %7411 = vrot.lane.b32.xlu0 %v6857, 32
    %v7412 = vpop.permute.xlu0 %7411
    %7413 = vrot.lane.b32.xlu0 %v6858, 32
    %v7414 = vpop.permute.xlu0 %7413
    %7415 = vrot.lane.b32.xlu0 %v6859, 32
    %v7416 = vpop.permute.xlu0 %7415
    %7417 = vrot.lane.b32.xlu0 %v6860, 32
    %v7418 = vpop.permute.xlu0 %7417
    %7419 = vrot.lane.b32.xlu0 %v6861, 32
    %v7420 = vpop.permute.xlu0 %7419
    %7421 = vrot.lane.b32.xlu0 %v6862, 32
    %v7422 = vpop.permute.xlu0 %7421
    %7423 = vrot.lane.b32.xlu0 %v6863, 32
    %v7424 = vpop.permute.xlu0 %7423
    %7425 = vrot.lane.b32.xlu0 %v6864, 32
    %v7426 = vpop.permute.xlu0 %7425
    %7427 = vrot.lane.b32.xlu0 %v6865, 32
    %v7428 = vpop.permute.xlu0 %7427
    %7429 = vrot.lane.b32.xlu0 %v6866, 32
    %v7430 = vpop.permute.xlu0 %7429
    %7431 = vrot.lane.b32.xlu0 %v6867, 32
    %v7432 = vpop.permute.xlu0 %7431
    %7433 = vrot.lane.b32.xlu0 %v6868, 32
    %v7434 = vpop.permute.xlu0 %7433
    %7435 = vrot.lane.b32.xlu0 %v6869, 32
    %v7436 = vpop.permute.xlu0 %7435
    %7437 = vrot.lane.b32.xlu0 %v6870, 32
    %v7438 = vpop.permute.xlu0 %7437
    %7439 = vrot.lane.b32.xlu0 %v6871, 32
    %v7440 = vpop.permute.xlu0 %7439
    %7441 = vrot.lane.b32.xlu0 %v6872, 32
    %v7442 = vpop.permute.xlu0 %7441
    %7443 = vrot.lane.b32.xlu0 %v6873, 32
    %v7444 = vpop.permute.xlu0 %7443
    %7445 = vrot.lane.b32.xlu0 %v6874, 32
    %v7446 = vpop.permute.xlu0 %7445
    %7447 = vrot.lane.b32.xlu0 %v6875, 32
    %v7448 = vpop.permute.xlu0 %7447
    %7449 = vrot.lane.b32.xlu0 %v6876, 32
    %v7450 = vpop.permute.xlu0 %7449
    %7451 = vrot.lane.b32.xlu0 %v6877, 32
    %v7452 = vpop.permute.xlu0 %7451
    %7453 = vrot.lane.b32.xlu0 %v6878, 32
    %v7454 = vpop.permute.xlu0 %7453
    %7487 = vrot.lane.b32.xlu0 %v7327, 64
    %v7488 = vpop.permute.xlu0 %7487
    %7489 = vrot.lane.b32.xlu0 %v7328, 64
    %v7490 = vpop.permute.xlu0 %7489
    %7491 = vrot.lane.b32.xlu0 %v7329, 64
    %v7492 = vpop.permute.xlu0 %7491
    %7493 = vrot.lane.b32.xlu0 %v7330, 64
    %v7494 = vpop.permute.xlu0 %7493
    %7495 = vrot.lane.b32.xlu0 %v7331, 64
    %v7496 = vpop.permute.xlu0 %7495
    %7497 = vrot.lane.b32.xlu0 %v7332, 64
    %v7498 = vpop.permute.xlu0 %7497
    %7499 = vrot.lane.b32.xlu0 %v7333, 64
    %v7500 = vpop.permute.xlu0 %7499
    %7501 = vrot.lane.b32.xlu0 %v7334, 64
    %v7502 = vpop.permute.xlu0 %7501
    %7503 = vrot.lane.b32.xlu0 %v7335, 64
    %v7504 = vpop.permute.xlu0 %7503
    %7505 = vrot.lane.b32.xlu0 %v7336, 64
    %v7506 = vpop.permute.xlu0 %7505
    %7507 = vrot.lane.b32.xlu0 %v7337, 64
    %v7508 = vpop.permute.xlu0 %7507
    %7509 = vrot.lane.b32.xlu0 %v7338, 64
    %v7510 = vpop.permute.xlu0 %7509
    %7511 = vrot.lane.b32.xlu0 %v7339, 64
    %v7512 = vpop.permute.xlu0 %7511
    %7513 = vrot.lane.b32.xlu0 %v7340, 64
    %v7514 = vpop.permute.xlu0 %7513
    %7515 = vrot.lane.b32.xlu0 %v7341, 64
    %v7516 = vpop.permute.xlu0 %7515
    %7517 = vrot.lane.b32.xlu0 %v7342, 64
    %v7518 = vpop.permute.xlu0 %7517
    %7519 = vrot.lane.b32.xlu0 %v7343, 64
    %v7520 = vpop.permute.xlu0 %7519
    %7521 = vrot.lane.b32.xlu0 %v7344, 64
    %v7522 = vpop.permute.xlu0 %7521
    %7523 = vrot.lane.b32.xlu0 %v7345, 64
    %v7524 = vpop.permute.xlu0 %7523
    %7525 = vrot.lane.b32.xlu0 %v7346, 64
    %v7526 = vpop.permute.xlu0 %7525
    %7527 = vrot.lane.b32.xlu0 %v7347, 64
    %v7528 = vpop.permute.xlu0 %7527
    %7529 = vrot.lane.b32.xlu0 %v7348, 64
    %v7530 = vpop.permute.xlu0 %7529
    %7531 = vrot.lane.b32.xlu0 %v7349, 64
    %v7532 = vpop.permute.xlu0 %7531
    %7533 = vrot.lane.b32.xlu0 %v7350, 64
    %v7534 = vpop.permute.xlu0 %7533
    %7535 = vrot.lane.b32.xlu0 %v7351, 64
    %v7536 = vpop.permute.xlu0 %7535
    %7537 = vrot.lane.b32.xlu0 %v7352, 64
    %v7538 = vpop.permute.xlu0 %7537
    %7539 = vrot.lane.b32.xlu0 %v7353, 64
    %v7540 = vpop.permute.xlu0 %7539
    %7541 = vrot.lane.b32.xlu0 %v7354, 64
    %v7542 = vpop.permute.xlu0 %7541
    %7543 = vrot.lane.b32.xlu0 %v7355, 64
    %v7544 = vpop.permute.xlu0 %7543
    %7545 = vrot.lane.b32.xlu0 %v7356, 64
    %v7546 = vpop.permute.xlu0 %7545
    %7547 = vrot.lane.b32.xlu0 %v7357, 64
    %v7548 = vpop.permute.xlu0 %7547
    %7549 = vrot.lane.b32.xlu0 %v7358, 64
    %v7550 = vpop.permute.xlu0 %7549
    %v7553 = vsel %vm3212, %v7167, %v7392
    %v7556 = vsel %vm3212, %v7168, %v7394
    %v7559 = vsel %vm3212, %v7169, %v7396
    %v7562 = vsel %vm3212, %v7170, %v7398
    %v7565 = vsel %vm3212, %v7171, %v7400
    %v7568 = vsel %vm3212, %v7172, %v7402
    %v7571 = vsel %vm3212, %v7173, %v7404
    %v7574 = vsel %vm3212, %v7174, %v7406
    %v7577 = vsel %vm3212, %v7175, %v7408
    %v7580 = vsel %vm3212, %v7176, %v7410
    %v7583 = vsel %vm3212, %v7177, %v7412
    %v7586 = vsel %vm3212, %v7178, %v7414
    %v7589 = vsel %vm3212, %v7179, %v7416
    %v7592 = vsel %vm3212, %v7180, %v7418
    %v7595 = vsel %vm3212, %v7181, %v7420
    %v7598 = vsel %vm3212, %v7182, %v7422
    %v7601 = vsel %vm3212, %v7183, %v7424
    %v7604 = vsel %vm3212, %v7184, %v7426
    %v7607 = vsel %vm3212, %v7185, %v7428
    %v7610 = vsel %vm3212, %v7186, %v7430
    %v7613 = vsel %vm3212, %v7187, %v7432
    %v7616 = vsel %vm3212, %v7188, %v7434
    %v7619 = vsel %vm3212, %v7189, %v7436
    %v7622 = vsel %vm3212, %v7190, %v7438
    %v7625 = vsel %vm3212, %v7191, %v7440
    %v7628 = vsel %vm3212, %v7192, %v7442
    %v7631 = vsel %vm3212, %v7193, %v7444
    %v7634 = vsel %vm3212, %v7194, %v7446
    %v7637 = vsel %vm3212, %v7195, %v7448
    %v7640 = vsel %vm3212, %v7196, %v7450
    %v7643 = vsel %vm3212, %v7197, %v7452
    %v7646 = vsel %vm3212, %v7198, %v7454
    %v7648 = vsel %vm3309, %v7553, %v7488
    %v7650 = vsel %vm3309, %v7556, %v7490
    %v7652 = vsel %vm3309, %v7559, %v7492
    %v7654 = vsel %vm3309, %v7562, %v7494
    %v7656 = vsel %vm3309, %v7565, %v7496
    %v7658 = vsel %vm3309, %v7568, %v7498
    %v7660 = vsel %vm3309, %v7571, %v7500
    %v7662 = vsel %vm3309, %v7574, %v7502
    %v7664 = vsel %vm3309, %v7577, %v7504
    %v7666 = vsel %vm3309, %v7580, %v7506
    %v7668 = vsel %vm3309, %v7583, %v7508
    %v7670 = vsel %vm3309, %v7586, %v7510
    %v7672 = vsel %vm3309, %v7589, %v7512
    %v7674 = vsel %vm3309, %v7592, %v7514
    %v7676 = vsel %vm3309, %v7595, %v7516
    %v7678 = vsel %vm3309, %v7598, %v7518
    %v7680 = vsel %vm3309, %v7601, %v7520
    %v7682 = vsel %vm3309, %v7604, %v7522
    %v7684 = vsel %vm3309, %v7607, %v7524
    %v7686 = vsel %vm3309, %v7610, %v7526
    %v7688 = vsel %vm3309, %v7613, %v7528
    %v7690 = vsel %vm3309, %v7616, %v7530
    %v7692 = vsel %vm3309, %v7619, %v7532
    %v7694 = vsel %vm3309, %v7622, %v7534
    %v7696 = vsel %vm3309, %v7625, %v7536
    %v7698 = vsel %vm3309, %v7628, %v7538
    %v7700 = vsel %vm3309, %v7631, %v7540
    %v7702 = vsel %vm3309, %v7634, %v7542
    %v7704 = vsel %vm3309, %v7637, %v7544
    %v7706 = vsel %vm3309, %v7640, %v7546
    %v7708 = vsel %vm3309, %v7643, %v7548
    %v7710 = vsel %vm3309, %v7646, %v7550
    %v7711 = vld [vmem:[%s0 + $0x144] sm:$0xf]
    %v7712 = vld [vmem:[%s0 + $0x148] sm:$0xf]
    %v7713 = vld [vmem:[%s0 + $0x14c] sm:$0xf]
    %v7714 = vld [vmem:[%s0 + $0x150] sm:$0xf]
    %v7715 = vld [vmem:[%s0 + $0x154] sm:$0xf]
    %v7716 = vld [vmem:[%s0 + $0x158] sm:$0xf]
    %v7717 = vld [vmem:[%s0 + $0x15c] sm:$0xf]
    %v7718 = vld [vmem:[%s0 + $0x160] sm:$0xf]
    %v7719 = vld [vmem:[%s0 + $0x164] sm:$0xf]
    %v7720 = vld [vmem:[%s0 + $0x168] sm:$0xf]
    %v7721 = vld [vmem:[%s0 + $0x16c] sm:$0xf]
    %v7722 = vld [vmem:[%s0 + $0x170] sm:$0xf]
    %v7723 = vld [vmem:[%s0 + $0x174] sm:$0xf]
    %v7724 = vld [vmem:[%s0 + $0x178] sm:$0xf]
    %v7725 = vld [vmem:[%s0 + $0x17c] sm:$0xf]
    %v7726 = vld [vmem:[%s0 + $0x180] sm:$0xf]
    %v7727 = vld [vmem:[%s0 + $0x184] sm:$0xf]
    %v7728 = vld [vmem:[%s0 + $0x188] sm:$0xf]
    %v7729 = vld [vmem:[%s0 + $0x18c] sm:$0xf]
    %v7730 = vld [vmem:[%s0 + $0x190] sm:$0xf]
    %v7731 = vld [vmem:[%s0 + $0x194] sm:$0xf]
    %v7732 = vld [vmem:[%s0 + $0x198] sm:$0xf]
    %v7733 = vld [vmem:[%s0 + $0x19c] sm:$0xf]
    %v7734 = vld [vmem:[%s0 + $0x1a0] sm:$0xf]
    %v7747 = vunpack.c.l.b16 %v7723
    %v7748 = vunpack.c.l.b16 %v7724
    %v7749 = vunpack.c.l.b16 %v7725
    %v7750 = vunpack.c.l.b16 %v7726
    %v7751 = vunpack.c.l.b16 %v7727
    %v7752 = vunpack.c.l.b16 %v7728
    %v7753 = vunpack.c.l.b16 %v7729
    %v7754 = vunpack.c.l.b16 %v7730
    %v7755 = vunpack.c.l.b16 %v7731
    %v7756 = vunpack.c.l.b16 %v7732
    %v7757 = vunpack.c.l.b16 %v7733
    %v7758 = vunpack.c.l.b16 %v7734
    %v7759 = vpack.c.b16 %v7748, %v7747
    %v7760 = vpack.c.b16 %v7750, %v7749
    %v7761 = vpack.c.b16 %v7752, %v7751
    %v7762 = vpack.c.b16 %v7754, %v7753
    %v7763 = vpack.c.b16 %v7756, %v7755
    %v7764 = vpack.c.b16 %v7758, %v7757
    %v7771 = vsel %vm3434, %v7648, 0
    %v7773 = vsel %vm3434, %v7650, 0
    %v7775 = vsel %vm3434, %v7652, 0
    %v7777 = vsel %vm3434, %v7654, 0
    %v7779 = vsel %vm3434, %v7656, 0
    %v7781 = vsel %vm3434, %v7658, 0
    %v7783 = vsel %vm3434, %v7660, 0
    %v7785 = vsel %vm3434, %v7662, 0
    %v7787 = vsel %vm3434, %v7664, 0
    %v7789 = vsel %vm3434, %v7666, 0
    %v7791 = vsel %vm3434, %v7668, 0
    %v7793 = vsel %vm3434, %v7670, 0
    %v7795 = vsel %vm3434, %v7672, 0
    %v7797 = vsel %vm3434, %v7674, 0
    %v7799 = vsel %vm3434, %v7676, 0
    %v7801 = vsel %vm3434, %v7678, 0
    %v7803 = vsel %vm3434, %v7680, 0
    %v7805 = vsel %vm3434, %v7682, 0
    %v7807 = vsel %vm3434, %v7684, 0
    %v7809 = vsel %vm3434, %v7686, 0
    %v7811 = vsel %vm3434, %v7688, 0
    %v7813 = vsel %vm3434, %v7690, 0
    %v7815 = vsel %vm3434, %v7692, 0
    %v7817 = vsel %vm3434, %v7694, 0
    %v7819 = vsel %vm3434, %v7696, 0
    %v7821 = vsel %vm3434, %v7698, 0
    %v7823 = vsel %vm3434, %v7700, 0
    %v7825 = vsel %vm3434, %v7702, 0
    %v7827 = vsel %vm3434, %v7704, 0
    %v7829 = vsel %vm3434, %v7706, 0
    %v7831 = vsel %vm3434, %v7708, 0
    %v7833 = vsel %vm3434, %v7710, 0
    %7835 = vmatprep.subr.bf16.mxu0 0
    %7836 = vmatpush1.bf16.msra.mxu0 0
    %7837 = vmatprep.subr.bf16.mxu0 0
    %7838 = vmatpush1.bf16.msra.mxu0 0
    %7839 = vmatprep.subr.bf16.mxu0 0
    %7840 = vmatpush1.bf16.msra.mxu0 %v7764
    %7841 = vmatprep.subr.bf16.mxu0 0
    %7842 = vmatpush1.bf16.msra.mxu0 %v7763
    %7843 = vmatprep.subr.bf16.mxu0 0
    %7844 = vmatpush1.bf16.msra.mxu0 %v7762
    %7845 = vmatprep.subr.bf16.mxu0 0
    %7846 = vmatpush1.bf16.msra.mxu0 %v7761
    %7847 = vmatprep.subr.bf16.mxu0 0
    %7848 = vmatpush1.bf16.msra.mxu0 %v7760
    %7849 = vmatprep.subr.bf16.mxu0 0
    %7850 = vmatpush1.bf16.msra.mxu0 %v7759
    %7851 = vmatprep.subr.bf16.mxu0 0
    %7852 = vmatpush2.bf16.msra.mxu0 0
    %7853 = vmatprep.subr.bf16.mxu0 0
    %7854 = vmatpush2.bf16.msra.mxu0 0
    %7855 = vmatprep.subr.bf16.mxu0 0
    %7856 = vmatpush2.bf16.msra.mxu0 0
    %7857 = vmatprep.subr.bf16.mxu0 0
    %7858 = vmatpush2.bf16.msra.mxu0 0
    %7859 = vmatprep.subr.bf16.mxu0 0
    %7860 = vmatpush2.bf16.msra.mxu0 0
    %7861 = vmatprep.subr.bf16.mxu0 0
    %7862 = vmatpush2.bf16.msra.mxu0 0
    %7863 = vmatprep.subr.bf16.mxu0 0
    %7864 = vmatpush2.bf16.msra.mxu0 0
    %7865 = vmatprep.subr.bf16.mxu0 0
    %7866 = vmatpush2.bf16.msra.mxu0 0
    %7867 = vmatprep.mubr.bf16.mxu0 0
    %7868 = vmatmul.mubr.bf16.gmra.mxu0 %v7771
    %v7869 = vpop.f32.mrf.mxu0
    %v7870 = vadd.f32 0.0, %v7869
    %v7871 = vpop.f32.mrf.mxu0
    %v7872 = vpop.f32.mrf.mxu0
    %v7873 = vadd.f32 0.0, %v7872
    %v7874 = vpop.f32.mrf.mxu0
    %7875 = vmatprep.mubr.bf16.mxu0 0
    %7876 = vmatmul.mubr.bf16.gmra.mxu0 %v7773
    %v7877 = vpop.f32.mrf.mxu0
    %v7878 = vadd.f32 0.0, %v7877
    %v7879 = vpop.f32.mrf.mxu0
    %v7880 = vpop.f32.mrf.mxu0
    %v7881 = vadd.f32 0.0, %v7880
    %v7882 = vpop.f32.mrf.mxu0
    %7883 = vmatprep.mubr.bf16.mxu0 0
    %7884 = vmatmul.mubr.bf16.gmra.mxu0 %v7775
    %v7885 = vpop.f32.mrf.mxu0
    %v7886 = vadd.f32 0.0, %v7885
    %v7887 = vpop.f32.mrf.mxu0
    %v7888 = vpop.f32.mrf.mxu0
    %v7889 = vadd.f32 0.0, %v7888
    %v7890 = vpop.f32.mrf.mxu0
    %7891 = vmatprep.mubr.bf16.mxu0 0
    %7892 = vmatmul.mubr.bf16.gmra.mxu0 %v7777
    %v7893 = vpop.f32.mrf.mxu0
    %v7894 = vadd.f32 0.0, %v7893
    %v7895 = vpop.f32.mrf.mxu0
    %v7896 = vpop.f32.mrf.mxu0
    %v7897 = vadd.f32 0.0, %v7896
    %v7898 = vpop.f32.mrf.mxu0
    %7899 = vmatprep.mubr.bf16.mxu0 0
    %7900 = vmatmul.mubr.bf16.gmra.mxu0 %v7779
    %v7901 = vpop.f32.mrf.mxu0
    %v7902 = vadd.f32 0.0, %v7901
    %v7903 = vpop.f32.mrf.mxu0
    %v7904 = vpop.f32.mrf.mxu0
    %v7905 = vadd.f32 0.0, %v7904
    %v7906 = vpop.f32.mrf.mxu0
    %7907 = vmatprep.mubr.bf16.mxu0 0
    %7908 = vmatmul.mubr.bf16.gmra.mxu0 %v7781
    %v7909 = vpop.f32.mrf.mxu0
    %v7910 = vadd.f32 0.0, %v7909
    %v7911 = vpop.f32.mrf.mxu0
    %v7912 = vpop.f32.mrf.mxu0
    %v7913 = vadd.f32 0.0, %v7912
    %v7914 = vpop.f32.mrf.mxu0
    %7915 = vmatprep.mubr.bf16.mxu0 0
    %7916 = vmatmul.mubr.bf16.gmra.mxu0 %v7783
    %v7917 = vpop.f32.mrf.mxu0
    %v7918 = vadd.f32 0.0, %v7917
    %v7919 = vpop.f32.mrf.mxu0
    %v7920 = vpop.f32.mrf.mxu0
    %v7921 = vadd.f32 0.0, %v7920
    %v7922 = vpop.f32.mrf.mxu0
    %7923 = vmatprep.mubr.bf16.mxu0 0
    %7924 = vmatmul.mubr.bf16.gmra.mxu0 %v7785
    %v7925 = vpop.f32.mrf.mxu0
    %v7926 = vadd.f32 0.0, %v7925
    %v7927 = vpop.f32.mrf.mxu0
    %v7928 = vpop.f32.mrf.mxu0
    %v7929 = vadd.f32 0.0, %v7928
    %v7930 = vpop.f32.mrf.mxu0
    %7931 = vmatprep.mubr.bf16.mxu0 0
    %7932 = vmatmul.mubr.bf16.gmra.mxu0 %v7787
    %v7933 = vpop.f32.mrf.mxu0
    %v7934 = vadd.f32 0.0, %v7933
    %v7935 = vpop.f32.mrf.mxu0
    %v7936 = vpop.f32.mrf.mxu0
    %v7937 = vadd.f32 0.0, %v7936
    %v7938 = vpop.f32.mrf.mxu0
    %7939 = vmatprep.mubr.bf16.mxu0 0
    %7940 = vmatmul.mubr.bf16.gmra.mxu0 %v7789
    %v7941 = vpop.f32.mrf.mxu0
    %v7942 = vadd.f32 0.0, %v7941
    %v7943 = vpop.f32.mrf.mxu0
    %v7944 = vpop.f32.mrf.mxu0
    %v7945 = vadd.f32 0.0, %v7944
    %v7946 = vpop.f32.mrf.mxu0
    %7947 = vmatprep.mubr.bf16.mxu0 0
    %7948 = vmatmul.mubr.bf16.gmra.mxu0 %v7791
    %v7949 = vpop.f32.mrf.mxu0
    %v7950 = vadd.f32 0.0, %v7949
    %v7951 = vpop.f32.mrf.mxu0
    %v7952 = vpop.f32.mrf.mxu0
    %v7953 = vadd.f32 0.0, %v7952
    %v7954 = vpop.f32.mrf.mxu0
    %7955 = vmatprep.mubr.bf16.mxu0 0
    %7956 = vmatmul.mubr.bf16.gmra.mxu0 %v7793
    %v7957 = vpop.f32.mrf.mxu0
    %v7958 = vadd.f32 0.0, %v7957
    %v7959 = vpop.f32.mrf.mxu0
    %v7960 = vpop.f32.mrf.mxu0
    %v7961 = vadd.f32 0.0, %v7960
    %v7962 = vpop.f32.mrf.mxu0
    %7963 = vmatprep.mubr.bf16.mxu0 0
    %7964 = vmatmul.mubr.bf16.gmra.mxu0 %v7795
    %v7965 = vpop.f32.mrf.mxu0
    %v7966 = vadd.f32 0.0, %v7965
    %v7967 = vpop.f32.mrf.mxu0
    %v7968 = vpop.f32.mrf.mxu0
    %v7969 = vadd.f32 0.0, %v7968
    %v7970 = vpop.f32.mrf.mxu0
    %7971 = vmatprep.mubr.bf16.mxu0 0
    %7972 = vmatmul.mubr.bf16.gmra.mxu0 %v7797
    %v7973 = vpop.f32.mrf.mxu0
    %v7974 = vadd.f32 0.0, %v7973
    %v7975 = vpop.f32.mrf.mxu0
    %v7976 = vpop.f32.mrf.mxu0
    %v7977 = vadd.f32 0.0, %v7976
    %v7978 = vpop.f32.mrf.mxu0
    %7979 = vmatprep.mubr.bf16.mxu0 0
    %7980 = vmatmul.mubr.bf16.gmra.mxu0 %v7799
    %v7981 = vpop.f32.mrf.mxu0
    %v7982 = vadd.f32 0.0, %v7981
    %v7983 = vpop.f32.mrf.mxu0
    %v7984 = vpop.f32.mrf.mxu0
    %v7985 = vadd.f32 0.0, %v7984
    %v7986 = vpop.f32.mrf.mxu0
    %7987 = vmatprep.mubr.bf16.mxu0 0
    %7988 = vmatmul.mubr.bf16.gmra.mxu0 %v7801
    %v7989 = vpop.f32.mrf.mxu0
    %v7990 = vadd.f32 0.0, %v7989
    %v7991 = vpop.f32.mrf.mxu0
    %v7992 = vpop.f32.mrf.mxu0
    %v7993 = vadd.f32 0.0, %v7992
    %v7994 = vpop.f32.mrf.mxu0
    %7995 = vmatprep.mubr.bf16.mxu0 0
    %7996 = vmatmul.mubr.bf16.gmra.mxu0 %v7803
    %v7997 = vpop.f32.mrf.mxu0
    %v7998 = vadd.f32 0.0, %v7997
    %v7999 = vpop.f32.mrf.mxu0
    %v8000 = vpop.f32.mrf.mxu0
    %v8001 = vadd.f32 0.0, %v8000
    %v8002 = vpop.f32.mrf.mxu0
    %8003 = vmatprep.mubr.bf16.mxu0 0
    %8004 = vmatmul.mubr.bf16.gmra.mxu0 %v7805
    %v8005 = vpop.f32.mrf.mxu0
    %v8006 = vadd.f32 0.0, %v8005
    %v8007 = vpop.f32.mrf.mxu0
    %v8008 = vpop.f32.mrf.mxu0
    %v8009 = vadd.f32 0.0, %v8008
    %v8010 = vpop.f32.mrf.mxu0
    %8011 = vmatprep.mubr.bf16.mxu0 0
    %8012 = vmatmul.mubr.bf16.gmra.mxu0 %v7807
    %v8013 = vpop.f32.mrf.mxu0
    %v8014 = vadd.f32 0.0, %v8013
    %v8015 = vpop.f32.mrf.mxu0
    %v8016 = vpop.f32.mrf.mxu0
    %v8017 = vadd.f32 0.0, %v8016
    %v8018 = vpop.f32.mrf.mxu0
    %8019 = vmatprep.mubr.bf16.mxu0 0
    %8020 = vmatmul.mubr.bf16.gmra.mxu0 %v7809
    %v8021 = vpop.f32.mrf.mxu0
    %v8022 = vadd.f32 0.0, %v8021
    %v8023 = vpop.f32.mrf.mxu0
    %v8024 = vpop.f32.mrf.mxu0
    %v8025 = vadd.f32 0.0, %v8024
    %v8026 = vpop.f32.mrf.mxu0
    %8027 = vmatprep.mubr.bf16.mxu0 0
    %8028 = vmatmul.mubr.bf16.gmra.mxu0 %v7811
    %v8029 = vpop.f32.mrf.mxu0
    %v8030 = vadd.f32 0.0, %v8029
    %v8031 = vpop.f32.mrf.mxu0
    %v8032 = vpop.f32.mrf.mxu0
    %v8033 = vadd.f32 0.0, %v8032
    %v8034 = vpop.f32.mrf.mxu0
    %8035 = vmatprep.mubr.bf16.mxu0 0
    %8036 = vmatmul.mubr.bf16.gmra.mxu0 %v7813
    %v8037 = vpop.f32.mrf.mxu0
    %v8038 = vadd.f32 0.0, %v8037
    %v8039 = vpop.f32.mrf.mxu0
    %v8040 = vpop.f32.mrf.mxu0
    %v8041 = vadd.f32 0.0, %v8040
    %v8042 = vpop.f32.mrf.mxu0
    %8043 = vmatprep.mubr.bf16.mxu0 0
    %8044 = vmatmul.mubr.bf16.gmra.mxu0 %v7815
    %v8045 = vpop.f32.mrf.mxu0
    %v8046 = vadd.f32 0.0, %v8045
    %v8047 = vpop.f32.mrf.mxu0
    %v8048 = vpop.f32.mrf.mxu0
    %v8049 = vadd.f32 0.0, %v8048
    %v8050 = vpop.f32.mrf.mxu0
    %8051 = vmatprep.mubr.bf16.mxu0 0
    %8052 = vmatmul.mubr.bf16.gmra.mxu0 %v7817
    %v8053 = vpop.f32.mrf.mxu0
    %v8054 = vadd.f32 0.0, %v8053
    %v8055 = vpop.f32.mrf.mxu0
    %v8056 = vpop.f32.mrf.mxu0
    %v8057 = vadd.f32 0.0, %v8056
    %v8058 = vpop.f32.mrf.mxu0
    %8059 = vmatprep.mubr.bf16.mxu0 0
    %8060 = vmatmul.mubr.bf16.gmra.mxu0 %v7819
    %v8061 = vpop.f32.mrf.mxu0
    %v8062 = vadd.f32 0.0, %v8061
    %v8063 = vpop.f32.mrf.mxu0
    %v8064 = vpop.f32.mrf.mxu0
    %v8065 = vadd.f32 0.0, %v8064
    %v8066 = vpop.f32.mrf.mxu0
    %8067 = vmatprep.mubr.bf16.mxu0 0
    %8068 = vmatmul.mubr.bf16.gmra.mxu0 %v7821
    %v8069 = vpop.f32.mrf.mxu0
    %v8070 = vadd.f32 0.0, %v8069
    %v8071 = vpop.f32.mrf.mxu0
    %v8072 = vpop.f32.mrf.mxu0
    %v8073 = vadd.f32 0.0, %v8072
    %v8074 = vpop.f32.mrf.mxu0
    %8075 = vmatprep.mubr.bf16.mxu0 0
    %8076 = vmatmul.mubr.bf16.gmra.mxu0 %v7823
    %v8077 = vpop.f32.mrf.mxu0
    %v8078 = vadd.f32 0.0, %v8077
    %v8079 = vpop.f32.mrf.mxu0
    %v8080 = vpop.f32.mrf.mxu0
    %v8081 = vadd.f32 0.0, %v8080
    %v8082 = vpop.f32.mrf.mxu0
    %8083 = vmatprep.mubr.bf16.mxu0 0
    %8084 = vmatmul.mubr.bf16.gmra.mxu0 %v7825
    %v8085 = vpop.f32.mrf.mxu0
    %v8086 = vadd.f32 0.0, %v8085
    %v8087 = vpop.f32.mrf.mxu0
    %v8088 = vpop.f32.mrf.mxu0
    %v8089 = vadd.f32 0.0, %v8088
    %v8090 = vpop.f32.mrf.mxu0
    %8091 = vmatprep.mubr.bf16.mxu0 0
    %8092 = vmatmul.mubr.bf16.gmra.mxu0 %v7827
    %v8093 = vpop.f32.mrf.mxu0
    %v8094 = vadd.f32 0.0, %v8093
    %v8095 = vpop.f32.mrf.mxu0
    %v8096 = vpop.f32.mrf.mxu0
    %v8097 = vadd.f32 0.0, %v8096
    %v8098 = vpop.f32.mrf.mxu0
    %8099 = vmatprep.mubr.bf16.mxu0 0
    %8100 = vmatmul.mubr.bf16.gmra.mxu0 %v7829
    %v8101 = vpop.f32.mrf.mxu0
    %v8102 = vadd.f32 0.0, %v8101
    %v8103 = vpop.f32.mrf.mxu0
    %v8104 = vpop.f32.mrf.mxu0
    %v8105 = vadd.f32 0.0, %v8104
    %v8106 = vpop.f32.mrf.mxu0
    %8107 = vmatprep.mubr.bf16.mxu0 0
    %8108 = vmatmul.mubr.bf16.gmra.mxu0 %v7831
    %v8109 = vpop.f32.mrf.mxu0
    %v8110 = vadd.f32 0.0, %v8109
    %v8111 = vpop.f32.mrf.mxu0
    %v8112 = vpop.f32.mrf.mxu0
    %v8113 = vadd.f32 0.0, %v8112
    %v8114 = vpop.f32.mrf.mxu0
    %8115 = vmatprep.mubr.bf16.mxu0 0
    %8116 = vmatmul.mubr.bf16.gmra.mxu0 %v7833
    %v8117 = vpop.f32.mrf.mxu0
    %v8118 = vadd.f32 0.0, %v8117
    %v8119 = vpop.f32.mrf.mxu0
    %v8120 = vpop.f32.mrf.mxu0
    %v8121 = vadd.f32 0.0, %v8120
    %v8122 = vpop.f32.mrf.mxu0
    %8123 = vdwg.mxu0
    %v8136 = vunpack.c.l.b16 %v7711
    %v8137 = vunpack.c.l.b16 %v7712
    %v8138 = vunpack.c.l.b16 %v7713
    %v8139 = vunpack.c.l.b16 %v7714
    %v8140 = vunpack.c.l.b16 %v7715
    %v8141 = vunpack.c.l.b16 %v7716
    %v8142 = vunpack.c.l.b16 %v7717
    %v8143 = vunpack.c.l.b16 %v7718
    %v8144 = vunpack.c.l.b16 %v7719
    %v8145 = vunpack.c.l.b16 %v7720
    %v8146 = vunpack.c.l.b16 %v7721
    %v8147 = vunpack.c.l.b16 %v7722
    %v8148 = vpack.c.b16 %v8137, %v8136
    %v8149 = vpack.c.b16 %v8139, %v8138
    %v8150 = vpack.c.b16 %v8141, %v8140
    %v8151 = vpack.c.b16 %v8143, %v8142
    %v8152 = vpack.c.b16 %v8145, %v8144
    %v8153 = vpack.c.b16 %v8147, %v8146
    %8160 = vmatprep.subr.bf16.mxu0 0
    %8161 = vmatpush1.bf16.msra.mxu0 0
    %8162 = vmatprep.subr.bf16.mxu0 0
    %8163 = vmatpush1.bf16.msra.mxu0 0
    %8164 = vmatprep.subr.bf16.mxu0 0
    %8165 = vmatpush1.bf16.msra.mxu0 %v8153
    %8166 = vmatprep.subr.bf16.mxu0 0
    %8167 = vmatpush1.bf16.msra.mxu0 %v8152
    %8168 = vmatprep.subr.bf16.mxu0 0
    %8169 = vmatpush1.bf16.msra.mxu0 %v8151
    %8170 = vmatprep.subr.bf16.mxu0 0
    %8171 = vmatpush1.bf16.msra.mxu0 %v8150
    %8172 = vmatprep.subr.bf16.mxu0 0
    %8173 = vmatpush1.bf16.msra.mxu0 %v8149
    %8174 = vmatprep.subr.bf16.mxu0 0
    %8175 = vmatpush1.bf16.msra.mxu0 %v8148
    %8176 = vmatprep.subr.bf16.mxu0 0
    %8177 = vmatpush2.bf16.msra.mxu0 0
    %8178 = vmatprep.subr.bf16.mxu0 0
    %8179 = vmatpush2.bf16.msra.mxu0 0
    %8180 = vmatprep.subr.bf16.mxu0 0
    %8181 = vmatpush2.bf16.msra.mxu0 0
    %8182 = vmatprep.subr.bf16.mxu0 0
    %8183 = vmatpush2.bf16.msra.mxu0 0
    %8184 = vmatprep.subr.bf16.mxu0 0
    %8185 = vmatpush2.bf16.msra.mxu0 0
    %8186 = vmatprep.subr.bf16.mxu0 0
    %8187 = vmatpush2.bf16.msra.mxu0 0
    %8188 = vmatprep.subr.bf16.mxu0 0
    %8189 = vmatpush2.bf16.msra.mxu0 0
    %8190 = vmatprep.subr.bf16.mxu0 0
    %8191 = vmatpush2.bf16.msra.mxu0 0
    %8192 = vmatprep.mubr.bf16.mxu0 0
    %8193 = vmatmul.mubr.bf16.gmra.mxu0 %v7801
    %v8194 = vpop.f32.mrf.mxu0
    %v8195 = vadd.f32 %v7870, %v8194
    %v8196 = vpop.f32.mrf.mxu0
    %v8197 = vpop.f32.mrf.mxu0
    %v8198 = vadd.f32 %v7873, %v8197
    %v8199 = vpop.f32.mrf.mxu0
    %8200 = vmatprep.mubr.bf16.mxu0 0
    %8201 = vmatmul.mubr.bf16.gmra.mxu0 %v7771
    %v8202 = vpop.f32.mrf.mxu0
    %v8203 = vadd.f32 %v7878, %v8202
    %v8204 = vpop.f32.mrf.mxu0
    %v8205 = vpop.f32.mrf.mxu0
    %v8206 = vadd.f32 %v7881, %v8205
    %v8207 = vpop.f32.mrf.mxu0
    %8208 = vmatprep.mubr.bf16.mxu0 0
    %8209 = vmatmul.mubr.bf16.gmra.mxu0 %v7773
    %v8210 = vpop.f32.mrf.mxu0
    %v8211 = vadd.f32 %v7886, %v8210
    %v8212 = vpop.f32.mrf.mxu0
    %v8213 = vpop.f32.mrf.mxu0
    %v8214 = vadd.f32 %v7889, %v8213
    %v8215 = vpop.f32.mrf.mxu0
    %8216 = vmatprep.mubr.bf16.mxu0 0
    %8217 = vmatmul.mubr.bf16.gmra.mxu0 %v7775
    %v8218 = vpop.f32.mrf.mxu0
    %v8219 = vadd.f32 %v7894, %v8218
    %v8220 = vpop.f32.mrf.mxu0
    %v8221 = vpop.f32.mrf.mxu0
    %v8222 = vadd.f32 %v7897, %v8221
    %v8223 = vpop.f32.mrf.mxu0
    %8224 = vmatprep.mubr.bf16.mxu0 0
    %8225 = vmatmul.mubr.bf16.gmra.mxu0 %v7777
    %v8226 = vpop.f32.mrf.mxu0
    %v8227 = vadd.f32 %v7902, %v8226
    %v8228 = vpop.f32.mrf.mxu0
    %v8229 = vpop.f32.mrf.mxu0
    %v8230 = vadd.f32 %v7905, %v8229
    %v8231 = vpop.f32.mrf.mxu0
    %8232 = vmatprep.mubr.bf16.mxu0 0
    %8233 = vmatmul.mubr.bf16.gmra.mxu0 %v7779
    %v8234 = vpop.f32.mrf.mxu0
    %v8235 = vadd.f32 %v7910, %v8234
    %v8236 = vpop.f32.mrf.mxu0
    %v8237 = vpop.f32.mrf.mxu0
    %v8238 = vadd.f32 %v7913, %v8237
    %v8239 = vpop.f32.mrf.mxu0
    %8240 = vmatprep.mubr.bf16.mxu0 0
    %8241 = vmatmul.mubr.bf16.gmra.mxu0 %v7781
    %v8242 = vpop.f32.mrf.mxu0
    %v8243 = vadd.f32 %v7918, %v8242
    %v8244 = vpop.f32.mrf.mxu0
    %v8245 = vpop.f32.mrf.mxu0
    %v8246 = vadd.f32 %v7921, %v8245
    %v8247 = vpop.f32.mrf.mxu0
    %8248 = vmatprep.mubr.bf16.mxu0 0
    %8249 = vmatmul.mubr.bf16.gmra.mxu0 %v7783
    %v8250 = vpop.f32.mrf.mxu0
    %v8251 = vadd.f32 %v7926, %v8250
    %v8252 = vpop.f32.mrf.mxu0
    %v8253 = vpop.f32.mrf.mxu0
    %v8254 = vadd.f32 %v7929, %v8253
    %v8255 = vpop.f32.mrf.mxu0
    %8256 = vmatprep.mubr.bf16.mxu0 0
    %8257 = vmatmul.mubr.bf16.gmra.mxu0 %v7785
    %v8258 = vpop.f32.mrf.mxu0
    %v8259 = vadd.f32 %v7934, %v8258
    %v8260 = vpop.f32.mrf.mxu0
    %v8261 = vpop.f32.mrf.mxu0
    %v8262 = vadd.f32 %v7937, %v8261
    %v8263 = vpop.f32.mrf.mxu0
    %8264 = vmatprep.mubr.bf16.mxu0 0
    %8265 = vmatmul.mubr.bf16.gmra.mxu0 %v7787
    %v8266 = vpop.f32.mrf.mxu0
    %v8267 = vadd.f32 %v7942, %v8266
    %v8268 = vpop.f32.mrf.mxu0
    %v8269 = vpop.f32.mrf.mxu0
    %v8270 = vadd.f32 %v7945, %v8269
    %v8271 = vpop.f32.mrf.mxu0
    %8272 = vmatprep.mubr.bf16.mxu0 0
    %8273 = vmatmul.mubr.bf16.gmra.mxu0 %v7789
    %v8274 = vpop.f32.mrf.mxu0
    %v8275 = vadd.f32 %v7950, %v8274
    %v8276 = vpop.f32.mrf.mxu0
    %v8277 = vpop.f32.mrf.mxu0
    %v8278 = vadd.f32 %v7953, %v8277
    %v8279 = vpop.f32.mrf.mxu0
    %8280 = vmatprep.mubr.bf16.mxu0 0
    %8281 = vmatmul.mubr.bf16.gmra.mxu0 %v7791
    %v8282 = vpop.f32.mrf.mxu0
    %v8283 = vadd.f32 %v7958, %v8282
    %v8284 = vpop.f32.mrf.mxu0
    %v8285 = vpop.f32.mrf.mxu0
    %v8286 = vadd.f32 %v7961, %v8285
    %v8287 = vpop.f32.mrf.mxu0
    %8288 = vmatprep.mubr.bf16.mxu0 0
    %8289 = vmatmul.mubr.bf16.gmra.mxu0 %v7793
    %v8290 = vpop.f32.mrf.mxu0
    %v8291 = vadd.f32 %v7966, %v8290
    %v8292 = vpop.f32.mrf.mxu0
    %v8293 = vpop.f32.mrf.mxu0
    %v8294 = vadd.f32 %v7969, %v8293
    %v8295 = vpop.f32.mrf.mxu0
    %8296 = vmatprep.mubr.bf16.mxu0 0
    %8297 = vmatmul.mubr.bf16.gmra.mxu0 %v7795
    %v8298 = vpop.f32.mrf.mxu0
    %v8299 = vadd.f32 %v7974, %v8298
    %v8300 = vpop.f32.mrf.mxu0
    %v8301 = vpop.f32.mrf.mxu0
    %v8302 = vadd.f32 %v7977, %v8301
    %v8303 = vpop.f32.mrf.mxu0
    %8304 = vmatprep.mubr.bf16.mxu0 0
    %8305 = vmatmul.mubr.bf16.gmra.mxu0 %v7797
    %v8306 = vpop.f32.mrf.mxu0
    %v8307 = vadd.f32 %v7982, %v8306
    %v8308 = vpop.f32.mrf.mxu0
    %v8309 = vpop.f32.mrf.mxu0
    %v8310 = vadd.f32 %v7985, %v8309
    %v8311 = vpop.f32.mrf.mxu0
    %8312 = vmatprep.mubr.bf16.mxu0 0
    %8313 = vmatmul.mubr.bf16.gmra.mxu0 %v7799
    %v8314 = vpop.f32.mrf.mxu0
    %v8315 = vadd.f32 %v7990, %v8314
    %v8316 = vpop.f32.mrf.mxu0
    %v8317 = vpop.f32.mrf.mxu0
    %v8318 = vadd.f32 %v7993, %v8317
    %v8319 = vpop.f32.mrf.mxu0
    %8320 = vmatprep.mubr.bf16.mxu0 0
    %8321 = vmatmul.mubr.bf16.gmra.mxu0 %v7833
    %v8322 = vpop.f32.mrf.mxu0
    %v8323 = vadd.f32 %v7998, %v8322
    %v8324 = vpop.f32.mrf.mxu0
    %v8325 = vpop.f32.mrf.mxu0
    %v8326 = vadd.f32 %v8001, %v8325
    %v8327 = vpop.f32.mrf.mxu0
    %8328 = vmatprep.mubr.bf16.mxu0 0
    %8329 = vmatmul.mubr.bf16.gmra.mxu0 %v7803
    %v8330 = vpop.f32.mrf.mxu0
    %v8331 = vadd.f32 %v8006, %v8330
    %v8332 = vpop.f32.mrf.mxu0
    %v8333 = vpop.f32.mrf.mxu0
    %v8334 = vadd.f32 %v8009, %v8333
    %v8335 = vpop.f32.mrf.mxu0
    %8336 = vmatprep.mubr.bf16.mxu0 0
    %8337 = vmatmul.mubr.bf16.gmra.mxu0 %v7805
    %v8338 = vpop.f32.mrf.mxu0
    %v8339 = vadd.f32 %v8014, %v8338
    %v8340 = vpop.f32.mrf.mxu0
    %v8341 = vpop.f32.mrf.mxu0
    %v8342 = vadd.f32 %v8017, %v8341
    %v8343 = vpop.f32.mrf.mxu0
    %8344 = vmatprep.mubr.bf16.mxu0 0
    %8345 = vmatmul.mubr.bf16.gmra.mxu0 %v7807
    %v8346 = vpop.f32.mrf.mxu0
    %v8347 = vadd.f32 %v8022, %v8346
    %v8348 = vpop.f32.mrf.mxu0
    %v8349 = vpop.f32.mrf.mxu0
    %v8350 = vadd.f32 %v8025, %v8349
    %v8351 = vpop.f32.mrf.mxu0
    %8352 = vmatprep.mubr.bf16.mxu0 0
    %8353 = vmatmul.mubr.bf16.gmra.mxu0 %v7809
    %v8354 = vpop.f32.mrf.mxu0
    %v8355 = vadd.f32 %v8030, %v8354
    %v8356 = vpop.f32.mrf.mxu0
    %v8357 = vpop.f32.mrf.mxu0
    %v8358 = vadd.f32 %v8033, %v8357
    %v8359 = vpop.f32.mrf.mxu0
    %8360 = vmatprep.mubr.bf16.mxu0 0
    %8361 = vmatmul.mubr.bf16.gmra.mxu0 %v7811
    %v8362 = vpop.f32.mrf.mxu0
    %v8363 = vadd.f32 %v8038, %v8362
    %v8364 = vpop.f32.mrf.mxu0
    %v8365 = vpop.f32.mrf.mxu0
    %v8366 = vadd.f32 %v8041, %v8365
    %v8367 = vpop.f32.mrf.mxu0
    %8368 = vmatprep.mubr.bf16.mxu0 0
    %8369 = vmatmul.mubr.bf16.gmra.mxu0 %v7813
    %v8370 = vpop.f32.mrf.mxu0
    %v8371 = vadd.f32 %v8046, %v8370
    %v8372 = vpop.f32.mrf.mxu0
    %v8373 = vpop.f32.mrf.mxu0
    %v8374 = vadd.f32 %v8049, %v8373
    %v8375 = vpop.f32.mrf.mxu0
    %8376 = vmatprep.mubr.bf16.mxu0 0
    %8377 = vmatmul.mubr.bf16.gmra.mxu0 %v7815
    %v8378 = vpop.f32.mrf.mxu0
    %v8379 = vadd.f32 %v8054, %v8378
    %v8380 = vpop.f32.mrf.mxu0
    %v8381 = vpop.f32.mrf.mxu0
    %v8382 = vadd.f32 %v8057, %v8381
    %v8383 = vpop.f32.mrf.mxu0
    %8384 = vmatprep.mubr.bf16.mxu0 0
    %8385 = vmatmul.mubr.bf16.gmra.mxu0 %v7817
    %v8386 = vpop.f32.mrf.mxu0
    %v8387 = vadd.f32 %v8062, %v8386
    %v8388 = vpop.f32.mrf.mxu0
    %v8389 = vpop.f32.mrf.mxu0
    %v8390 = vadd.f32 %v8065, %v8389
    %v8391 = vpop.f32.mrf.mxu0
    %8392 = vmatprep.mubr.bf16.mxu0 0
    %8393 = vmatmul.mubr.bf16.gmra.mxu0 %v7819
    %v8394 = vpop.f32.mrf.mxu0
    %v8395 = vadd.f32 %v8070, %v8394
    %v8396 = vpop.f32.mrf.mxu0
    %v8397 = vpop.f32.mrf.mxu0
    %v8398 = vadd.f32 %v8073, %v8397
    %v8399 = vpop.f32.mrf.mxu0
    %8400 = vmatprep.mubr.bf16.mxu0 0
    %8401 = vmatmul.mubr.bf16.gmra.mxu0 %v7821
    %v8402 = vpop.f32.mrf.mxu0
    %v8403 = vadd.f32 %v8078, %v8402
    %v8404 = vpop.f32.mrf.mxu0
    %v8405 = vpop.f32.mrf.mxu0
    %v8406 = vadd.f32 %v8081, %v8405
    %v8407 = vpop.f32.mrf.mxu0
    %8408 = vmatprep.mubr.bf16.mxu0 0
    %8409 = vmatmul.mubr.bf16.gmra.mxu0 %v7823
    %v8410 = vpop.f32.mrf.mxu0
    %v8411 = vadd.f32 %v8086, %v8410
    %v8412 = vpop.f32.mrf.mxu0
    %v8413 = vpop.f32.mrf.mxu0
    %v8414 = vadd.f32 %v8089, %v8413
    %v8415 = vpop.f32.mrf.mxu0
    %8416 = vmatprep.mubr.bf16.mxu0 0
    %8417 = vmatmul.mubr.bf16.gmra.mxu0 %v7825
    %v8418 = vpop.f32.mrf.mxu0
    %v8419 = vadd.f32 %v8094, %v8418
    %v8420 = vpop.f32.mrf.mxu0
    %v8421 = vpop.f32.mrf.mxu0
    %v8422 = vadd.f32 %v8097, %v8421
    %v8423 = vpop.f32.mrf.mxu0
    %8424 = vmatprep.mubr.bf16.mxu0 0
    %8425 = vmatmul.mubr.bf16.gmra.mxu0 %v7827
    %v8426 = vpop.f32.mrf.mxu0
    %v8427 = vadd.f32 %v8102, %v8426
    %v8428 = vpop.f32.mrf.mxu0
    %v8429 = vpop.f32.mrf.mxu0
    %v8430 = vadd.f32 %v8105, %v8429
    %v8431 = vpop.f32.mrf.mxu0
    %8432 = vmatprep.mubr.bf16.mxu0 0
    %8433 = vmatmul.mubr.bf16.gmra.mxu0 %v7829
    %v8434 = vpop.f32.mrf.mxu0
    %v8435 = vadd.f32 %v8110, %v8434
    %v8436 = vpop.f32.mrf.mxu0
    %v8437 = vpop.f32.mrf.mxu0
    %v8438 = vadd.f32 %v8113, %v8437
    %v8439 = vpop.f32.mrf.mxu0
    %8440 = vmatprep.mubr.bf16.mxu0 0
    %8441 = vmatmul.mubr.bf16.gmra.mxu0 %v7831
    %v8442 = vpop.f32.mrf.mxu0
    %v8443 = vadd.f32 %v8118, %v8442
    %v8444 = vpop.f32.mrf.mxu0
    %v8445 = vpop.f32.mrf.mxu0
    %v8446 = vadd.f32 %v8121, %v8445
    %v8447 = vpop.f32.mrf.mxu0
    %8448 = vdwg.mxu0
    %v8449 = vld [vmem:[%s0 + $0x1a4] sm:$0xf]
    %v8450 = vld [vmem:[%s0 + $0x1a8] sm:$0xf]
    %v8451 = vld [vmem:[%s0 + $0x1ac] sm:$0xf]
    %v8452 = vld [vmem:[%s0 + $0x1b0] sm:$0xf]
    %v8453 = vld [vmem:[%s0 + $0x1b4] sm:$0xf]
    %v8454 = vld [vmem:[%s0 + $0x1b8] sm:$0xf]
    %v8455 = vld [vmem:[%s0 + $0x1bc] sm:$0xf]
    %v8456 = vld [vmem:[%s0 + $0x1c0] sm:$0xf]
    %v8457 = vld [vmem:[%s0 + $0x1c4] sm:$0xf]
    %v8458 = vld [vmem:[%s0 + $0x1c8] sm:$0xf]
    %v8459 = vld [vmem:[%s0 + $0x1cc] sm:$0xf]
    %v8460 = vld [vmem:[%s0 + $0x1d0] sm:$0xf]
    %v8473 = vunpack.c.l.b16 %v8449
    %v8474 = vunpack.c.l.b16 %v8450
    %v8475 = vunpack.c.l.b16 %v8451
    %v8476 = vunpack.c.l.b16 %v8452
    %v8477 = vunpack.c.l.b16 %v8453
    %v8478 = vunpack.c.l.b16 %v8454
    %v8479 = vunpack.c.l.b16 %v8455
    %v8480 = vunpack.c.l.b16 %v8456
    %v8481 = vunpack.c.l.b16 %v8457
    %v8482 = vunpack.c.l.b16 %v8458
    %v8483 = vunpack.c.l.b16 %v8459
    %v8484 = vunpack.c.l.b16 %v8460
    %v8485 = vpack.c.b16 %v8474, %v8473
    %v8486 = vpack.c.b16 %v8476, %v8475
    %v8487 = vpack.c.b16 %v8478, %v8477
    %v8488 = vpack.c.b16 %v8480, %v8479
    %v8489 = vpack.c.b16 %v8482, %v8481
    %v8490 = vpack.c.b16 %v8484, %v8483
    %8497 = vmatprep.subr.bf16.mxu0 0
    %8498 = vmatpush1.bf16.msra.mxu0 0
    %8499 = vmatprep.subr.bf16.mxu0 0
    %8500 = vmatpush1.bf16.msra.mxu0 0
    %8501 = vmatprep.subr.bf16.mxu0 0
    %8502 = vmatpush1.bf16.msra.mxu0 %v8490
    %8503 = vmatprep.subr.bf16.mxu0 0
    %8504 = vmatpush1.bf16.msra.mxu0 %v8489
    %8505 = vmatprep.subr.bf16.mxu0 0
    %8506 = vmatpush1.bf16.msra.mxu0 %v8488
    %8507 = vmatprep.subr.bf16.mxu0 0
    %8508 = vmatpush1.bf16.msra.mxu0 %v8487
    %8509 = vmatprep.subr.bf16.mxu0 0
    %8510 = vmatpush1.bf16.msra.mxu0 %v8486
    %8511 = vmatprep.subr.bf16.mxu0 0
    %8512 = vmatpush1.bf16.msra.mxu0 %v8485
    %8513 = vmatprep.subr.bf16.mxu0 0
    %8514 = vmatpush2.bf16.msra.mxu0 0
    %8515 = vmatprep.subr.bf16.mxu0 0
    %8516 = vmatpush2.bf16.msra.mxu0 0
    %8517 = vmatprep.subr.bf16.mxu0 0
    %8518 = vmatpush2.bf16.msra.mxu0 0
    %8519 = vmatprep.subr.bf16.mxu0 0
    %8520 = vmatpush2.bf16.msra.mxu0 0
    %8521 = vmatprep.subr.bf16.mxu0 0
    %8522 = vmatpush2.bf16.msra.mxu0 0
    %8523 = vmatprep.subr.bf16.mxu0 0
    %8524 = vmatpush2.bf16.msra.mxu0 0
    %8525 = vmatprep.subr.bf16.mxu0 0
    %8526 = vmatpush2.bf16.msra.mxu0 0
    %8527 = vmatprep.subr.bf16.mxu0 0
    %8528 = vmatpush2.bf16.msra.mxu0 0
    %8529 = vmatprep.mubr.bf16.mxu0 0
    %8530 = vmatmul.mubr.bf16.gmra.mxu0 %v7773
    %v8531 = vpop.f32.mrf.mxu0
    %v8532 = vadd.f32 0.0, %v8531
    %v8533 = vpop.f32.mrf.mxu0
    %v8534 = vpop.f32.mrf.mxu0
    %v8535 = vadd.f32 0.0, %v8534
    %v8536 = vpop.f32.mrf.mxu0
    %8537 = vmatprep.mubr.bf16.mxu0 0
    %8538 = vmatmul.mubr.bf16.gmra.mxu0 %v7775
    %v8539 = vpop.f32.mrf.mxu0
    %v8540 = vadd.f32 0.0, %v8539
    %v8541 = vpop.f32.mrf.mxu0
    %v8542 = vpop.f32.mrf.mxu0
    %v8543 = vadd.f32 0.0, %v8542
    %v8544 = vpop.f32.mrf.mxu0
    %8545 = vmatprep.mubr.bf16.mxu0 0
    %8546 = vmatmul.mubr.bf16.gmra.mxu0 %v7777
    %v8547 = vpop.f32.mrf.mxu0
    %v8548 = vadd.f32 0.0, %v8547
    %v8549 = vpop.f32.mrf.mxu0
    %v8550 = vpop.f32.mrf.mxu0
    %v8551 = vadd.f32 0.0, %v8550
    %v8552 = vpop.f32.mrf.mxu0
    %8553 = vmatprep.mubr.bf16.mxu0 0
    %8554 = vmatmul.mubr.bf16.gmra.mxu0 %v7779
    %v8555 = vpop.f32.mrf.mxu0
    %v8556 = vadd.f32 0.0, %v8555
    %v8557 = vpop.f32.mrf.mxu0
    %v8558 = vpop.f32.mrf.mxu0
    %v8559 = vadd.f32 0.0, %v8558
    %v8560 = vpop.f32.mrf.mxu0
    %8561 = vmatprep.mubr.bf16.mxu0 0
    %8562 = vmatmul.mubr.bf16.gmra.mxu0 %v7781
    %v8563 = vpop.f32.mrf.mxu0
    %v8564 = vadd.f32 0.0, %v8563
    %v8565 = vpop.f32.mrf.mxu0
    %v8566 = vpop.f32.mrf.mxu0
    %v8567 = vadd.f32 0.0, %v8566
    %v8568 = vpop.f32.mrf.mxu0
    %8569 = vmatprep.mubr.bf16.mxu0 0
    %8570 = vmatmul.mubr.bf16.gmra.mxu0 %v7783
    %v8571 = vpop.f32.mrf.mxu0
    %v8572 = vadd.f32 0.0, %v8571
    %v8573 = vpop.f32.mrf.mxu0
    %v8574 = vpop.f32.mrf.mxu0
    %v8575 = vadd.f32 0.0, %v8574
    %v8576 = vpop.f32.mrf.mxu0
    %8577 = vmatprep.mubr.bf16.mxu0 0
    %8578 = vmatmul.mubr.bf16.gmra.mxu0 %v7785
    %v8579 = vpop.f32.mrf.mxu0
    %v8580 = vadd.f32 0.0, %v8579
    %v8581 = vpop.f32.mrf.mxu0
    %v8582 = vpop.f32.mrf.mxu0
    %v8583 = vadd.f32 0.0, %v8582
    %v8584 = vpop.f32.mrf.mxu0
    %8585 = vmatprep.mubr.bf16.mxu0 0
    %8586 = vmatmul.mubr.bf16.gmra.mxu0 %v7787
    %v8587 = vpop.f32.mrf.mxu0
    %v8588 = vadd.f32 0.0, %v8587
    %v8589 = vpop.f32.mrf.mxu0
    %v8590 = vpop.f32.mrf.mxu0
    %v8591 = vadd.f32 0.0, %v8590
    %v8592 = vpop.f32.mrf.mxu0
    %8593 = vmatprep.mubr.bf16.mxu0 0
    %8594 = vmatmul.mubr.bf16.gmra.mxu0 %v7789
    %v8595 = vpop.f32.mrf.mxu0
    %v8596 = vadd.f32 0.0, %v8595
    %v8597 = vpop.f32.mrf.mxu0
    %v8598 = vpop.f32.mrf.mxu0
    %v8599 = vadd.f32 0.0, %v8598
    %v8600 = vpop.f32.mrf.mxu0
    %8601 = vmatprep.mubr.bf16.mxu0 0
    %8602 = vmatmul.mubr.bf16.gmra.mxu0 %v7791
    %v8603 = vpop.f32.mrf.mxu0
    %v8604 = vadd.f32 0.0, %v8603
    %v8605 = vpop.f32.mrf.mxu0
    %v8606 = vpop.f32.mrf.mxu0
    %v8607 = vadd.f32 0.0, %v8606
    %v8608 = vpop.f32.mrf.mxu0
    %8609 = vmatprep.mubr.bf16.mxu0 0
    %8610 = vmatmul.mubr.bf16.gmra.mxu0 %v7793
    %v8611 = vpop.f32.mrf.mxu0
    %v8612 = vadd.f32 0.0, %v8611
    %v8613 = vpop.f32.mrf.mxu0
    %v8614 = vpop.f32.mrf.mxu0
    %v8615 = vadd.f32 0.0, %v8614
    %v8616 = vpop.f32.mrf.mxu0
    %8617 = vmatprep.mubr.bf16.mxu0 0
    %8618 = vmatmul.mubr.bf16.gmra.mxu0 %v7795
    %v8619 = vpop.f32.mrf.mxu0
    %v8620 = vadd.f32 0.0, %v8619
    %v8621 = vpop.f32.mrf.mxu0
    %v8622 = vpop.f32.mrf.mxu0
    %v8623 = vadd.f32 0.0, %v8622
    %v8624 = vpop.f32.mrf.mxu0
    %8625 = vmatprep.mubr.bf16.mxu0 0
    %8626 = vmatmul.mubr.bf16.gmra.mxu0 %v7797
    %v8627 = vpop.f32.mrf.mxu0
    %v8628 = vadd.f32 0.0, %v8627
    %v8629 = vpop.f32.mrf.mxu0
    %v8630 = vpop.f32.mrf.mxu0
    %v8631 = vadd.f32 0.0, %v8630
    %v8632 = vpop.f32.mrf.mxu0
    %8633 = vmatprep.mubr.bf16.mxu0 0
    %8634 = vmatmul.mubr.bf16.gmra.mxu0 %v7799
    %v8635 = vpop.f32.mrf.mxu0
    %v8636 = vadd.f32 0.0, %v8635
    %v8637 = vpop.f32.mrf.mxu0
    %v8638 = vpop.f32.mrf.mxu0
    %v8639 = vadd.f32 0.0, %v8638
    %v8640 = vpop.f32.mrf.mxu0
    %8641 = vmatprep.mubr.bf16.mxu0 0
    %8642 = vmatmul.mubr.bf16.gmra.mxu0 %v7801
    %v8643 = vpop.f32.mrf.mxu0
    %v8644 = vadd.f32 0.0, %v8643
    %v8645 = vpop.f32.mrf.mxu0
    %v8646 = vpop.f32.mrf.mxu0
    %v8647 = vadd.f32 0.0, %v8646
    %v8648 = vpop.f32.mrf.mxu0
    %8649 = vmatprep.mubr.bf16.mxu0 0
    %8650 = vmatmul.mubr.bf16.gmra.mxu0 %v7771
    %v8651 = vpop.f32.mrf.mxu0
    %v8652 = vadd.f32 0.0, %v8651
    %v8653 = vpop.f32.mrf.mxu0
    %v8654 = vpop.f32.mrf.mxu0
    %v8655 = vadd.f32 0.0, %v8654
    %v8656 = vpop.f32.mrf.mxu0
    %8657 = vmatprep.mubr.bf16.mxu0 0
    %8658 = vmatmul.mubr.bf16.gmra.mxu0 %v7805
    %v8659 = vpop.f32.mrf.mxu0
    %v8660 = vadd.f32 0.0, %v8659
    %v8661 = vpop.f32.mrf.mxu0
    %v8662 = vpop.f32.mrf.mxu0
    %v8663 = vadd.f32 0.0, %v8662
    %v8664 = vpop.f32.mrf.mxu0
    %8665 = vmatprep.mubr.bf16.mxu0 0
    %8666 = vmatmul.mubr.bf16.gmra.mxu0 %v7807
    %v8667 = vpop.f32.mrf.mxu0
    %v8668 = vadd.f32 0.0, %v8667
    %v8669 = vpop.f32.mrf.mxu0
    %v8670 = vpop.f32.mrf.mxu0
    %v8671 = vadd.f32 0.0, %v8670
    %v8672 = vpop.f32.mrf.mxu0
    %8673 = vmatprep.mubr.bf16.mxu0 0
    %8674 = vmatmul.mubr.bf16.gmra.mxu0 %v7809
    %v8675 = vpop.f32.mrf.mxu0
    %v8676 = vadd.f32 0.0, %v8675
    %v8677 = vpop.f32.mrf.mxu0
    %v8678 = vpop.f32.mrf.mxu0
    %v8679 = vadd.f32 0.0, %v8678
    %v8680 = vpop.f32.mrf.mxu0
    %8681 = vmatprep.mubr.bf16.mxu0 0
    %8682 = vmatmul.mubr.bf16.gmra.mxu0 %v7811
    %v8683 = vpop.f32.mrf.mxu0
    %v8684 = vadd.f32 0.0, %v8683
    %v8685 = vpop.f32.mrf.mxu0
    %v8686 = vpop.f32.mrf.mxu0
    %v8687 = vadd.f32 0.0, %v8686
    %v8688 = vpop.f32.mrf.mxu0
    %8689 = vmatprep.mubr.bf16.mxu0 0
    %8690 = vmatmul.mubr.bf16.gmra.mxu0 %v7813
    %v8691 = vpop.f32.mrf.mxu0
    %v8692 = vadd.f32 0.0, %v8691
    %v8693 = vpop.f32.mrf.mxu0
    %v8694 = vpop.f32.mrf.mxu0
    %v8695 = vadd.f32 0.0, %v8694
    %v8696 = vpop.f32.mrf.mxu0
    %8697 = vmatprep.mubr.bf16.mxu0 0
    %8698 = vmatmul.mubr.bf16.gmra.mxu0 %v7815
    %v8699 = vpop.f32.mrf.mxu0
    %v8700 = vadd.f32 0.0, %v8699
    %v8701 = vpop.f32.mrf.mxu0
    %v8702 = vpop.f32.mrf.mxu0
    %v8703 = vadd.f32 0.0, %v8702
    %v8704 = vpop.f32.mrf.mxu0
    %8705 = vmatprep.mubr.bf16.mxu0 0
    %8706 = vmatmul.mubr.bf16.gmra.mxu0 %v7817
    %v8707 = vpop.f32.mrf.mxu0
    %v8708 = vadd.f32 0.0, %v8707
    %v8709 = vpop.f32.mrf.mxu0
    %v8710 = vpop.f32.mrf.mxu0
    %v8711 = vadd.f32 0.0, %v8710
    %v8712 = vpop.f32.mrf.mxu0
    %8713 = vmatprep.mubr.bf16.mxu0 0
    %8714 = vmatmul.mubr.bf16.gmra.mxu0 %v7819
    %v8715 = vpop.f32.mrf.mxu0
    %v8716 = vadd.f32 0.0, %v8715
    %v8717 = vpop.f32.mrf.mxu0
    %v8718 = vpop.f32.mrf.mxu0
    %v8719 = vadd.f32 0.0, %v8718
    %v8720 = vpop.f32.mrf.mxu0
    %8721 = vmatprep.mubr.bf16.mxu0 0
    %8722 = vmatmul.mubr.bf16.gmra.mxu0 %v7821
    %v8723 = vpop.f32.mrf.mxu0
    %v8724 = vadd.f32 0.0, %v8723
    %v8725 = vpop.f32.mrf.mxu0
    %v8726 = vpop.f32.mrf.mxu0
    %v8727 = vadd.f32 0.0, %v8726
    %v8728 = vpop.f32.mrf.mxu0
    %8729 = vmatprep.mubr.bf16.mxu0 0
    %8730 = vmatmul.mubr.bf16.gmra.mxu0 %v7823
    %v8731 = vpop.f32.mrf.mxu0
    %v8732 = vadd.f32 0.0, %v8731
    %v8733 = vpop.f32.mrf.mxu0
    %v8734 = vpop.f32.mrf.mxu0
    %v8735 = vadd.f32 0.0, %v8734
    %v8736 = vpop.f32.mrf.mxu0
    %8737 = vmatprep.mubr.bf16.mxu0 0
    %8738 = vmatmul.mubr.bf16.gmra.mxu0 %v7825
    %v8739 = vpop.f32.mrf.mxu0
    %v8740 = vadd.f32 0.0, %v8739
    %v8741 = vpop.f32.mrf.mxu0
    %v8742 = vpop.f32.mrf.mxu0
    %v8743 = vadd.f32 0.0, %v8742
    %v8744 = vpop.f32.mrf.mxu0
    %8745 = vmatprep.mubr.bf16.mxu0 0
    %8746 = vmatmul.mubr.bf16.gmra.mxu0 %v7827
    %v8747 = vpop.f32.mrf.mxu0
    %v8748 = vadd.f32 0.0, %v8747
    %v8749 = vpop.f32.mrf.mxu0
    %v8750 = vpop.f32.mrf.mxu0
    %v8751 = vadd.f32 0.0, %v8750
    %v8752 = vpop.f32.mrf.mxu0
    %8753 = vmatprep.mubr.bf16.mxu0 0
    %8754 = vmatmul.mubr.bf16.gmra.mxu0 %v7829
    %v8755 = vpop.f32.mrf.mxu0
    %v8756 = vadd.f32 0.0, %v8755
    %v8757 = vpop.f32.mrf.mxu0
    %v8758 = vpop.f32.mrf.mxu0
    %v8759 = vadd.f32 0.0, %v8758
    %v8760 = vpop.f32.mrf.mxu0
    %8761 = vmatprep.mubr.bf16.mxu0 0
    %8762 = vmatmul.mubr.bf16.gmra.mxu0 %v7831
    %v8763 = vpop.f32.mrf.mxu0
    %v8764 = vadd.f32 0.0, %v8763
    %v8765 = vpop.f32.mrf.mxu0
    %v8766 = vpop.f32.mrf.mxu0
    %v8767 = vadd.f32 0.0, %v8766
    %v8768 = vpop.f32.mrf.mxu0
    %8769 = vmatprep.mubr.bf16.mxu0 0
    %8770 = vmatmul.mubr.bf16.gmra.mxu0 %v7833
    %v8771 = vpop.f32.mrf.mxu0
    %v8772 = vadd.f32 0.0, %v8771
    %v8773 = vpop.f32.mrf.mxu0
    %v8774 = vpop.f32.mrf.mxu0
    %v8775 = vadd.f32 0.0, %v8774
    %v8776 = vpop.f32.mrf.mxu0
    %8777 = vmatprep.mubr.bf16.mxu0 0
    %8778 = vmatmul.mubr.bf16.gmra.mxu0 %v7803
    %v8779 = vpop.f32.mrf.mxu0
    %v8780 = vadd.f32 0.0, %v8779
    %v8781 = vpop.f32.mrf.mxu0
    %v8782 = vpop.f32.mrf.mxu0
    %v8783 = vadd.f32 0.0, %v8782
    %v8784 = vpop.f32.mrf.mxu0
    %8785 = vdwg.mxu0
    %v8786 = vadd.f32 %v8195, %v8532
    %v8787 = vadd.f32 %v8198, %v8535
    %v8788 = vadd.f32 %v8203, %v8540
    %v8789 = vadd.f32 %v8206, %v8543
    %v8790 = vadd.f32 %v8211, %v8548
    %v8791 = vadd.f32 %v8214, %v8551
    %v8792 = vadd.f32 %v8219, %v8556
    %v8793 = vadd.f32 %v8222, %v8559
    %v8794 = vadd.f32 %v8227, %v8564
    %v8795 = vadd.f32 %v8230, %v8567
    %v8796 = vadd.f32 %v8235, %v8572
    %v8797 = vadd.f32 %v8238, %v8575
    %v8798 = vadd.f32 %v8243, %v8580
    %v8799 = vadd.f32 %v8246, %v8583
    %v8800 = vadd.f32 %v8251, %v8588
    %v8801 = vadd.f32 %v8254, %v8591
    %v8802 = vadd.f32 %v8259, %v8596
    %v8803 = vadd.f32 %v8262, %v8599
    %v8804 = vadd.f32 %v8267, %v8604
    %v8805 = vadd.f32 %v8270, %v8607
    %v8806 = vadd.f32 %v8275, %v8612
    %v8807 = vadd.f32 %v8278, %v8615
    %v8808 = vadd.f32 %v8283, %v8620
    %v8809 = vadd.f32 %v8286, %v8623
    %v8810 = vadd.f32 %v8291, %v8628
    %v8811 = vadd.f32 %v8294, %v8631
    %v8812 = vadd.f32 %v8299, %v8636
    %v8813 = vadd.f32 %v8302, %v8639
    %v8814 = vadd.f32 %v8307, %v8644
    %v8815 = vadd.f32 %v8310, %v8647
    %v8816 = vadd.f32 %v8315, %v8652
    %v8817 = vadd.f32 %v8318, %v8655
    %v8818 = vadd.f32 %v8323, %v8660
    %v8819 = vadd.f32 %v8326, %v8663
    %v8820 = vadd.f32 %v8331, %v8668
    %v8821 = vadd.f32 %v8334, %v8671
    %v8822 = vadd.f32 %v8339, %v8676
    %v8823 = vadd.f32 %v8342, %v8679
    %v8824 = vadd.f32 %v8347, %v8684
    %v8825 = vadd.f32 %v8350, %v8687
    %v8826 = vadd.f32 %v8355, %v8692
    %v8827 = vadd.f32 %v8358, %v8695
    %v8828 = vadd.f32 %v8363, %v8700
    %v8829 = vadd.f32 %v8366, %v8703
    %v8830 = vadd.f32 %v8371, %v8708
    %v8831 = vadd.f32 %v8374, %v8711
    %v8832 = vadd.f32 %v8379, %v8716
    %v8833 = vadd.f32 %v8382, %v8719
    %v8834 = vadd.f32 %v8387, %v8724
    %v8835 = vadd.f32 %v8390, %v8727
    %v8836 = vadd.f32 %v8395, %v8732
    %v8837 = vadd.f32 %v8398, %v8735
    %v8838 = vadd.f32 %v8403, %v8740
    %v8839 = vadd.f32 %v8406, %v8743
    %v8840 = vadd.f32 %v8411, %v8748
    %v8841 = vadd.f32 %v8414, %v8751
    %v8842 = vadd.f32 %v8419, %v8756
    %v8843 = vadd.f32 %v8422, %v8759
    %v8844 = vadd.f32 %v8427, %v8764
    %v8845 = vadd.f32 %v8430, %v8767
    %v8846 = vadd.f32 %v8435, %v8772
    %v8847 = vadd.f32 %v8438, %v8775
    %v8848 = vadd.f32 %v8443, %v8780
    %v8849 = vadd.f32 %v8446, %v8783
    %v8850 = vld [vmem:[%s1 + $0x3] sm:$0x1]
    %v8851 = vlaneseq
    %v8852 = vshrl.u32 %v8851, 7
    %v8853 = vsub.s32 0, %v8852
    %v8854 = vrot.slane %v8850, %v8853
    %v8855 = vadd.f32 %v8786, %v8854
    %v8856 = vadd.f32 %v8787, %v8854
    %v8857 = vadd.f32 %v8788, %v8854
    %v8858 = vadd.f32 %v8789, %v8854
    %v8859 = vadd.f32 %v8790, %v8854
    %v8860 = vadd.f32 %v8791, %v8854
    %v8861 = vadd.f32 %v8792, %v8854
    %v8862 = vadd.f32 %v8793, %v8854
    %v8863 = vadd.f32 %v8794, %v8854
    %v8864 = vadd.f32 %v8795, %v8854
    %v8865 = vadd.f32 %v8796, %v8854
    %v8866 = vadd.f32 %v8797, %v8854
    %v8867 = vadd.f32 %v8798, %v8854
    %v8868 = vadd.f32 %v8799, %v8854
    %v8869 = vadd.f32 %v8800, %v8854
    %v8870 = vadd.f32 %v8801, %v8854
    %v8871 = vadd.f32 %v8802, %v8854
    %v8872 = vadd.f32 %v8803, %v8854
    %v8873 = vadd.f32 %v8804, %v8854
    %v8874 = vadd.f32 %v8805, %v8854
    %v8875 = vadd.f32 %v8806, %v8854
    %v8876 = vadd.f32 %v8807, %v8854
    %v8877 = vadd.f32 %v8808, %v8854
    %v8878 = vadd.f32 %v8809, %v8854
    %v8879 = vadd.f32 %v8810, %v8854
    %v8880 = vadd.f32 %v8811, %v8854
    %v8881 = vadd.f32 %v8812, %v8854
    %v8882 = vadd.f32 %v8813, %v8854
    %v8883 = vadd.f32 %v8814, %v8854
    %v8884 = vadd.f32 %v8815, %v8854
    %v8885 = vadd.f32 %v8816, %v8854
    %v8886 = vadd.f32 %v8817, %v8854
    %v8887 = vadd.f32 %v8818, %v8854
    %v8888 = vadd.f32 %v8819, %v8854
    %v8889 = vadd.f32 %v8820, %v8854
    %v8890 = vadd.f32 %v8821, %v8854
    %v8891 = vadd.f32 %v8822, %v8854
    %v8892 = vadd.f32 %v8823, %v8854
    %v8893 = vadd.f32 %v8824, %v8854
    %v8894 = vadd.f32 %v8825, %v8854
    %v8895 = vadd.f32 %v8826, %v8854
    %v8896 = vadd.f32 %v8827, %v8854
    %v8897 = vadd.f32 %v8828, %v8854
    %v8898 = vadd.f32 %v8829, %v8854
    %v8899 = vadd.f32 %v8830, %v8854
    %v8900 = vadd.f32 %v8831, %v8854
    %v8901 = vadd.f32 %v8832, %v8854
    %v8902 = vadd.f32 %v8833, %v8854
    %v8903 = vadd.f32 %v8834, %v8854
    %v8904 = vadd.f32 %v8835, %v8854
    %v8905 = vadd.f32 %v8836, %v8854
    %v8906 = vadd.f32 %v8837, %v8854
    %v8907 = vadd.f32 %v8838, %v8854
    %v8908 = vadd.f32 %v8839, %v8854
    %v8909 = vadd.f32 %v8840, %v8854
    %v8910 = vadd.f32 %v8841, %v8854
    %v8911 = vadd.f32 %v8842, %v8854
    %v8912 = vadd.f32 %v8843, %v8854
    %v8913 = vadd.f32 %v8844, %v8854
    %v8914 = vadd.f32 %v8845, %v8854
    %v8915 = vadd.f32 %v8846, %v8854
    %v8916 = vadd.f32 %v8847, %v8854
    %v8917 = vadd.f32 %v8848, %v8854
    %v8918 = vadd.f32 %v8849, %v8854
    %v8919 = vmax.f32 %v8855, 0.0
    %v8920 = vmax.f32 %v8856, 0.0
    %v8921 = vmax.f32 %v8857, 0.0
    %v8922 = vmax.f32 %v8858, 0.0
    %v8923 = vmax.f32 %v8859, 0.0
    %v8924 = vmax.f32 %v8860, 0.0
    %v8925 = vmax.f32 %v8861, 0.0
    %v8926 = vmax.f32 %v8862, 0.0
    %v8927 = vmax.f32 %v8863, 0.0
    %v8928 = vmax.f32 %v8864, 0.0
    %v8929 = vmax.f32 %v8865, 0.0
    %v8930 = vmax.f32 %v8866, 0.0
    %v8931 = vmax.f32 %v8867, 0.0
    %v8932 = vmax.f32 %v8868, 0.0
    %v8933 = vmax.f32 %v8869, 0.0
    %v8934 = vmax.f32 %v8870, 0.0
    %v8935 = vmax.f32 %v8871, 0.0
    %v8936 = vmax.f32 %v8872, 0.0
    %v8937 = vmax.f32 %v8873, 0.0
    %v8938 = vmax.f32 %v8874, 0.0
    %v8939 = vmax.f32 %v8875, 0.0
    %v8940 = vmax.f32 %v8876, 0.0
    %v8941 = vmax.f32 %v8877, 0.0
    %v8942 = vmax.f32 %v8878, 0.0
    %v8943 = vmax.f32 %v8879, 0.0
    %v8944 = vmax.f32 %v8880, 0.0
    %v8945 = vmax.f32 %v8881, 0.0
    %v8946 = vmax.f32 %v8882, 0.0
    %v8947 = vmax.f32 %v8883, 0.0
    %v8948 = vmax.f32 %v8884, 0.0
    %v8949 = vmax.f32 %v8885, 0.0
    %v8950 = vmax.f32 %v8886, 0.0
    %v8951 = vmax.f32 %v8887, 0.0
    %v8952 = vmax.f32 %v8888, 0.0
    %v8953 = vmax.f32 %v8889, 0.0
    %v8954 = vmax.f32 %v8890, 0.0
    %v8955 = vmax.f32 %v8891, 0.0
    %v8956 = vmax.f32 %v8892, 0.0
    %v8957 = vmax.f32 %v8893, 0.0
    %v8958 = vmax.f32 %v8894, 0.0
    %v8959 = vmax.f32 %v8895, 0.0
    %v8960 = vmax.f32 %v8896, 0.0
    %v8961 = vmax.f32 %v8897, 0.0
    %v8962 = vmax.f32 %v8898, 0.0
    %v8963 = vmax.f32 %v8899, 0.0
    %v8964 = vmax.f32 %v8900, 0.0
    %v8965 = vmax.f32 %v8901, 0.0
    %v8966 = vmax.f32 %v8902, 0.0
    %v8967 = vmax.f32 %v8903, 0.0
    %v8968 = vmax.f32 %v8904, 0.0
    %v8969 = vmax.f32 %v8905, 0.0
    %v8970 = vmax.f32 %v8906, 0.0
    %v8971 = vmax.f32 %v8907, 0.0
    %v8972 = vmax.f32 %v8908, 0.0
    %v8973 = vmax.f32 %v8909, 0.0
    %v8974 = vmax.f32 %v8910, 0.0
    %v8975 = vmax.f32 %v8911, 0.0
    %v8976 = vmax.f32 %v8912, 0.0
    %v8977 = vmax.f32 %v8913, 0.0
    %v8978 = vmax.f32 %v8914, 0.0
    %v8979 = vmax.f32 %v8915, 0.0
    %v8980 = vmax.f32 %v8916, 0.0
    %v8981 = vmax.f32 %v8917, 0.0
    %v8982 = vmax.f32 %v8918, 0.0
    %v8983 = vpack.c.bf16 %v8920, %v8919
    %v8984 = vpack.c.bf16 %v8922, %v8921
    %v8985 = vpack.c.bf16 %v8924, %v8923
    %v8986 = vpack.c.bf16 %v8926, %v8925
    %v8987 = vpack.c.bf16 %v8928, %v8927
    %v8988 = vpack.c.bf16 %v8930, %v8929
    %v8989 = vpack.c.bf16 %v8932, %v8931
    %v8990 = vpack.c.bf16 %v8934, %v8933
    %v8991 = vpack.c.bf16 %v8936, %v8935
    %v8992 = vpack.c.bf16 %v8938, %v8937
    %v8993 = vpack.c.bf16 %v8940, %v8939
    %v8994 = vpack.c.bf16 %v8942, %v8941
    %v8995 = vpack.c.bf16 %v8944, %v8943
    %v8996 = vpack.c.bf16 %v8946, %v8945
    %v8997 = vpack.c.bf16 %v8948, %v8947
    %v8998 = vpack.c.bf16 %v8950, %v8949
    %v8999 = vpack.c.bf16 %v8952, %v8951
    %v9000 = vpack.c.bf16 %v8954, %v8953
    %v9001 = vpack.c.bf16 %v8956, %v8955
    %v9002 = vpack.c.bf16 %v8958, %v8957
    %v9003 = vpack.c.bf16 %v8960, %v8959
    %v9004 = vpack.c.bf16 %v8962, %v8961
    %v9005 = vpack.c.bf16 %v8964, %v8963
    %v9006 = vpack.c.bf16 %v8966, %v8965
    %v9007 = vpack.c.bf16 %v8968, %v8967
    %v9008 = vpack.c.bf16 %v8970, %v8969
    %v9009 = vpack.c.bf16 %v8972, %v8971
    %v9010 = vpack.c.bf16 %v8974, %v8973
    %v9011 = vpack.c.bf16 %v8976, %v8975
    %v9012 = vpack.c.bf16 %v8978, %v8977
    %v9013 = vpack.c.bf16 %v8980, %v8979
    %v9014 = vpack.c.bf16 %v8982, %v8981
    %v9016 = vshrl.u32 %v8983, 16
    %v9018 = vrot.slane %v9016, 7
    %v9020 = vshrl.u32 %v8984, 16
    %v9022 = vrot.slane %v9020, 7
    %v9024 = vshrl.u32 %v8985, 16
    %v9026 = vrot.slane %v9024, 7
    %v9028 = vshrl.u32 %v8986, 16
    %v9030 = vrot.slane %v9028, 7
    %v9032 = vshrl.u32 %v8987, 16
    %v9034 = vrot.slane %v9032, 7
    %v9036 = vshrl.u32 %v8988, 16
    %v9038 = vrot.slane %v9036, 7
    %v9040 = vshrl.u32 %v8989, 16
    %v9042 = vrot.slane %v9040, 7
    %v9044 = vshrl.u32 %v8990, 16
    %v9046 = vrot.slane %v9044, 7
    %v9048 = vshrl.u32 %v8991, 16
    %v9050 = vrot.slane %v9048, 7
    %v9052 = vshrl.u32 %v8992, 16
    %v9054 = vrot.slane %v9052, 7
    %v9056 = vshrl.u32 %v8993, 16
    %v9058 = vrot.slane %v9056, 7
    %v9060 = vshrl.u32 %v8994, 16
    %v9062 = vrot.slane %v9060, 7
    %v9064 = vshrl.u32 %v8995, 16
    %v9066 = vrot.slane %v9064, 7
    %v9068 = vshrl.u32 %v8996, 16
    %v9070 = vrot.slane %v9068, 7
    %v9072 = vshrl.u32 %v8997, 16
    %v9074 = vrot.slane %v9072, 7
    %v9076 = vshrl.u32 %v8998, 16
    %v9078 = vrot.slane %v9076, 7
    %v9080 = vshrl.u32 %v8999, 16
    %v9082 = vrot.slane %v9080, 7
    %v9084 = vshrl.u32 %v9000, 16
    %v9086 = vrot.slane %v9084, 7
    %v9088 = vshrl.u32 %v9001, 16
    %v9090 = vrot.slane %v9088, 7
    %v9092 = vshrl.u32 %v9002, 16
    %v9094 = vrot.slane %v9092, 7
    %v9096 = vshrl.u32 %v9003, 16
    %v9098 = vrot.slane %v9096, 7
    %v9100 = vshrl.u32 %v9004, 16
    %v9102 = vrot.slane %v9100, 7
    %v9104 = vshrl.u32 %v9005, 16
    %v9106 = vrot.slane %v9104, 7
    %v9108 = vshrl.u32 %v9006, 16
    %v9110 = vrot.slane %v9108, 7
    %v9112 = vshrl.u32 %v9007, 16
    %v9114 = vrot.slane %v9112, 7
    %v9116 = vshrl.u32 %v9008, 16
    %v9118 = vrot.slane %v9116, 7
    %v9120 = vshrl.u32 %v9009, 16
    %v9122 = vrot.slane %v9120, 7
    %v9124 = vshrl.u32 %v9010, 16
    %v9126 = vrot.slane %v9124, 7
    %v9128 = vshrl.u32 %v9011, 16
    %v9130 = vrot.slane %v9128, 7
    %v9132 = vshrl.u32 %v9012, 16
    %v9134 = vrot.slane %v9132, 7
    %v9136 = vshrl.u32 %v9013, 16
    %v9138 = vrot.slane %v9136, 7
    %v9140 = vshrl.u32 %v9014, 16
    %v9142 = vrot.slane %v9140, 7
    %v9175 = vshll.u32 %v8983, 16
    %v9177 = vor.u32 %v9018, %v9175
    %v9178 = vshll.u32 %v8984, 16
    %v9180 = vor.u32 %v9022, %v9178
    %v9181 = vshll.u32 %v8985, 16
    %v9183 = vor.u32 %v9026, %v9181
    %v9184 = vshll.u32 %v8986, 16
    %v9186 = vor.u32 %v9030, %v9184
    %v9187 = vshll.u32 %v8987, 16
    %v9189 = vor.u32 %v9034, %v9187
    %v9190 = vshll.u32 %v8988, 16
    %v9192 = vor.u32 %v9038, %v9190
    %v9193 = vshll.u32 %v8989, 16
    %v9195 = vor.u32 %v9042, %v9193
    %v9196 = vshll.u32 %v8990, 16
    %v9198 = vor.u32 %v9046, %v9196
    %v9199 = vshll.u32 %v8991, 16
    %v9201 = vor.u32 %v9050, %v9199
    %v9202 = vshll.u32 %v8992, 16
    %v9204 = vor.u32 %v9054, %v9202
    %v9205 = vshll.u32 %v8993, 16
    %v9207 = vor.u32 %v9058, %v9205
    %v9208 = vshll.u32 %v8994, 16
    %v9210 = vor.u32 %v9062, %v9208
    %v9211 = vshll.u32 %v8995, 16
    %v9213 = vor.u32 %v9066, %v9211
    %v9214 = vshll.u32 %v8996, 16
    %v9216 = vor.u32 %v9070, %v9214
    %v9217 = vshll.u32 %v8997, 16
    %v9219 = vor.u32 %v9074, %v9217
    %v9220 = vshll.u32 %v8998, 16
    %v9222 = vor.u32 %v9078, %v9220
    %v9223 = vshll.u32 %v8999, 16
    %v9225 = vor.u32 %v9082, %v9223
    %v9226 = vshll.u32 %v9000, 16
    %v9228 = vor.u32 %v9086, %v9226
    %v9229 = vshll.u32 %v9001, 16
    %v9231 = vor.u32 %v9090, %v9229
    %v9232 = vshll.u32 %v9002, 16
    %v9234 = vor.u32 %v9094, %v9232
    %v9235 = vshll.u32 %v9003, 16
    %v9237 = vor.u32 %v9098, %v9235
    %v9238 = vshll.u32 %v9004, 16
    %v9240 = vor.u32 %v9102, %v9238
    %v9241 = vshll.u32 %v9005, 16
    %v9243 = vor.u32 %v9106, %v9241
    %v9244 = vshll.u32 %v9006, 16
    %v9246 = vor.u32 %v9110, %v9244
    %v9247 = vshll.u32 %v9007, 16
    %v9249 = vor.u32 %v9114, %v9247
    %v9250 = vshll.u32 %v9008, 16
    %v9252 = vor.u32 %v9118, %v9250
    %v9253 = vshll.u32 %v9009, 16
    %v9255 = vor.u32 %v9122, %v9253
    %v9256 = vshll.u32 %v9010, 16
    %v9258 = vor.u32 %v9126, %v9256
    %v9259 = vshll.u32 %v9011, 16
    %v9261 = vor.u32 %v9130, %v9259
    %v9262 = vshll.u32 %v9012, 16
    %v9264 = vor.u32 %v9134, %v9262
    %v9265 = vshll.u32 %v9013, 16
    %v9267 = vor.u32 %v9138, %v9265
    %v9268 = vshll.u32 %v9014, 16
    %v9270 = vor.u32 %v9142, %v9268
    %v9303 = vsel %vm783, %v9018, %v9177
    %v9304 = vsel %vm783, %v9022, %v9180
    %v9305 = vsel %vm783, %v9026, %v9183
    %v9306 = vsel %vm783, %v9030, %v9186
    %v9307 = vsel %vm783, %v9034, %v9189
    %v9308 = vsel %vm783, %v9038, %v9192
    %v9309 = vsel %vm783, %v9042, %v9195
    %v9310 = vsel %vm783, %v9046, %v9198
    %v9311 = vsel %vm783, %v9050, %v9201
    %v9312 = vsel %vm783, %v9054, %v9204
    %v9313 = vsel %vm783, %v9058, %v9207
    %v9314 = vsel %vm783, %v9062, %v9210
    %v9315 = vsel %vm783, %v9066, %v9213
    %v9316 = vsel %vm783, %v9070, %v9216
    %v9317 = vsel %vm783, %v9074, %v9219
    %v9318 = vsel %vm783, %v9078, %v9222
    %v9319 = vsel %vm783, %v9082, %v9225
    %v9320 = vsel %vm783, %v9086, %v9228
    %v9321 = vsel %vm783, %v9090, %v9231
    %v9322 = vsel %vm783, %v9094, %v9234
    %v9323 = vsel %vm783, %v9098, %v9237
    %v9324 = vsel %vm783, %v9102, %v9240
    %v9325 = vsel %vm783, %v9106, %v9243
    %v9326 = vsel %vm783, %v9110, %v9246
    %v9327 = vsel %vm783, %v9114, %v9249
    %v9328 = vsel %vm783, %v9118, %v9252
    %v9329 = vsel %vm783, %v9122, %v9255
    %v9330 = vsel %vm783, %v9126, %v9258
    %v9331 = vsel %vm783, %v9130, %v9261
    %v9332 = vsel %vm783, %v9134, %v9264
    %v9333 = vsel %vm783, %v9138, %v9267
    %v9334 = vsel %vm783, %v9142, %v9270
    %v9335 = vrot.slane %v9175, 1
    %v9336 = vor.u32 %v9016, %v9335
    %v9337 = vrot.slane %v9178, 1
    %v9338 = vor.u32 %v9020, %v9337
    %v9339 = vrot.slane %v9181, 1
    %v9340 = vor.u32 %v9024, %v9339
    %v9341 = vrot.slane %v9184, 1
    %v9342 = vor.u32 %v9028, %v9341
    %v9343 = vrot.slane %v9187, 1
    %v9344 = vor.u32 %v9032, %v9343
    %v9345 = vrot.slane %v9190, 1
    %v9346 = vor.u32 %v9036, %v9345
    %v9347 = vrot.slane %v9193, 1
    %v9348 = vor.u32 %v9040, %v9347
    %v9349 = vrot.slane %v9196, 1
    %v9350 = vor.u32 %v9044, %v9349
    %v9351 = vrot.slane %v9199, 1
    %v9352 = vor.u32 %v9048, %v9351
    %v9353 = vrot.slane %v9202, 1
    %v9354 = vor.u32 %v9052, %v9353
    %v9355 = vrot.slane %v9205, 1
    %v9356 = vor.u32 %v9056, %v9355
    %v9357 = vrot.slane %v9208, 1
    %v9358 = vor.u32 %v9060, %v9357
    %v9359 = vrot.slane %v9211, 1
    %v9360 = vor.u32 %v9064, %v9359
    %v9361 = vrot.slane %v9214, 1
    %v9362 = vor.u32 %v9068, %v9361
    %v9363 = vrot.slane %v9217, 1
    %v9364 = vor.u32 %v9072, %v9363
    %v9365 = vrot.slane %v9220, 1
    %v9366 = vor.u32 %v9076, %v9365
    %v9367 = vrot.slane %v9223, 1
    %v9368 = vor.u32 %v9080, %v9367
    %v9369 = vrot.slane %v9226, 1
    %v9370 = vor.u32 %v9084, %v9369
    %v9371 = vrot.slane %v9229, 1
    %v9372 = vor.u32 %v9088, %v9371
    %v9373 = vrot.slane %v9232, 1
    %v9374 = vor.u32 %v9092, %v9373
    %v9375 = vrot.slane %v9235, 1
    %v9376 = vor.u32 %v9096, %v9375
    %v9377 = vrot.slane %v9238, 1
    %v9378 = vor.u32 %v9100, %v9377
    %v9379 = vrot.slane %v9241, 1
    %v9380 = vor.u32 %v9104, %v9379
    %v9381 = vrot.slane %v9244, 1
    %v9382 = vor.u32 %v9108, %v9381
    %v9383 = vrot.slane %v9247, 1
    %v9384 = vor.u32 %v9112, %v9383
    %v9385 = vrot.slane %v9250, 1
    %v9386 = vor.u32 %v9116, %v9385
    %v9387 = vrot.slane %v9253, 1
    %v9388 = vor.u32 %v9120, %v9387
    %v9389 = vrot.slane %v9256, 1
    %v9390 = vor.u32 %v9124, %v9389
    %v9391 = vrot.slane %v9259, 1
    %v9392 = vor.u32 %v9128, %v9391
    %v9393 = vrot.slane %v9262, 1
    %v9394 = vor.u32 %v9132, %v9393
    %v9395 = vrot.slane %v9265, 1
    %v9396 = vor.u32 %v9136, %v9395
    %v9397 = vrot.slane %v9268, 1
    %v9398 = vor.u32 %v9140, %v9397
    %v9463 = vsel %vm946, %v9336, %v9335
    %v9464 = vsel %vm946, %v9338, %v9337
    %v9465 = vsel %vm946, %v9340, %v9339
    %v9466 = vsel %vm946, %v9342, %v9341
    %v9467 = vsel %vm946, %v9344, %v9343
    %v9468 = vsel %vm946, %v9346, %v9345
    %v9469 = vsel %vm946, %v9348, %v9347
    %v9470 = vsel %vm946, %v9350, %v9349
    %v9471 = vsel %vm946, %v9352, %v9351
    %v9472 = vsel %vm946, %v9354, %v9353
    %v9473 = vsel %vm946, %v9356, %v9355
    %v9474 = vsel %vm946, %v9358, %v9357
    %v9475 = vsel %vm946, %v9360, %v9359
    %v9476 = vsel %vm946, %v9362, %v9361
    %v9477 = vsel %vm946, %v9364, %v9363
    %v9478 = vsel %vm946, %v9366, %v9365
    %v9479 = vsel %vm946, %v9368, %v9367
    %v9480 = vsel %vm946, %v9370, %v9369
    %v9481 = vsel %vm946, %v9372, %v9371
    %v9482 = vsel %vm946, %v9374, %v9373
    %v9483 = vsel %vm946, %v9376, %v9375
    %v9484 = vsel %vm946, %v9378, %v9377
    %v9485 = vsel %vm946, %v9380, %v9379
    %v9486 = vsel %vm946, %v9382, %v9381
    %v9487 = vsel %vm946, %v9384, %v9383
    %v9488 = vsel %vm946, %v9386, %v9385
    %v9489 = vsel %vm946, %v9388, %v9387
    %v9490 = vsel %vm946, %v9390, %v9389
    %v9491 = vsel %vm946, %v9392, %v9391
    %v9492 = vsel %vm946, %v9394, %v9393
    %v9493 = vsel %vm946, %v9396, %v9395
    %v9494 = vsel %vm946, %v9398, %v9397
    %9527 = vrot.lane.b32.xlu0 %v8983, 32
    %v9528 = vpop.permute.xlu0 %9527
    %9529 = vrot.lane.b32.xlu0 %v8984, 32
    %v9530 = vpop.permute.xlu0 %9529
    %9531 = vrot.lane.b32.xlu0 %v8985, 32
    %v9532 = vpop.permute.xlu0 %9531
    %9533 = vrot.lane.b32.xlu0 %v8986, 32
    %v9534 = vpop.permute.xlu0 %9533
    %9535 = vrot.lane.b32.xlu0 %v8987, 32
    %v9536 = vpop.permute.xlu0 %9535
    %9537 = vrot.lane.b32.xlu0 %v8988, 32
    %v9538 = vpop.permute.xlu0 %9537
    %9539 = vrot.lane.b32.xlu0 %v8989, 32
    %v9540 = vpop.permute.xlu0 %9539
    %9541 = vrot.lane.b32.xlu0 %v8990, 32
    %v9542 = vpop.permute.xlu0 %9541
    %9543 = vrot.lane.b32.xlu0 %v8991, 32
    %v9544 = vpop.permute.xlu0 %9543
    %9545 = vrot.lane.b32.xlu0 %v8992, 32
    %v9546 = vpop.permute.xlu0 %9545
    %9547 = vrot.lane.b32.xlu0 %v8993, 32
    %v9548 = vpop.permute.xlu0 %9547
    %9549 = vrot.lane.b32.xlu0 %v8994, 32
    %v9550 = vpop.permute.xlu0 %9549
    %9551 = vrot.lane.b32.xlu0 %v8995, 32
    %v9552 = vpop.permute.xlu0 %9551
    %9553 = vrot.lane.b32.xlu0 %v8996, 32
    %v9554 = vpop.permute.xlu0 %9553
    %9555 = vrot.lane.b32.xlu0 %v8997, 32
    %v9556 = vpop.permute.xlu0 %9555
    %9557 = vrot.lane.b32.xlu0 %v8998, 32
    %v9558 = vpop.permute.xlu0 %9557
    %9559 = vrot.lane.b32.xlu0 %v8999, 32
    %v9560 = vpop.permute.xlu0 %9559
    %9561 = vrot.lane.b32.xlu0 %v9000, 32
    %v9562 = vpop.permute.xlu0 %9561
    %9563 = vrot.lane.b32.xlu0 %v9001, 32
    %v9564 = vpop.permute.xlu0 %9563
    %9565 = vrot.lane.b32.xlu0 %v9002, 32
    %v9566 = vpop.permute.xlu0 %9565
    %9567 = vrot.lane.b32.xlu0 %v9003, 32
    %v9568 = vpop.permute.xlu0 %9567
    %9569 = vrot.lane.b32.xlu0 %v9004, 32
    %v9570 = vpop.permute.xlu0 %9569
    %9571 = vrot.lane.b32.xlu0 %v9005, 32
    %v9572 = vpop.permute.xlu0 %9571
    %9573 = vrot.lane.b32.xlu0 %v9006, 32
    %v9574 = vpop.permute.xlu0 %9573
    %9575 = vrot.lane.b32.xlu0 %v9007, 32
    %v9576 = vpop.permute.xlu0 %9575
    %9577 = vrot.lane.b32.xlu0 %v9008, 32
    %v9578 = vpop.permute.xlu0 %9577
    %9579 = vrot.lane.b32.xlu0 %v9009, 32
    %v9580 = vpop.permute.xlu0 %9579
    %9581 = vrot.lane.b32.xlu0 %v9010, 32
    %v9582 = vpop.permute.xlu0 %9581
    %9583 = vrot.lane.b32.xlu0 %v9011, 32
    %v9584 = vpop.permute.xlu0 %9583
    %9585 = vrot.lane.b32.xlu0 %v9012, 32
    %v9586 = vpop.permute.xlu0 %9585
    %9587 = vrot.lane.b32.xlu0 %v9013, 32
    %v9588 = vpop.permute.xlu0 %9587
    %9589 = vrot.lane.b32.xlu0 %v9014, 32
    %v9590 = vpop.permute.xlu0 %9589
    %9623 = vrot.lane.b32.xlu0 %v9463, 64
    %v9624 = vpop.permute.xlu0 %9623
    %9625 = vrot.lane.b32.xlu0 %v9464, 64
    %v9626 = vpop.permute.xlu0 %9625
    %9627 = vrot.lane.b32.xlu0 %v9465, 64
    %v9628 = vpop.permute.xlu0 %9627
    %9629 = vrot.lane.b32.xlu0 %v9466, 64
    %v9630 = vpop.permute.xlu0 %9629
    %9631 = vrot.lane.b32.xlu0 %v9467, 64
    %v9632 = vpop.permute.xlu0 %9631
    %9633 = vrot.lane.b32.xlu0 %v9468, 64
    %v9634 = vpop.permute.xlu0 %9633
    %9635 = vrot.lane.b32.xlu0 %v9469, 64
    %v9636 = vpop.permute.xlu0 %9635
    %9637 = vrot.lane.b32.xlu0 %v9470, 64
    %v9638 = vpop.permute.xlu0 %9637
    %9639 = vrot.lane.b32.xlu0 %v9471, 64
    %v9640 = vpop.permute.xlu0 %9639
    %9641 = vrot.lane.b32.xlu0 %v9472, 64
    %v9642 = vpop.permute.xlu0 %9641
    %9643 = vrot.lane.b32.xlu0 %v9473, 64
    %v9644 = vpop.permute.xlu0 %9643
    %9645 = vrot.lane.b32.xlu0 %v9474, 64
    %v9646 = vpop.permute.xlu0 %9645
    %9647 = vrot.lane.b32.xlu0 %v9475, 64
    %v9648 = vpop.permute.xlu0 %9647
    %9649 = vrot.lane.b32.xlu0 %v9476, 64
    %v9650 = vpop.permute.xlu0 %9649
    %9651 = vrot.lane.b32.xlu0 %v9477, 64
    %v9652 = vpop.permute.xlu0 %9651
    %9653 = vrot.lane.b32.xlu0 %v9478, 64
    %v9654 = vpop.permute.xlu0 %9653
    %9655 = vrot.lane.b32.xlu0 %v9479, 64
    %v9656 = vpop.permute.xlu0 %9655
    %9657 = vrot.lane.b32.xlu0 %v9480, 64
    %v9658 = vpop.permute.xlu0 %9657
    %9659 = vrot.lane.b32.xlu0 %v9481, 64
    %v9660 = vpop.permute.xlu0 %9659
    %9661 = vrot.lane.b32.xlu0 %v9482, 64
    %v9662 = vpop.permute.xlu0 %9661
    %9663 = vrot.lane.b32.xlu0 %v9483, 64
    %v9664 = vpop.permute.xlu0 %9663
    %9665 = vrot.lane.b32.xlu0 %v9484, 64
    %v9666 = vpop.permute.xlu0 %9665
    %9667 = vrot.lane.b32.xlu0 %v9485, 64
    %v9668 = vpop.permute.xlu0 %9667
    %9669 = vrot.lane.b32.xlu0 %v9486, 64
    %v9670 = vpop.permute.xlu0 %9669
    %9671 = vrot.lane.b32.xlu0 %v9487, 64
    %v9672 = vpop.permute.xlu0 %9671
    %9673 = vrot.lane.b32.xlu0 %v9488, 64
    %v9674 = vpop.permute.xlu0 %9673
    %9675 = vrot.lane.b32.xlu0 %v9489, 64
    %v9676 = vpop.permute.xlu0 %9675
    %9677 = vrot.lane.b32.xlu0 %v9490, 64
    %v9678 = vpop.permute.xlu0 %9677
    %9679 = vrot.lane.b32.xlu0 %v9491, 64
    %v9680 = vpop.permute.xlu0 %9679
    %9681 = vrot.lane.b32.xlu0 %v9492, 64
    %v9682 = vpop.permute.xlu0 %9681
    %9683 = vrot.lane.b32.xlu0 %v9493, 64
    %v9684 = vpop.permute.xlu0 %9683
    %9685 = vrot.lane.b32.xlu0 %v9494, 64
    %v9686 = vpop.permute.xlu0 %9685
    %v9689 = vsel %vm3212, %v9303, %v9528
    %v9692 = vsel %vm3212, %v9304, %v9530
    %v9695 = vsel %vm3212, %v9305, %v9532
    %v9698 = vsel %vm3212, %v9306, %v9534
    %v9701 = vsel %vm3212, %v9307, %v9536
    %v9704 = vsel %vm3212, %v9308, %v9538
    %v9707 = vsel %vm3212, %v9309, %v9540
    %v9710 = vsel %vm3212, %v9310, %v9542
    %v9713 = vsel %vm3212, %v9311, %v9544
    %v9716 = vsel %vm3212, %v9312, %v9546
    %v9719 = vsel %vm3212, %v9313, %v9548
    %v9722 = vsel %vm3212, %v9314, %v9550
    %v9725 = vsel %vm3212, %v9315, %v9552
    %v9728 = vsel %vm3212, %v9316, %v9554
    %v9731 = vsel %vm3212, %v9317, %v9556
    %v9734 = vsel %vm3212, %v9318, %v9558
    %v9737 = vsel %vm3212, %v9319, %v9560
    %v9740 = vsel %vm3212, %v9320, %v9562
    %v9743 = vsel %vm3212, %v9321, %v9564
    %v9746 = vsel %vm3212, %v9322, %v9566
    %v9749 = vsel %vm3212, %v9323, %v9568
    %v9752 = vsel %vm3212, %v9324, %v9570
    %v9755 = vsel %vm3212, %v9325, %v9572
    %v9758 = vsel %vm3212, %v9326, %v9574
    %v9761 = vsel %vm3212, %v9327, %v9576
    %v9764 = vsel %vm3212, %v9328, %v9578
    %v9767 = vsel %vm3212, %v9329, %v9580
    %v9770 = vsel %vm3212, %v9330, %v9582
    %v9773 = vsel %vm3212, %v9331, %v9584
    %v9776 = vsel %vm3212, %v9332, %v9586
    %v9779 = vsel %vm3212, %v9333, %v9588
    %v9782 = vsel %vm3212, %v9334, %v9590
    %v9784 = vsel %vm3309, %v9689, %v9624
    %v9786 = vsel %vm3309, %v9692, %v9626
    %v9788 = vsel %vm3309, %v9695, %v9628
    %v9790 = vsel %vm3309, %v9698, %v9630
    %v9792 = vsel %vm3309, %v9701, %v9632
    %v9794 = vsel %vm3309, %v9704, %v9634
    %v9796 = vsel %vm3309, %v9707, %v9636
    %v9798 = vsel %vm3309, %v9710, %v9638
    %v9800 = vsel %vm3309, %v9713, %v9640
    %v9802 = vsel %vm3309, %v9716, %v9642
    %v9804 = vsel %vm3309, %v9719, %v9644
    %v9806 = vsel %vm3309, %v9722, %v9646
    %v9808 = vsel %vm3309, %v9725, %v9648
    %v9810 = vsel %vm3309, %v9728, %v9650
    %v9812 = vsel %vm3309, %v9731, %v9652
    %v9814 = vsel %vm3309, %v9734, %v9654
    %v9816 = vsel %vm3309, %v9737, %v9656
    %v9818 = vsel %vm3309, %v9740, %v9658
    %v9820 = vsel %vm3309, %v9743, %v9660
    %v9822 = vsel %vm3309, %v9746, %v9662
    %v9824 = vsel %vm3309, %v9749, %v9664
    %v9826 = vsel %vm3309, %v9752, %v9666
    %v9828 = vsel %vm3309, %v9755, %v9668
    %v9830 = vsel %vm3309, %v9758, %v9670
    %v9832 = vsel %vm3309, %v9761, %v9672
    %v9834 = vsel %vm3309, %v9764, %v9674
    %v9836 = vsel %vm3309, %v9767, %v9676
    %v9838 = vsel %vm3309, %v9770, %v9678
    %v9840 = vsel %vm3309, %v9773, %v9680
    %v9842 = vsel %vm3309, %v9776, %v9682
    %v9844 = vsel %vm3309, %v9779, %v9684
    %v9846 = vsel %vm3309, %v9782, %v9686
    %v9847 = vld [vmem:[%s0 + $0x1d4] sm:$0xf]
    %v9848 = vld [vmem:[%s0 + $0x1d8] sm:$0xf]
    %v9849 = vld [vmem:[%s0 + $0x1dc] sm:$0xf]
    %v9850 = vld [vmem:[%s0 + $0x1e0] sm:$0xf]
    %v9851 = vld [vmem:[%s0 + $0x1e4] sm:$0xf]
    %v9852 = vld [vmem:[%s0 + $0x1e8] sm:$0xf]
    %v9853 = vld [vmem:[%s0 + $0x1ec] sm:$0xf]
    %v9854 = vld [vmem:[%s0 + $0x1f0] sm:$0xf]
    %v9855 = vld [vmem:[%s0 + $0x1f4] sm:$0xf]
    %v9856 = vld [vmem:[%s0 + $0x1f8] sm:$0xf]
    %v9857 = vld [vmem:[%s0 + $0x1fc] sm:$0xf]
    %v9858 = vld [vmem:[%s0 + $0x200] sm:$0xf]
    %v9859 = vld [vmem:[%s0 + $0x204] sm:$0xf]
    %v9860 = vld [vmem:[%s0 + $0x208] sm:$0xf]
    %v9861 = vld [vmem:[%s0 + $0x20c] sm:$0xf]
    %v9862 = vld [vmem:[%s0 + $0x210] sm:$0xf]
    %v9863 = vld [vmem:[%s0 + $0x214] sm:$0xf]
    %v9864 = vld [vmem:[%s0 + $0x218] sm:$0xf]
    %v9865 = vld [vmem:[%s0 + $0x21c] sm:$0xf]
    %v9866 = vld [vmem:[%s0 + $0x220] sm:$0xf]
    %v9867 = vld [vmem:[%s0 + $0x224] sm:$0xf]
    %v9868 = vld [vmem:[%s0 + $0x228] sm:$0xf]
    %v9869 = vld [vmem:[%s0 + $0x22c] sm:$0xf]
    %v9870 = vld [vmem:[%s0 + $0x230] sm:$0xf]
    %v9883 = vunpack.c.l.b16 %v9859
    %v9884 = vunpack.c.l.b16 %v9860
    %v9885 = vunpack.c.l.b16 %v9861
    %v9886 = vunpack.c.l.b16 %v9862
    %v9887 = vunpack.c.l.b16 %v9863
    %v9888 = vunpack.c.l.b16 %v9864
    %v9889 = vunpack.c.l.b16 %v9865
    %v9890 = vunpack.c.l.b16 %v9866
    %v9891 = vunpack.c.l.b16 %v9867
    %v9892 = vunpack.c.l.b16 %v9868
    %v9893 = vunpack.c.l.b16 %v9869
    %v9894 = vunpack.c.l.b16 %v9870
    %v9895 = vpack.c.b16 %v9884, %v9883
    %v9896 = vpack.c.b16 %v9886, %v9885
    %v9897 = vpack.c.b16 %v9888, %v9887
    %v9898 = vpack.c.b16 %v9890, %v9889
    %v9899 = vpack.c.b16 %v9892, %v9891
    %v9900 = vpack.c.b16 %v9894, %v9893
    %v9907 = vsel %vm3434, %v9784, 0
    %v9909 = vsel %vm3434, %v9786, 0
    %v9911 = vsel %vm3434, %v9788, 0
    %v9913 = vsel %vm3434, %v9790, 0
    %v9915 = vsel %vm3434, %v9792, 0
    %v9917 = vsel %vm3434, %v9794, 0
    %v9919 = vsel %vm3434, %v9796, 0
    %v9921 = vsel %vm3434, %v9798, 0
    %v9923 = vsel %vm3434, %v9800, 0
    %v9925 = vsel %vm3434, %v9802, 0
    %v9927 = vsel %vm3434, %v9804, 0
    %v9929 = vsel %vm3434, %v9806, 0
    %v9931 = vsel %vm3434, %v9808, 0
    %v9933 = vsel %vm3434, %v9810, 0
    %v9935 = vsel %vm3434, %v9812, 0
    %v9937 = vsel %vm3434, %v9814, 0
    %v9939 = vsel %vm3434, %v9816, 0
    %v9941 = vsel %vm3434, %v9818, 0
    %v9943 = vsel %vm3434, %v9820, 0
    %v9945 = vsel %vm3434, %v9822, 0
    %v9947 = vsel %vm3434, %v9824, 0
    %v9949 = vsel %vm3434, %v9826, 0
    %v9951 = vsel %vm3434, %v9828, 0
    %v9953 = vsel %vm3434, %v9830, 0
    %v9955 = vsel %vm3434, %v9832, 0
    %v9957 = vsel %vm3434, %v9834, 0
    %v9959 = vsel %vm3434, %v9836, 0
    %v9961 = vsel %vm3434, %v9838, 0
    %v9963 = vsel %vm3434, %v9840, 0
    %v9965 = vsel %vm3434, %v9842, 0
    %v9967 = vsel %vm3434, %v9844, 0
    %v9969 = vsel %vm3434, %v9846, 0
    %9971 = vmatprep.subr.bf16.mxu0 0
    %9972 = vmatpush1.bf16.msra.mxu0 0
    %9973 = vmatprep.subr.bf16.mxu0 0
    %9974 = vmatpush1.bf16.msra.mxu0 0
    %9975 = vmatprep.subr.bf16.mxu0 0
    %9976 = vmatpush1.bf16.msra.mxu0 %v9900
    %9977 = vmatprep.subr.bf16.mxu0 0
    %9978 = vmatpush1.bf16.msra.mxu0 %v9899
    %9979 = vmatprep.subr.bf16.mxu0 0
    %9980 = vmatpush1.bf16.msra.mxu0 %v9898
    %9981 = vmatprep.subr.bf16.mxu0 0
    %9982 = vmatpush1.bf16.msra.mxu0 %v9897
    %9983 = vmatprep.subr.bf16.mxu0 0
    %9984 = vmatpush1.bf16.msra.mxu0 %v9896
    %9985 = vmatprep.subr.bf16.mxu0 0
    %9986 = vmatpush1.bf16.msra.mxu0 %v9895
    %9987 = vmatprep.subr.bf16.mxu0 0
    %9988 = vmatpush2.bf16.msra.mxu0 0
    %9989 = vmatprep.subr.bf16.mxu0 0
    %9990 = vmatpush2.bf16.msra.mxu0 0
    %9991 = vmatprep.subr.bf16.mxu0 0
    %9992 = vmatpush2.bf16.msra.mxu0 0
    %9993 = vmatprep.subr.bf16.mxu0 0
    %9994 = vmatpush2.bf16.msra.mxu0 0
    %9995 = vmatprep.subr.bf16.mxu0 0
    %9996 = vmatpush2.bf16.msra.mxu0 0
    %9997 = vmatprep.subr.bf16.mxu0 0
    %9998 = vmatpush2.bf16.msra.mxu0 0
    %9999 = vmatprep.subr.bf16.mxu0 0
    %10000 = vmatpush2.bf16.msra.mxu0 0
    %10001 = vmatprep.subr.bf16.mxu0 0
    %10002 = vmatpush2.bf16.msra.mxu0 0
    %10003 = vmatprep.mubr.bf16.mxu0 0
    %10004 = vmatmul.mubr.bf16.gmra.mxu0 %v9907
    %v10005 = vpop.f32.mrf.mxu0
    %v10006 = vadd.f32 0.0, %v10005
    %v10007 = vpop.f32.mrf.mxu0
    %v10008 = vpop.f32.mrf.mxu0
    %v10009 = vadd.f32 0.0, %v10008
    %v10010 = vpop.f32.mrf.mxu0
    %10011 = vmatprep.mubr.bf16.mxu0 0
    %10012 = vmatmul.mubr.bf16.gmra.mxu0 %v9909
    %v10013 = vpop.f32.mrf.mxu0
    %v10014 = vadd.f32 0.0, %v10013
    %v10015 = vpop.f32.mrf.mxu0
    %v10016 = vpop.f32.mrf.mxu0
    %v10017 = vadd.f32 0.0, %v10016
    %v10018 = vpop.f32.mrf.mxu0
    %10019 = vmatprep.mubr.bf16.mxu0 0
    %10020 = vmatmul.mubr.bf16.gmra.mxu0 %v9911
    %v10021 = vpop.f32.mrf.mxu0
    %v10022 = vadd.f32 0.0, %v10021
    %v10023 = vpop.f32.mrf.mxu0
    %v10024 = vpop.f32.mrf.mxu0
    %v10025 = vadd.f32 0.0, %v10024
    %v10026 = vpop.f32.mrf.mxu0
    %10027 = vmatprep.mubr.bf16.mxu0 0
    %10028 = vmatmul.mubr.bf16.gmra.mxu0 %v9913
    %v10029 = vpop.f32.mrf.mxu0
    %v10030 = vadd.f32 0.0, %v10029
    %v10031 = vpop.f32.mrf.mxu0
    %v10032 = vpop.f32.mrf.mxu0
    %v10033 = vadd.f32 0.0, %v10032
    %v10034 = vpop.f32.mrf.mxu0
    %10035 = vmatprep.mubr.bf16.mxu0 0
    %10036 = vmatmul.mubr.bf16.gmra.mxu0 %v9915
    %v10037 = vpop.f32.mrf.mxu0
    %v10038 = vadd.f32 0.0, %v10037
    %v10039 = vpop.f32.mrf.mxu0
    %v10040 = vpop.f32.mrf.mxu0
    %v10041 = vadd.f32 0.0, %v10040
    %v10042 = vpop.f32.mrf.mxu0
    %10043 = vmatprep.mubr.bf16.mxu0 0
    %10044 = vmatmul.mubr.bf16.gmra.mxu0 %v9917
    %v10045 = vpop.f32.mrf.mxu0
    %v10046 = vadd.f32 0.0, %v10045
    %v10047 = vpop.f32.mrf.mxu0
    %v10048 = vpop.f32.mrf.mxu0
    %v10049 = vadd.f32 0.0, %v10048
    %v10050 = vpop.f32.mrf.mxu0
    %10051 = vmatprep.mubr.bf16.mxu0 0
    %10052 = vmatmul.mubr.bf16.gmra.mxu0 %v9919
    %v10053 = vpop.f32.mrf.mxu0
    %v10054 = vadd.f32 0.0, %v10053
    %v10055 = vpop.f32.mrf.mxu0
    %v10056 = vpop.f32.mrf.mxu0
    %v10057 = vadd.f32 0.0, %v10056
    %v10058 = vpop.f32.mrf.mxu0
    %10059 = vmatprep.mubr.bf16.mxu0 0
    %10060 = vmatmul.mubr.bf16.gmra.mxu0 %v9921
    %v10061 = vpop.f32.mrf.mxu0
    %v10062 = vadd.f32 0.0, %v10061
    %v10063 = vpop.f32.mrf.mxu0
    %v10064 = vpop.f32.mrf.mxu0
    %v10065 = vadd.f32 0.0, %v10064
    %v10066 = vpop.f32.mrf.mxu0
    %10067 = vmatprep.mubr.bf16.mxu0 0
    %10068 = vmatmul.mubr.bf16.gmra.mxu0 %v9923
    %v10069 = vpop.f32.mrf.mxu0
    %v10070 = vadd.f32 0.0, %v10069
    %v10071 = vpop.f32.mrf.mxu0
    %v10072 = vpop.f32.mrf.mxu0
    %v10073 = vadd.f32 0.0, %v10072
    %v10074 = vpop.f32.mrf.mxu0
    %10075 = vmatprep.mubr.bf16.mxu0 0
    %10076 = vmatmul.mubr.bf16.gmra.mxu0 %v9925
    %v10077 = vpop.f32.mrf.mxu0
    %v10078 = vadd.f32 0.0, %v10077
    %v10079 = vpop.f32.mrf.mxu0
    %v10080 = vpop.f32.mrf.mxu0
    %v10081 = vadd.f32 0.0, %v10080
    %v10082 = vpop.f32.mrf.mxu0
    %10083 = vmatprep.mubr.bf16.mxu0 0
    %10084 = vmatmul.mubr.bf16.gmra.mxu0 %v9927
    %v10085 = vpop.f32.mrf.mxu0
    %v10086 = vadd.f32 0.0, %v10085
    %v10087 = vpop.f32.mrf.mxu0
    %v10088 = vpop.f32.mrf.mxu0
    %v10089 = vadd.f32 0.0, %v10088
    %v10090 = vpop.f32.mrf.mxu0
    %10091 = vmatprep.mubr.bf16.mxu0 0
    %10092 = vmatmul.mubr.bf16.gmra.mxu0 %v9929
    %v10093 = vpop.f32.mrf.mxu0
    %v10094 = vadd.f32 0.0, %v10093
    %v10095 = vpop.f32.mrf.mxu0
    %v10096 = vpop.f32.mrf.mxu0
    %v10097 = vadd.f32 0.0, %v10096
    %v10098 = vpop.f32.mrf.mxu0
    %10099 = vmatprep.mubr.bf16.mxu0 0
    %10100 = vmatmul.mubr.bf16.gmra.mxu0 %v9931
    %v10101 = vpop.f32.mrf.mxu0
    %v10102 = vadd.f32 0.0, %v10101
    %v10103 = vpop.f32.mrf.mxu0
    %v10104 = vpop.f32.mrf.mxu0
    %v10105 = vadd.f32 0.0, %v10104
    %v10106 = vpop.f32.mrf.mxu0
    %10107 = vmatprep.mubr.bf16.mxu0 0
    %10108 = vmatmul.mubr.bf16.gmra.mxu0 %v9933
    %v10109 = vpop.f32.mrf.mxu0
    %v10110 = vadd.f32 0.0, %v10109
    %v10111 = vpop.f32.mrf.mxu0
    %v10112 = vpop.f32.mrf.mxu0
    %v10113 = vadd.f32 0.0, %v10112
    %v10114 = vpop.f32.mrf.mxu0
    %10115 = vmatprep.mubr.bf16.mxu0 0
    %10116 = vmatmul.mubr.bf16.gmra.mxu0 %v9935
    %v10117 = vpop.f32.mrf.mxu0
    %v10118 = vadd.f32 0.0, %v10117
    %v10119 = vpop.f32.mrf.mxu0
    %v10120 = vpop.f32.mrf.mxu0
    %v10121 = vadd.f32 0.0, %v10120
    %v10122 = vpop.f32.mrf.mxu0
    %10123 = vmatprep.mubr.bf16.mxu0 0
    %10124 = vmatmul.mubr.bf16.gmra.mxu0 %v9937
    %v10125 = vpop.f32.mrf.mxu0
    %v10126 = vadd.f32 0.0, %v10125
    %v10127 = vpop.f32.mrf.mxu0
    %v10128 = vpop.f32.mrf.mxu0
    %v10129 = vadd.f32 0.0, %v10128
    %v10130 = vpop.f32.mrf.mxu0
    %10131 = vmatprep.mubr.bf16.mxu0 0
    %10132 = vmatmul.mubr.bf16.gmra.mxu0 %v9939
    %v10133 = vpop.f32.mrf.mxu0
    %v10134 = vadd.f32 0.0, %v10133
    %v10135 = vpop.f32.mrf.mxu0
    %v10136 = vpop.f32.mrf.mxu0
    %v10137 = vadd.f32 0.0, %v10136
    %v10138 = vpop.f32.mrf.mxu0
    %10139 = vmatprep.mubr.bf16.mxu0 0
    %10140 = vmatmul.mubr.bf16.gmra.mxu0 %v9941
    %v10141 = vpop.f32.mrf.mxu0
    %v10142 = vadd.f32 0.0, %v10141
    %v10143 = vpop.f32.mrf.mxu0
    %v10144 = vpop.f32.mrf.mxu0
    %v10145 = vadd.f32 0.0, %v10144
    %v10146 = vpop.f32.mrf.mxu0
    %10147 = vmatprep.mubr.bf16.mxu0 0
    %10148 = vmatmul.mubr.bf16.gmra.mxu0 %v9943
    %v10149 = vpop.f32.mrf.mxu0
    %v10150 = vadd.f32 0.0, %v10149
    %v10151 = vpop.f32.mrf.mxu0
    %v10152 = vpop.f32.mrf.mxu0
    %v10153 = vadd.f32 0.0, %v10152
    %v10154 = vpop.f32.mrf.mxu0
    %10155 = vmatprep.mubr.bf16.mxu0 0
    %10156 = vmatmul.mubr.bf16.gmra.mxu0 %v9945
    %v10157 = vpop.f32.mrf.mxu0
    %v10158 = vadd.f32 0.0, %v10157
    %v10159 = vpop.f32.mrf.mxu0
    %v10160 = vpop.f32.mrf.mxu0
    %v10161 = vadd.f32 0.0, %v10160
    %v10162 = vpop.f32.mrf.mxu0
    %10163 = vmatprep.mubr.bf16.mxu0 0
    %10164 = vmatmul.mubr.bf16.gmra.mxu0 %v9947
    %v10165 = vpop.f32.mrf.mxu0
    %v10166 = vadd.f32 0.0, %v10165
    %v10167 = vpop.f32.mrf.mxu0
    %v10168 = vpop.f32.mrf.mxu0
    %v10169 = vadd.f32 0.0, %v10168
    %v10170 = vpop.f32.mrf.mxu0
    %10171 = vmatprep.mubr.bf16.mxu0 0
    %10172 = vmatmul.mubr.bf16.gmra.mxu0 %v9949
    %v10173 = vpop.f32.mrf.mxu0
    %v10174 = vadd.f32 0.0, %v10173
    %v10175 = vpop.f32.mrf.mxu0
    %v10176 = vpop.f32.mrf.mxu0
    %v10177 = vadd.f32 0.0, %v10176
    %v10178 = vpop.f32.mrf.mxu0
    %10179 = vmatprep.mubr.bf16.mxu0 0
    %10180 = vmatmul.mubr.bf16.gmra.mxu0 %v9951
    %v10181 = vpop.f32.mrf.mxu0
    %v10182 = vadd.f32 0.0, %v10181
    %v10183 = vpop.f32.mrf.mxu0
    %v10184 = vpop.f32.mrf.mxu0
    %v10185 = vadd.f32 0.0, %v10184
    %v10186 = vpop.f32.mrf.mxu0
    %10187 = vmatprep.mubr.bf16.mxu0 0
    %10188 = vmatmul.mubr.bf16.gmra.mxu0 %v9953
    %v10189 = vpop.f32.mrf.mxu0
    %v10190 = vadd.f32 0.0, %v10189
    %v10191 = vpop.f32.mrf.mxu0
    %v10192 = vpop.f32.mrf.mxu0
    %v10193 = vadd.f32 0.0, %v10192
    %v10194 = vpop.f32.mrf.mxu0
    %10195 = vmatprep.mubr.bf16.mxu0 0
    %10196 = vmatmul.mubr.bf16.gmra.mxu0 %v9955
    %v10197 = vpop.f32.mrf.mxu0
    %v10198 = vadd.f32 0.0, %v10197
    %v10199 = vpop.f32.mrf.mxu0
    %v10200 = vpop.f32.mrf.mxu0
    %v10201 = vadd.f32 0.0, %v10200
    %v10202 = vpop.f32.mrf.mxu0
    %10203 = vmatprep.mubr.bf16.mxu0 0
    %10204 = vmatmul.mubr.bf16.gmra.mxu0 %v9957
    %v10205 = vpop.f32.mrf.mxu0
    %v10206 = vadd.f32 0.0, %v10205
    %v10207 = vpop.f32.mrf.mxu0
    %v10208 = vpop.f32.mrf.mxu0
    %v10209 = vadd.f32 0.0, %v10208
    %v10210 = vpop.f32.mrf.mxu0
    %10211 = vmatprep.mubr.bf16.mxu0 0
    %10212 = vmatmul.mubr.bf16.gmra.mxu0 %v9959
    %v10213 = vpop.f32.mrf.mxu0
    %v10214 = vadd.f32 0.0, %v10213
    %v10215 = vpop.f32.mrf.mxu0
    %v10216 = vpop.f32.mrf.mxu0
    %v10217 = vadd.f32 0.0, %v10216
    %v10218 = vpop.f32.mrf.mxu0
    %10219 = vmatprep.mubr.bf16.mxu0 0
    %10220 = vmatmul.mubr.bf16.gmra.mxu0 %v9961
    %v10221 = vpop.f32.mrf.mxu0
    %v10222 = vadd.f32 0.0, %v10221
    %v10223 = vpop.f32.mrf.mxu0
    %v10224 = vpop.f32.mrf.mxu0
    %v10225 = vadd.f32 0.0, %v10224
    %v10226 = vpop.f32.mrf.mxu0
    %10227 = vmatprep.mubr.bf16.mxu0 0
    %10228 = vmatmul.mubr.bf16.gmra.mxu0 %v9963
    %v10229 = vpop.f32.mrf.mxu0
    %v10230 = vadd.f32 0.0, %v10229
    %v10231 = vpop.f32.mrf.mxu0
    %v10232 = vpop.f32.mrf.mxu0
    %v10233 = vadd.f32 0.0, %v10232
    %v10234 = vpop.f32.mrf.mxu0
    %10235 = vmatprep.mubr.bf16.mxu0 0
    %10236 = vmatmul.mubr.bf16.gmra.mxu0 %v9965
    %v10237 = vpop.f32.mrf.mxu0
    %v10238 = vadd.f32 0.0, %v10237
    %v10239 = vpop.f32.mrf.mxu0
    %v10240 = vpop.f32.mrf.mxu0
    %v10241 = vadd.f32 0.0, %v10240
    %v10242 = vpop.f32.mrf.mxu0
    %10243 = vmatprep.mubr.bf16.mxu0 0
    %10244 = vmatmul.mubr.bf16.gmra.mxu0 %v9967
    %v10245 = vpop.f32.mrf.mxu0
    %v10246 = vadd.f32 0.0, %v10245
    %v10247 = vpop.f32.mrf.mxu0
    %v10248 = vpop.f32.mrf.mxu0
    %v10249 = vadd.f32 0.0, %v10248
    %v10250 = vpop.f32.mrf.mxu0
    %10251 = vmatprep.mubr.bf16.mxu0 0
    %10252 = vmatmul.mubr.bf16.gmra.mxu0 %v9969
    %v10253 = vpop.f32.mrf.mxu0
    %v10254 = vadd.f32 0.0, %v10253
    %v10255 = vpop.f32.mrf.mxu0
    %v10256 = vpop.f32.mrf.mxu0
    %v10257 = vadd.f32 0.0, %v10256
    %v10258 = vpop.f32.mrf.mxu0
    %10259 = vdwg.mxu0
    %v10272 = vunpack.c.l.b16 %v9847
    %v10273 = vunpack.c.l.b16 %v9848
    %v10274 = vunpack.c.l.b16 %v9849
    %v10275 = vunpack.c.l.b16 %v9850
    %v10276 = vunpack.c.l.b16 %v9851
    %v10277 = vunpack.c.l.b16 %v9852
    %v10278 = vunpack.c.l.b16 %v9853
    %v10279 = vunpack.c.l.b16 %v9854
    %v10280 = vunpack.c.l.b16 %v9855
    %v10281 = vunpack.c.l.b16 %v9856
    %v10282 = vunpack.c.l.b16 %v9857
    %v10283 = vunpack.c.l.b16 %v9858
    %v10284 = vpack.c.b16 %v10273, %v10272
    %v10285 = vpack.c.b16 %v10275, %v10274
    %v10286 = vpack.c.b16 %v10277, %v10276
    %v10287 = vpack.c.b16 %v10279, %v10278
    %v10288 = vpack.c.b16 %v10281, %v10280
    %v10289 = vpack.c.b16 %v10283, %v10282
    %10296 = vmatprep.subr.bf16.mxu0 0
    %10297 = vmatpush1.bf16.msra.mxu0 0
    %10298 = vmatprep.subr.bf16.mxu0 0
    %10299 = vmatpush1.bf16.msra.mxu0 0
    %10300 = vmatprep.subr.bf16.mxu0 0
    %10301 = vmatpush1.bf16.msra.mxu0 %v10289
    %10302 = vmatprep.subr.bf16.mxu0 0
    %10303 = vmatpush1.bf16.msra.mxu0 %v10288
    %10304 = vmatprep.subr.bf16.mxu0 0
    %10305 = vmatpush1.bf16.msra.mxu0 %v10287
    %10306 = vmatprep.subr.bf16.mxu0 0
    %10307 = vmatpush1.bf16.msra.mxu0 %v10286
    %10308 = vmatprep.subr.bf16.mxu0 0
    %10309 = vmatpush1.bf16.msra.mxu0 %v10285
    %10310 = vmatprep.subr.bf16.mxu0 0
    %10311 = vmatpush1.bf16.msra.mxu0 %v10284
    %10312 = vmatprep.subr.bf16.mxu0 0
    %10313 = vmatpush2.bf16.msra.mxu0 0
    %10314 = vmatprep.subr.bf16.mxu0 0
    %10315 = vmatpush2.bf16.msra.mxu0 0
    %10316 = vmatprep.subr.bf16.mxu0 0
    %10317 = vmatpush2.bf16.msra.mxu0 0
    %10318 = vmatprep.subr.bf16.mxu0 0
    %10319 = vmatpush2.bf16.msra.mxu0 0
    %10320 = vmatprep.subr.bf16.mxu0 0
    %10321 = vmatpush2.bf16.msra.mxu0 0
    %10322 = vmatprep.subr.bf16.mxu0 0
    %10323 = vmatpush2.bf16.msra.mxu0 0
    %10324 = vmatprep.subr.bf16.mxu0 0
    %10325 = vmatpush2.bf16.msra.mxu0 0
    %10326 = vmatprep.subr.bf16.mxu0 0
    %10327 = vmatpush2.bf16.msra.mxu0 0
    %10328 = vmatprep.mubr.bf16.mxu0 0
    %10329 = vmatmul.mubr.bf16.gmra.mxu0 %v9937
    %v10330 = vpop.f32.mrf.mxu0
    %v10331 = vadd.f32 %v10006, %v10330
    %v10332 = vpop.f32.mrf.mxu0
    %v10333 = vpop.f32.mrf.mxu0
    %v10334 = vadd.f32 %v10009, %v10333
    %v10335 = vpop.f32.mrf.mxu0
    %10336 = vmatprep.mubr.bf16.mxu0 0
    %10337 = vmatmul.mubr.bf16.gmra.mxu0 %v9907
    %v10338 = vpop.f32.mrf.mxu0
    %v10339 = vadd.f32 %v10014, %v10338
    %v10340 = vpop.f32.mrf.mxu0
    %v10341 = vpop.f32.mrf.mxu0
    %v10342 = vadd.f32 %v10017, %v10341
    %v10343 = vpop.f32.mrf.mxu0
    %10344 = vmatprep.mubr.bf16.mxu0 0
    %10345 = vmatmul.mubr.bf16.gmra.mxu0 %v9909
    %v10346 = vpop.f32.mrf.mxu0
    %v10347 = vadd.f32 %v10022, %v10346
    %v10348 = vpop.f32.mrf.mxu0
    %v10349 = vpop.f32.mrf.mxu0
    %v10350 = vadd.f32 %v10025, %v10349
    %v10351 = vpop.f32.mrf.mxu0
    %10352 = vmatprep.mubr.bf16.mxu0 0
    %10353 = vmatmul.mubr.bf16.gmra.mxu0 %v9911
    %v10354 = vpop.f32.mrf.mxu0
    %v10355 = vadd.f32 %v10030, %v10354
    %v10356 = vpop.f32.mrf.mxu0
    %v10357 = vpop.f32.mrf.mxu0
    %v10358 = vadd.f32 %v10033, %v10357
    %v10359 = vpop.f32.mrf.mxu0
    %10360 = vmatprep.mubr.bf16.mxu0 0
    %10361 = vmatmul.mubr.bf16.gmra.mxu0 %v9913
    %v10362 = vpop.f32.mrf.mxu0
    %v10363 = vadd.f32 %v10038, %v10362
    %v10364 = vpop.f32.mrf.mxu0
    %v10365 = vpop.f32.mrf.mxu0
    %v10366 = vadd.f32 %v10041, %v10365
    %v10367 = vpop.f32.mrf.mxu0
    %10368 = vmatprep.mubr.bf16.mxu0 0
    %10369 = vmatmul.mubr.bf16.gmra.mxu0 %v9915
    %v10370 = vpop.f32.mrf.mxu0
    %v10371 = vadd.f32 %v10046, %v10370
    %v10372 = vpop.f32.mrf.mxu0
    %v10373 = vpop.f32.mrf.mxu0
    %v10374 = vadd.f32 %v10049, %v10373
    %v10375 = vpop.f32.mrf.mxu0
    %10376 = vmatprep.mubr.bf16.mxu0 0
    %10377 = vmatmul.mubr.bf16.gmra.mxu0 %v9917
    %v10378 = vpop.f32.mrf.mxu0
    %v10379 = vadd.f32 %v10054, %v10378
    %v10380 = vpop.f32.mrf.mxu0
    %v10381 = vpop.f32.mrf.mxu0
    %v10382 = vadd.f32 %v10057, %v10381
    %v10383 = vpop.f32.mrf.mxu0
    %10384 = vmatprep.mubr.bf16.mxu0 0
    %10385 = vmatmul.mubr.bf16.gmra.mxu0 %v9919
    %v10386 = vpop.f32.mrf.mxu0
    %v10387 = vadd.f32 %v10062, %v10386
    %v10388 = vpop.f32.mrf.mxu0
    %v10389 = vpop.f32.mrf.mxu0
    %v10390 = vadd.f32 %v10065, %v10389
    %v10391 = vpop.f32.mrf.mxu0
    %10392 = vmatprep.mubr.bf16.mxu0 0
    %10393 = vmatmul.mubr.bf16.gmra.mxu0 %v9921
    %v10394 = vpop.f32.mrf.mxu0
    %v10395 = vadd.f32 %v10070, %v10394
    %v10396 = vpop.f32.mrf.mxu0
    %v10397 = vpop.f32.mrf.mxu0
    %v10398 = vadd.f32 %v10073, %v10397
    %v10399 = vpop.f32.mrf.mxu0
    %10400 = vmatprep.mubr.bf16.mxu0 0
    %10401 = vmatmul.mubr.bf16.gmra.mxu0 %v9923
    %v10402 = vpop.f32.mrf.mxu0
    %v10403 = vadd.f32 %v10078, %v10402
    %v10404 = vpop.f32.mrf.mxu0
    %v10405 = vpop.f32.mrf.mxu0
    %v10406 = vadd.f32 %v10081, %v10405
    %v10407 = vpop.f32.mrf.mxu0
    %10408 = vmatprep.mubr.bf16.mxu0 0
    %10409 = vmatmul.mubr.bf16.gmra.mxu0 %v9925
    %v10410 = vpop.f32.mrf.mxu0
    %v10411 = vadd.f32 %v10086, %v10410
    %v10412 = vpop.f32.mrf.mxu0
    %v10413 = vpop.f32.mrf.mxu0
    %v10414 = vadd.f32 %v10089, %v10413
    %v10415 = vpop.f32.mrf.mxu0
    %10416 = vmatprep.mubr.bf16.mxu0 0
    %10417 = vmatmul.mubr.bf16.gmra.mxu0 %v9927
    %v10418 = vpop.f32.mrf.mxu0
    %v10419 = vadd.f32 %v10094, %v10418
    %v10420 = vpop.f32.mrf.mxu0
    %v10421 = vpop.f32.mrf.mxu0
    %v10422 = vadd.f32 %v10097, %v10421
    %v10423 = vpop.f32.mrf.mxu0
    %10424 = vmatprep.mubr.bf16.mxu0 0
    %10425 = vmatmul.mubr.bf16.gmra.mxu0 %v9929
    %v10426 = vpop.f32.mrf.mxu0
    %v10427 = vadd.f32 %v10102, %v10426
    %v10428 = vpop.f32.mrf.mxu0
    %v10429 = vpop.f32.mrf.mxu0
    %v10430 = vadd.f32 %v10105, %v10429
    %v10431 = vpop.f32.mrf.mxu0
    %10432 = vmatprep.mubr.bf16.mxu0 0
    %10433 = vmatmul.mubr.bf16.gmra.mxu0 %v9931
    %v10434 = vpop.f32.mrf.mxu0
    %v10435 = vadd.f32 %v10110, %v10434
    %v10436 = vpop.f32.mrf.mxu0
    %v10437 = vpop.f32.mrf.mxu0
    %v10438 = vadd.f32 %v10113, %v10437
    %v10439 = vpop.f32.mrf.mxu0
    %10440 = vmatprep.mubr.bf16.mxu0 0
    %10441 = vmatmul.mubr.bf16.gmra.mxu0 %v9933
    %v10442 = vpop.f32.mrf.mxu0
    %v10443 = vadd.f32 %v10118, %v10442
    %v10444 = vpop.f32.mrf.mxu0
    %v10445 = vpop.f32.mrf.mxu0
    %v10446 = vadd.f32 %v10121, %v10445
    %v10447 = vpop.f32.mrf.mxu0
    %10448 = vmatprep.mubr.bf16.mxu0 0
    %10449 = vmatmul.mubr.bf16.gmra.mxu0 %v9935
    %v10450 = vpop.f32.mrf.mxu0
    %v10451 = vadd.f32 %v10126, %v10450
    %v10452 = vpop.f32.mrf.mxu0
    %v10453 = vpop.f32.mrf.mxu0
    %v10454 = vadd.f32 %v10129, %v10453
    %v10455 = vpop.f32.mrf.mxu0
    %10456 = vmatprep.mubr.bf16.mxu0 0
    %10457 = vmatmul.mubr.bf16.gmra.mxu0 %v9969
    %v10458 = vpop.f32.mrf.mxu0
    %v10459 = vadd.f32 %v10134, %v10458
    %v10460 = vpop.f32.mrf.mxu0
    %v10461 = vpop.f32.mrf.mxu0
    %v10462 = vadd.f32 %v10137, %v10461
    %v10463 = vpop.f32.mrf.mxu0
    %10464 = vmatprep.mubr.bf16.mxu0 0
    %10465 = vmatmul.mubr.bf16.gmra.mxu0 %v9939
    %v10466 = vpop.f32.mrf.mxu0
    %v10467 = vadd.f32 %v10142, %v10466
    %v10468 = vpop.f32.mrf.mxu0
    %v10469 = vpop.f32.mrf.mxu0
    %v10470 = vadd.f32 %v10145, %v10469
    %v10471 = vpop.f32.mrf.mxu0
    %10472 = vmatprep.mubr.bf16.mxu0 0
    %10473 = vmatmul.mubr.bf16.gmra.mxu0 %v9941
    %v10474 = vpop.f32.mrf.mxu0
    %v10475 = vadd.f32 %v10150, %v10474
    %v10476 = vpop.f32.mrf.mxu0
    %v10477 = vpop.f32.mrf.mxu0
    %v10478 = vadd.f32 %v10153, %v10477
    %v10479 = vpop.f32.mrf.mxu0
    %10480 = vmatprep.mubr.bf16.mxu0 0
    %10481 = vmatmul.mubr.bf16.gmra.mxu0 %v9943
    %v10482 = vpop.f32.mrf.mxu0
    %v10483 = vadd.f32 %v10158, %v10482
    %v10484 = vpop.f32.mrf.mxu0
    %v10485 = vpop.f32.mrf.mxu0
    %v10486 = vadd.f32 %v10161, %v10485
    %v10487 = vpop.f32.mrf.mxu0
    %10488 = vmatprep.mubr.bf16.mxu0 0
    %10489 = vmatmul.mubr.bf16.gmra.mxu0 %v9945
    %v10490 = vpop.f32.mrf.mxu0
    %v10491 = vadd.f32 %v10166, %v10490
    %v10492 = vpop.f32.mrf.mxu0
    %v10493 = vpop.f32.mrf.mxu0
    %v10494 = vadd.f32 %v10169, %v10493
    %v10495 = vpop.f32.mrf.mxu0
    %10496 = vmatprep.mubr.bf16.mxu0 0
    %10497 = vmatmul.mubr.bf16.gmra.mxu0 %v9947
    %v10498 = vpop.f32.mrf.mxu0
    %v10499 = vadd.f32 %v10174, %v10498
    %v10500 = vpop.f32.mrf.mxu0
    %v10501 = vpop.f32.mrf.mxu0
    %v10502 = vadd.f32 %v10177, %v10501
    %v10503 = vpop.f32.mrf.mxu0
    %10504 = vmatprep.mubr.bf16.mxu0 0
    %10505 = vmatmul.mubr.bf16.gmra.mxu0 %v9949
    %v10506 = vpop.f32.mrf.mxu0
    %v10507 = vadd.f32 %v10182, %v10506
    %v10508 = vpop.f32.mrf.mxu0
    %v10509 = vpop.f32.mrf.mxu0
    %v10510 = vadd.f32 %v10185, %v10509
    %v10511 = vpop.f32.mrf.mxu0
    %10512 = vmatprep.mubr.bf16.mxu0 0
    %10513 = vmatmul.mubr.bf16.gmra.mxu0 %v9951
    %v10514 = vpop.f32.mrf.mxu0
    %v10515 = vadd.f32 %v10190, %v10514
    %v10516 = vpop.f32.mrf.mxu0
    %v10517 = vpop.f32.mrf.mxu0
    %v10518 = vadd.f32 %v10193, %v10517
    %v10519 = vpop.f32.mrf.mxu0
    %10520 = vmatprep.mubr.bf16.mxu0 0
    %10521 = vmatmul.mubr.bf16.gmra.mxu0 %v9953
    %v10522 = vpop.f32.mrf.mxu0
    %v10523 = vadd.f32 %v10198, %v10522
    %v10524 = vpop.f32.mrf.mxu0
    %v10525 = vpop.f32.mrf.mxu0
    %v10526 = vadd.f32 %v10201, %v10525
    %v10527 = vpop.f32.mrf.mxu0
    %10528 = vmatprep.mubr.bf16.mxu0 0
    %10529 = vmatmul.mubr.bf16.gmra.mxu0 %v9955
    %v10530 = vpop.f32.mrf.mxu0
    %v10531 = vadd.f32 %v10206, %v10530
    %v10532 = vpop.f32.mrf.mxu0
    %v10533 = vpop.f32.mrf.mxu0
    %v10534 = vadd.f32 %v10209, %v10533
    %v10535 = vpop.f32.mrf.mxu0
    %10536 = vmatprep.mubr.bf16.mxu0 0
    %10537 = vmatmul.mubr.bf16.gmra.mxu0 %v9957
    %v10538 = vpop.f32.mrf.mxu0
    %v10539 = vadd.f32 %v10214, %v10538
    %v10540 = vpop.f32.mrf.mxu0
    %v10541 = vpop.f32.mrf.mxu0
    %v10542 = vadd.f32 %v10217, %v10541
    %v10543 = vpop.f32.mrf.mxu0
    %10544 = vmatprep.mubr.bf16.mxu0 0
    %10545 = vmatmul.mubr.bf16.gmra.mxu0 %v9959
    %v10546 = vpop.f32.mrf.mxu0
    %v10547 = vadd.f32 %v10222, %v10546
    %v10548 = vpop.f32.mrf.mxu0
    %v10549 = vpop.f32.mrf.mxu0
    %v10550 = vadd.f32 %v10225, %v10549
    %v10551 = vpop.f32.mrf.mxu0
    %10552 = vmatprep.mubr.bf16.mxu0 0
    %10553 = vmatmul.mubr.bf16.gmra.mxu0 %v9961
    %v10554 = vpop.f32.mrf.mxu0
    %v10555 = vadd.f32 %v10230, %v10554
    %v10556 = vpop.f32.mrf.mxu0
    %v10557 = vpop.f32.mrf.mxu0
    %v10558 = vadd.f32 %v10233, %v10557
    %v10559 = vpop.f32.mrf.mxu0
    %10560 = vmatprep.mubr.bf16.mxu0 0
    %10561 = vmatmul.mubr.bf16.gmra.mxu0 %v9963
    %v10562 = vpop.f32.mrf.mxu0
    %v10563 = vadd.f32 %v10238, %v10562
    %v10564 = vpop.f32.mrf.mxu0
    %v10565 = vpop.f32.mrf.mxu0
    %v10566 = vadd.f32 %v10241, %v10565
    %v10567 = vpop.f32.mrf.mxu0
    %10568 = vmatprep.mubr.bf16.mxu0 0
    %10569 = vmatmul.mubr.bf16.gmra.mxu0 %v9965
    %v10570 = vpop.f32.mrf.mxu0
    %v10571 = vadd.f32 %v10246, %v10570
    %v10572 = vpop.f32.mrf.mxu0
    %v10573 = vpop.f32.mrf.mxu0
    %v10574 = vadd.f32 %v10249, %v10573
    %v10575 = vpop.f32.mrf.mxu0
    %10576 = vmatprep.mubr.bf16.mxu0 0
    %10577 = vmatmul.mubr.bf16.gmra.mxu0 %v9967
    %v10578 = vpop.f32.mrf.mxu0
    %v10579 = vadd.f32 %v10254, %v10578
    %v10580 = vpop.f32.mrf.mxu0
    %v10581 = vpop.f32.mrf.mxu0
    %v10582 = vadd.f32 %v10257, %v10581
    %v10583 = vpop.f32.mrf.mxu0
    %10584 = vdwg.mxu0
    %v10585 = vld [vmem:[%s0 + $0x234] sm:$0xf]
    %v10586 = vld [vmem:[%s0 + $0x238] sm:$0xf]
    %v10587 = vld [vmem:[%s0 + $0x23c] sm:$0xf]
    %v10588 = vld [vmem:[%s0 + $0x240] sm:$0xf]
    %v10589 = vld [vmem:[%s0 + $0x244] sm:$0xf]
    %v10590 = vld [vmem:[%s0 + $0x248] sm:$0xf]
    %v10591 = vld [vmem:[%s0 + $0x24c] sm:$0xf]
    %v10592 = vld [vmem:[%s0 + $0x250] sm:$0xf]
    %v10593 = vld [vmem:[%s0 + $0x254] sm:$0xf]
    %v10594 = vld [vmem:[%s0 + $0x258] sm:$0xf]
    %v10595 = vld [vmem:[%s0 + $0x25c] sm:$0xf]
    %v10596 = vld [vmem:[%s0 + $0x260] sm:$0xf]
    %v10609 = vunpack.c.l.b16 %v10585
    %v10610 = vunpack.c.l.b16 %v10586
    %v10611 = vunpack.c.l.b16 %v10587
    %v10612 = vunpack.c.l.b16 %v10588
    %v10613 = vunpack.c.l.b16 %v10589
    %v10614 = vunpack.c.l.b16 %v10590
    %v10615 = vunpack.c.l.b16 %v10591
    %v10616 = vunpack.c.l.b16 %v10592
    %v10617 = vunpack.c.l.b16 %v10593
    %v10618 = vunpack.c.l.b16 %v10594
    %v10619 = vunpack.c.l.b16 %v10595
    %v10620 = vunpack.c.l.b16 %v10596
    %v10621 = vpack.c.b16 %v10610, %v10609
    %v10622 = vpack.c.b16 %v10612, %v10611
    %v10623 = vpack.c.b16 %v10614, %v10613
    %v10624 = vpack.c.b16 %v10616, %v10615
    %v10625 = vpack.c.b16 %v10618, %v10617
    %v10626 = vpack.c.b16 %v10620, %v10619
    %10633 = vmatprep.subr.bf16.mxu0 0
    %10634 = vmatpush1.bf16.msra.mxu0 0
    %10635 = vmatprep.subr.bf16.mxu0 0
    %10636 = vmatpush1.bf16.msra.mxu0 0
    %10637 = vmatprep.subr.bf16.mxu0 0
    %10638 = vmatpush1.bf16.msra.mxu0 %v10626
    %10639 = vmatprep.subr.bf16.mxu0 0
    %10640 = vmatpush1.bf16.msra.mxu0 %v10625
    %10641 = vmatprep.subr.bf16.mxu0 0
    %10642 = vmatpush1.bf16.msra.mxu0 %v10624
    %10643 = vmatprep.subr.bf16.mxu0 0
    %10644 = vmatpush1.bf16.msra.mxu0 %v10623
    %10645 = vmatprep.subr.bf16.mxu0 0
    %10646 = vmatpush1.bf16.msra.mxu0 %v10622
    %10647 = vmatprep.subr.bf16.mxu0 0
    %10648 = vmatpush1.bf16.msra.mxu0 %v10621
    %10649 = vmatprep.subr.bf16.mxu0 0
    %10650 = vmatpush2.bf16.msra.mxu0 0
    %10651 = vmatprep.subr.bf16.mxu0 0
    %10652 = vmatpush2.bf16.msra.mxu0 0
    %10653 = vmatprep.subr.bf16.mxu0 0
    %10654 = vmatpush2.bf16.msra.mxu0 0
    %10655 = vmatprep.subr.bf16.mxu0 0
    %10656 = vmatpush2.bf16.msra.mxu0 0
    %10657 = vmatprep.subr.bf16.mxu0 0
    %10658 = vmatpush2.bf16.msra.mxu0 0
    %10659 = vmatprep.subr.bf16.mxu0 0
    %10660 = vmatpush2.bf16.msra.mxu0 0
    %10661 = vmatprep.subr.bf16.mxu0 0
    %10662 = vmatpush2.bf16.msra.mxu0 0
    %10663 = vmatprep.subr.bf16.mxu0 0
    %10664 = vmatpush2.bf16.msra.mxu0 0
    %10665 = vmatprep.mubr.bf16.mxu0 0
    %10666 = vmatmul.mubr.bf16.gmra.mxu0 %v9909
    %v10667 = vpop.f32.mrf.mxu0
    %v10668 = vadd.f32 0.0, %v10667
    %v10669 = vpop.f32.mrf.mxu0
    %v10670 = vpop.f32.mrf.mxu0
    %v10671 = vadd.f32 0.0, %v10670
    %v10672 = vpop.f32.mrf.mxu0
    %10673 = vmatprep.mubr.bf16.mxu0 0
    %10674 = vmatmul.mubr.bf16.gmra.mxu0 %v9911
    %v10675 = vpop.f32.mrf.mxu0
    %v10676 = vadd.f32 0.0, %v10675
    %v10677 = vpop.f32.mrf.mxu0
    %v10678 = vpop.f32.mrf.mxu0
    %v10679 = vadd.f32 0.0, %v10678
    %v10680 = vpop.f32.mrf.mxu0
    %10681 = vmatprep.mubr.bf16.mxu0 0
    %10682 = vmatmul.mubr.bf16.gmra.mxu0 %v9913
    %v10683 = vpop.f32.mrf.mxu0
    %v10684 = vadd.f32 0.0, %v10683
    %v10685 = vpop.f32.mrf.mxu0
    %v10686 = vpop.f32.mrf.mxu0
    %v10687 = vadd.f32 0.0, %v10686
    %v10688 = vpop.f32.mrf.mxu0
    %10689 = vmatprep.mubr.bf16.mxu0 0
    %10690 = vmatmul.mubr.bf16.gmra.mxu0 %v9915
    %v10691 = vpop.f32.mrf.mxu0
    %v10692 = vadd.f32 0.0, %v10691
    %v10693 = vpop.f32.mrf.mxu0
    %v10694 = vpop.f32.mrf.mxu0
    %v10695 = vadd.f32 0.0, %v10694
    %v10696 = vpop.f32.mrf.mxu0
    %10697 = vmatprep.mubr.bf16.mxu0 0
    %10698 = vmatmul.mubr.bf16.gmra.mxu0 %v9917
    %v10699 = vpop.f32.mrf.mxu0
    %v10700 = vadd.f32 0.0, %v10699
    %v10701 = vpop.f32.mrf.mxu0
    %v10702 = vpop.f32.mrf.mxu0
    %v10703 = vadd.f32 0.0, %v10702
    %v10704 = vpop.f32.mrf.mxu0
    %10705 = vmatprep.mubr.bf16.mxu0 0
    %10706 = vmatmul.mubr.bf16.gmra.mxu0 %v9919
    %v10707 = vpop.f32.mrf.mxu0
    %v10708 = vadd.f32 0.0, %v10707
    %v10709 = vpop.f32.mrf.mxu0
    %v10710 = vpop.f32.mrf.mxu0
    %v10711 = vadd.f32 0.0, %v10710
    %v10712 = vpop.f32.mrf.mxu0
    %10713 = vmatprep.mubr.bf16.mxu0 0
    %10714 = vmatmul.mubr.bf16.gmra.mxu0 %v9921
    %v10715 = vpop.f32.mrf.mxu0
    %v10716 = vadd.f32 0.0, %v10715
    %v10717 = vpop.f32.mrf.mxu0
    %v10718 = vpop.f32.mrf.mxu0
    %v10719 = vadd.f32 0.0, %v10718
    %v10720 = vpop.f32.mrf.mxu0
    %10721 = vmatprep.mubr.bf16.mxu0 0
    %10722 = vmatmul.mubr.bf16.gmra.mxu0 %v9923
    %v10723 = vpop.f32.mrf.mxu0
    %v10724 = vadd.f32 0.0, %v10723
    %v10725 = vpop.f32.mrf.mxu0
    %v10726 = vpop.f32.mrf.mxu0
    %v10727 = vadd.f32 0.0, %v10726
    %v10728 = vpop.f32.mrf.mxu0
    %10729 = vmatprep.mubr.bf16.mxu0 0
    %10730 = vmatmul.mubr.bf16.gmra.mxu0 %v9925
    %v10731 = vpop.f32.mrf.mxu0
    %v10732 = vadd.f32 0.0, %v10731
    %v10733 = vpop.f32.mrf.mxu0
    %v10734 = vpop.f32.mrf.mxu0
    %v10735 = vadd.f32 0.0, %v10734
    %v10736 = vpop.f32.mrf.mxu0
    %10737 = vmatprep.mubr.bf16.mxu0 0
    %10738 = vmatmul.mubr.bf16.gmra.mxu0 %v9927
    %v10739 = vpop.f32.mrf.mxu0
    %v10740 = vadd.f32 0.0, %v10739
    %v10741 = vpop.f32.mrf.mxu0
    %v10742 = vpop.f32.mrf.mxu0
    %v10743 = vadd.f32 0.0, %v10742
    %v10744 = vpop.f32.mrf.mxu0
    %10745 = vmatprep.mubr.bf16.mxu0 0
    %10746 = vmatmul.mubr.bf16.gmra.mxu0 %v9929
    %v10747 = vpop.f32.mrf.mxu0
    %v10748 = vadd.f32 0.0, %v10747
    %v10749 = vpop.f32.mrf.mxu0
    %v10750 = vpop.f32.mrf.mxu0
    %v10751 = vadd.f32 0.0, %v10750
    %v10752 = vpop.f32.mrf.mxu0
    %10753 = vmatprep.mubr.bf16.mxu0 0
    %10754 = vmatmul.mubr.bf16.gmra.mxu0 %v9931
    %v10755 = vpop.f32.mrf.mxu0
    %v10756 = vadd.f32 0.0, %v10755
    %v10757 = vpop.f32.mrf.mxu0
    %v10758 = vpop.f32.mrf.mxu0
    %v10759 = vadd.f32 0.0, %v10758
    %v10760 = vpop.f32.mrf.mxu0
    %10761 = vmatprep.mubr.bf16.mxu0 0
    %10762 = vmatmul.mubr.bf16.gmra.mxu0 %v9933
    %v10763 = vpop.f32.mrf.mxu0
    %v10764 = vadd.f32 0.0, %v10763
    %v10765 = vpop.f32.mrf.mxu0
    %v10766 = vpop.f32.mrf.mxu0
    %v10767 = vadd.f32 0.0, %v10766
    %v10768 = vpop.f32.mrf.mxu0
    %10769 = vmatprep.mubr.bf16.mxu0 0
    %10770 = vmatmul.mubr.bf16.gmra.mxu0 %v9935
    %v10771 = vpop.f32.mrf.mxu0
    %v10772 = vadd.f32 0.0, %v10771
    %v10773 = vpop.f32.mrf.mxu0
    %v10774 = vpop.f32.mrf.mxu0
    %v10775 = vadd.f32 0.0, %v10774
    %v10776 = vpop.f32.mrf.mxu0
    %10777 = vmatprep.mubr.bf16.mxu0 0
    %10778 = vmatmul.mubr.bf16.gmra.mxu0 %v9937
    %v10779 = vpop.f32.mrf.mxu0
    %v10780 = vadd.f32 0.0, %v10779
    %v10781 = vpop.f32.mrf.mxu0
    %v10782 = vpop.f32.mrf.mxu0
    %v10783 = vadd.f32 0.0, %v10782
    %v10784 = vpop.f32.mrf.mxu0
    %10785 = vmatprep.mubr.bf16.mxu0 0
    %10786 = vmatmul.mubr.bf16.gmra.mxu0 %v9907
    %v10787 = vpop.f32.mrf.mxu0
    %v10788 = vadd.f32 0.0, %v10787
    %v10789 = vpop.f32.mrf.mxu0
    %v10790 = vpop.f32.mrf.mxu0
    %v10791 = vadd.f32 0.0, %v10790
    %v10792 = vpop.f32.mrf.mxu0
    %10793 = vmatprep.mubr.bf16.mxu0 0
    %10794 = vmatmul.mubr.bf16.gmra.mxu0 %v9941
    %v10795 = vpop.f32.mrf.mxu0
    %v10796 = vadd.f32 0.0, %v10795
    %v10797 = vpop.f32.mrf.mxu0
    %v10798 = vpop.f32.mrf.mxu0
    %v10799 = vadd.f32 0.0, %v10798
    %v10800 = vpop.f32.mrf.mxu0
    %10801 = vmatprep.mubr.bf16.mxu0 0
    %10802 = vmatmul.mubr.bf16.gmra.mxu0 %v9943
    %v10803 = vpop.f32.mrf.mxu0
    %v10804 = vadd.f32 0.0, %v10803
    %v10805 = vpop.f32.mrf.mxu0
    %v10806 = vpop.f32.mrf.mxu0
    %v10807 = vadd.f32 0.0, %v10806
    %v10808 = vpop.f32.mrf.mxu0
    %10809 = vmatprep.mubr.bf16.mxu0 0
    %10810 = vmatmul.mubr.bf16.gmra.mxu0 %v9945
    %v10811 = vpop.f32.mrf.mxu0
    %v10812 = vadd.f32 0.0, %v10811
    %v10813 = vpop.f32.mrf.mxu0
    %v10814 = vpop.f32.mrf.mxu0
    %v10815 = vadd.f32 0.0, %v10814
    %v10816 = vpop.f32.mrf.mxu0
    %10817 = vmatprep.mubr.bf16.mxu0 0
    %10818 = vmatmul.mubr.bf16.gmra.mxu0 %v9947
    %v10819 = vpop.f32.mrf.mxu0
    %v10820 = vadd.f32 0.0, %v10819
    %v10821 = vpop.f32.mrf.mxu0
    %v10822 = vpop.f32.mrf.mxu0
    %v10823 = vadd.f32 0.0, %v10822
    %v10824 = vpop.f32.mrf.mxu0
    %10825 = vmatprep.mubr.bf16.mxu0 0
    %10826 = vmatmul.mubr.bf16.gmra.mxu0 %v9949
    %v10827 = vpop.f32.mrf.mxu0
    %v10828 = vadd.f32 0.0, %v10827
    %v10829 = vpop.f32.mrf.mxu0
    %v10830 = vpop.f32.mrf.mxu0
    %v10831 = vadd.f32 0.0, %v10830
    %v10832 = vpop.f32.mrf.mxu0
    %10833 = vmatprep.mubr.bf16.mxu0 0
    %10834 = vmatmul.mubr.bf16.gmra.mxu0 %v9951
    %v10835 = vpop.f32.mrf.mxu0
    %v10836 = vadd.f32 0.0, %v10835
    %v10837 = vpop.f32.mrf.mxu0
    %v10838 = vpop.f32.mrf.mxu0
    %v10839 = vadd.f32 0.0, %v10838
    %v10840 = vpop.f32.mrf.mxu0
    %10841 = vmatprep.mubr.bf16.mxu0 0
    %10842 = vmatmul.mubr.bf16.gmra.mxu0 %v9953
    %v10843 = vpop.f32.mrf.mxu0
    %v10844 = vadd.f32 0.0, %v10843
    %v10845 = vpop.f32.mrf.mxu0
    %v10846 = vpop.f32.mrf.mxu0
    %v10847 = vadd.f32 0.0, %v10846
    %v10848 = vpop.f32.mrf.mxu0
    %10849 = vmatprep.mubr.bf16.mxu0 0
    %10850 = vmatmul.mubr.bf16.gmra.mxu0 %v9955
    %v10851 = vpop.f32.mrf.mxu0
    %v10852 = vadd.f32 0.0, %v10851
    %v10853 = vpop.f32.mrf.mxu0
    %v10854 = vpop.f32.mrf.mxu0
    %v10855 = vadd.f32 0.0, %v10854
    %v10856 = vpop.f32.mrf.mxu0
    %10857 = vmatprep.mubr.bf16.mxu0 0
    %10858 = vmatmul.mubr.bf16.gmra.mxu0 %v9957
    %v10859 = vpop.f32.mrf.mxu0
    %v10860 = vadd.f32 0.0, %v10859
    %v10861 = vpop.f32.mrf.mxu0
    %v10862 = vpop.f32.mrf.mxu0
    %v10863 = vadd.f32 0.0, %v10862
    %v10864 = vpop.f32.mrf.mxu0
    %10865 = vmatprep.mubr.bf16.mxu0 0
    %10866 = vmatmul.mubr.bf16.gmra.mxu0 %v9959
    %v10867 = vpop.f32.mrf.mxu0
    %v10868 = vadd.f32 0.0, %v10867
    %v10869 = vpop.f32.mrf.mxu0
    %v10870 = vpop.f32.mrf.mxu0
    %v10871 = vadd.f32 0.0, %v10870
    %v10872 = vpop.f32.mrf.mxu0
    %10873 = vmatprep.mubr.bf16.mxu0 0
    %10874 = vmatmul.mubr.bf16.gmra.mxu0 %v9961
    %v10875 = vpop.f32.mrf.mxu0
    %v10876 = vadd.f32 0.0, %v10875
    %v10877 = vpop.f32.mrf.mxu0
    %v10878 = vpop.f32.mrf.mxu0
    %v10879 = vadd.f32 0.0, %v10878
    %v10880 = vpop.f32.mrf.mxu0
    %10881 = vmatprep.mubr.bf16.mxu0 0
    %10882 = vmatmul.mubr.bf16.gmra.mxu0 %v9963
    %v10883 = vpop.f32.mrf.mxu0
    %v10884 = vadd.f32 0.0, %v10883
    %v10885 = vpop.f32.mrf.mxu0
    %v10886 = vpop.f32.mrf.mxu0
    %v10887 = vadd.f32 0.0, %v10886
    %v10888 = vpop.f32.mrf.mxu0
    %10889 = vmatprep.mubr.bf16.mxu0 0
    %10890 = vmatmul.mubr.bf16.gmra.mxu0 %v9965
    %v10891 = vpop.f32.mrf.mxu0
    %v10892 = vadd.f32 0.0, %v10891
    %v10893 = vpop.f32.mrf.mxu0
    %v10894 = vpop.f32.mrf.mxu0
    %v10895 = vadd.f32 0.0, %v10894
    %v10896 = vpop.f32.mrf.mxu0
    %10897 = vmatprep.mubr.bf16.mxu0 0
    %10898 = vmatmul.mubr.bf16.gmra.mxu0 %v9967
    %v10899 = vpop.f32.mrf.mxu0
    %v10900 = vadd.f32 0.0, %v10899
    %v10901 = vpop.f32.mrf.mxu0
    %v10902 = vpop.f32.mrf.mxu0
    %v10903 = vadd.f32 0.0, %v10902
    %v10904 = vpop.f32.mrf.mxu0
    %10905 = vmatprep.mubr.bf16.mxu0 0
    %10906 = vmatmul.mubr.bf16.gmra.mxu0 %v9969
    %v10907 = vpop.f32.mrf.mxu0
    %v10908 = vadd.f32 0.0, %v10907
    %v10909 = vpop.f32.mrf.mxu0
    %v10910 = vpop.f32.mrf.mxu0
    %v10911 = vadd.f32 0.0, %v10910
    %v10912 = vpop.f32.mrf.mxu0
    %10913 = vmatprep.mubr.bf16.mxu0 0
    %10914 = vmatmul.mubr.bf16.gmra.mxu0 %v9939
    %v10915 = vpop.f32.mrf.mxu0
    %v10916 = vadd.f32 0.0, %v10915
    %v10917 = vpop.f32.mrf.mxu0
    %v10918 = vpop.f32.mrf.mxu0
    %v10919 = vadd.f32 0.0, %v10918
    %v10920 = vpop.f32.mrf.mxu0
    %10921 = vdwg.mxu0
    %v10922 = vadd.f32 %v10331, %v10668
    %v10923 = vadd.f32 %v10334, %v10671
    %v10924 = vadd.f32 %v10339, %v10676
    %v10925 = vadd.f32 %v10342, %v10679
    %v10926 = vadd.f32 %v10347, %v10684
    %v10927 = vadd.f32 %v10350, %v10687
    %v10928 = vadd.f32 %v10355, %v10692
    %v10929 = vadd.f32 %v10358, %v10695
    %v10930 = vadd.f32 %v10363, %v10700
    %v10931 = vadd.f32 %v10366, %v10703
    %v10932 = vadd.f32 %v10371, %v10708
    %v10933 = vadd.f32 %v10374, %v10711
    %v10934 = vadd.f32 %v10379, %v10716
    %v10935 = vadd.f32 %v10382, %v10719
    %v10936 = vadd.f32 %v10387, %v10724
    %v10937 = vadd.f32 %v10390, %v10727
    %v10938 = vadd.f32 %v10395, %v10732
    %v10939 = vadd.f32 %v10398, %v10735
    %v10940 = vadd.f32 %v10403, %v10740
    %v10941 = vadd.f32 %v10406, %v10743
    %v10942 = vadd.f32 %v10411, %v10748
    %v10943 = vadd.f32 %v10414, %v10751
    %v10944 = vadd.f32 %v10419, %v10756
    %v10945 = vadd.f32 %v10422, %v10759
    %v10946 = vadd.f32 %v10427, %v10764
    %v10947 = vadd.f32 %v10430, %v10767
    %v10948 = vadd.f32 %v10435, %v10772
    %v10949 = vadd.f32 %v10438, %v10775
    %v10950 = vadd.f32 %v10443, %v10780
    %v10951 = vadd.f32 %v10446, %v10783
    %v10952 = vadd.f32 %v10451, %v10788
    %v10953 = vadd.f32 %v10454, %v10791
    %v10954 = vadd.f32 %v10459, %v10796
    %v10955 = vadd.f32 %v10462, %v10799
    %v10956 = vadd.f32 %v10467, %v10804
    %v10957 = vadd.f32 %v10470, %v10807
    %v10958 = vadd.f32 %v10475, %v10812
    %v10959 = vadd.f32 %v10478, %v10815
    %v10960 = vadd.f32 %v10483, %v10820
    %v10961 = vadd.f32 %v10486, %v10823
    %v10962 = vadd.f32 %v10491, %v10828
    %v10963 = vadd.f32 %v10494, %v10831
    %v10964 = vadd.f32 %v10499, %v10836
    %v10965 = vadd.f32 %v10502, %v10839
    %v10966 = vadd.f32 %v10507, %v10844
    %v10967 = vadd.f32 %v10510, %v10847
    %v10968 = vadd.f32 %v10515, %v10852
    %v10969 = vadd.f32 %v10518, %v10855
    %v10970 = vadd.f32 %v10523, %v10860
    %v10971 = vadd.f32 %v10526, %v10863
    %v10972 = vadd.f32 %v10531, %v10868
    %v10973 = vadd.f32 %v10534, %v10871
    %v10974 = vadd.f32 %v10539, %v10876
    %v10975 = vadd.f32 %v10542, %v10879
    %v10976 = vadd.f32 %v10547, %v10884
    %v10977 = vadd.f32 %v10550, %v10887
    %v10978 = vadd.f32 %v10555, %v10892
    %v10979 = vadd.f32 %v10558, %v10895
    %v10980 = vadd.f32 %v10563, %v10900
    %v10981 = vadd.f32 %v10566, %v10903
    %v10982 = vadd.f32 %v10571, %v10908
    %v10983 = vadd.f32 %v10574, %v10911
    %v10984 = vadd.f32 %v10579, %v10916
    %v10985 = vadd.f32 %v10582, %v10919
    %v10986 = vld [vmem:[%s1 + $0x4] sm:$0x1]
    %v10987 = vlaneseq
    %v10988 = vshrl.u32 %v10987, 7
    %v10989 = vsub.s32 0, %v10988
    %v10990 = vrot.slane %v10986, %v10989
    %v10991 = vadd.f32 %v10922, %v10990
    %v10992 = vadd.f32 %v10923, %v10990
    %v10993 = vadd.f32 %v10924, %v10990
    %v10994 = vadd.f32 %v10925, %v10990
    %v10995 = vadd.f32 %v10926, %v10990
    %v10996 = vadd.f32 %v10927, %v10990
    %v10997 = vadd.f32 %v10928, %v10990
    %v10998 = vadd.f32 %v10929, %v10990
    %v10999 = vadd.f32 %v10930, %v10990
    %v11000 = vadd.f32 %v10931, %v10990
    %v11001 = vadd.f32 %v10932, %v10990
    %v11002 = vadd.f32 %v10933, %v10990
    %v11003 = vadd.f32 %v10934, %v10990
    %v11004 = vadd.f32 %v10935, %v10990
    %v11005 = vadd.f32 %v10936, %v10990
    %v11006 = vadd.f32 %v10937, %v10990
    %v11007 = vadd.f32 %v10938, %v10990
    %v11008 = vadd.f32 %v10939, %v10990
    %v11009 = vadd.f32 %v10940, %v10990
    %v11010 = vadd.f32 %v10941, %v10990
    %v11011 = vadd.f32 %v10942, %v10990
    %v11012 = vadd.f32 %v10943, %v10990
    %v11013 = vadd.f32 %v10944, %v10990
    %v11014 = vadd.f32 %v10945, %v10990
    %v11015 = vadd.f32 %v10946, %v10990
    %v11016 = vadd.f32 %v10947, %v10990
    %v11017 = vadd.f32 %v10948, %v10990
    %v11018 = vadd.f32 %v10949, %v10990
    %v11019 = vadd.f32 %v10950, %v10990
    %v11020 = vadd.f32 %v10951, %v10990
    %v11021 = vadd.f32 %v10952, %v10990
    %v11022 = vadd.f32 %v10953, %v10990
    %v11023 = vadd.f32 %v10954, %v10990
    %v11024 = vadd.f32 %v10955, %v10990
    %v11025 = vadd.f32 %v10956, %v10990
    %v11026 = vadd.f32 %v10957, %v10990
    %v11027 = vadd.f32 %v10958, %v10990
    %v11028 = vadd.f32 %v10959, %v10990
    %v11029 = vadd.f32 %v10960, %v10990
    %v11030 = vadd.f32 %v10961, %v10990
    %v11031 = vadd.f32 %v10962, %v10990
    %v11032 = vadd.f32 %v10963, %v10990
    %v11033 = vadd.f32 %v10964, %v10990
    %v11034 = vadd.f32 %v10965, %v10990
    %v11035 = vadd.f32 %v10966, %v10990
    %v11036 = vadd.f32 %v10967, %v10990
    %v11037 = vadd.f32 %v10968, %v10990
    %v11038 = vadd.f32 %v10969, %v10990
    %v11039 = vadd.f32 %v10970, %v10990
    %v11040 = vadd.f32 %v10971, %v10990
    %v11041 = vadd.f32 %v10972, %v10990
    %v11042 = vadd.f32 %v10973, %v10990
    %v11043 = vadd.f32 %v10974, %v10990
    %v11044 = vadd.f32 %v10975, %v10990
    %v11045 = vadd.f32 %v10976, %v10990
    %v11046 = vadd.f32 %v10977, %v10990
    %v11047 = vadd.f32 %v10978, %v10990
    %v11048 = vadd.f32 %v10979, %v10990
    %v11049 = vadd.f32 %v10980, %v10990
    %v11050 = vadd.f32 %v10981, %v10990
    %v11051 = vadd.f32 %v10982, %v10990
    %v11052 = vadd.f32 %v10983, %v10990
    %v11053 = vadd.f32 %v10984, %v10990
    %v11054 = vadd.f32 %v10985, %v10990
    %v11055 = vadd.f32 %v10991, %v6783
    %v11056 = vadd.f32 %v10992, %v6784
    %v11057 = vadd.f32 %v10993, %v6785
    %v11058 = vadd.f32 %v10994, %v6786
    %v11059 = vadd.f32 %v10995, %v6787
    %v11060 = vadd.f32 %v10996, %v6788
    %v11061 = vadd.f32 %v10997, %v6789
    %v11062 = vadd.f32 %v10998, %v6790
    %v11063 = vadd.f32 %v10999, %v6791
    %v11064 = vadd.f32 %v11000, %v6792
    %v11065 = vadd.f32 %v11001, %v6793
    %v11066 = vadd.f32 %v11002, %v6794
    %v11067 = vadd.f32 %v11003, %v6795
    %v11068 = vadd.f32 %v11004, %v6796
    %v11069 = vadd.f32 %v11005, %v6797
    %v11070 = vadd.f32 %v11006, %v6798
    %v11071 = vadd.f32 %v11007, %v6799
    %v11072 = vadd.f32 %v11008, %v6800
    %v11073 = vadd.f32 %v11009, %v6801
    %v11074 = vadd.f32 %v11010, %v6802
    %v11075 = vadd.f32 %v11011, %v6803
    %v11076 = vadd.f32 %v11012, %v6804
    %v11077 = vadd.f32 %v11013, %v6805
    %v11078 = vadd.f32 %v11014, %v6806
    %v11079 = vadd.f32 %v11015, %v6807
    %v11080 = vadd.f32 %v11016, %v6808
    %v11081 = vadd.f32 %v11017, %v6809
    %v11082 = vadd.f32 %v11018, %v6810
    %v11083 = vadd.f32 %v11019, %v6811
    %v11084 = vadd.f32 %v11020, %v6812
    %v11085 = vadd.f32 %v11021, %v6813
    %v11086 = vadd.f32 %v11022, %v6814
    %v11087 = vadd.f32 %v11023, %v6815
    %v11088 = vadd.f32 %v11024, %v6816
    %v11089 = vadd.f32 %v11025, %v6817
    %v11090 = vadd.f32 %v11026, %v6818
    %v11091 = vadd.f32 %v11027, %v6819
    %v11092 = vadd.f32 %v11028, %v6820
    %v11093 = vadd.f32 %v11029, %v6821
    %v11094 = vadd.f32 %v11030, %v6822
    %v11095 = vadd.f32 %v11031, %v6823
    %v11096 = vadd.f32 %v11032, %v6824
    %v11097 = vadd.f32 %v11033, %v6825
    %v11098 = vadd.f32 %v11034, %v6826
    %v11099 = vadd.f32 %v11035, %v6827
    %v11100 = vadd.f32 %v11036, %v6828
    %v11101 = vadd.f32 %v11037, %v6829
    %v11102 = vadd.f32 %v11038, %v6830
    %v11103 = vadd.f32 %v11039, %v6831
    %v11104 = vadd.f32 %v11040, %v6832
    %v11105 = vadd.f32 %v11041, %v6833
    %v11106 = vadd.f32 %v11042, %v6834
    %v11107 = vadd.f32 %v11043, %v6835
    %v11108 = vadd.f32 %v11044, %v6836
    %v11109 = vadd.f32 %v11045, %v6837
    %v11110 = vadd.f32 %v11046, %v6838
    %v11111 = vadd.f32 %v11047, %v6839
    %v11112 = vadd.f32 %v11048, %v6840
    %v11113 = vadd.f32 %v11049, %v6841
    %v11114 = vadd.f32 %v11050, %v6842
    %v11115 = vadd.f32 %v11051, %v6843
    %v11116 = vadd.f32 %v11052, %v6844
    %v11117 = vadd.f32 %v11053, %v6845
    %v11118 = vadd.f32 %v11054, %v6846
    %v11119 = vmax.f32 %v11055, 0.0
    %v11120 = vmax.f32 %v11056, 0.0
    %v11121 = vmax.f32 %v11057, 0.0
    %v11122 = vmax.f32 %v11058, 0.0
    %v11123 = vmax.f32 %v11059, 0.0
    %v11124 = vmax.f32 %v11060, 0.0
    %v11125 = vmax.f32 %v11061, 0.0
    %v11126 = vmax.f32 %v11062, 0.0
    %v11127 = vmax.f32 %v11063, 0.0
    %v11128 = vmax.f32 %v11064, 0.0
    %v11129 = vmax.f32 %v11065, 0.0
    %v11130 = vmax.f32 %v11066, 0.0
    %v11131 = vmax.f32 %v11067, 0.0
    %v11132 = vmax.f32 %v11068, 0.0
    %v11133 = vmax.f32 %v11069, 0.0
    %v11134 = vmax.f32 %v11070, 0.0
    %v11135 = vmax.f32 %v11071, 0.0
    %v11136 = vmax.f32 %v11072, 0.0
    %v11137 = vmax.f32 %v11073, 0.0
    %v11138 = vmax.f32 %v11074, 0.0
    %v11139 = vmax.f32 %v11075, 0.0
    %v11140 = vmax.f32 %v11076, 0.0
    %v11141 = vmax.f32 %v11077, 0.0
    %v11142 = vmax.f32 %v11078, 0.0
    %v11143 = vmax.f32 %v11079, 0.0
    %v11144 = vmax.f32 %v11080, 0.0
    %v11145 = vmax.f32 %v11081, 0.0
    %v11146 = vmax.f32 %v11082, 0.0
    %v11147 = vmax.f32 %v11083, 0.0
    %v11148 = vmax.f32 %v11084, 0.0
    %v11149 = vmax.f32 %v11085, 0.0
    %v11150 = vmax.f32 %v11086, 0.0
    %v11151 = vmax.f32 %v11087, 0.0
    %v11152 = vmax.f32 %v11088, 0.0
    %v11153 = vmax.f32 %v11089, 0.0
    %v11154 = vmax.f32 %v11090, 0.0
    %v11155 = vmax.f32 %v11091, 0.0
    %v11156 = vmax.f32 %v11092, 0.0
    %v11157 = vmax.f32 %v11093, 0.0
    %v11158 = vmax.f32 %v11094, 0.0
    %v11159 = vmax.f32 %v11095, 0.0
    %v11160 = vmax.f32 %v11096, 0.0
    %v11161 = vmax.f32 %v11097, 0.0
    %v11162 = vmax.f32 %v11098, 0.0
    %v11163 = vmax.f32 %v11099, 0.0
    %v11164 = vmax.f32 %v11100, 0.0
    %v11165 = vmax.f32 %v11101, 0.0
    %v11166 = vmax.f32 %v11102, 0.0
    %v11167 = vmax.f32 %v11103, 0.0
    %v11168 = vmax.f32 %v11104, 0.0
    %v11169 = vmax.f32 %v11105, 0.0
    %v11170 = vmax.f32 %v11106, 0.0
    %v11171 = vmax.f32 %v11107, 0.0
    %v11172 = vmax.f32 %v11108, 0.0
    %v11173 = vmax.f32 %v11109, 0.0
    %v11174 = vmax.f32 %v11110, 0.0
    %v11175 = vmax.f32 %v11111, 0.0
    %v11176 = vmax.f32 %v11112, 0.0
    %v11177 = vmax.f32 %v11113, 0.0
    %v11178 = vmax.f32 %v11114, 0.0
    %v11179 = vmax.f32 %v11115, 0.0
    %v11180 = vmax.f32 %v11116, 0.0
    %v11181 = vmax.f32 %v11117, 0.0
    %v11182 = vmax.f32 %v11118, 0.0
    %v11183 = vpack.c.bf16 %v11120, %v11119
    %v11184 = vpack.c.bf16 %v11122, %v11121
    %v11185 = vpack.c.bf16 %v11124, %v11123
    %v11186 = vpack.c.bf16 %v11126, %v11125
    %v11187 = vpack.c.bf16 %v11128, %v11127
    %v11188 = vpack.c.bf16 %v11130, %v11129
    %v11189 = vpack.c.bf16 %v11132, %v11131
    %v11190 = vpack.c.bf16 %v11134, %v11133
    %v11191 = vpack.c.bf16 %v11136, %v11135
    %v11192 = vpack.c.bf16 %v11138, %v11137
    %v11193 = vpack.c.bf16 %v11140, %v11139
    %v11194 = vpack.c.bf16 %v11142, %v11141
    %v11195 = vpack.c.bf16 %v11144, %v11143
    %v11196 = vpack.c.bf16 %v11146, %v11145
    %v11197 = vpack.c.bf16 %v11148, %v11147
    %v11198 = vpack.c.bf16 %v11150, %v11149
    %v11199 = vpack.c.bf16 %v11152, %v11151
    %v11200 = vpack.c.bf16 %v11154, %v11153
    %v11201 = vpack.c.bf16 %v11156, %v11155
    %v11202 = vpack.c.bf16 %v11158, %v11157
    %v11203 = vpack.c.bf16 %v11160, %v11159
    %v11204 = vpack.c.bf16 %v11162, %v11161
    %v11205 = vpack.c.bf16 %v11164, %v11163
    %v11206 = vpack.c.bf16 %v11166, %v11165
    %v11207 = vpack.c.bf16 %v11168, %v11167
    %v11208 = vpack.c.bf16 %v11170, %v11169
    %v11209 = vpack.c.bf16 %v11172, %v11171
    %v11210 = vpack.c.bf16 %v11174, %v11173
    %v11211 = vpack.c.bf16 %v11176, %v11175
    %v11212 = vpack.c.bf16 %v11178, %v11177
    %v11213 = vpack.c.bf16 %v11180, %v11179
    %v11214 = vpack.c.bf16 %v11182, %v11181
    %v11216 = vshrl.u32 %v11183, 16
    %v11218 = vrot.slane %v11216, 7
    %v11220 = vshrl.u32 %v11184, 16
    %v11222 = vrot.slane %v11220, 7
    %v11224 = vshrl.u32 %v11185, 16
    %v11226 = vrot.slane %v11224, 7
    %v11228 = vshrl.u32 %v11186, 16
    %v11230 = vrot.slane %v11228, 7
    %v11232 = vshrl.u32 %v11187, 16
    %v11234 = vrot.slane %v11232, 7
    %v11236 = vshrl.u32 %v11188, 16
    %v11238 = vrot.slane %v11236, 7
    %v11240 = vshrl.u32 %v11189, 16
    %v11242 = vrot.slane %v11240, 7
    %v11244 = vshrl.u32 %v11190, 16
    %v11246 = vrot.slane %v11244, 7
    %v11248 = vshrl.u32 %v11191, 16
    %v11250 = vrot.slane %v11248, 7
    %v11252 = vshrl.u32 %v11192, 16
    %v11254 = vrot.slane %v11252, 7
    %v11256 = vshrl.u32 %v11193, 16
    %v11258 = vrot.slane %v11256, 7
    %v11260 = vshrl.u32 %v11194, 16
    %v11262 = vrot.slane %v11260, 7
    %v11264 = vshrl.u32 %v11195, 16
    %v11266 = vrot.slane %v11264, 7
    %v11268 = vshrl.u32 %v11196, 16
    %v11270 = vrot.slane %v11268, 7
    %v11272 = vshrl.u32 %v11197, 16
    %v11274 = vrot.slane %v11272, 7
    %v11276 = vshrl.u32 %v11198, 16
    %v11278 = vrot.slane %v11276, 7
    %v11280 = vshrl.u32 %v11199, 16
    %v11282 = vrot.slane %v11280, 7
    %v11284 = vshrl.u32 %v11200, 16
    %v11286 = vrot.slane %v11284, 7
    %v11288 = vshrl.u32 %v11201, 16
    %v11290 = vrot.slane %v11288, 7
    %v11292 = vshrl.u32 %v11202, 16
    %v11294 = vrot.slane %v11292, 7
    %v11296 = vshrl.u32 %v11203, 16
    %v11298 = vrot.slane %v11296, 7
    %v11300 = vshrl.u32 %v11204, 16
    %v11302 = vrot.slane %v11300, 7
    %v11304 = vshrl.u32 %v11205, 16
    %v11306 = vrot.slane %v11304, 7
    %v11308 = vshrl.u32 %v11206, 16
    %v11310 = vrot.slane %v11308, 7
    %v11312 = vshrl.u32 %v11207, 16
    %v11314 = vrot.slane %v11312, 7
    %v11316 = vshrl.u32 %v11208, 16
    %v11318 = vrot.slane %v11316, 7
    %v11320 = vshrl.u32 %v11209, 16
    %v11322 = vrot.slane %v11320, 7
    %v11324 = vshrl.u32 %v11210, 16
    %v11326 = vrot.slane %v11324, 7
    %v11328 = vshrl.u32 %v11211, 16
    %v11330 = vrot.slane %v11328, 7
    %v11332 = vshrl.u32 %v11212, 16
    %v11334 = vrot.slane %v11332, 7
    %v11336 = vshrl.u32 %v11213, 16
    %v11338 = vrot.slane %v11336, 7
    %v11340 = vshrl.u32 %v11214, 16
    %v11342 = vrot.slane %v11340, 7
    %v11375 = vshll.u32 %v11183, 16
    %v11377 = vor.u32 %v11218, %v11375
    %v11378 = vshll.u32 %v11184, 16
    %v11380 = vor.u32 %v11222, %v11378
    %v11381 = vshll.u32 %v11185, 16
    %v11383 = vor.u32 %v11226, %v11381
    %v11384 = vshll.u32 %v11186, 16
    %v11386 = vor.u32 %v11230, %v11384
    %v11387 = vshll.u32 %v11187, 16
    %v11389 = vor.u32 %v11234, %v11387
    %v11390 = vshll.u32 %v11188, 16
    %v11392 = vor.u32 %v11238, %v11390
    %v11393 = vshll.u32 %v11189, 16
    %v11395 = vor.u32 %v11242, %v11393
    %v11396 = vshll.u32 %v11190, 16
    %v11398 = vor.u32 %v11246, %v11396
    %v11399 = vshll.u32 %v11191, 16
    %v11401 = vor.u32 %v11250, %v11399
    %v11402 = vshll.u32 %v11192, 16
    %v11404 = vor.u32 %v11254, %v11402
    %v11405 = vshll.u32 %v11193, 16
    %v11407 = vor.u32 %v11258, %v11405
    %v11408 = vshll.u32 %v11194, 16
    %v11410 = vor.u32 %v11262, %v11408
    %v11411 = vshll.u32 %v11195, 16
    %v11413 = vor.u32 %v11266, %v11411
    %v11414 = vshll.u32 %v11196, 16
    %v11416 = vor.u32 %v11270, %v11414
    %v11417 = vshll.u32 %v11197, 16
    %v11419 = vor.u32 %v11274, %v11417
    %v11420 = vshll.u32 %v11198, 16
    %v11422 = vor.u32 %v11278, %v11420
    %v11423 = vshll.u32 %v11199, 16
    %v11425 = vor.u32 %v11282, %v11423
    %v11426 = vshll.u32 %v11200, 16
    %v11428 = vor.u32 %v11286, %v11426
    %v11429 = vshll.u32 %v11201, 16
    %v11431 = vor.u32 %v11290, %v11429
    %v11432 = vshll.u32 %v11202, 16
    %v11434 = vor.u32 %v11294, %v11432
    %v11435 = vshll.u32 %v11203, 16
    %v11437 = vor.u32 %v11298, %v11435
    %v11438 = vshll.u32 %v11204, 16
    %v11440 = vor.u32 %v11302, %v11438
    %v11441 = vshll.u32 %v11205, 16
    %v11443 = vor.u32 %v11306, %v11441
    %v11444 = vshll.u32 %v11206, 16
    %v11446 = vor.u32 %v11310, %v11444
    %v11447 = vshll.u32 %v11207, 16
    %v11449 = vor.u32 %v11314, %v11447
    %v11450 = vshll.u32 %v11208, 16
    %v11452 = vor.u32 %v11318, %v11450
    %v11453 = vshll.u32 %v11209, 16
    %v11455 = vor.u32 %v11322, %v11453
    %v11456 = vshll.u32 %v11210, 16
    %v11458 = vor.u32 %v11326, %v11456
    %v11459 = vshll.u32 %v11211, 16
    %v11461 = vor.u32 %v11330, %v11459
    %v11462 = vshll.u32 %v11212, 16
    %v11464 = vor.u32 %v11334, %v11462
    %v11465 = vshll.u32 %v11213, 16
    %v11467 = vor.u32 %v11338, %v11465
    %v11468 = vshll.u32 %v11214, 16
    %v11470 = vor.u32 %v11342, %v11468
    %v11503 = vsel %vm783, %v11218, %v11377
    %v11504 = vsel %vm783, %v11222, %v11380
    %v11505 = vsel %vm783, %v11226, %v11383
    %v11506 = vsel %vm783, %v11230, %v11386
    %v11507 = vsel %vm783, %v11234, %v11389
    %v11508 = vsel %vm783, %v11238, %v11392
    %v11509 = vsel %vm783, %v11242, %v11395
    %v11510 = vsel %vm783, %v11246, %v11398
    %v11511 = vsel %vm783, %v11250, %v11401
    %v11512 = vsel %vm783, %v11254, %v11404
    %v11513 = vsel %vm783, %v11258, %v11407
    %v11514 = vsel %vm783, %v11262, %v11410
    %v11515 = vsel %vm783, %v11266, %v11413
    %v11516 = vsel %vm783, %v11270, %v11416
    %v11517 = vsel %vm783, %v11274, %v11419
    %v11518 = vsel %vm783, %v11278, %v11422
    %v11519 = vsel %vm783, %v11282, %v11425
    %v11520 = vsel %vm783, %v11286, %v11428
    %v11521 = vsel %vm783, %v11290, %v11431
    %v11522 = vsel %vm783, %v11294, %v11434
    %v11523 = vsel %vm783, %v11298, %v11437
    %v11524 = vsel %vm783, %v11302, %v11440
    %v11525 = vsel %vm783, %v11306, %v11443
    %v11526 = vsel %vm783, %v11310, %v11446
    %v11527 = vsel %vm783, %v11314, %v11449
    %v11528 = vsel %vm783, %v11318, %v11452
    %v11529 = vsel %vm783, %v11322, %v11455
    %v11530 = vsel %vm783, %v11326, %v11458
    %v11531 = vsel %vm783, %v11330, %v11461
    %v11532 = vsel %vm783, %v11334, %v11464
    %v11533 = vsel %vm783, %v11338, %v11467
    %v11534 = vsel %vm783, %v11342, %v11470
    %v11535 = vrot.slane %v11375, 1
    %v11536 = vor.u32 %v11216, %v11535
    %v11537 = vrot.slane %v11378, 1
    %v11538 = vor.u32 %v11220, %v11537
    %v11539 = vrot.slane %v11381, 1
    %v11540 = vor.u32 %v11224, %v11539
    %v11541 = vrot.slane %v11384, 1
    %v11542 = vor.u32 %v11228, %v11541
    %v11543 = vrot.slane %v11387, 1
    %v11544 = vor.u32 %v11232, %v11543
    %v11545 = vrot.slane %v11390, 1
    %v11546 = vor.u32 %v11236, %v11545
    %v11547 = vrot.slane %v11393, 1
    %v11548 = vor.u32 %v11240, %v11547
    %v11549 = vrot.slane %v11396, 1
    %v11550 = vor.u32 %v11244, %v11549
    %v11551 = vrot.slane %v11399, 1
    %v11552 = vor.u32 %v11248, %v11551
    %v11553 = vrot.slane %v11402, 1
    %v11554 = vor.u32 %v11252, %v11553
    %v11555 = vrot.slane %v11405, 1
    %v11556 = vor.u32 %v11256, %v11555
    %v11557 = vrot.slane %v11408, 1
    %v11558 = vor.u32 %v11260, %v11557
    %v11559 = vrot.slane %v11411, 1
    %v11560 = vor.u32 %v11264, %v11559
    %v11561 = vrot.slane %v11414, 1
    %v11562 = vor.u32 %v11268, %v11561
    %v11563 = vrot.slane %v11417, 1
    %v11564 = vor.u32 %v11272, %v11563
    %v11565 = vrot.slane %v11420, 1
    %v11566 = vor.u32 %v11276, %v11565
    %v11567 = vrot.slane %v11423, 1
    %v11568 = vor.u32 %v11280, %v11567
    %v11569 = vrot.slane %v11426, 1
    %v11570 = vor.u32 %v11284, %v11569
    %v11571 = vrot.slane %v11429, 1
    %v11572 = vor.u32 %v11288, %v11571
    %v11573 = vrot.slane %v11432, 1
    %v11574 = vor.u32 %v11292, %v11573
    %v11575 = vrot.slane %v11435, 1
    %v11576 = vor.u32 %v11296, %v11575
    %v11577 = vrot.slane %v11438, 1
    %v11578 = vor.u32 %v11300, %v11577
    %v11579 = vrot.slane %v11441, 1
    %v11580 = vor.u32 %v11304, %v11579
    %v11581 = vrot.slane %v11444, 1
    %v11582 = vor.u32 %v11308, %v11581
    %v11583 = vrot.slane %v11447, 1
    %v11584 = vor.u32 %v11312, %v11583
    %v11585 = vrot.slane %v11450, 1
    %v11586 = vor.u32 %v11316, %v11585
    %v11587 = vrot.slane %v11453, 1
    %v11588 = vor.u32 %v11320, %v11587
    %v11589 = vrot.slane %v11456, 1
    %v11590 = vor.u32 %v11324, %v11589
    %v11591 = vrot.slane %v11459, 1
    %v11592 = vor.u32 %v11328, %v11591
    %v11593 = vrot.slane %v11462, 1
    %v11594 = vor.u32 %v11332, %v11593
    %v11595 = vrot.slane %v11465, 1
    %v11596 = vor.u32 %v11336, %v11595
    %v11597 = vrot.slane %v11468, 1
    %v11598 = vor.u32 %v11340, %v11597
    %v11663 = vsel %vm946, %v11536, %v11535
    %v11664 = vsel %vm946, %v11538, %v11537
    %v11665 = vsel %vm946, %v11540, %v11539
    %v11666 = vsel %vm946, %v11542, %v11541
    %v11667 = vsel %vm946, %v11544, %v11543
    %v11668 = vsel %vm946, %v11546, %v11545
    %v11669 = vsel %vm946, %v11548, %v11547
    %v11670 = vsel %vm946, %v11550, %v11549
    %v11671 = vsel %vm946, %v11552, %v11551
    %v11672 = vsel %vm946, %v11554, %v11553
    %v11673 = vsel %vm946, %v11556, %v11555
    %v11674 = vsel %vm946, %v11558, %v11557
    %v11675 = vsel %vm946, %v11560, %v11559
    %v11676 = vsel %vm946, %v11562, %v11561
    %v11677 = vsel %vm946, %v11564, %v11563
    %v11678 = vsel %vm946, %v11566, %v11565
    %v11679 = vsel %vm946, %v11568, %v11567
    %v11680 = vsel %vm946, %v11570, %v11569
    %v11681 = vsel %vm946, %v11572, %v11571
    %v11682 = vsel %vm946, %v11574, %v11573
    %v11683 = vsel %vm946, %v11576, %v11575
    %v11684 = vsel %vm946, %v11578, %v11577
    %v11685 = vsel %vm946, %v11580, %v11579
    %v11686 = vsel %vm946, %v11582, %v11581
    %v11687 = vsel %vm946, %v11584, %v11583
    %v11688 = vsel %vm946, %v11586, %v11585
    %v11689 = vsel %vm946, %v11588, %v11587
    %v11690 = vsel %vm946, %v11590, %v11589
    %v11691 = vsel %vm946, %v11592, %v11591
    %v11692 = vsel %vm946, %v11594, %v11593
    %v11693 = vsel %vm946, %v11596, %v11595
    %v11694 = vsel %vm946, %v11598, %v11597
    %11727 = vrot.lane.b32.xlu0 %v11183, 32
    %v11728 = vpop.permute.xlu0 %11727
    %11729 = vrot.lane.b32.xlu0 %v11184, 32
    %v11730 = vpop.permute.xlu0 %11729
    %11731 = vrot.lane.b32.xlu0 %v11185, 32
    %v11732 = vpop.permute.xlu0 %11731
    %11733 = vrot.lane.b32.xlu0 %v11186, 32
    %v11734 = vpop.permute.xlu0 %11733
    %11735 = vrot.lane.b32.xlu0 %v11187, 32
    %v11736 = vpop.permute.xlu0 %11735
    %11737 = vrot.lane.b32.xlu0 %v11188, 32
    %v11738 = vpop.permute.xlu0 %11737
    %11739 = vrot.lane.b32.xlu0 %v11189, 32
    %v11740 = vpop.permute.xlu0 %11739
    %11741 = vrot.lane.b32.xlu0 %v11190, 32
    %v11742 = vpop.permute.xlu0 %11741
    %11743 = vrot.lane.b32.xlu0 %v11191, 32
    %v11744 = vpop.permute.xlu0 %11743
    %11745 = vrot.lane.b32.xlu0 %v11192, 32
    %v11746 = vpop.permute.xlu0 %11745
    %11747 = vrot.lane.b32.xlu0 %v11193, 32
    %v11748 = vpop.permute.xlu0 %11747
    %11749 = vrot.lane.b32.xlu0 %v11194, 32
    %v11750 = vpop.permute.xlu0 %11749
    %11751 = vrot.lane.b32.xlu0 %v11195, 32
    %v11752 = vpop.permute.xlu0 %11751
    %11753 = vrot.lane.b32.xlu0 %v11196, 32
    %v11754 = vpop.permute.xlu0 %11753
    %11755 = vrot.lane.b32.xlu0 %v11197, 32
    %v11756 = vpop.permute.xlu0 %11755
    %11757 = vrot.lane.b32.xlu0 %v11198, 32
    %v11758 = vpop.permute.xlu0 %11757
    %11759 = vrot.lane.b32.xlu0 %v11199, 32
    %v11760 = vpop.permute.xlu0 %11759
    %11761 = vrot.lane.b32.xlu0 %v11200, 32
    %v11762 = vpop.permute.xlu0 %11761
    %11763 = vrot.lane.b32.xlu0 %v11201, 32
    %v11764 = vpop.permute.xlu0 %11763
    %11765 = vrot.lane.b32.xlu0 %v11202, 32
    %v11766 = vpop.permute.xlu0 %11765
    %11767 = vrot.lane.b32.xlu0 %v11203, 32
    %v11768 = vpop.permute.xlu0 %11767
    %11769 = vrot.lane.b32.xlu0 %v11204, 32
    %v11770 = vpop.permute.xlu0 %11769
    %11771 = vrot.lane.b32.xlu0 %v11205, 32
    %v11772 = vpop.permute.xlu0 %11771
    %11773 = vrot.lane.b32.xlu0 %v11206, 32
    %v11774 = vpop.permute.xlu0 %11773
    %11775 = vrot.lane.b32.xlu0 %v11207, 32
    %v11776 = vpop.permute.xlu0 %11775
    %11777 = vrot.lane.b32.xlu0 %v11208, 32
    %v11778 = vpop.permute.xlu0 %11777
    %11779 = vrot.lane.b32.xlu0 %v11209, 32
    %v11780 = vpop.permute.xlu0 %11779
    %11781 = vrot.lane.b32.xlu0 %v11210, 32
    %v11782 = vpop.permute.xlu0 %11781
    %11783 = vrot.lane.b32.xlu0 %v11211, 32
    %v11784 = vpop.permute.xlu0 %11783
    %11785 = vrot.lane.b32.xlu0 %v11212, 32
    %v11786 = vpop.permute.xlu0 %11785
    %11787 = vrot.lane.b32.xlu0 %v11213, 32
    %v11788 = vpop.permute.xlu0 %11787
    %11789 = vrot.lane.b32.xlu0 %v11214, 32
    %v11790 = vpop.permute.xlu0 %11789
    %11823 = vrot.lane.b32.xlu0 %v11663, 64
    %v11824 = vpop.permute.xlu0 %11823
    %11825 = vrot.lane.b32.xlu0 %v11664, 64
    %v11826 = vpop.permute.xlu0 %11825
    %11827 = vrot.lane.b32.xlu0 %v11665, 64
    %v11828 = vpop.permute.xlu0 %11827
    %11829 = vrot.lane.b32.xlu0 %v11666, 64
    %v11830 = vpop.permute.xlu0 %11829
    %11831 = vrot.lane.b32.xlu0 %v11667, 64
    %v11832 = vpop.permute.xlu0 %11831
    %11833 = vrot.lane.b32.xlu0 %v11668, 64
    %v11834 = vpop.permute.xlu0 %11833
    %11835 = vrot.lane.b32.xlu0 %v11669, 64
    %v11836 = vpop.permute.xlu0 %11835
    %11837 = vrot.lane.b32.xlu0 %v11670, 64
    %v11838 = vpop.permute.xlu0 %11837
    %11839 = vrot.lane.b32.xlu0 %v11671, 64
    %v11840 = vpop.permute.xlu0 %11839
    %11841 = vrot.lane.b32.xlu0 %v11672, 64
    %v11842 = vpop.permute.xlu0 %11841
    %11843 = vrot.lane.b32.xlu0 %v11673, 64
    %v11844 = vpop.permute.xlu0 %11843
    %11845 = vrot.lane.b32.xlu0 %v11674, 64
    %v11846 = vpop.permute.xlu0 %11845
    %11847 = vrot.lane.b32.xlu0 %v11675, 64
    %v11848 = vpop.permute.xlu0 %11847
    %11849 = vrot.lane.b32.xlu0 %v11676, 64
    %v11850 = vpop.permute.xlu0 %11849
    %11851 = vrot.lane.b32.xlu0 %v11677, 64
    %v11852 = vpop.permute.xlu0 %11851
    %11853 = vrot.lane.b32.xlu0 %v11678, 64
    %v11854 = vpop.permute.xlu0 %11853
    %11855 = vrot.lane.b32.xlu0 %v11679, 64
    %v11856 = vpop.permute.xlu0 %11855
    %11857 = vrot.lane.b32.xlu0 %v11680, 64
    %v11858 = vpop.permute.xlu0 %11857
    %11859 = vrot.lane.b32.xlu0 %v11681, 64
    %v11860 = vpop.permute.xlu0 %11859
    %11861 = vrot.lane.b32.xlu0 %v11682, 64
    %v11862 = vpop.permute.xlu0 %11861
    %11863 = vrot.lane.b32.xlu0 %v11683, 64
    %v11864 = vpop.permute.xlu0 %11863
    %11865 = vrot.lane.b32.xlu0 %v11684, 64
    %v11866 = vpop.permute.xlu0 %11865
    %11867 = vrot.lane.b32.xlu0 %v11685, 64
    %v11868 = vpop.permute.xlu0 %11867
    %11869 = vrot.lane.b32.xlu0 %v11686, 64
    %v11870 = vpop.permute.xlu0 %11869
    %11871 = vrot.lane.b32.xlu0 %v11687, 64
    %v11872 = vpop.permute.xlu0 %11871
    %11873 = vrot.lane.b32.xlu0 %v11688, 64
    %v11874 = vpop.permute.xlu0 %11873
    %11875 = vrot.lane.b32.xlu0 %v11689, 64
    %v11876 = vpop.permute.xlu0 %11875
    %11877 = vrot.lane.b32.xlu0 %v11690, 64
    %v11878 = vpop.permute.xlu0 %11877
    %11879 = vrot.lane.b32.xlu0 %v11691, 64
    %v11880 = vpop.permute.xlu0 %11879
    %11881 = vrot.lane.b32.xlu0 %v11692, 64
    %v11882 = vpop.permute.xlu0 %11881
    %11883 = vrot.lane.b32.xlu0 %v11693, 64
    %v11884 = vpop.permute.xlu0 %11883
    %11885 = vrot.lane.b32.xlu0 %v11694, 64
    %v11886 = vpop.permute.xlu0 %11885
    %v11889 = vsel %vm3212, %v11503, %v11728
    %v11892 = vsel %vm3212, %v11504, %v11730
    %v11895 = vsel %vm3212, %v11505, %v11732
    %v11898 = vsel %vm3212, %v11506, %v11734
    %v11901 = vsel %vm3212, %v11507, %v11736
    %v11904 = vsel %vm3212, %v11508, %v11738
    %v11907 = vsel %vm3212, %v11509, %v11740
    %v11910 = vsel %vm3212, %v11510, %v11742
    %v11913 = vsel %vm3212, %v11511, %v11744
    %v11916 = vsel %vm3212, %v11512, %v11746
    %v11919 = vsel %vm3212, %v11513, %v11748
    %v11922 = vsel %vm3212, %v11514, %v11750
    %v11925 = vsel %vm3212, %v11515, %v11752
    %v11928 = vsel %vm3212, %v11516, %v11754
    %v11931 = vsel %vm3212, %v11517, %v11756
    %v11934 = vsel %vm3212, %v11518, %v11758
    %v11937 = vsel %vm3212, %v11519, %v11760
    %v11940 = vsel %vm3212, %v11520, %v11762
    %v11943 = vsel %vm3212, %v11521, %v11764
    %v11946 = vsel %vm3212, %v11522, %v11766
    %v11949 = vsel %vm3212, %v11523, %v11768
    %v11952 = vsel %vm3212, %v11524, %v11770
    %v11955 = vsel %vm3212, %v11525, %v11772
    %v11958 = vsel %vm3212, %v11526, %v11774
    %v11961 = vsel %vm3212, %v11527, %v11776
    %v11964 = vsel %vm3212, %v11528, %v11778
    %v11967 = vsel %vm3212, %v11529, %v11780
    %v11970 = vsel %vm3212, %v11530, %v11782
    %v11973 = vsel %vm3212, %v11531, %v11784
    %v11976 = vsel %vm3212, %v11532, %v11786
    %v11979 = vsel %vm3212, %v11533, %v11788
    %v11982 = vsel %vm3212, %v11534, %v11790
    %v11984 = vsel %vm3309, %v11889, %v11824
    %v11986 = vsel %vm3309, %v11892, %v11826
    %v11988 = vsel %vm3309, %v11895, %v11828
    %v11990 = vsel %vm3309, %v11898, %v11830
    %v11992 = vsel %vm3309, %v11901, %v11832
    %v11994 = vsel %vm3309, %v11904, %v11834
    %v11996 = vsel %vm3309, %v11907, %v11836
    %v11998 = vsel %vm3309, %v11910, %v11838
    %v12000 = vsel %vm3309, %v11913, %v11840
    %v12002 = vsel %vm3309, %v11916, %v11842
    %v12004 = vsel %vm3309, %v11919, %v11844
    %v12006 = vsel %vm3309, %v11922, %v11846
    %v12008 = vsel %vm3309, %v11925, %v11848
    %v12010 = vsel %vm3309, %v11928, %v11850
    %v12012 = vsel %vm3309, %v11931, %v11852
    %v12014 = vsel %vm3309, %v11934, %v11854
    %v12016 = vsel %vm3309, %v11937, %v11856
    %v12018 = vsel %vm3309, %v11940, %v11858
    %v12020 = vsel %vm3309, %v11943, %v11860
    %v12022 = vsel %vm3309, %v11946, %v11862
    %v12024 = vsel %vm3309, %v11949, %v11864
    %v12026 = vsel %vm3309, %v11952, %v11866
    %v12028 = vsel %vm3309, %v11955, %v11868
    %v12030 = vsel %vm3309, %v11958, %v11870
    %v12032 = vsel %vm3309, %v11961, %v11872
    %v12034 = vsel %vm3309, %v11964, %v11874
    %v12036 = vsel %vm3309, %v11967, %v11876
    %v12038 = vsel %vm3309, %v11970, %v11878
    %v12040 = vsel %vm3309, %v11973, %v11880
    %v12042 = vsel %vm3309, %v11976, %v11882
    %v12044 = vsel %vm3309, %v11979, %v11884
    %v12046 = vsel %vm3309, %v11982, %v11886
    %v12047 = vld [vmem:[%s0 + $0x264] sm:$0xf]
    %v12048 = vld [vmem:[%s0 + $0x268] sm:$0xf]
    %v12049 = vld [vmem:[%s0 + $0x26c] sm:$0xf]
    %v12050 = vld [vmem:[%s0 + $0x270] sm:$0xf]
    %v12051 = vld [vmem:[%s0 + $0x274] sm:$0xf]
    %v12052 = vld [vmem:[%s0 + $0x278] sm:$0xf]
    %v12053 = vld [vmem:[%s0 + $0x27c] sm:$0xf]
    %v12054 = vld [vmem:[%s0 + $0x280] sm:$0xf]
    %v12055 = vld [vmem:[%s0 + $0x284] sm:$0xf]
    %v12056 = vld [vmem:[%s0 + $0x288] sm:$0xf]
    %v12057 = vld [vmem:[%s0 + $0x28c] sm:$0xf]
    %v12058 = vld [vmem:[%s0 + $0x290] sm:$0xf]
    %v12059 = vld [vmem:[%s0 + $0x294] sm:$0xf]
    %v12060 = vld [vmem:[%s0 + $0x298] sm:$0xf]
    %v12061 = vld [vmem:[%s0 + $0x29c] sm:$0xf]
    %v12062 = vld [vmem:[%s0 + $0x2a0] sm:$0xf]
    %v12063 = vld [vmem:[%s0 + $0x2a4] sm:$0xf]
    %v12064 = vld [vmem:[%s0 + $0x2a8] sm:$0xf]
    %v12065 = vld [vmem:[%s0 + $0x2ac] sm:$0xf]
    %v12066 = vld [vmem:[%s0 + $0x2b0] sm:$0xf]
    %v12067 = vld [vmem:[%s0 + $0x2b4] sm:$0xf]
    %v12068 = vld [vmem:[%s0 + $0x2b8] sm:$0xf]
    %v12069 = vld [vmem:[%s0 + $0x2bc] sm:$0xf]
    %v12070 = vld [vmem:[%s0 + $0x2c0] sm:$0xf]
    %v12083 = vunpack.c.l.b16 %v12059
    %v12084 = vunpack.c.l.b16 %v12060
    %v12085 = vunpack.c.l.b16 %v12061
    %v12086 = vunpack.c.l.b16 %v12062
    %v12087 = vunpack.c.l.b16 %v12063
    %v12088 = vunpack.c.l.b16 %v12064
    %v12089 = vunpack.c.l.b16 %v12065
    %v12090 = vunpack.c.l.b16 %v12066
    %v12091 = vunpack.c.l.b16 %v12067
    %v12092 = vunpack.c.l.b16 %v12068
    %v12093 = vunpack.c.l.b16 %v12069
    %v12094 = vunpack.c.l.b16 %v12070
    %v12095 = vpack.c.b16 %v12084, %v12083
    %v12096 = vpack.c.b16 %v12086, %v12085
    %v12097 = vpack.c.b16 %v12088, %v12087
    %v12098 = vpack.c.b16 %v12090, %v12089
    %v12099 = vpack.c.b16 %v12092, %v12091
    %v12100 = vpack.c.b16 %v12094, %v12093
    %v12107 = vsel %vm3434, %v11984, 0
    %v12109 = vsel %vm3434, %v11986, 0
    %v12111 = vsel %vm3434, %v11988, 0
    %v12113 = vsel %vm3434, %v11990, 0
    %v12115 = vsel %vm3434, %v11992, 0
    %v12117 = vsel %vm3434, %v11994, 0
    %v12119 = vsel %vm3434, %v11996, 0
    %v12121 = vsel %vm3434, %v11998, 0
    %v12123 = vsel %vm3434, %v12000, 0
    %v12125 = vsel %vm3434, %v12002, 0
    %v12127 = vsel %vm3434, %v12004, 0
    %v12129 = vsel %vm3434, %v12006, 0
    %v12131 = vsel %vm3434, %v12008, 0
    %v12133 = vsel %vm3434, %v12010, 0
    %v12135 = vsel %vm3434, %v12012, 0
    %v12137 = vsel %vm3434, %v12014, 0
    %v12139 = vsel %vm3434, %v12016, 0
    %v12141 = vsel %vm3434, %v12018, 0
    %v12143 = vsel %vm3434, %v12020, 0
    %v12145 = vsel %vm3434, %v12022, 0
    %v12147 = vsel %vm3434, %v12024, 0
    %v12149 = vsel %vm3434, %v12026, 0
    %v12151 = vsel %vm3434, %v12028, 0
    %v12153 = vsel %vm3434, %v12030, 0
    %v12155 = vsel %vm3434, %v12032, 0
    %v12157 = vsel %vm3434, %v12034, 0
    %v12159 = vsel %vm3434, %v12036, 0
    %v12161 = vsel %vm3434, %v12038, 0
    %v12163 = vsel %vm3434, %v12040, 0
    %v12165 = vsel %vm3434, %v12042, 0
    %v12167 = vsel %vm3434, %v12044, 0
    %v12169 = vsel %vm3434, %v12046, 0
    %12171 = vmatprep.subr.bf16.mxu0 0
    %12172 = vmatpush1.bf16.msra.mxu0 0
    %12173 = vmatprep.subr.bf16.mxu0 0
    %12174 = vmatpush1.bf16.msra.mxu0 0
    %12175 = vmatprep.subr.bf16.mxu0 0
    %12176 = vmatpush1.bf16.msra.mxu0 %v12100
    %12177 = vmatprep.subr.bf16.mxu0 0
    %12178 = vmatpush1.bf16.msra.mxu0 %v12099
    %12179 = vmatprep.subr.bf16.mxu0 0
    %12180 = vmatpush1.bf16.msra.mxu0 %v12098
    %12181 = vmatprep.subr.bf16.mxu0 0
    %12182 = vmatpush1.bf16.msra.mxu0 %v12097
    %12183 = vmatprep.subr.bf16.mxu0 0
    %12184 = vmatpush1.bf16.msra.mxu0 %v12096
    %12185 = vmatprep.subr.bf16.mxu0 0
    %12186 = vmatpush1.bf16.msra.mxu0 %v12095
    %12187 = vmatprep.subr.bf16.mxu0 0
    %12188 = vmatpush2.bf16.msra.mxu0 0
    %12189 = vmatprep.subr.bf16.mxu0 0
    %12190 = vmatpush2.bf16.msra.mxu0 0
    %12191 = vmatprep.subr.bf16.mxu0 0
    %12192 = vmatpush2.bf16.msra.mxu0 0
    %12193 = vmatprep.subr.bf16.mxu0 0
    %12194 = vmatpush2.bf16.msra.mxu0 0
    %12195 = vmatprep.subr.bf16.mxu0 0
    %12196 = vmatpush2.bf16.msra.mxu0 0
    %12197 = vmatprep.subr.bf16.mxu0 0
    %12198 = vmatpush2.bf16.msra.mxu0 0
    %12199 = vmatprep.subr.bf16.mxu0 0
    %12200 = vmatpush2.bf16.msra.mxu0 0
    %12201 = vmatprep.subr.bf16.mxu0 0
    %12202 = vmatpush2.bf16.msra.mxu0 0
    %12203 = vmatprep.mubr.bf16.mxu0 0
    %12204 = vmatmul.mubr.bf16.gmra.mxu0 %v12107
    %v12205 = vpop.f32.mrf.mxu0
    %v12206 = vadd.f32 0.0, %v12205
    %v12207 = vpop.f32.mrf.mxu0
    %v12208 = vpop.f32.mrf.mxu0
    %v12209 = vadd.f32 0.0, %v12208
    %v12210 = vpop.f32.mrf.mxu0
    %12211 = vmatprep.mubr.bf16.mxu0 0
    %12212 = vmatmul.mubr.bf16.gmra.mxu0 %v12109
    %v12213 = vpop.f32.mrf.mxu0
    %v12214 = vadd.f32 0.0, %v12213
    %v12215 = vpop.f32.mrf.mxu0
    %v12216 = vpop.f32.mrf.mxu0
    %v12217 = vadd.f32 0.0, %v12216
    %v12218 = vpop.f32.mrf.mxu0
    %12219 = vmatprep.mubr.bf16.mxu0 0
    %12220 = vmatmul.mubr.bf16.gmra.mxu0 %v12111
    %v12221 = vpop.f32.mrf.mxu0
    %v12222 = vadd.f32 0.0, %v12221
    %v12223 = vpop.f32.mrf.mxu0
    %v12224 = vpop.f32.mrf.mxu0
    %v12225 = vadd.f32 0.0, %v12224
    %v12226 = vpop.f32.mrf.mxu0
    %12227 = vmatprep.mubr.bf16.mxu0 0
    %12228 = vmatmul.mubr.bf16.gmra.mxu0 %v12113
    %v12229 = vpop.f32.mrf.mxu0
    %v12230 = vadd.f32 0.0, %v12229
    %v12231 = vpop.f32.mrf.mxu0
    %v12232 = vpop.f32.mrf.mxu0
    %v12233 = vadd.f32 0.0, %v12232
    %v12234 = vpop.f32.mrf.mxu0
    %12235 = vmatprep.mubr.bf16.mxu0 0
    %12236 = vmatmul.mubr.bf16.gmra.mxu0 %v12115
    %v12237 = vpop.f32.mrf.mxu0
    %v12238 = vadd.f32 0.0, %v12237
    %v12239 = vpop.f32.mrf.mxu0
    %v12240 = vpop.f32.mrf.mxu0
    %v12241 = vadd.f32 0.0, %v12240
    %v12242 = vpop.f32.mrf.mxu0
    %12243 = vmatprep.mubr.bf16.mxu0 0
    %12244 = vmatmul.mubr.bf16.gmra.mxu0 %v12117
    %v12245 = vpop.f32.mrf.mxu0
    %v12246 = vadd.f32 0.0, %v12245
    %v12247 = vpop.f32.mrf.mxu0
    %v12248 = vpop.f32.mrf.mxu0
    %v12249 = vadd.f32 0.0, %v12248
    %v12250 = vpop.f32.mrf.mxu0
    %12251 = vmatprep.mubr.bf16.mxu0 0
    %12252 = vmatmul.mubr.bf16.gmra.mxu0 %v12119
    %v12253 = vpop.f32.mrf.mxu0
    %v12254 = vadd.f32 0.0, %v12253
    %v12255 = vpop.f32.mrf.mxu0
    %v12256 = vpop.f32.mrf.mxu0
    %v12257 = vadd.f32 0.0, %v12256
    %v12258 = vpop.f32.mrf.mxu0
    %12259 = vmatprep.mubr.bf16.mxu0 0
    %12260 = vmatmul.mubr.bf16.gmra.mxu0 %v12121
    %v12261 = vpop.f32.mrf.mxu0
    %v12262 = vadd.f32 0.0, %v12261
    %v12263 = vpop.f32.mrf.mxu0
    %v12264 = vpop.f32.mrf.mxu0
    %v12265 = vadd.f32 0.0, %v12264
    %v12266 = vpop.f32.mrf.mxu0
    %12267 = vmatprep.mubr.bf16.mxu0 0
    %12268 = vmatmul.mubr.bf16.gmra.mxu0 %v12123
    %v12269 = vpop.f32.mrf.mxu0
    %v12270 = vadd.f32 0.0, %v12269
    %v12271 = vpop.f32.mrf.mxu0
    %v12272 = vpop.f32.mrf.mxu0
    %v12273 = vadd.f32 0.0, %v12272
    %v12274 = vpop.f32.mrf.mxu0
    %12275 = vmatprep.mubr.bf16.mxu0 0
    %12276 = vmatmul.mubr.bf16.gmra.mxu0 %v12125
    %v12277 = vpop.f32.mrf.mxu0
    %v12278 = vadd.f32 0.0, %v12277
    %v12279 = vpop.f32.mrf.mxu0
    %v12280 = vpop.f32.mrf.mxu0
    %v12281 = vadd.f32 0.0, %v12280
    %v12282 = vpop.f32.mrf.mxu0
    %12283 = vmatprep.mubr.bf16.mxu0 0
    %12284 = vmatmul.mubr.bf16.gmra.mxu0 %v12127
    %v12285 = vpop.f32.mrf.mxu0
    %v12286 = vadd.f32 0.0, %v12285
    %v12287 = vpop.f32.mrf.mxu0
    %v12288 = vpop.f32.mrf.mxu0
    %v12289 = vadd.f32 0.0, %v12288
    %v12290 = vpop.f32.mrf.mxu0
    %12291 = vmatprep.mubr.bf16.mxu0 0
    %12292 = vmatmul.mubr.bf16.gmra.mxu0 %v12129
    %v12293 = vpop.f32.mrf.mxu0
    %v12294 = vadd.f32 0.0, %v12293
    %v12295 = vpop.f32.mrf.mxu0
    %v12296 = vpop.f32.mrf.mxu0
    %v12297 = vadd.f32 0.0, %v12296
    %v12298 = vpop.f32.mrf.mxu0
    %12299 = vmatprep.mubr.bf16.mxu0 0
    %12300 = vmatmul.mubr.bf16.gmra.mxu0 %v12131
    %v12301 = vpop.f32.mrf.mxu0
    %v12302 = vadd.f32 0.0, %v12301
    %v12303 = vpop.f32.mrf.mxu0
    %v12304 = vpop.f32.mrf.mxu0
    %v12305 = vadd.f32 0.0, %v12304
    %v12306 = vpop.f32.mrf.mxu0
    %12307 = vmatprep.mubr.bf16.mxu0 0
    %12308 = vmatmul.mubr.bf16.gmra.mxu0 %v12133
    %v12309 = vpop.f32.mrf.mxu0
    %v12310 = vadd.f32 0.0, %v12309
    %v12311 = vpop.f32.mrf.mxu0
    %v12312 = vpop.f32.mrf.mxu0
    %v12313 = vadd.f32 0.0, %v12312
    %v12314 = vpop.f32.mrf.mxu0
    %12315 = vmatprep.mubr.bf16.mxu0 0
    %12316 = vmatmul.mubr.bf16.gmra.mxu0 %v12135
    %v12317 = vpop.f32.mrf.mxu0
    %v12318 = vadd.f32 0.0, %v12317
    %v12319 = vpop.f32.mrf.mxu0
    %v12320 = vpop.f32.mrf.mxu0
    %v12321 = vadd.f32 0.0, %v12320
    %v12322 = vpop.f32.mrf.mxu0
    %12323 = vmatprep.mubr.bf16.mxu0 0
    %12324 = vmatmul.mubr.bf16.gmra.mxu0 %v12137
    %v12325 = vpop.f32.mrf.mxu0
    %v12326 = vadd.f32 0.0, %v12325
    %v12327 = vpop.f32.mrf.mxu0
    %v12328 = vpop.f32.mrf.mxu0
    %v12329 = vadd.f32 0.0, %v12328
    %v12330 = vpop.f32.mrf.mxu0
    %12331 = vmatprep.mubr.bf16.mxu0 0
    %12332 = vmatmul.mubr.bf16.gmra.mxu0 %v12139
    %v12333 = vpop.f32.mrf.mxu0
    %v12334 = vadd.f32 0.0, %v12333
    %v12335 = vpop.f32.mrf.mxu0
    %v12336 = vpop.f32.mrf.mxu0
    %v12337 = vadd.f32 0.0, %v12336
    %v12338 = vpop.f32.mrf.mxu0
    %12339 = vmatprep.mubr.bf16.mxu0 0
    %12340 = vmatmul.mubr.bf16.gmra.mxu0 %v12141
    %v12341 = vpop.f32.mrf.mxu0
    %v12342 = vadd.f32 0.0, %v12341
    %v12343 = vpop.f32.mrf.mxu0
    %v12344 = vpop.f32.mrf.mxu0
    %v12345 = vadd.f32 0.0, %v12344
    %v12346 = vpop.f32.mrf.mxu0
    %12347 = vmatprep.mubr.bf16.mxu0 0
    %12348 = vmatmul.mubr.bf16.gmra.mxu0 %v12143
    %v12349 = vpop.f32.mrf.mxu0
    %v12350 = vadd.f32 0.0, %v12349
    %v12351 = vpop.f32.mrf.mxu0
    %v12352 = vpop.f32.mrf.mxu0
    %v12353 = vadd.f32 0.0, %v12352
    %v12354 = vpop.f32.mrf.mxu0
    %12355 = vmatprep.mubr.bf16.mxu0 0
    %12356 = vmatmul.mubr.bf16.gmra.mxu0 %v12145
    %v12357 = vpop.f32.mrf.mxu0
    %v12358 = vadd.f32 0.0, %v12357
    %v12359 = vpop.f32.mrf.mxu0
    %v12360 = vpop.f32.mrf.mxu0
    %v12361 = vadd.f32 0.0, %v12360
    %v12362 = vpop.f32.mrf.mxu0
    %12363 = vmatprep.mubr.bf16.mxu0 0
    %12364 = vmatmul.mubr.bf16.gmra.mxu0 %v12147
    %v12365 = vpop.f32.mrf.mxu0
    %v12366 = vadd.f32 0.0, %v12365
    %v12367 = vpop.f32.mrf.mxu0
    %v12368 = vpop.f32.mrf.mxu0
    %v12369 = vadd.f32 0.0, %v12368
    %v12370 = vpop.f32.mrf.mxu0
    %12371 = vmatprep.mubr.bf16.mxu0 0
    %12372 = vmatmul.mubr.bf16.gmra.mxu0 %v12149
    %v12373 = vpop.f32.mrf.mxu0
    %v12374 = vadd.f32 0.0, %v12373
    %v12375 = vpop.f32.mrf.mxu0
    %v12376 = vpop.f32.mrf.mxu0
    %v12377 = vadd.f32 0.0, %v12376
    %v12378 = vpop.f32.mrf.mxu0
    %12379 = vmatprep.mubr.bf16.mxu0 0
    %12380 = vmatmul.mubr.bf16.gmra.mxu0 %v12151
    %v12381 = vpop.f32.mrf.mxu0
    %v12382 = vadd.f32 0.0, %v12381
    %v12383 = vpop.f32.mrf.mxu0
    %v12384 = vpop.f32.mrf.mxu0
    %v12385 = vadd.f32 0.0, %v12384
    %v12386 = vpop.f32.mrf.mxu0
    %12387 = vmatprep.mubr.bf16.mxu0 0
    %12388 = vmatmul.mubr.bf16.gmra.mxu0 %v12153
    %v12389 = vpop.f32.mrf.mxu0
    %v12390 = vadd.f32 0.0, %v12389
    %v12391 = vpop.f32.mrf.mxu0
    %v12392 = vpop.f32.mrf.mxu0
    %v12393 = vadd.f32 0.0, %v12392
    %v12394 = vpop.f32.mrf.mxu0
    %12395 = vmatprep.mubr.bf16.mxu0 0
    %12396 = vmatmul.mubr.bf16.gmra.mxu0 %v12155
    %v12397 = vpop.f32.mrf.mxu0
    %v12398 = vadd.f32 0.0, %v12397
    %v12399 = vpop.f32.mrf.mxu0
    %v12400 = vpop.f32.mrf.mxu0
    %v12401 = vadd.f32 0.0, %v12400
    %v12402 = vpop.f32.mrf.mxu0
    %12403 = vmatprep.mubr.bf16.mxu0 0
    %12404 = vmatmul.mubr.bf16.gmra.mxu0 %v12157
    %v12405 = vpop.f32.mrf.mxu0
    %v12406 = vadd.f32 0.0, %v12405
    %v12407 = vpop.f32.mrf.mxu0
    %v12408 = vpop.f32.mrf.mxu0
    %v12409 = vadd.f32 0.0, %v12408
    %v12410 = vpop.f32.mrf.mxu0
    %12411 = vmatprep.mubr.bf16.mxu0 0
    %12412 = vmatmul.mubr.bf16.gmra.mxu0 %v12159
    %v12413 = vpop.f32.mrf.mxu0
    %v12414 = vadd.f32 0.0, %v12413
    %v12415 = vpop.f32.mrf.mxu0
    %v12416 = vpop.f32.mrf.mxu0
    %v12417 = vadd.f32 0.0, %v12416
    %v12418 = vpop.f32.mrf.mxu0
    %12419 = vmatprep.mubr.bf16.mxu0 0
    %12420 = vmatmul.mubr.bf16.gmra.mxu0 %v12161
    %v12421 = vpop.f32.mrf.mxu0
    %v12422 = vadd.f32 0.0, %v12421
    %v12423 = vpop.f32.mrf.mxu0
    %v12424 = vpop.f32.mrf.mxu0
    %v12425 = vadd.f32 0.0, %v12424
    %v12426 = vpop.f32.mrf.mxu0
    %12427 = vmatprep.mubr.bf16.mxu0 0
    %12428 = vmatmul.mubr.bf16.gmra.mxu0 %v12163
    %v12429 = vpop.f32.mrf.mxu0
    %v12430 = vadd.f32 0.0, %v12429
    %v12431 = vpop.f32.mrf.mxu0
    %v12432 = vpop.f32.mrf.mxu0
    %v12433 = vadd.f32 0.0, %v12432
    %v12434 = vpop.f32.mrf.mxu0
    %12435 = vmatprep.mubr.bf16.mxu0 0
    %12436 = vmatmul.mubr.bf16.gmra.mxu0 %v12165
    %v12437 = vpop.f32.mrf.mxu0
    %v12438 = vadd.f32 0.0, %v12437
    %v12439 = vpop.f32.mrf.mxu0
    %v12440 = vpop.f32.mrf.mxu0
    %v12441 = vadd.f32 0.0, %v12440
    %v12442 = vpop.f32.mrf.mxu0
    %12443 = vmatprep.mubr.bf16.mxu0 0
    %12444 = vmatmul.mubr.bf16.gmra.mxu0 %v12167
    %v12445 = vpop.f32.mrf.mxu0
    %v12446 = vadd.f32 0.0, %v12445
    %v12447 = vpop.f32.mrf.mxu0
    %v12448 = vpop.f32.mrf.mxu0
    %v12449 = vadd.f32 0.0, %v12448
    %v12450 = vpop.f32.mrf.mxu0
    %12451 = vmatprep.mubr.bf16.mxu0 0
    %12452 = vmatmul.mubr.bf16.gmra.mxu0 %v12169
    %v12453 = vpop.f32.mrf.mxu0
    %v12454 = vadd.f32 0.0, %v12453
    %v12455 = vpop.f32.mrf.mxu0
    %v12456 = vpop.f32.mrf.mxu0
    %v12457 = vadd.f32 0.0, %v12456
    %v12458 = vpop.f32.mrf.mxu0
    %12459 = vdwg.mxu0
    %v12472 = vunpack.c.l.b16 %v12047
    %v12473 = vunpack.c.l.b16 %v12048
    %v12474 = vunpack.c.l.b16 %v12049
    %v12475 = vunpack.c.l.b16 %v12050
    %v12476 = vunpack.c.l.b16 %v12051
    %v12477 = vunpack.c.l.b16 %v12052
    %v12478 = vunpack.c.l.b16 %v12053
    %v12479 = vunpack.c.l.b16 %v12054
    %v12480 = vunpack.c.l.b16 %v12055
    %v12481 = vunpack.c.l.b16 %v12056
    %v12482 = vunpack.c.l.b16 %v12057
    %v12483 = vunpack.c.l.b16 %v12058
    %v12484 = vpack.c.b16 %v12473, %v12472
    %v12485 = vpack.c.b16 %v12475, %v12474
    %v12486 = vpack.c.b16 %v12477, %v12476
    %v12487 = vpack.c.b16 %v12479, %v12478
    %v12488 = vpack.c.b16 %v12481, %v12480
    %v12489 = vpack.c.b16 %v12483, %v12482
    %12496 = vmatprep.subr.bf16.mxu0 0
    %12497 = vmatpush1.bf16.msra.mxu0 0
    %12498 = vmatprep.subr.bf16.mxu0 0
    %12499 = vmatpush1.bf16.msra.mxu0 0
    %12500 = vmatprep.subr.bf16.mxu0 0
    %12501 = vmatpush1.bf16.msra.mxu0 %v12489
    %12502 = vmatprep.subr.bf16.mxu0 0
    %12503 = vmatpush1.bf16.msra.mxu0 %v12488
    %12504 = vmatprep.subr.bf16.mxu0 0
    %12505 = vmatpush1.bf16.msra.mxu0 %v12487
    %12506 = vmatprep.subr.bf16.mxu0 0
    %12507 = vmatpush1.bf16.msra.mxu0 %v12486
    %12508 = vmatprep.subr.bf16.mxu0 0
    %12509 = vmatpush1.bf16.msra.mxu0 %v12485
    %12510 = vmatprep.subr.bf16.mxu0 0
    %12511 = vmatpush1.bf16.msra.mxu0 %v12484
    %12512 = vmatprep.subr.bf16.mxu0 0
    %12513 = vmatpush2.bf16.msra.mxu0 0
    %12514 = vmatprep.subr.bf16.mxu0 0
    %12515 = vmatpush2.bf16.msra.mxu0 0
    %12516 = vmatprep.subr.bf16.mxu0 0
    %12517 = vmatpush2.bf16.msra.mxu0 0
    %12518 = vmatprep.subr.bf16.mxu0 0
    %12519 = vmatpush2.bf16.msra.mxu0 0
    %12520 = vmatprep.subr.bf16.mxu0 0
    %12521 = vmatpush2.bf16.msra.mxu0 0
    %12522 = vmatprep.subr.bf16.mxu0 0
    %12523 = vmatpush2.bf16.msra.mxu0 0
    %12524 = vmatprep.subr.bf16.mxu0 0
    %12525 = vmatpush2.bf16.msra.mxu0 0
    %12526 = vmatprep.subr.bf16.mxu0 0
    %12527 = vmatpush2.bf16.msra.mxu0 0
    %12528 = vmatprep.mubr.bf16.mxu0 0
    %12529 = vmatmul.mubr.bf16.gmra.mxu0 %v12137
    %v12530 = vpop.f32.mrf.mxu0
    %v12531 = vadd.f32 %v12206, %v12530
    %v12532 = vpop.f32.mrf.mxu0
    %v12533 = vpop.f32.mrf.mxu0
    %v12534 = vadd.f32 %v12209, %v12533
    %v12535 = vpop.f32.mrf.mxu0
    %12536 = vmatprep.mubr.bf16.mxu0 0
    %12537 = vmatmul.mubr.bf16.gmra.mxu0 %v12107
    %v12538 = vpop.f32.mrf.mxu0
    %v12539 = vadd.f32 %v12214, %v12538
    %v12540 = vpop.f32.mrf.mxu0
    %v12541 = vpop.f32.mrf.mxu0
    %v12542 = vadd.f32 %v12217, %v12541
    %v12543 = vpop.f32.mrf.mxu0
    %12544 = vmatprep.mubr.bf16.mxu0 0
    %12545 = vmatmul.mubr.bf16.gmra.mxu0 %v12109
    %v12546 = vpop.f32.mrf.mxu0
    %v12547 = vadd.f32 %v12222, %v12546
    %v12548 = vpop.f32.mrf.mxu0
    %v12549 = vpop.f32.mrf.mxu0
    %v12550 = vadd.f32 %v12225, %v12549
    %v12551 = vpop.f32.mrf.mxu0
    %12552 = vmatprep.mubr.bf16.mxu0 0
    %12553 = vmatmul.mubr.bf16.gmra.mxu0 %v12111
    %v12554 = vpop.f32.mrf.mxu0
    %v12555 = vadd.f32 %v12230, %v12554
    %v12556 = vpop.f32.mrf.mxu0
    %v12557 = vpop.f32.mrf.mxu0
    %v12558 = vadd.f32 %v12233, %v12557
    %v12559 = vpop.f32.mrf.mxu0
    %12560 = vmatprep.mubr.bf16.mxu0 0
    %12561 = vmatmul.mubr.bf16.gmra.mxu0 %v12113
    %v12562 = vpop.f32.mrf.mxu0
    %v12563 = vadd.f32 %v12238, %v12562
    %v12564 = vpop.f32.mrf.mxu0
    %v12565 = vpop.f32.mrf.mxu0
    %v12566 = vadd.f32 %v12241, %v12565
    %v12567 = vpop.f32.mrf.mxu0
    %12568 = vmatprep.mubr.bf16.mxu0 0
    %12569 = vmatmul.mubr.bf16.gmra.mxu0 %v12115
    %v12570 = vpop.f32.mrf.mxu0
    %v12571 = vadd.f32 %v12246, %v12570
    %v12572 = vpop.f32.mrf.mxu0
    %v12573 = vpop.f32.mrf.mxu0
    %v12574 = vadd.f32 %v12249, %v12573
    %v12575 = vpop.f32.mrf.mxu0
    %12576 = vmatprep.mubr.bf16.mxu0 0
    %12577 = vmatmul.mubr.bf16.gmra.mxu0 %v12117
    %v12578 = vpop.f32.mrf.mxu0
    %v12579 = vadd.f32 %v12254, %v12578
    %v12580 = vpop.f32.mrf.mxu0
    %v12581 = vpop.f32.mrf.mxu0
    %v12582 = vadd.f32 %v12257, %v12581
    %v12583 = vpop.f32.mrf.mxu0
    %12584 = vmatprep.mubr.bf16.mxu0 0
    %12585 = vmatmul.mubr.bf16.gmra.mxu0 %v12119
    %v12586 = vpop.f32.mrf.mxu0
    %v12587 = vadd.f32 %v12262, %v12586
    %v12588 = vpop.f32.mrf.mxu0
    %v12589 = vpop.f32.mrf.mxu0
    %v12590 = vadd.f32 %v12265, %v12589
    %v12591 = vpop.f32.mrf.mxu0
    %12592 = vmatprep.mubr.bf16.mxu0 0
    %12593 = vmatmul.mubr.bf16.gmra.mxu0 %v12121
    %v12594 = vpop.f32.mrf.mxu0
    %v12595 = vadd.f32 %v12270, %v12594
    %v12596 = vpop.f32.mrf.mxu0
    %v12597 = vpop.f32.mrf.mxu0
    %v12598 = vadd.f32 %v12273, %v12597
    %v12599 = vpop.f32.mrf.mxu0
    %12600 = vmatprep.mubr.bf16.mxu0 0
    %12601 = vmatmul.mubr.bf16.gmra.mxu0 %v12123
    %v12602 = vpop.f32.mrf.mxu0
    %v12603 = vadd.f32 %v12278, %v12602
    %v12604 = vpop.f32.mrf.mxu0
    %v12605 = vpop.f32.mrf.mxu0
    %v12606 = vadd.f32 %v12281, %v12605
    %v12607 = vpop.f32.mrf.mxu0
    %12608 = vmatprep.mubr.bf16.mxu0 0
    %12609 = vmatmul.mubr.bf16.gmra.mxu0 %v12125
    %v12610 = vpop.f32.mrf.mxu0
    %v12611 = vadd.f32 %v12286, %v12610
    %v12612 = vpop.f32.mrf.mxu0
    %v12613 = vpop.f32.mrf.mxu0
    %v12614 = vadd.f32 %v12289, %v12613
    %v12615 = vpop.f32.mrf.mxu0
    %12616 = vmatprep.mubr.bf16.mxu0 0
    %12617 = vmatmul.mubr.bf16.gmra.mxu0 %v12127
    %v12618 = vpop.f32.mrf.mxu0
    %v12619 = vadd.f32 %v12294, %v12618
    %v12620 = vpop.f32.mrf.mxu0
    %v12621 = vpop.f32.mrf.mxu0
    %v12622 = vadd.f32 %v12297, %v12621
    %v12623 = vpop.f32.mrf.mxu0
    %12624 = vmatprep.mubr.bf16.mxu0 0
    %12625 = vmatmul.mubr.bf16.gmra.mxu0 %v12129
    %v12626 = vpop.f32.mrf.mxu0
    %v12627 = vadd.f32 %v12302, %v12626
    %v12628 = vpop.f32.mrf.mxu0
    %v12629 = vpop.f32.mrf.mxu0
    %v12630 = vadd.f32 %v12305, %v12629
    %v12631 = vpop.f32.mrf.mxu0
    %12632 = vmatprep.mubr.bf16.mxu0 0
    %12633 = vmatmul.mubr.bf16.gmra.mxu0 %v12131
    %v12634 = vpop.f32.mrf.mxu0
    %v12635 = vadd.f32 %v12310, %v12634
    %v12636 = vpop.f32.mrf.mxu0
    %v12637 = vpop.f32.mrf.mxu0
    %v12638 = vadd.f32 %v12313, %v12637
    %v12639 = vpop.f32.mrf.mxu0
    %12640 = vmatprep.mubr.bf16.mxu0 0
    %12641 = vmatmul.mubr.bf16.gmra.mxu0 %v12133
    %v12642 = vpop.f32.mrf.mxu0
    %v12643 = vadd.f32 %v12318, %v12642
    %v12644 = vpop.f32.mrf.mxu0
    %v12645 = vpop.f32.mrf.mxu0
    %v12646 = vadd.f32 %v12321, %v12645
    %v12647 = vpop.f32.mrf.mxu0
    %12648 = vmatprep.mubr.bf16.mxu0 0
    %12649 = vmatmul.mubr.bf16.gmra.mxu0 %v12135
    %v12650 = vpop.f32.mrf.mxu0
    %v12651 = vadd.f32 %v12326, %v12650
    %v12652 = vpop.f32.mrf.mxu0
    %v12653 = vpop.f32.mrf.mxu0
    %v12654 = vadd.f32 %v12329, %v12653
    %v12655 = vpop.f32.mrf.mxu0
    %12656 = vmatprep.mubr.bf16.mxu0 0
    %12657 = vmatmul.mubr.bf16.gmra.mxu0 %v12169
    %v12658 = vpop.f32.mrf.mxu0
    %v12659 = vadd.f32 %v12334, %v12658
    %v12660 = vpop.f32.mrf.mxu0
    %v12661 = vpop.f32.mrf.mxu0
    %v12662 = vadd.f32 %v12337, %v12661
    %v12663 = vpop.f32.mrf.mxu0
    %12664 = vmatprep.mubr.bf16.mxu0 0
    %12665 = vmatmul.mubr.bf16.gmra.mxu0 %v12139
    %v12666 = vpop.f32.mrf.mxu0
    %v12667 = vadd.f32 %v12342, %v12666
    %v12668 = vpop.f32.mrf.mxu0
    %v12669 = vpop.f32.mrf.mxu0
    %v12670 = vadd.f32 %v12345, %v12669
    %v12671 = vpop.f32.mrf.mxu0
    %12672 = vmatprep.mubr.bf16.mxu0 0
    %12673 = vmatmul.mubr.bf16.gmra.mxu0 %v12141
    %v12674 = vpop.f32.mrf.mxu0
    %v12675 = vadd.f32 %v12350, %v12674
    %v12676 = vpop.f32.mrf.mxu0
    %v12677 = vpop.f32.mrf.mxu0
    %v12678 = vadd.f32 %v12353, %v12677
    %v12679 = vpop.f32.mrf.mxu0
    %12680 = vmatprep.mubr.bf16.mxu0 0
    %12681 = vmatmul.mubr.bf16.gmra.mxu0 %v12143
    %v12682 = vpop.f32.mrf.mxu0
    %v12683 = vadd.f32 %v12358, %v12682
    %v12684 = vpop.f32.mrf.mxu0
    %v12685 = vpop.f32.mrf.mxu0
    %v12686 = vadd.f32 %v12361, %v12685
    %v12687 = vpop.f32.mrf.mxu0
    %12688 = vmatprep.mubr.bf16.mxu0 0
    %12689 = vmatmul.mubr.bf16.gmra.mxu0 %v12145
    %v12690 = vpop.f32.mrf.mxu0
    %v12691 = vadd.f32 %v12366, %v12690
    %v12692 = vpop.f32.mrf.mxu0
    %v12693 = vpop.f32.mrf.mxu0
    %v12694 = vadd.f32 %v12369, %v12693
    %v12695 = vpop.f32.mrf.mxu0
    %12696 = vmatprep.mubr.bf16.mxu0 0
    %12697 = vmatmul.mubr.bf16.gmra.mxu0 %v12147
    %v12698 = vpop.f32.mrf.mxu0
    %v12699 = vadd.f32 %v12374, %v12698
    %v12700 = vpop.f32.mrf.mxu0
    %v12701 = vpop.f32.mrf.mxu0
    %v12702 = vadd.f32 %v12377, %v12701
    %v12703 = vpop.f32.mrf.mxu0
    %12704 = vmatprep.mubr.bf16.mxu0 0
    %12705 = vmatmul.mubr.bf16.gmra.mxu0 %v12149
    %v12706 = vpop.f32.mrf.mxu0
    %v12707 = vadd.f32 %v12382, %v12706
    %v12708 = vpop.f32.mrf.mxu0
    %v12709 = vpop.f32.mrf.mxu0
    %v12710 = vadd.f32 %v12385, %v12709
    %v12711 = vpop.f32.mrf.mxu0
    %12712 = vmatprep.mubr.bf16.mxu0 0
    %12713 = vmatmul.mubr.bf16.gmra.mxu0 %v12151
    %v12714 = vpop.f32.mrf.mxu0
    %v12715 = vadd.f32 %v12390, %v12714
    %v12716 = vpop.f32.mrf.mxu0
    %v12717 = vpop.f32.mrf.mxu0
    %v12718 = vadd.f32 %v12393, %v12717
    %v12719 = vpop.f32.mrf.mxu0
    %12720 = vmatprep.mubr.bf16.mxu0 0
    %12721 = vmatmul.mubr.bf16.gmra.mxu0 %v12153
    %v12722 = vpop.f32.mrf.mxu0
    %v12723 = vadd.f32 %v12398, %v12722
    %v12724 = vpop.f32.mrf.mxu0
    %v12725 = vpop.f32.mrf.mxu0
    %v12726 = vadd.f32 %v12401, %v12725
    %v12727 = vpop.f32.mrf.mxu0
    %12728 = vmatprep.mubr.bf16.mxu0 0
    %12729 = vmatmul.mubr.bf16.gmra.mxu0 %v12155
    %v12730 = vpop.f32.mrf.mxu0
    %v12731 = vadd.f32 %v12406, %v12730
    %v12732 = vpop.f32.mrf.mxu0
    %v12733 = vpop.f32.mrf.mxu0
    %v12734 = vadd.f32 %v12409, %v12733
    %v12735 = vpop.f32.mrf.mxu0
    %12736 = vmatprep.mubr.bf16.mxu0 0
    %12737 = vmatmul.mubr.bf16.gmra.mxu0 %v12157
    %v12738 = vpop.f32.mrf.mxu0
    %v12739 = vadd.f32 %v12414, %v12738
    %v12740 = vpop.f32.mrf.mxu0
    %v12741 = vpop.f32.mrf.mxu0
    %v12742 = vadd.f32 %v12417, %v12741
    %v12743 = vpop.f32.mrf.mxu0
    %12744 = vmatprep.mubr.bf16.mxu0 0
    %12745 = vmatmul.mubr.bf16.gmra.mxu0 %v12159
    %v12746 = vpop.f32.mrf.mxu0
    %v12747 = vadd.f32 %v12422, %v12746
    %v12748 = vpop.f32.mrf.mxu0
    %v12749 = vpop.f32.mrf.mxu0
    %v12750 = vadd.f32 %v12425, %v12749
    %v12751 = vpop.f32.mrf.mxu0
    %12752 = vmatprep.mubr.bf16.mxu0 0
    %12753 = vmatmul.mubr.bf16.gmra.mxu0 %v12161
    %v12754 = vpop.f32.mrf.mxu0
    %v12755 = vadd.f32 %v12430, %v12754
    %v12756 = vpop.f32.mrf.mxu0
    %v12757 = vpop.f32.mrf.mxu0
    %v12758 = vadd.f32 %v12433, %v12757
    %v12759 = vpop.f32.mrf.mxu0
    %12760 = vmatprep.mubr.bf16.mxu0 0
    %12761 = vmatmul.mubr.bf16.gmra.mxu0 %v12163
    %v12762 = vpop.f32.mrf.mxu0
    %v12763 = vadd.f32 %v12438, %v12762
    %v12764 = vpop.f32.mrf.mxu0
    %v12765 = vpop.f32.mrf.mxu0
    %v12766 = vadd.f32 %v12441, %v12765
    %v12767 = vpop.f32.mrf.mxu0
    %12768 = vmatprep.mubr.bf16.mxu0 0
    %12769 = vmatmul.mubr.bf16.gmra.mxu0 %v12165
    %v12770 = vpop.f32.mrf.mxu0
    %v12771 = vadd.f32 %v12446, %v12770
    %v12772 = vpop.f32.mrf.mxu0
    %v12773 = vpop.f32.mrf.mxu0
    %v12774 = vadd.f32 %v12449, %v12773
    %v12775 = vpop.f32.mrf.mxu0
    %12776 = vmatprep.mubr.bf16.mxu0 0
    %12777 = vmatmul.mubr.bf16.gmra.mxu0 %v12167
    %v12778 = vpop.f32.mrf.mxu0
    %v12779 = vadd.f32 %v12454, %v12778
    %v12780 = vpop.f32.mrf.mxu0
    %v12781 = vpop.f32.mrf.mxu0
    %v12782 = vadd.f32 %v12457, %v12781
    %v12783 = vpop.f32.mrf.mxu0
    %12784 = vdwg.mxu0
    %v12785 = vld [vmem:[%s0 + $0x2c4] sm:$0xf]
    %v12786 = vld [vmem:[%s0 + $0x2c8] sm:$0xf]
    %v12787 = vld [vmem:[%s0 + $0x2cc] sm:$0xf]
    %v12788 = vld [vmem:[%s0 + $0x2d0] sm:$0xf]
    %v12789 = vld [vmem:[%s0 + $0x2d4] sm:$0xf]
    %v12790 = vld [vmem:[%s0 + $0x2d8] sm:$0xf]
    %v12791 = vld [vmem:[%s0 + $0x2dc] sm:$0xf]
    %v12792 = vld [vmem:[%s0 + $0x2e0] sm:$0xf]
    %v12793 = vld [vmem:[%s0 + $0x2e4] sm:$0xf]
    %v12794 = vld [vmem:[%s0 + $0x2e8] sm:$0xf]
    %v12795 = vld [vmem:[%s0 + $0x2ec] sm:$0xf]
    %v12796 = vld [vmem:[%s0 + $0x2f0] sm:$0xf]
    %v12809 = vunpack.c.l.b16 %v12785
    %v12810 = vunpack.c.l.b16 %v12786
    %v12811 = vunpack.c.l.b16 %v12787
    %v12812 = vunpack.c.l.b16 %v12788
    %v12813 = vunpack.c.l.b16 %v12789
    %v12814 = vunpack.c.l.b16 %v12790
    %v12815 = vunpack.c.l.b16 %v12791
    %v12816 = vunpack.c.l.b16 %v12792
    %v12817 = vunpack.c.l.b16 %v12793
    %v12818 = vunpack.c.l.b16 %v12794
    %v12819 = vunpack.c.l.b16 %v12795
    %v12820 = vunpack.c.l.b16 %v12796
    %v12821 = vpack.c.b16 %v12810, %v12809
    %v12822 = vpack.c.b16 %v12812, %v12811
    %v12823 = vpack.c.b16 %v12814, %v12813
    %v12824 = vpack.c.b16 %v12816, %v12815
    %v12825 = vpack.c.b16 %v12818, %v12817
    %v12826 = vpack.c.b16 %v12820, %v12819
    %12833 = vmatprep.subr.bf16.mxu0 0
    %12834 = vmatpush1.bf16.msra.mxu0 0
    %12835 = vmatprep.subr.bf16.mxu0 0
    %12836 = vmatpush1.bf16.msra.mxu0 0
    %12837 = vmatprep.subr.bf16.mxu0 0
    %12838 = vmatpush1.bf16.msra.mxu0 %v12826
    %12839 = vmatprep.subr.bf16.mxu0 0
    %12840 = vmatpush1.bf16.msra.mxu0 %v12825
    %12841 = vmatprep.subr.bf16.mxu0 0
    %12842 = vmatpush1.bf16.msra.mxu0 %v12824
    %12843 = vmatprep.subr.bf16.mxu0 0
    %12844 = vmatpush1.bf16.msra.mxu0 %v12823
    %12845 = vmatprep.subr.bf16.mxu0 0
    %12846 = vmatpush1.bf16.msra.mxu0 %v12822
    %12847 = vmatprep.subr.bf16.mxu0 0
    %12848 = vmatpush1.bf16.msra.mxu0 %v12821
    %12849 = vmatprep.subr.bf16.mxu0 0
    %12850 = vmatpush2.bf16.msra.mxu0 0
    %12851 = vmatprep.subr.bf16.mxu0 0
    %12852 = vmatpush2.bf16.msra.mxu0 0
    %12853 = vmatprep.subr.bf16.mxu0 0
    %12854 = vmatpush2.bf16.msra.mxu0 0
    %12855 = vmatprep.subr.bf16.mxu0 0
    %12856 = vmatpush2.bf16.msra.mxu0 0
    %12857 = vmatprep.subr.bf16.mxu0 0
    %12858 = vmatpush2.bf16.msra.mxu0 0
    %12859 = vmatprep.subr.bf16.mxu0 0
    %12860 = vmatpush2.bf16.msra.mxu0 0
    %12861 = vmatprep.subr.bf16.mxu0 0
    %12862 = vmatpush2.bf16.msra.mxu0 0
    %12863 = vmatprep.subr.bf16.mxu0 0
    %12864 = vmatpush2.bf16.msra.mxu0 0
    %12865 = vmatprep.mubr.bf16.mxu0 0
    %12866 = vmatmul.mubr.bf16.gmra.mxu0 %v12109
    %v12867 = vpop.f32.mrf.mxu0
    %v12868 = vadd.f32 0.0, %v12867
    %v12869 = vpop.f32.mrf.mxu0
    %v12870 = vpop.f32.mrf.mxu0
    %v12871 = vadd.f32 0.0, %v12870
    %v12872 = vpop.f32.mrf.mxu0
    %12873 = vmatprep.mubr.bf16.mxu0 0
    %12874 = vmatmul.mubr.bf16.gmra.mxu0 %v12111
    %v12875 = vpop.f32.mrf.mxu0
    %v12876 = vadd.f32 0.0, %v12875
    %v12877 = vpop.f32.mrf.mxu0
    %v12878 = vpop.f32.mrf.mxu0
    %v12879 = vadd.f32 0.0, %v12878
    %v12880 = vpop.f32.mrf.mxu0
    %12881 = vmatprep.mubr.bf16.mxu0 0
    %12882 = vmatmul.mubr.bf16.gmra.mxu0 %v12113
    %v12883 = vpop.f32.mrf.mxu0
    %v12884 = vadd.f32 0.0, %v12883
    %v12885 = vpop.f32.mrf.mxu0
    %v12886 = vpop.f32.mrf.mxu0
    %v12887 = vadd.f32 0.0, %v12886
    %v12888 = vpop.f32.mrf.mxu0
    %12889 = vmatprep.mubr.bf16.mxu0 0
    %12890 = vmatmul.mubr.bf16.gmra.mxu0 %v12115
    %v12891 = vpop.f32.mrf.mxu0
    %v12892 = vadd.f32 0.0, %v12891
    %v12893 = vpop.f32.mrf.mxu0
    %v12894 = vpop.f32.mrf.mxu0
    %v12895 = vadd.f32 0.0, %v12894
    %v12896 = vpop.f32.mrf.mxu0
    %12897 = vmatprep.mubr.bf16.mxu0 0
    %12898 = vmatmul.mubr.bf16.gmra.mxu0 %v12117
    %v12899 = vpop.f32.mrf.mxu0
    %v12900 = vadd.f32 0.0, %v12899
    %v12901 = vpop.f32.mrf.mxu0
    %v12902 = vpop.f32.mrf.mxu0
    %v12903 = vadd.f32 0.0, %v12902
    %v12904 = vpop.f32.mrf.mxu0
    %12905 = vmatprep.mubr.bf16.mxu0 0
    %12906 = vmatmul.mubr.bf16.gmra.mxu0 %v12119
    %v12907 = vpop.f32.mrf.mxu0
    %v12908 = vadd.f32 0.0, %v12907
    %v12909 = vpop.f32.mrf.mxu0
    %v12910 = vpop.f32.mrf.mxu0
    %v12911 = vadd.f32 0.0, %v12910
    %v12912 = vpop.f32.mrf.mxu0
    %12913 = vmatprep.mubr.bf16.mxu0 0
    %12914 = vmatmul.mubr.bf16.gmra.mxu0 %v12121
    %v12915 = vpop.f32.mrf.mxu0
    %v12916 = vadd.f32 0.0, %v12915
    %v12917 = vpop.f32.mrf.mxu0
    %v12918 = vpop.f32.mrf.mxu0
    %v12919 = vadd.f32 0.0, %v12918
    %v12920 = vpop.f32.mrf.mxu0
    %12921 = vmatprep.mubr.bf16.mxu0 0
    %12922 = vmatmul.mubr.bf16.gmra.mxu0 %v12123
    %v12923 = vpop.f32.mrf.mxu0
    %v12924 = vadd.f32 0.0, %v12923
    %v12925 = vpop.f32.mrf.mxu0
    %v12926 = vpop.f32.mrf.mxu0
    %v12927 = vadd.f32 0.0, %v12926
    %v12928 = vpop.f32.mrf.mxu0
    %12929 = vmatprep.mubr.bf16.mxu0 0
    %12930 = vmatmul.mubr.bf16.gmra.mxu0 %v12125
    %v12931 = vpop.f32.mrf.mxu0
    %v12932 = vadd.f32 0.0, %v12931
    %v12933 = vpop.f32.mrf.mxu0
    %v12934 = vpop.f32.mrf.mxu0
    %v12935 = vadd.f32 0.0, %v12934
    %v12936 = vpop.f32.mrf.mxu0
    %12937 = vmatprep.mubr.bf16.mxu0 0
    %12938 = vmatmul.mubr.bf16.gmra.mxu0 %v12127
    %v12939 = vpop.f32.mrf.mxu0
    %v12940 = vadd.f32 0.0, %v12939
    %v12941 = vpop.f32.mrf.mxu0
    %v12942 = vpop.f32.mrf.mxu0
    %v12943 = vadd.f32 0.0, %v12942
    %v12944 = vpop.f32.mrf.mxu0
    %12945 = vmatprep.mubr.bf16.mxu0 0
    %12946 = vmatmul.mubr.bf16.gmra.mxu0 %v12129
    %v12947 = vpop.f32.mrf.mxu0
    %v12948 = vadd.f32 0.0, %v12947
    %v12949 = vpop.f32.mrf.mxu0
    %v12950 = vpop.f32.mrf.mxu0
    %v12951 = vadd.f32 0.0, %v12950
    %v12952 = vpop.f32.mrf.mxu0
    %12953 = vmatprep.mubr.bf16.mxu0 0
    %12954 = vmatmul.mubr.bf16.gmra.mxu0 %v12131
    %v12955 = vpop.f32.mrf.mxu0
    %v12956 = vadd.f32 0.0, %v12955
    %v12957 = vpop.f32.mrf.mxu0
    %v12958 = vpop.f32.mrf.mxu0
    %v12959 = vadd.f32 0.0, %v12958
    %v12960 = vpop.f32.mrf.mxu0
    %12961 = vmatprep.mubr.bf16.mxu0 0
    %12962 = vmatmul.mubr.bf16.gmra.mxu0 %v12133
    %v12963 = vpop.f32.mrf.mxu0
    %v12964 = vadd.f32 0.0, %v12963
    %v12965 = vpop.f32.mrf.mxu0
    %v12966 = vpop.f32.mrf.mxu0
    %v12967 = vadd.f32 0.0, %v12966
    %v12968 = vpop.f32.mrf.mxu0
    %12969 = vmatprep.mubr.bf16.mxu0 0
    %12970 = vmatmul.mubr.bf16.gmra.mxu0 %v12135
    %v12971 = vpop.f32.mrf.mxu0
    %v12972 = vadd.f32 0.0, %v12971
    %v12973 = vpop.f32.mrf.mxu0
    %v12974 = vpop.f32.mrf.mxu0
    %v12975 = vadd.f32 0.0, %v12974
    %v12976 = vpop.f32.mrf.mxu0
    %12977 = vmatprep.mubr.bf16.mxu0 0
    %12978 = vmatmul.mubr.bf16.gmra.mxu0 %v12137
    %v12979 = vpop.f32.mrf.mxu0
    %v12980 = vadd.f32 0.0, %v12979
    %v12981 = vpop.f32.mrf.mxu0
    %v12982 = vpop.f32.mrf.mxu0
    %v12983 = vadd.f32 0.0, %v12982
    %v12984 = vpop.f32.mrf.mxu0
    %12985 = vmatprep.mubr.bf16.mxu0 0
    %12986 = vmatmul.mubr.bf16.gmra.mxu0 %v12107
    %v12987 = vpop.f32.mrf.mxu0
    %v12988 = vadd.f32 0.0, %v12987
    %v12989 = vpop.f32.mrf.mxu0
    %v12990 = vpop.f32.mrf.mxu0
    %v12991 = vadd.f32 0.0, %v12990
    %v12992 = vpop.f32.mrf.mxu0
    %12993 = vmatprep.mubr.bf16.mxu0 0
    %12994 = vmatmul.mubr.bf16.gmra.mxu0 %v12141
    %v12995 = vpop.f32.mrf.mxu0
    %v12996 = vadd.f32 0.0, %v12995
    %v12997 = vpop.f32.mrf.mxu0
    %v12998 = vpop.f32.mrf.mxu0
    %v12999 = vadd.f32 0.0, %v12998
    %v13000 = vpop.f32.mrf.mxu0
    %13001 = vmatprep.mubr.bf16.mxu0 0
    %13002 = vmatmul.mubr.bf16.gmra.mxu0 %v12143
    %v13003 = vpop.f32.mrf.mxu0
    %v13004 = vadd.f32 0.0, %v13003
    %v13005 = vpop.f32.mrf.mxu0
    %v13006 = vpop.f32.mrf.mxu0
    %v13007 = vadd.f32 0.0, %v13006
    %v13008 = vpop.f32.mrf.mxu0
    %13009 = vmatprep.mubr.bf16.mxu0 0
    %13010 = vmatmul.mubr.bf16.gmra.mxu0 %v12145
    %v13011 = vpop.f32.mrf.mxu0
    %v13012 = vadd.f32 0.0, %v13011
    %v13013 = vpop.f32.mrf.mxu0
    %v13014 = vpop.f32.mrf.mxu0
    %v13015 = vadd.f32 0.0, %v13014
    %v13016 = vpop.f32.mrf.mxu0
    %13017 = vmatprep.mubr.bf16.mxu0 0
    %13018 = vmatmul.mubr.bf16.gmra.mxu0 %v12147
    %v13019 = vpop.f32.mrf.mxu0
    %v13020 = vadd.f32 0.0, %v13019
    %v13021 = vpop.f32.mrf.mxu0
    %v13022 = vpop.f32.mrf.mxu0
    %v13023 = vadd.f32 0.0, %v13022
    %v13024 = vpop.f32.mrf.mxu0
    %13025 = vmatprep.mubr.bf16.mxu0 0
    %13026 = vmatmul.mubr.bf16.gmra.mxu0 %v12149
    %v13027 = vpop.f32.mrf.mxu0
    %v13028 = vadd.f32 0.0, %v13027
    %v13029 = vpop.f32.mrf.mxu0
    %v13030 = vpop.f32.mrf.mxu0
    %v13031 = vadd.f32 0.0, %v13030
    %v13032 = vpop.f32.mrf.mxu0
    %13033 = vmatprep.mubr.bf16.mxu0 0
    %13034 = vmatmul.mubr.bf16.gmra.mxu0 %v12151
    %v13035 = vpop.f32.mrf.mxu0
    %v13036 = vadd.f32 0.0, %v13035
    %v13037 = vpop.f32.mrf.mxu0
    %v13038 = vpop.f32.mrf.mxu0
    %v13039 = vadd.f32 0.0, %v13038
    %v13040 = vpop.f32.mrf.mxu0
    %13041 = vmatprep.mubr.bf16.mxu0 0
    %13042 = vmatmul.mubr.bf16.gmra.mxu0 %v12153
    %v13043 = vpop.f32.mrf.mxu0
    %v13044 = vadd.f32 0.0, %v13043
    %v13045 = vpop.f32.mrf.mxu0
    %v13046 = vpop.f32.mrf.mxu0
    %v13047 = vadd.f32 0.0, %v13046
    %v13048 = vpop.f32.mrf.mxu0
    %13049 = vmatprep.mubr.bf16.mxu0 0
    %13050 = vmatmul.mubr.bf16.gmra.mxu0 %v12155
    %v13051 = vpop.f32.mrf.mxu0
    %v13052 = vadd.f32 0.0, %v13051
    %v13053 = vpop.f32.mrf.mxu0
    %v13054 = vpop.f32.mrf.mxu0
    %v13055 = vadd.f32 0.0, %v13054
    %v13056 = vpop.f32.mrf.mxu0
    %13057 = vmatprep.mubr.bf16.mxu0 0
    %13058 = vmatmul.mubr.bf16.gmra.mxu0 %v12157
    %v13059 = vpop.f32.mrf.mxu0
    %v13060 = vadd.f32 0.0, %v13059
    %v13061 = vpop.f32.mrf.mxu0
    %v13062 = vpop.f32.mrf.mxu0
    %v13063 = vadd.f32 0.0, %v13062
    %v13064 = vpop.f32.mrf.mxu0
    %13065 = vmatprep.mubr.bf16.mxu0 0
    %13066 = vmatmul.mubr.bf16.gmra.mxu0 %v12159
    %v13067 = vpop.f32.mrf.mxu0
    %v13068 = vadd.f32 0.0, %v13067
    %v13069 = vpop.f32.mrf.mxu0
    %v13070 = vpop.f32.mrf.mxu0
    %v13071 = vadd.f32 0.0, %v13070
    %v13072 = vpop.f32.mrf.mxu0
    %13073 = vmatprep.mubr.bf16.mxu0 0
    %13074 = vmatmul.mubr.bf16.gmra.mxu0 %v12161
    %v13075 = vpop.f32.mrf.mxu0
    %v13076 = vadd.f32 0.0, %v13075
    %v13077 = vpop.f32.mrf.mxu0
    %v13078 = vpop.f32.mrf.mxu0
    %v13079 = vadd.f32 0.0, %v13078
    %v13080 = vpop.f32.mrf.mxu0
    %13081 = vmatprep.mubr.bf16.mxu0 0
    %13082 = vmatmul.mubr.bf16.gmra.mxu0 %v12163
    %v13083 = vpop.f32.mrf.mxu0
    %v13084 = vadd.f32 0.0, %v13083
    %v13085 = vpop.f32.mrf.mxu0
    %v13086 = vpop.f32.mrf.mxu0
    %v13087 = vadd.f32 0.0, %v13086
    %v13088 = vpop.f32.mrf.mxu0
    %13089 = vmatprep.mubr.bf16.mxu0 0
    %13090 = vmatmul.mubr.bf16.gmra.mxu0 %v12165
    %v13091 = vpop.f32.mrf.mxu0
    %v13092 = vadd.f32 0.0, %v13091
    %v13093 = vpop.f32.mrf.mxu0
    %v13094 = vpop.f32.mrf.mxu0
    %v13095 = vadd.f32 0.0, %v13094
    %v13096 = vpop.f32.mrf.mxu0
    %13097 = vmatprep.mubr.bf16.mxu0 0
    %13098 = vmatmul.mubr.bf16.gmra.mxu0 %v12167
    %v13099 = vpop.f32.mrf.mxu0
    %v13100 = vadd.f32 0.0, %v13099
    %v13101 = vpop.f32.mrf.mxu0
    %v13102 = vpop.f32.mrf.mxu0
    %v13103 = vadd.f32 0.0, %v13102
    %v13104 = vpop.f32.mrf.mxu0
    %13105 = vmatprep.mubr.bf16.mxu0 0
    %13106 = vmatmul.mubr.bf16.gmra.mxu0 %v12169
    %v13107 = vpop.f32.mrf.mxu0
    %v13108 = vadd.f32 0.0, %v13107
    %v13109 = vpop.f32.mrf.mxu0
    %v13110 = vpop.f32.mrf.mxu0
    %v13111 = vadd.f32 0.0, %v13110
    %v13112 = vpop.f32.mrf.mxu0
    %13113 = vmatprep.mubr.bf16.mxu0 0
    %13114 = vmatmul.mubr.bf16.gmra.mxu0 %v12139
    %v13115 = vpop.f32.mrf.mxu0
    %v13116 = vadd.f32 0.0, %v13115
    %v13117 = vpop.f32.mrf.mxu0
    %v13118 = vpop.f32.mrf.mxu0
    %v13119 = vadd.f32 0.0, %v13118
    %v13120 = vpop.f32.mrf.mxu0
    %13121 = vdwg.mxu0
    %v13122 = vadd.f32 %v12531, %v12868
    %v13123 = vadd.f32 %v12534, %v12871
    %v13124 = vadd.f32 %v12539, %v12876
    %v13125 = vadd.f32 %v12542, %v12879
    %v13126 = vadd.f32 %v12547, %v12884
    %v13127 = vadd.f32 %v12550, %v12887
    %v13128 = vadd.f32 %v12555, %v12892
    %v13129 = vadd.f32 %v12558, %v12895
    %v13130 = vadd.f32 %v12563, %v12900
    %v13131 = vadd.f32 %v12566, %v12903
    %v13132 = vadd.f32 %v12571, %v12908
    %v13133 = vadd.f32 %v12574, %v12911
    %v13134 = vadd.f32 %v12579, %v12916
    %v13135 = vadd.f32 %v12582, %v12919
    %v13136 = vadd.f32 %v12587, %v12924
    %v13137 = vadd.f32 %v12590, %v12927
    %v13138 = vadd.f32 %v12595, %v12932
    %v13139 = vadd.f32 %v12598, %v12935
    %v13140 = vadd.f32 %v12603, %v12940
    %v13141 = vadd.f32 %v12606, %v12943
    %v13142 = vadd.f32 %v12611, %v12948
    %v13143 = vadd.f32 %v12614, %v12951
    %v13144 = vadd.f32 %v12619, %v12956
    %v13145 = vadd.f32 %v12622, %v12959
    %v13146 = vadd.f32 %v12627, %v12964
    %v13147 = vadd.f32 %v12630, %v12967
    %v13148 = vadd.f32 %v12635, %v12972
    %v13149 = vadd.f32 %v12638, %v12975
    %v13150 = vadd.f32 %v12643, %v12980
    %v13151 = vadd.f32 %v12646, %v12983
    %v13152 = vadd.f32 %v12651, %v12988
    %v13153 = vadd.f32 %v12654, %v12991
    %v13154 = vadd.f32 %v12659, %v12996
    %v13155 = vadd.f32 %v12662, %v12999
    %v13156 = vadd.f32 %v12667, %v13004
    %v13157 = vadd.f32 %v12670, %v13007
    %v13158 = vadd.f32 %v12675, %v13012
    %v13159 = vadd.f32 %v12678, %v13015
    %v13160 = vadd.f32 %v12683, %v13020
    %v13161 = vadd.f32 %v12686, %v13023
    %v13162 = vadd.f32 %v12691, %v13028
    %v13163 = vadd.f32 %v12694, %v13031
    %v13164 = vadd.f32 %v12699, %v13036
    %v13165 = vadd.f32 %v12702, %v13039
    %v13166 = vadd.f32 %v12707, %v13044
    %v13167 = vadd.f32 %v12710, %v13047
    %v13168 = vadd.f32 %v12715, %v13052
    %v13169 = vadd.f32 %v12718, %v13055
    %v13170 = vadd.f32 %v12723, %v13060
    %v13171 = vadd.f32 %v12726, %v13063
    %v13172 = vadd.f32 %v12731, %v13068
    %v13173 = vadd.f32 %v12734, %v13071
    %v13174 = vadd.f32 %v12739, %v13076
    %v13175 = vadd.f32 %v12742, %v13079
    %v13176 = vadd.f32 %v12747, %v13084
    %v13177 = vadd.f32 %v12750, %v13087
    %v13178 = vadd.f32 %v12755, %v13092
    %v13179 = vadd.f32 %v12758, %v13095
    %v13180 = vadd.f32 %v12763, %v13100
    %v13181 = vadd.f32 %v12766, %v13103
    %v13182 = vadd.f32 %v12771, %v13108
    %v13183 = vadd.f32 %v12774, %v13111
    %v13184 = vadd.f32 %v12779, %v13116
    %v13185 = vadd.f32 %v12782, %v13119
    %v13186 = vld [vmem:[%s1 + $0x5] sm:$0x1]
    %v13187 = vlaneseq
    %v13188 = vshrl.u32 %v13187, 7
    %v13189 = vsub.s32 0, %v13188
    %v13190 = vrot.slane %v13186, %v13189
    %v13191 = vadd.f32 %v13122, %v13190
    %v13192 = vadd.f32 %v13123, %v13190
    %v13193 = vadd.f32 %v13124, %v13190
    %v13194 = vadd.f32 %v13125, %v13190
    %v13195 = vadd.f32 %v13126, %v13190
    %v13196 = vadd.f32 %v13127, %v13190
    %v13197 = vadd.f32 %v13128, %v13190
    %v13198 = vadd.f32 %v13129, %v13190
    %v13199 = vadd.f32 %v13130, %v13190
    %v13200 = vadd.f32 %v13131, %v13190
    %v13201 = vadd.f32 %v13132, %v13190
    %v13202 = vadd.f32 %v13133, %v13190
    %v13203 = vadd.f32 %v13134, %v13190
    %v13204 = vadd.f32 %v13135, %v13190
    %v13205 = vadd.f32 %v13136, %v13190
    %v13206 = vadd.f32 %v13137, %v13190
    %v13207 = vadd.f32 %v13138, %v13190
    %v13208 = vadd.f32 %v13139, %v13190
    %v13209 = vadd.f32 %v13140, %v13190
    %v13210 = vadd.f32 %v13141, %v13190
    %v13211 = vadd.f32 %v13142, %v13190
    %v13212 = vadd.f32 %v13143, %v13190
    %v13213 = vadd.f32 %v13144, %v13190
    %v13214 = vadd.f32 %v13145, %v13190
    %v13215 = vadd.f32 %v13146, %v13190
    %v13216 = vadd.f32 %v13147, %v13190
    %v13217 = vadd.f32 %v13148, %v13190
    %v13218 = vadd.f32 %v13149, %v13190
    %v13219 = vadd.f32 %v13150, %v13190
    %v13220 = vadd.f32 %v13151, %v13190
    %v13221 = vadd.f32 %v13152, %v13190
    %v13222 = vadd.f32 %v13153, %v13190
    %v13223 = vadd.f32 %v13154, %v13190
    %v13224 = vadd.f32 %v13155, %v13190
    %v13225 = vadd.f32 %v13156, %v13190
    %v13226 = vadd.f32 %v13157, %v13190
    %v13227 = vadd.f32 %v13158, %v13190
    %v13228 = vadd.f32 %v13159, %v13190
    %v13229 = vadd.f32 %v13160, %v13190
    %v13230 = vadd.f32 %v13161, %v13190
    %v13231 = vadd.f32 %v13162, %v13190
    %v13232 = vadd.f32 %v13163, %v13190
    %v13233 = vadd.f32 %v13164, %v13190
    %v13234 = vadd.f32 %v13165, %v13190
    %v13235 = vadd.f32 %v13166, %v13190
    %v13236 = vadd.f32 %v13167, %v13190
    %v13237 = vadd.f32 %v13168, %v13190
    %v13238 = vadd.f32 %v13169, %v13190
    %v13239 = vadd.f32 %v13170, %v13190
    %v13240 = vadd.f32 %v13171, %v13190
    %v13241 = vadd.f32 %v13172, %v13190
    %v13242 = vadd.f32 %v13173, %v13190
    %v13243 = vadd.f32 %v13174, %v13190
    %v13244 = vadd.f32 %v13175, %v13190
    %v13245 = vadd.f32 %v13176, %v13190
    %v13246 = vadd.f32 %v13177, %v13190
    %v13247 = vadd.f32 %v13178, %v13190
    %v13248 = vadd.f32 %v13179, %v13190
    %v13249 = vadd.f32 %v13180, %v13190
    %v13250 = vadd.f32 %v13181, %v13190
    %v13251 = vadd.f32 %v13182, %v13190
    %v13252 = vadd.f32 %v13183, %v13190
    %v13253 = vadd.f32 %v13184, %v13190
    %v13254 = vadd.f32 %v13185, %v13190
    %vm13255 = vcmask 31744
    %13256 = vst.msk [vmem:[%s3] sm:$0xff] %vm13255, %v13191
    %13257 = vst.msk [vmem:[%s3 + $0x8] sm:$0xff] %vm13255, %v13192
    %13258 = vst.msk [vmem:[%s3 + $0x10] sm:$0xff] %vm13255, %v13193
    %13259 = vst.msk [vmem:[%s3 + $0x18] sm:$0xff] %vm13255, %v13194
    %13260 = vst.msk [vmem:[%s3 + $0x20] sm:$0xff] %vm13255, %v13195
    %13261 = vst.msk [vmem:[%s3 + $0x28] sm:$0xff] %vm13255, %v13196
    %13262 = vst.msk [vmem:[%s3 + $0x30] sm:$0xff] %vm13255, %v13197
    %13263 = vst.msk [vmem:[%s3 + $0x38] sm:$0xff] %vm13255, %v13198
    %13264 = vst.msk [vmem:[%s3 + $0x40] sm:$0xff] %vm13255, %v13199
    %13265 = vst.msk [vmem:[%s3 + $0x48] sm:$0xff] %vm13255, %v13200
    %13266 = vst.msk [vmem:[%s3 + $0x50] sm:$0xff] %vm13255, %v13201
    %13267 = vst.msk [vmem:[%s3 + $0x58] sm:$0xff] %vm13255, %v13202
    %13268 = vst.msk [vmem:[%s3 + $0x60] sm:$0xff] %vm13255, %v13203
    %13269 = vst.msk [vmem:[%s3 + $0x68] sm:$0xff] %vm13255, %v13204
    %13270 = vst.msk [vmem:[%s3 + $0x70] sm:$0xff] %vm13255, %v13205
    %13271 = vst.msk [vmem:[%s3 + $0x78] sm:$0xff] %vm13255, %v13206
    %13272 = vst.msk [vmem:[%s3 + $0x80] sm:$0xff] %vm13255, %v13207
    %13273 = vst.msk [vmem:[%s3 + $0x88] sm:$0xff] %vm13255, %v13208
    %13274 = vst.msk [vmem:[%s3 + $0x90] sm:$0xff] %vm13255, %v13209
    %13275 = vst.msk [vmem:[%s3 + $0x98] sm:$0xff] %vm13255, %v13210
    %13276 = vst.msk [vmem:[%s3 + $0xa0] sm:$0xff] %vm13255, %v13211
    %13277 = vst.msk [vmem:[%s3 + $0xa8] sm:$0xff] %vm13255, %v13212
    %13278 = vst.msk [vmem:[%s3 + $0xb0] sm:$0xff] %vm13255, %v13213
    %13279 = vst.msk [vmem:[%s3 + $0xb8] sm:$0xff] %vm13255, %v13214
    %13280 = vst.msk [vmem:[%s3 + $0xc0] sm:$0xff] %vm13255, %v13215
    %13281 = vst.msk [vmem:[%s3 + $0xc8] sm:$0xff] %vm13255, %v13216
    %13282 = vst.msk [vmem:[%s3 + $0xd0] sm:$0xff] %vm13255, %v13217
    %13283 = vst.msk [vmem:[%s3 + $0xd8] sm:$0xff] %vm13255, %v13218
    %13284 = vst.msk [vmem:[%s3 + $0xe0] sm:$0xff] %vm13255, %v13219
    %13285 = vst.msk [vmem:[%s3 + $0xe8] sm:$0xff] %vm13255, %v13220
    %13286 = vst.msk [vmem:[%s3 + $0xf0] sm:$0xff] %vm13255, %v13221
    %13287 = vst.msk [vmem:[%s3 + $0xf8] sm:$0xff] %vm13255, %v13222
    %13288 = vst.msk [vmem:[%s3 + $0x100] sm:$0xff] %vm13255, %v13223
    %13289 = vst.msk [vmem:[%s3 + $0x108] sm:$0xff] %vm13255, %v13224
    %13290 = vst.msk [vmem:[%s3 + $0x110] sm:$0xff] %vm13255, %v13225
    %13291 = vst.msk [vmem:[%s3 + $0x118] sm:$0xff] %vm13255, %v13226
    %13292 = vst.msk [vmem:[%s3 + $0x120] sm:$0xff] %vm13255, %v13227
    %13293 = vst.msk [vmem:[%s3 + $0x128] sm:$0xff] %vm13255, %v13228
    %13294 = vst.msk [vmem:[%s3 + $0x130] sm:$0xff] %vm13255, %v13229
    %13295 = vst.msk [vmem:[%s3 + $0x138] sm:$0xff] %vm13255, %v13230
    %13296 = vst.msk [vmem:[%s3 + $0x140] sm:$0xff] %vm13255, %v13231
    %13297 = vst.msk [vmem:[%s3 + $0x148] sm:$0xff] %vm13255, %v13232
    %13298 = vst.msk [vmem:[%s3 + $0x150] sm:$0xff] %vm13255, %v13233
    %13299 = vst.msk [vmem:[%s3 + $0x158] sm:$0xff] %vm13255, %v13234
    %13300 = vst.msk [vmem:[%s3 + $0x160] sm:$0xff] %vm13255, %v13235
    %13301 = vst.msk [vmem:[%s3 + $0x168] sm:$0xff] %vm13255, %v13236
    %13302 = vst.msk [vmem:[%s3 + $0x170] sm:$0xff] %vm13255, %v13237
    %13303 = vst.msk [vmem:[%s3 + $0x178] sm:$0xff] %vm13255, %v13238
    %13304 = vst.msk [vmem:[%s3 + $0x180] sm:$0xff] %vm13255, %v13239
    %13305 = vst.msk [vmem:[%s3 + $0x188] sm:$0xff] %vm13255, %v13240
    %13306 = vst.msk [vmem:[%s3 + $0x190] sm:$0xff] %vm13255, %v13241
    %13307 = vst.msk [vmem:[%s3 + $0x198] sm:$0xff] %vm13255, %v13242
    %13308 = vst.msk [vmem:[%s3 + $0x1a0] sm:$0xff] %vm13255, %v13243
    %13309 = vst.msk [vmem:[%s3 + $0x1a8] sm:$0xff] %vm13255, %v13244
    %13310 = vst.msk [vmem:[%s3 + $0x1b0] sm:$0xff] %vm13255, %v13245
    %13311 = vst.msk [vmem:[%s3 + $0x1b8] sm:$0xff] %vm13255, %v13246
    %13312 = vst.msk [vmem:[%s3 + $0x1c0] sm:$0xff] %vm13255, %v13247
    %13313 = vst.msk [vmem:[%s3 + $0x1c8] sm:$0xff] %vm13255, %v13248
    %13314 = vst.msk [vmem:[%s3 + $0x1d0] sm:$0xff] %vm13255, %v13249
    %13315 = vst.msk [vmem:[%s3 + $0x1d8] sm:$0xff] %vm13255, %v13250
    %13316 = vst.msk [vmem:[%s3 + $0x1e0] sm:$0xff] %vm13255, %v13251
    %13317 = vst.msk [vmem:[%s3 + $0x1e8] sm:$0xff] %vm13255, %v13252
    %13318 = vst.msk [vmem:[%s3 + $0x1f0] sm:$0xff] %vm13255, %v13253
    %13319 = vst.msk [vmem:[%s3 + $0x1f8] sm:$0xff] %vm13255, %v13254
    // Predicated region
    $region14: #{simple_resnet_forward.2} parent=1 // pred_check
      _
    $region15: #{simple_resnet_forward.2} parent=1 // pred_check_branch
      %13321 = sbr.rel (0) target = $region17
    $region16: #{simple_resnet_forward.2} parent=1 // pred_region
      _
    $region17: #{simple_resnet_forward.2} parent=1 // pred_fallthru
      _
    // Predicated region
    $region18: #{simple_resnet_forward.2} parent=1 // pred_check
      _
    $region19: #{simple_resnet_forward.2} parent=1 // pred_check_branch
      %13323 = sbr.rel (0) target = $region21
    $region20: #{simple_resnet_forward.2} parent=1 // pred_region
      _
    $region21: #{simple_resnet_forward.2} parent=1 // pred_fallthru
      _

</llo_original>
